<compile_context>
chip_gen: v7x
topology: tpu7x:2x2x1
jax: 0.10.0
libtpu: 0.0.40
codegen_flags: <defaults>
</compile_context>

<pallas_src>
import functools

import jax
import jax.numpy as jnp
import numpy as np
from jax.experimental import pallas as pl
from jax.experimental.pallas import tpu as pltpu


def _default_vmem_limit():
    """Generation-aware scoped-VMEM limit (64 MiB is the whole physical VMEM on v7x)."""
    try:
        info = pltpu.get_tpu_info()
        cap = getattr(info, "vmem_capacity_bytes", None)
        if cap:
            return min(64 << 20, int(0.75 * cap))
    except Exception:
        pass
    return 48 << 20  # safe everywhere (v5e/v6e: 128 MiB physical, v7x: 64 MiB)


VMEM_LIMIT = _default_vmem_limit()


def _pick_tile(n, target=1024):
    """Largest convenient spatial tile (multiple of 128 or full array).
    With bf16 MXU operands the same tile uses half the VMEM, so deeper pipelining /
    larger tiles are possible on v7x without exceeding the 64 MiB budget."""
    if n <= target:
        return n
    for t in (1024, 512, 256, 128):
        if n % t == 0:
            return t
    return n


def _erf(x):
    # Abramowitz & Stegun 7.1.26 polynomial approximation (|err| < 1.5e-7),
    # built only from exp / abs / basic arithmetic (safe to lower in Mosaic).
    a1, a2, a3, a4, a5 = 0.254829592, -0.284496736, 1.421413741, -1.453152027, 1.061405429
    p = 0.3275911
    sgn = jnp.where(x < 0.0, -1.0, 1.0)
    ax = jnp.abs(x)
    t = 1.0 / (1.0 + p * ax)
    poly = ((((a5 * t + a4) * t + a3) * t + a2) * t + a1) * t
    return sgn * (1.0 - poly * jnp.exp(-ax * ax))


def _gelu(x):
    # exact (erf-based) GELU, matching torch.nn.GELU()
    return 0.5 * x * (1.0 + _erf(x * 0.7071067811865476))


def _conv_valid_mask(H, W, K):
    """mask[kh*K+kw, h*W+w] = 1 iff source pixel (h+kh-p, w+kw-p) is inside the image
    (implements zero padding of the depthwise conv without a wrapper jnp.pad)."""
    p = K // 2
    hh, ww = np.meshgrid(np.arange(H), np.arange(W), indexing="ij")
    m = np.zeros((K * K, H * W), np.float32)
    for kh in range(K):
        for kw in range(K):
            ok = ((hh + kh - p >= 0) & (hh + kh - p < H)
                  & (ww + kw - p >= 0) & (ww + kw - p < W))
            m[kh * K + kw] = ok.reshape(-1).astype(np.float32)
    return jnp.asarray(m)


# ---------------------------------------------------------------------------
# 1x1 conv, channels-first:  out[b] = W (Cout,Cin) @ x[b] (Cin, N) + bias
# Lane-dense output (spatial in lanes); MXU operands cast to the weight dtype
# (bf16 in the fast path), f32 accumulation.
# TODO(synk): folding the batch axis into the lane axis (C, B*HW) would need an
# HBM-level transpose that breaks the otherwise transpose-free layout; at these
# shapes the per-batch grid (2 steps) is cheaper than that round trip.
# ---------------------------------------------------------------------------
def pointwise_conv(x, w, b, out_dtype):
    B, Cin, N = x.shape
    Cout = w.shape[0]
    b2 = b.reshape(Cout, 1).astype(jnp.float32)
    tn = _pick_tile(N)
    wdt = w.dtype

    def kernel(x_ref, w_ref, b_ref, o_ref):
        xb = x_ref[0].astype(wdt)
        acc = jnp.dot(w_ref[...], xb, preferred_element_type=jnp.float32)
        o_ref[0] = (acc + b_ref[...]).astype(o_ref.dtype)

    return pl.pallas_call(
        kernel,
        out_shape=jax.ShapeDtypeStruct((B, Cout, N), out_dtype),
        grid=(B, N // tn),
        in_specs=[
            pl.BlockSpec((1, Cin, tn), lambda i, j: (i, 0, j)),
            pl.BlockSpec((Cout, Cin), lambda i, j: (0, 0)),
            pl.BlockSpec((Cout, 1), lambda i, j: (0, 0)),
        ],
        out_specs=pl.BlockSpec((1, Cout, tn), lambda i, j: (i, 0, j)),
        compiler_params=pltpu.CompilerParams(
            dimension_semantics=("parallel", "parallel"),
            vmem_limit_bytes=VMEM_LIMIT),
    )(x, w, b2)


# ---------------------------------------------------------------------------
# Fused offset branch (channels-first, lane-dense):
#   depthwise KxK conv (zero padding via precomputed mask) + bias
#   + LayerNorm(channel) + exact GELU + 1x1 (c -> 2) offset projection.
# Output is the 2-channel offset field at full resolution (BH, 2, H*W); the conv
# stride is applied by the wrapper on this tiny tensor (the extra stride-1 positions
# cost ~c*HW*K*K VALU ops, negligible, and keep every vreg 128-lane dense).
# ---------------------------------------------------------------------------
def offset_branch(q_bh, w_dw_t, b_dw, ln_g, ln_b, w_off_t, mask, H, W, K):
    BH, c, HW = q_bh.shape
    p = K // 2

    def kernel(x_ref, w_ref, b_ref, g_ref, be_ref, wo_ref, m_ref, o_ref, acc_ref):
        x = x_ref[0].astype(jnp.float32)                     # (c, HW)
        acc_ref[...] = jnp.zeros_like(acc_ref)
        for kh in range(K):
            for kw in range(K):
                t = kh * K + kw
                delta = (kh - p) * W + (kw - p)
                lo = max(0, -delta)
                hi = HW - max(0, delta)
                tap = (x[:, lo + delta:hi + delta]
                       * m_ref[t:t + 1, lo:hi]
                       * w_ref[:, t:t + 1])
                acc_ref[:, lo:hi] += tap
        acc = acc_ref[...] + b_ref[...]
        # LayerNorm over the channel axis (rows), rsqrt on the EUP
        mu = jnp.mean(acc, axis=0, keepdims=True)
        xc = acc - mu
        var = jnp.mean(xc * xc, axis=0, keepdims=True)
        xn = xc * jax.lax.rsqrt(var + 1e-5)
        xn = xn * g_ref[...] + be_ref[...]
        act = _gelu(xn)
        off = jnp.dot(wo_ref[...], act, preferred_element_type=jnp.float32)  # (2, HW)
        o_ref[0] = off.astype(o_ref.dtype)

    return pl.pallas_call(
        kernel,
        out_shape=jax.ShapeDtypeStruct((BH, 2, HW), jnp.float32),
        grid=(BH,),
        in_specs=[
            pl.BlockSpec((1, c, HW), lambda i: (i, 0, 0)),
            pl.BlockSpec((c, K * K), lambda i: (0, 0)),
            pl.BlockSpec((c, 1), lambda i: (0, 0)),
            pl.BlockSpec((c, 1), lambda i: (0, 0)),
            pl.BlockSpec((c, 1), lambda i: (0, 0)),
            pl.BlockSpec((2, c), lambda i: (0, 0)),
            pl.BlockSpec((K * K, HW), lambda i: (0, 0)),
        ],
        out_specs=pl.BlockSpec((1, 2, HW), lambda i: (i, 0, 0)),
        scratch_shapes=[pltpu.VMEM((c, HW), jnp.float32)],
        compiler_params=pltpu.CompilerParams(
            dimension_semantics=("parallel",),
            vmem_limit_bytes=VMEM_LIMIT),
    )(q_bh, w_dw_t, b_dw, ln_g, ln_b, w_off_t, mask)


# ---------------------------------------------------------------------------
# Fused deformable sampling + stacked k/v projection, per batch.
#   * Separable bilinear sampling (align_corners=True, coords pre-clamped):
#       Wx (W, ns) and Wy (H, ns) 2-tap weight matrices (f32),
#       t1 = kv(c*H, W) @ Wx on the MXU, then a weighted reduce over H with Wy.
#   * The sampled (C, ns) tokens never leave VMEM: the stacked (2C, C) k/v
#     projection (softmax scale pre-folded into the k half) runs in the epilogue.
# ---------------------------------------------------------------------------
def sample_project(off_s, ref_pts, kv2, w_kv, b_kv, H, W, heads, dim_head):
    B = off_s.shape[0]
    ns = off_s.shape[3]
    c = dim_head
    C = heads * c
    cH = c * H
    proj_dt = w_kv.dtype

    def kernel(off_ref, ref_ref, kv_ref, w_ref, b_ref, k_ref, v_ref):
        samples = []
        for g in range(heads):
            kvg = kv_ref[0, g].astype(jnp.float32)                       # (c*H, W)
            pos = jnp.clip(off_ref[0, g] + ref_ref[...], -1.0, 1.0)      # (2, ns): (y, x)
            yf = (pos[0:1, :] + 1.0) * (0.5 * (H - 1))
            xf = (pos[1:2, :] + 1.0) * (0.5 * (W - 1))
            x0f = jnp.floor(xf)
            y0f = jnp.floor(yf)
            wx1 = xf - x0f
            wx0 = 1.0 - wx1
            wy1 = yf - y0f
            wy0 = 1.0 - wy1
            x0 = jnp.clip(x0f.astype(jnp.int32), 0, W - 1)
            y0 = jnp.clip(y0f.astype(jnp.int32), 0, H - 1)
            x1 = jnp.minimum(x0 + 1, W - 1)
            y1 = jnp.minimum(y0 + 1, H - 1)
            wi = jax.lax.broadcasted_iota(jnp.int32, (W, ns), 0)
            wxm = jnp.where(wi == x0, wx0, 0.0) + jnp.where(wi == x1, wx1, 0.0)  # (W, ns)
            hi2 = jax.lax.broadcasted_iota(jnp.int32, (H, ns), 0)
            wym = jnp.where(hi2 == y0, wy0, 0.0) + jnp.where(hi2 == y1, wy1, 0.0)  # (H, ns)
            t1 = jnp.dot(kvg, wxm, preferred_element_type=jnp.float32)   # (c*H, ns)
            t1 = t1.reshape(c, H, ns)
            samples.append(jnp.sum(t1 * wym[None, :, :], axis=1))        # (c, ns)
        sampled = jnp.concatenate(samples, axis=0)                       # (C, ns)
        kvp = jnp.dot(w_ref[...], sampled.astype(proj_dt),
                      preferred_element_type=jnp.float32) + b_ref[...]   # (2C, ns)
        k_ref[0] = kvp[:C, :].astype(k_ref.dtype)
        v_ref[0] = kvp[C:, :].astype(v_ref.dtype)

    return pl.pallas_call(
        kernel,
        out_shape=(jax.ShapeDtypeStruct((B, C, ns), proj_dt),
                   jax.ShapeDtypeStruct((B, C, ns), proj_dt)),
        grid=(B,),
        in_specs=[
            pl.BlockSpec((1, heads, 2, ns), lambda i: (i, 0, 0, 0)),
            pl.BlockSpec((2, ns), lambda i: (0, 0)),
            pl.BlockSpec((1, heads, cH, W), lambda i: (i, 0, 0, 0)),
            pl.BlockSpec((2 * C, C), lambda i: (0, 0)),
            pl.BlockSpec((2 * C, 1), lambda i: (0, 0)),
        ],
        out_specs=[pl.BlockSpec((1, C, ns), lambda i: (i, 0, 0)),
                   pl.BlockSpec((1, C, ns), lambda i: (i, 0, 0))],
        compiler_params=pltpu.CompilerParams(
            dimension_semantics=("parallel",),
            vmem_limit_bytes=VMEM_LIMIT),
    )(off_s, ref_pts, kv2, w_kv, b_kv)


# ---------------------------------------------------------------------------
# Attention core, per (batch, query-tile); all heads of the batch in one grid step.
#   attn = softmax(q^T k) over the sample axis (scale already folded into k);
#   out  = v attn.  dot_general contracts the channel axis directly (no k.T copy),
#   softmax in f32 with an approximate EUP reciprocal.
# ---------------------------------------------------------------------------
def attention(q, k, v, heads, dim_head):
    B, C, M = q.shape
    ns = k.shape[2]
    c = dim_head
    tm = _pick_tile(M)

    def kernel(q_ref, k_ref, v_ref, o_ref):
        for g in range(heads):
            qg = q_ref[0, g * c:(g + 1) * c, :]            # (c, tm)
            kg = k_ref[0, g * c:(g + 1) * c, :]            # (c, ns)
            vg = v_ref[0, g * c:(g + 1) * c, :]            # (c, ns)
            s = jax.lax.dot_general(kg, qg, (((0,), (0,)), ((), ())),
                                    preferred_element_type=jnp.float32)  # (ns, tm)
            s = s - jnp.max(s, axis=0, keepdims=True)
            p = jnp.exp(s)
            denom = jnp.sum(p, axis=0, keepdims=True)
            p = p * pl.reciprocal(denom, approx=True)
            out = jnp.dot(vg, p.astype(vg.dtype),
                          preferred_element_type=jnp.float32)            # (c, tm)
            o_ref[0, g * c:(g + 1) * c, :] = out.astype(o_ref.dtype)

    return pl.pallas_call(
        kernel,
        out_shape=jax.ShapeDtypeStruct((B, C, M), q.dtype),
        grid=(B, M // tm),
        in_specs=[
            pl.BlockSpec((1, C, tm), lambda i, j: (i, 0, j)),
            pl.BlockSpec((1, C, ns), lambda i, j: (i, 0, 0)),
            pl.BlockSpec((1, C, ns), lambda i, j: (i, 0, 0)),
        ],
        out_specs=pl.BlockSpec((1, C, tm), lambda i, j: (i, 0, j)),
        compiler_params=pltpu.CompilerParams(
            dimension_semantics=("parallel", "parallel"),
            vmem_limit_bytes=VMEM_LIMIT),
    )(q, k, v)


# ---------------------------------------------------------------------------
# Full DCA forward (glue in plain JAX; all heavy ops in Pallas kernels).
# ---------------------------------------------------------------------------
def dca_forward(x, kv, params, *, heads, dim_head, offset_kernel, offset_stride,
                compute_dtype=jnp.bfloat16):
    B, C, H, W = x.shape
    inner = heads * dim_head
    assert C == inner, "DCA's reshapes require dim == heads * dim_head"
    HW = H * W
    BH = B * heads
    K = offset_kernel
    p = K // 2
    s = offset_stride
    scale = dim_head ** (-0.5)
    cdt = compute_dtype
    f32 = jnp.float32

    Hk = (H + 2 * p - K) // s + 1
    Wk = (W + 2 * p - K) // s + 1
    ns = Hk * Wk

    # ---- parameter prep (tiny, XLA side) ----
    w_q = params["w_q"].astype(cdt)
    w_o = params["w_o"].astype(cdt)
    # fold softmax scale into proj_k; stack k/v weights for a single fused matmul
    w_kv = jnp.concatenate([params["w_k"] * scale, params["w_v"]], axis=0).astype(cdt)
    b_kv = jnp.concatenate([params["b_k"] * scale, params["b_v"]],
                           axis=0).reshape(2 * C, 1).astype(f32)
    w_dw_t = params["w_dw"].T.astype(f32)                      # (c, K*K)
    b_dw = params["b_dw"].reshape(dim_head, 1).astype(f32)
    ln_g = params["ln_g"].reshape(dim_head, 1).astype(f32)
    ln_b = params["ln_b"].reshape(dim_head, 1).astype(f32)
    w_off_t = params["w_off"].T.astype(f32)                    # (2, c)
    mask = _conv_valid_mask(H, W, K)                           # (K*K, HW) f32

    # reference points (y, x), exactly torch's _get_ref_points convention
    # TODO(synk): Hk == 1 or Wk == 1 divides by zero, exactly as the torch code does.
    ry = (jnp.arange(Hk, dtype=f32) + 0.5) / (Hk - 1.0) * 2.0 - 1.0
    rx = (jnp.arange(Wk, dtype=f32) + 0.5) / (Wk - 1.0) * 2.0 - 1.0
    ref_pts = jnp.concatenate(
        [jnp.broadcast_to(ry[:, None], (Hk, Wk)).reshape(1, ns),
         jnp.broadcast_to(rx[None, :], (Hk, Wk)).reshape(1, ns)], axis=0)   # (2, ns)

    # ---- proj_q (channels-first, lane-dense) ----
    q = pointwise_conv(x.reshape(B, C, HW), w_q, params["b_q"], out_dtype=cdt)

    # ---- fused offset branch -> 2-channel offset field ----
    off_full = offset_branch(q.reshape(BH, dim_head, HW), w_dw_t, b_dw, ln_g, ln_b,
                             w_off_t, mask, H, W, K)           # (BH, 2, HW) f32
    # TODO(synk): the conv stride is applied as an XLA strided slice of this tiny
    # 2-channel field (no clean in-kernel strided lane slice); it is exactly
    # equivalent because LN/GELU/1x1-proj are pointwise per spatial location.
    off_s = off_full.reshape(BH, 2, H, W)[:, :, :s * Hk:s, :s * Wk:s]
    off_s = off_s.reshape(B, heads, 2, ns)

    # ---- fused deformable sampling + stacked k/v projection ----
    kv2 = kv.reshape(B, heads, dim_head * H, W)
    k, v = sample_project(off_s, ref_pts, kv2, w_kv, b_kv, H, W, heads, dim_head)

    # ---- attention (scale already folded into k) ----
    out = attention(q, k, v, heads, dim_head)                  # (B, C, HW)

    # ---- proj_out ----
    y = pointwise_conv(out, w_o, params["b_o"], out_dtype=x.dtype)
    return y.reshape(B, C, H, W)


# ---------------------------------------------------------------------------
# Pure-JAX reference mirroring the PyTorch DCA module (for the sanity check).
# ---------------------------------------------------------------------------
def _ref_grid_sample(img, grid):
    # img (N, C, H, W), grid (N, Hk, Wk, 2) in (x, y), coords already in [-1, 1],
    # bilinear, align_corners=True.
    N, C, H, W = img.shape
    gx, gy = grid[..., 0], grid[..., 1]
    xf = (gx + 1.0) * 0.5 * (W - 1)
    yf = (gy + 1.0) * 0.5 * (H - 1)
    x0 = jnp.floor(xf)
    y0 = jnp.floor(yf)
    wx1 = xf - x0
    wx0 = 1.0 - wx1
    wy1 = yf - y0
    wy0 = 1.0 - wy1
    x0i = jnp.clip(x0, 0, W - 1).astype(jnp.int32)
    y0i = jnp.clip(y0, 0, H - 1).astype(jnp.int32)
    x1i = jnp.clip(x0 + 1, 0, W - 1).astype(jnp.int32)
    y1i = jnp.clip(y0 + 1, 0, H - 1).astype(jnp.int32)
    flat = img.reshape(N, C, H * W)

    def gat(yi, xi):
        idx = (yi * W + xi).reshape(N, 1, -1)
        return jnp.take_along_axis(flat, idx, axis=2).reshape(N, C, *yi.shape[1:])

    return (gat(y0i, x0i) * (wy0 * wx0)[:, None]
            + gat(y0i, x1i) * (wy0 * wx1)[:, None]
            + gat(y1i, x0i) * (wy1 * wx0)[:, None]
            + gat(y1i, x1i) * (wy1 * wx1)[:, None])


def reference_forward(x, kv, params, *, heads, dim_head, offset_kernel, offset_stride):
    B, C, H, W = x.shape
    K, s, p = offset_kernel, offset_stride, offset_kernel // 2
    hp = jax.lax.Precision.HIGHEST
    scale = dim_head ** (-0.5)
    BH = B * heads

    def conv1x1(t, w, b):
        return jnp.einsum("bchw,oc->bohw", t, w, precision=hp) + b[None, :, None, None]

    q = conv1x1(x, params["w_q"], params["b_q"])
    q_off = q.reshape(BH, dim_head, H, W)
    xp = jnp.pad(q_off, ((0, 0), (0, 0), (p, p), (p, p)))
    Hk = (H + 2 * p - K) // s + 1
    Wk = (W + 2 * p - K) // s + 1
    acc = jnp.zeros((BH, dim_head, Hk, Wk), jnp.float32)
    for kh in range(K):
        for kw in range(K):
            patch = xp[:, :, kh:kh + s * Hk:s, kw:kw + s * Wk:s]
            acc = acc + patch * params["w_dw"][kh * K + kw][None, :, None, None]
    acc = acc + params["b_dw"][None, :, None, None]
    t = jnp.transpose(acc, (0, 2, 3, 1))
    mu = jnp.mean(t, axis=-1, keepdims=True)
    var = jnp.mean((t - mu) ** 2, axis=-1, keepdims=True)
    t = (t - mu) / jnp.sqrt(var + 1e-5) * params["ln_g"] + params["ln_b"]
    t = jax.nn.gelu(t, approximate=False)
    off = jnp.einsum("bhwc,co->bhwo", t, params["w_off"], precision=hp)     # (BH,Hk,Wk,2)

    ry = (jnp.arange(Hk, dtype=jnp.float32) + 0.5) / (Hk - 1.0) * 2.0 - 1.0
    rx = (jnp.arange(Wk, dtype=jnp.float32) + 0.5) / (Wk - 1.0) * 2.0 - 1.0
    ref = jnp.stack(jnp.meshgrid(ry, rx, indexing="ij"), axis=-1)[None]
    pos = jnp.clip(off + ref, -1.0, 1.0)                                    # (y, x)

    kv_r = kv.reshape(BH, dim_head, H, W)
    kv_samp = _ref_grid_sample(kv_r, pos[..., ::-1])                        # grid is (x, y)
    ns = Hk * Wk
    kv_samp = kv_samp.reshape(B, C, 1, ns)
    k = conv1x1(kv_samp, params["w_k"], params["b_k"]).reshape(BH, dim_head, ns)
    v = conv1x1(kv_samp, params["w_v"], params["b_v"]).reshape(BH, dim_head, ns)
    q2 = q.reshape(BH, dim_head, H * W)
    attn = jnp.einsum("bcm,bcn->bmn", q2, k, precision=hp) * scale
    attn = jax.nn.softmax(attn, axis=2)
    out = jnp.einsum("bmn,bcn->bcm", attn, v, precision=hp).reshape(B, C, H, W)
    return conv1x1(out, params["w_o"], params["b_o"])


if __name__ == "__main__":
    B, heads, dim_head = 2, 2, 32
    dim = heads * dim_head          # module's reshapes require dim == heads * dim_head
    H = W = 16
    offset_kernel, offset_stride = 3, 2

    key = jax.random.PRNGKey(0)
    ks = jax.random.split(key, 16)
    f32 = jnp.float32
    params = {
        # 1x1 conv weights stored as (Cout, Cin) == squeezed torch Conv2d weight
        "w_q": 0.1 * jax.random.normal(ks[0], (dim, dim), f32),
        "b_q": 0.1 * jax.random.normal(ks[1], (dim,), f32),
        "w_k": 0.1 * jax.random.normal(ks[2], (dim, dim), f32),
        "b_k": 0.1 * jax.random.normal(ks[3], (dim,), f32),
        "w_v": 0.1 * jax.random.normal(ks[4], (dim, dim), f32),
        "b_v": 0.1 * jax.random.normal(ks[5], (dim,), f32),
        "w_o": 0.1 * jax.random.normal(ks[6], (dim, dim), f32),
        "b_o": 0.1 * jax.random.normal(ks[7], (dim,), f32),
        # depthwise offset conv: (K*K, dim_head), row kh*K+kw holds per-channel taps
        "w_dw": 0.1 * jax.random.normal(ks[8], (offset_kernel * offset_kernel, dim_head), f32),
        "b_dw": 0.1 * jax.random.normal(ks[9], (dim_head,), f32),
        # LayerNormProxy affine params
        "ln_g": 1.0 + 0.1 * jax.random.normal(ks[10], (dim_head,), f32),
        "ln_b": 0.1 * jax.random.normal(ks[11], (dim_head,), f32),
        # final 1x1 offset conv (dim_head -> 2, no bias), stored as (dim_head, 2)
        "w_off": 0.1 * jax.random.normal(ks[12], (dim_head, 2), f32),
    }

    x = jax.random.normal(ks[13], (B, dim, H, W), f32)
    kv = jax.random.normal(ks[14], (B, dim, H, W), f32)

    ref = reference_forward(x, kv, params, heads=heads, dim_head=dim_head,
                            offset_kernel=offset_kernel, offset_stride=offset_stride)

    # 1) algorithmic exactness: full-f32 path, tight tolerance
    fwd_f32 = jax.jit(functools.partial(
        dca_forward, heads=heads, dim_head=dim_head,
        offset_kernel=offset_kernel, offset_stride=offset_stride,
        compute_dtype=jnp.float32))
    out_f32 = jax.block_until_ready(fwd_f32(x, kv, params))
    np.testing.assert_allclose(np.asarray(out_f32), np.asarray(ref), rtol=2e-3, atol=2e-3)

    # 2) production path: bf16 MXU operands (f32 accumulation / softmax / bilinear)
    fwd_bf16 = jax.jit(functools.partial(
        dca_forward, heads=heads, dim_head=dim_head,
        offset_kernel=offset_kernel, offset_stride=offset_stride,
        compute_dtype=jnp.bfloat16))
    out_bf16 = jax.block_until_ready(fwd_bf16(x, kv, params))
    np.testing.assert_allclose(np.asarray(out_bf16), np.asarray(ref), rtol=2e-2, atol=2e-2)

    print("KERNEL_OK")
</pallas_src>

<mosaic_0001>
module attributes {stable_mosaic.version = 11 : i64} {
  func.func @kernel(%arg0: i32, %arg1: i32, %arg2: memref<1x64x256xf32, #tpu.memory_space<vmem>>, %arg3: memref<64x64xf32, #tpu.memory_space<vmem>>, %arg4: memref<64x1xf32, #tpu.memory_space<vmem>>, %arg5: memref<1x64x256xf32, #tpu.memory_space<vmem>>) attributes {dimension_semantics = [#tpu.dimension_semantics<parallel>, #tpu.dimension_semantics<parallel>], iteration_bounds = array<i64: 2, 1>, scalar_prefetch = 0 : i64, scratch_operands = 0 : i64, tpu.core_type = #tpu.core_type<tc>, window_params = [{transform_indices = @transform_0, window_bounds = array<i64: 1, 64, 256>}, {pipeline_mode = #tpu.pipeline_mode<synchronous>, transform_indices = @transform_1, window_bounds = array<i64: 64, 64>}, {pipeline_mode = #tpu.pipeline_mode<synchronous>, transform_indices = @transform_2, window_bounds = array<i64: 64, 1>}, {transform_indices = @transform_3, window_bounds = array<i64: 1, 64, 256>}]} {
    %c0 = arith.constant 0 : index
    %c0_0 = arith.constant 0 : index
    %c0_1 = arith.constant 0 : index
    %0 = vector.load %arg2[%c0, %c0_0, %c0_1] : memref<1x64x256xf32, #tpu.memory_space<vmem>>, vector<1x64x256xf32>
    %1 = vector.shape_cast %0 : vector<1x64x256xf32> to vector<64x256xf32>
    %c0_2 = arith.constant 0 : index
    %c0_3 = arith.constant 0 : index
    %2 = vector.load %arg3[%c0_2, %c0_3] : memref<64x64xf32, #tpu.memory_space<vmem>>, vector<64x64xf32>
    %cst = arith.constant dense<0.000000e+00> : vector<64x256xf32>
    %3 = tpu.matmul %2, %1, %cst {dimension_numbers = #tpu.dot_dimension_numbers<[1], [0], [0], [1], [0, 0, 1, 1], [], []>} : vector<64x64xf32>, vector<64x256xf32>, vector<64x256xf32> -> vector<64x256xf32>
    %c0_4 = arith.constant 0 : index
    %c0_5 = arith.constant 0 : index
    %4 = vector.load %arg4[%c0_4, %c0_5] : memref<64x1xf32, #tpu.memory_space<vmem>>, vector<64x1xf32>
    %5 = vector.broadcast %4 : vector<64x1xf32> to vector<64x256xf32>
    %6 = arith.addf %3, %5 : vector<64x256xf32>
    %c0_6 = arith.constant 0 : index
    %c0_7 = arith.constant 0 : index
    %c0_8 = arith.constant 0 : index
    %7 = vector.load %arg5[%c0_6, %c0_7, %c0_8] : memref<1x64x256xf32, #tpu.memory_space<vmem>>, vector<1x64x256xf32>
    %8 = vector.shape_cast %7 : vector<1x64x256xf32> to vector<64x256xf32>
    %9 = vector.shape_cast %6 : vector<64x256xf32> to vector<1x64x256xf32>
    tpu.vector_store %arg5[%c0_6, %c0_7, %c0_8], %9 {strides = array<i32>} : memref<1x64x256xf32, #tpu.memory_space<vmem>>, vector<1x64x256xf32>,
    return
  }
  func.func @transform_0(%arg0: i32, %arg1: i32) -> (i32, i32, i32) {
    %c0_i32 = arith.constant 0 : i32
    %c0_i32_0 = arith.constant 0 : i32
    return %arg0, %c0_i32, %arg1 : i32, i32, i32
  }
  func.func @transform_1(%arg0: i32, %arg1: i32) -> (i32, i32) {
    %c0_i32 = arith.constant 0 : i32
    %c0_i32_0 = arith.constant 0 : i32
    %c0_i32_1 = arith.constant 0 : i32
    return %c0_i32, %c0_i32_0 : i32, i32
  }
  func.func @transform_2(%arg0: i32, %arg1: i32) -> (i32, i32) {
    %c0_i32 = arith.constant 0 : i32
    %c0_i32_0 = arith.constant 0 : i32
    %c0_i32_1 = arith.constant 0 : i32
    return %c0_i32, %c0_i32_0 : i32, i32
  }
  func.func @transform_3(%arg0: i32, %arg1: i32) -> (i32, i32, i32) {
    %c0_i32 = arith.constant 0 : i32
    %c0_i32_0 = arith.constant 0 : i32
    return %arg0, %c0_i32, %arg1 : i32, i32, i32
  }
}

module attributes {stable_mosaic.version = 11 : i64} {
  func.func @kernel(%arg0: i32, %arg1: memref<1x32x256xf32, #tpu.memory_space<vmem>>, %arg2: memref<32x9xf32, #tpu.memory_space<vmem>>, %arg3: memref<32x1xf32, #tpu.memory_space<vmem>>, %arg4: memref<32x1xf32, #tpu.memory_space<vmem>>, %arg5: memref<32x1xf32, #tpu.memory_space<vmem>>, %arg6: memref<2x32xf32, #tpu.memory_space<vmem>>, %arg7: memref<9x256xf32, #tpu.memory_space<vmem>>, %arg8: memref<1x2x256xf32, #tpu.memory_space<vmem>>, %arg9: memref<32x256xf32, #tpu.memory_space<vmem>>) attributes {dimension_semantics = [#tpu.dimension_semantics<parallel>], iteration_bounds = array<i64: 4>, scalar_prefetch = 0 : i64, scratch_operands = 1 : i64, tpu.core_type = #tpu.core_type<tc>, window_params = [{transform_indices = @transform_0, window_bounds = array<i64: 1, 32, 256>}, {pipeline_mode = #tpu.pipeline_mode<synchronous>, transform_indices = @transform_1, window_bounds = array<i64: 32, 9>}, {pipeline_mode = #tpu.pipeline_mode<synchronous>, transform_indices = @transform_2, window_bounds = array<i64: 32, 1>}, {pipeline_mode = #tpu.pipeline_mode<synchronous>, transform_indices = @transform_3, window_bounds = array<i64: 32, 1>}, {pipeline_mode = #tpu.pipeline_mode<synchronous>, transform_indices = @transform_4, window_bounds = array<i64: 32, 1>}, {pipeline_mode = #tpu.pipeline_mode<synchronous>, transform_indices = @transform_5, window_bounds = array<i64: 2, 32>}, {pipeline_mode = #tpu.pipeline_mode<synchronous>, transform_indices = @transform_6, window_bounds = array<i64: 9, 256>}, {transform_indices = @transform_7, window_bounds = array<i64: 1, 2, 256>}]} {
    %c0 = arith.constant 0 : index
    %c0_0 = arith.constant 0 : index
    %c0_1 = arith.constant 0 : index
    %0 = vector.load %arg1[%c0, %c0_0, %c0_1] : memref<1x32x256xf32, #tpu.memory_space<vmem>>, vector<1x32x256xf32>
    %1 = vector.shape_cast %0 : vector<1x32x256xf32> to vector<32x256xf32>
    %cst = arith.constant 0.000000e+00 : f32
    %2 = vector.broadcast %cst : f32 to vector<32x256xf32>
    %c0_2 = arith.constant 0 : index
    %c0_3 = arith.constant 0 : index
    %3 = vector.load %arg9[%c0_2, %c0_3] : memref<32x256xf32, #tpu.memory_space<vmem>>, vector<32x256xf32>
    tpu.vector_store %arg9[%c0_2, %c0_3], %2 {strides = array<i32>} : memref<32x256xf32, #tpu.memory_space<vmem>>, vector<32x256xf32>,
    %4 = vector.extract_strided_slice %1 {offsets = [0, 0], sizes = [32, 239], strides = [1, 1]} : vector<32x256xf32> to vector<32x239xf32>
    %c0_4 = arith.constant 0 : index
    %c17 = arith.constant 17 : index
    %5 = vector.load %arg7[%c0_4, %c17] : memref<9x256xf32, #tpu.memory_space<vmem>>, vector<1x239xf32>
    %6 = vector.broadcast %5 : vector<1x239xf32> to vector<32x239xf32>
    %7 = arith.mulf %4, %6 : vector<32x239xf32>
    %c0_5 = arith.constant 0 : index
    %c0_6 = arith.constant 0 : index
    %8 = vector.load %arg2[%c0_5, %c0_6] : memref<32x9xf32, #tpu.memory_space<vmem>>, vector<32x1xf32>
    %9 = vector.broadcast %8 : vector<32x1xf32> to vector<32x239xf32>
    %10 = arith.mulf %7, %9 : vector<32x239xf32>
    %c0_7 = arith.constant 0 : index
    %c17_8 = arith.constant 17 : index
    %11 = vector.load %arg9[%c0_7, %c17_8] : memref<32x256xf32, #tpu.memory_space<vmem>>, vector<32x239xf32>
    %12 = arith.addf %11, %10 : vector<32x239xf32>
    %c0_9 = arith.constant 0 : index
    %c17_10 = arith.constant 17 : index
    %13 = vector.load %arg9[%c0_9, %c17_10] : memref<32x256xf32, #tpu.memory_space<vmem>>, vector<32x239xf32>
    tpu.vector_store %arg9[%c0_9, %c17_10], %12 {strides = array<i32>} : memref<32x256xf32, #tpu.memory_space<vmem>>, vector<32x239xf32>,
    %14 = vector.extract_strided_slice %1 {offsets = [0, 0], sizes = [32, 240], strides = [1, 1]} : vector<32x256xf32> to vector<32x240xf32>
    %c1 = arith.constant 1 : index
    %c16 = arith.constant 16 : index
    %15 = vector.load %arg7[%c1, %c16] : memref<9x256xf32, #tpu.memory_space<vmem>>, vector<1x240xf32>
    %16 = vector.broadcast %15 : vector<1x240xf32> to vector<32x240xf32>
    %17 = arith.mulf %14, %16 : vector<32x240xf32>
    %c0_11 = arith.constant 0 : index
    %c1_12 = arith.constant 1 : index
    %18 = vector.load %arg2[%c0_11, %c1_12] : memref<32x9xf32, #tpu.memory_space<vmem>>, vector<32x1xf32>
    %19 = vector.broadcast %18 : vector<32x1xf32> to vector<32x240xf32>
    %20 = arith.mulf %17, %19 : vector<32x240xf32>
    %c0_13 = arith.constant 0 : index
    %c16_14 = arith.constant 16 : index
    %21 = vector.load %arg9[%c0_13, %c16_14] : memref<32x256xf32, #tpu.memory_space<vmem>>, vector<32x240xf32>
    %22 = arith.addf %21, %20 : vector<32x240xf32>
    %c0_15 = arith.constant 0 : index
    %c16_16 = arith.constant 16 : index
    %23 = vector.load %arg9[%c0_15, %c16_16] : memref<32x256xf32, #tpu.memory_space<vmem>>, vector<32x240xf32>
    tpu.vector_store %arg9[%c0_15, %c16_16], %22 {strides = array<i32>} : memref<32x256xf32, #tpu.memory_space<vmem>>, vector<32x240xf32>,
    %24 = vector.extract_strided_slice %1 {offsets = [0, 0], sizes = [32, 241], strides = [1, 1]} : vector<32x256xf32> to vector<32x241xf32>
    %c2 = arith.constant 2 : index
    %c15 = arith.constant 15 : index
    %25 = vector.load %arg7[%c2, %c15] : memref<9x256xf32, #tpu.memory_space<vmem>>, vector<1x241xf32>
    %26 = vector.broadcast %25 : vector<1x241xf32> to vector<32x241xf32>
    %27 = arith.mulf %24, %26 : vector<32x241xf32>
    %c0_17 = arith.constant 0 : index
    %c2_18 = arith.constant 2 : index
    %28 = vector.load %arg2[%c0_17, %c2_18] : memref<32x9xf32, #tpu.memory_space<vmem>>, vector<32x1xf32>
    %29 = vector.broadcast %28 : vector<32x1xf32> to vector<32x241xf32>
    %30 = arith.mulf %27, %29 : vector<32x241xf32>
    %c0_19 = arith.constant 0 : index
    %c15_20 = arith.constant 15 : index
    %31 = vector.load %arg9[%c0_19, %c15_20] : memref<32x256xf32, #tpu.memory_space<vmem>>, vector<32x241xf32>
    %32 = arith.addf %31, %30 : vector<32x241xf32>
    %c0_21 = arith.constant 0 : index
    %c15_22 = arith.constant 15 : index
    %33 = vector.load %arg9[%c0_21, %c15_22] : memref<32x256xf32, #tpu.memory_space<vmem>>, vector<32x241xf32>
    tpu.vector_store %arg9[%c0_21, %c15_22], %32 {strides = array<i32>} : memref<32x256xf32, #tpu.memory_space<vmem>>, vector<32x241xf32>,
    %34 = vector.extract_strided_slice %1 {offsets = [0, 0], sizes = [32, 255], strides = [1, 1]} : vector<32x256xf32> to vector<32x255xf32>
    %c3 = arith.constant 3 : index
    %c1_23 = arith.constant 1 : index
    %35 = vector.load %arg7[%c3, %c1_23] : memref<9x256xf32, #tpu.memory_space<vmem>>, vector<1x255xf32>
    %36 = vector.broadcast %35 : vector<1x255xf32> to vector<32x255xf32>
    %37 = arith.mulf %34, %36 : vector<32x255xf32>
    %c0_24 = arith.constant 0 : index
    %c3_25 = arith.constant 3 : index
    %38 = vector.load %arg2[%c0_24, %c3_25] : memref<32x9xf32, #tpu.memory_space<vmem>>, vector<32x1xf32>
    %39 = vector.broadcast %38 : vector<32x1xf32> to vector<32x255xf32>
    %40 = arith.mulf %37, %39 : vector<32x255xf32>
    %c0_26 = arith.constant 0 : index
    %c1_27 = arith.constant 1 : index
    %41 = vector.load %arg9[%c0_26, %c1_27] : memref<32x256xf32, #tpu.memory_space<vmem>>, vector<32x255xf32>
    %42 = arith.addf %41, %40 : vector<32x255xf32>
    %c0_28 = arith.constant 0 : index
    %c1_29 = arith.constant 1 : index
    %43 = vector.load %arg9[%c0_28, %c1_29] : memref<32x256xf32, #tpu.memory_space<vmem>>, vector<32x255xf32>
    tpu.vector_store %arg9[%c0_28, %c1_29], %42 {strides = array<i32>} : memref<32x256xf32, #tpu.memory_space<vmem>>, vector<32x255xf32>,
    %c4 = arith.constant 4 : index
    %c0_30 = arith.constant 0 : index
    %44 = vector.load %arg7[%c4, %c0_30] : memref<9x256xf32, #tpu.memory_space<vmem>>, vector<1x256xf32>
    %45 = vector.broadcast %44 : vector<1x256xf32> to vector<32x256xf32>
    %46 = arith.mulf %1, %45 : vector<32x256xf32>
    %c0_31 = arith.constant 0 : index
    %c4_32 = arith.constant 4 : index
    %47 = vector.load %arg2[%c0_31, %c4_32] : memref<32x9xf32, #tpu.memory_space<vmem>>, vector<32x1xf32>
    %48 = vector.broadcast %47 : vector<32x1xf32> to vector<32x256xf32>
    %49 = arith.mulf %46, %48 : vector<32x256xf32>
    %c0_33 = arith.constant 0 : index
    %c0_34 = arith.constant 0 : index
    %50 = vector.load %arg9[%c0_33, %c0_34] : memref<32x256xf32, #tpu.memory_space<vmem>>, vector<32x256xf32>
    %51 = arith.addf %50, %49 : vector<32x256xf32>
    %c0_35 = arith.constant 0 : index
    %c0_36 = arith.constant 0 : index
    %52 = vector.load %arg9[%c0_35, %c0_36] : memref<32x256xf32, #tpu.memory_space<vmem>>, vector<32x256xf32>
    tpu.vector_store %arg9[%c0_35, %c0_36], %51 {strides = array<i32>} : memref<32x256xf32, #tpu.memory_space<vmem>>, vector<32x256xf32>,
    %53 = vector.extract_strided_slice %1 {offsets = [0, 1], sizes = [32, 255], strides = [1, 1]} : vector<32x256xf32> to vector<32x255xf32>
    %c5 = arith.constant 5 : index
    %c0_37 = arith.constant 0 : index
    %54 = vector.load %arg7[%c5, %c0_37] : memref<9x256xf32, #tpu.memory_space<vmem>>, vector<1x255xf32>
    %55 = vector.broadcast %54 : vector<1x255xf32> to vector<32x255xf32>
    %56 = arith.mulf %53, %55 : vector<32x255xf32>
    %c0_38 = arith.constant 0 : index
    %c5_39 = arith.constant 5 : index
    %57 = vector.load %arg2[%c0_38, %c5_39] : memref<32x9xf32, #tpu.memory_space<vmem>>, vector<32x1xf32>
    %58 = vector.broadcast %57 : vector<32x1xf32> to vector<32x255xf32>
    %59 = arith.mulf %56, %58 : vector<32x255xf32>
    %c0_40 = arith.constant 0 : index
    %c0_41 = arith.constant 0 : index
    %60 = vector.load %arg9[%c0_40, %c0_41] : memref<32x256xf32, #tpu.memory_space<vmem>>, vector<32x255xf32>
    %61 = arith.addf %60, %59 : vector<32x255xf32>
    %c0_42 = arith.constant 0 : index
    %c0_43 = arith.constant 0 : index
    %62 = vector.load %arg9[%c0_42, %c0_43] : memref<32x256xf32, #tpu.memory_space<vmem>>, vector<32x255xf32>
    tpu.vector_store %arg9[%c0_42, %c0_43], %61 {strides = array<i32>} : memref<32x256xf32, #tpu.memory_space<vmem>>, vector<32x255xf32>,
    %63 = vector.extract_strided_slice %1 {offsets = [0, 15], sizes = [32, 241], strides = [1, 1]} : vector<32x256xf32> to vector<32x241xf32>
    %c6 = arith.constant 6 : index
    %c0_44 = arith.constant 0 : index
    %64 = vector.load %arg7[%c6, %c0_44] : memref<9x256xf32, #tpu.memory_space<vmem>>, vector<1x241xf32>
    %65 = vector.broadcast %64 : vector<1x241xf32> to vector<32x241xf32>
    %66 = arith.mulf %63, %65 : vector<32x241xf32>
    %c0_45 = arith.constant 0 : index
    %c6_46 = arith.constant 6 : index
    %67 = vector.load %arg2[%c0_45, %c6_46] : memref<32x9xf32, #tpu.memory_space<vmem>>, vector<32x1xf32>
    %68 = vector.broadcast %67 : vector<32x1xf32> to vector<32x241xf32>
    %69 = arith.mulf %66, %68 : vector<32x241xf32>
    %c0_47 = arith.constant 0 : index
    %c0_48 = arith.constant 0 : index
    %70 = vector.load %arg9[%c0_47, %c0_48] : memref<32x256xf32, #tpu.memory_space<vmem>>, vector<32x241xf32>
    %71 = arith.addf %70, %69 : vector<32x241xf32>
    %c0_49 = arith.constant 0 : index
    %c0_50 = arith.constant 0 : index
    %72 = vector.load %arg9[%c0_49, %c0_50] : memref<32x256xf32, #tpu.memory_space<vmem>>, vector<32x241xf32>
    tpu.vector_store %arg9[%c0_49, %c0_50], %71 {strides = array<i32>} : memref<32x256xf32, #tpu.memory_space<vmem>>, vector<32x241xf32>,
    %73 = vector.extract_strided_slice %1 {offsets = [0, 16], sizes = [32, 240], strides = [1, 1]} : vector<32x256xf32> to vector<32x240xf32>
    %c7 = arith.constant 7 : index
    %c0_51 = arith.constant 0 : index
    %74 = vector.load %arg7[%c7, %c0_51] : memref<9x256xf32, #tpu.memory_space<vmem>>, vector<1x240xf32>
    %75 = vector.broadcast %74 : vector<1x240xf32> to vector<32x240xf32>
    %76 = arith.mulf %73, %75 : vector<32x240xf32>
    %c0_52 = arith.constant 0 : index
    %c7_53 = arith.constant 7 : index
    %77 = vector.load %arg2[%c0_52, %c7_53] : memref<32x9xf32, #tpu.memory_space<vmem>>, vector<32x1xf32>
    %78 = vector.broadcast %77 : vector<32x1xf32> to vector<32x240xf32>
    %79 = arith.mulf %76, %78 : vector<32x240xf32>
    %c0_54 = arith.constant 0 : index
    %c0_55 = arith.constant 0 : index
    %80 = vector.load %arg9[%c0_54, %c0_55] : memref<32x256xf32, #tpu.memory_space<vmem>>, vector<32x240xf32>
    %81 = arith.addf %80, %79 : vector<32x240xf32>
    %c0_56 = arith.constant 0 : index
    %c0_57 = arith.constant 0 : index
    %82 = vector.load %arg9[%c0_56, %c0_57] : memref<32x256xf32, #tpu.memory_space<vmem>>, vector<32x240xf32>
    tpu.vector_store %arg9[%c0_56, %c0_57], %81 {strides = array<i32>} : memref<32x256xf32, #tpu.memory_space<vmem>>, vector<32x240xf32>,
    %83 = vector.extract_strided_slice %1 {offsets = [0, 17], sizes = [32, 239], strides = [1, 1]} : vector<32x256xf32> to vector<32x239xf32>
    %c8 = arith.constant 8 : index
    %c0_58 = arith.constant 0 : index
    %84 = vector.load %arg7[%c8, %c0_58] : memref<9x256xf32, #tpu.memory_space<vmem>>, vector<1x239xf32>
    %85 = vector.broadcast %84 : vector<1x239xf32> to vector<32x239xf32>
    %86 = arith.mulf %83, %85 : vector<32x239xf32>
    %c0_59 = arith.constant 0 : index
    %c8_60 = arith.constant 8 : index
    %87 = vector.load %arg2[%c0_59, %c8_60] : memref<32x9xf32, #tpu.memory_space<vmem>>, vector<32x1xf32>
    %88 = vector.broadcast %87 : vector<32x1xf32> to vector<32x239xf32>
    %89 = arith.mulf %86, %88 : vector<32x239xf32>
    %c0_61 = arith.constant 0 : index
    %c0_62 = arith.constant 0 : index
    %90 = vector.load %arg9[%c0_61, %c0_62] : memref<32x256xf32, #tpu.memory_space<vmem>>, vector<32x239xf32>
    %91 = arith.addf %90, %89 : vector<32x239xf32>
    %c0_63 = arith.constant 0 : index
    %c0_64 = arith.constant 0 : index
    %92 = vector.load %arg9[%c0_63, %c0_64] : memref<32x256xf32, #tpu.memory_space<vmem>>, vector<32x239xf32>
    tpu.vector_store %arg9[%c0_63, %c0_64], %91 {strides = array<i32>} : memref<32x256xf32, #tpu.memory_space<vmem>>, vector<32x239xf32>,
    %c0_65 = arith.constant 0 : index
    %c0_66 = arith.constant 0 : index
    %93 = vector.load %arg9[%c0_65, %c0_66] : memref<32x256xf32, #tpu.memory_space<vmem>>, vector<32x256xf32>
    %c0_67 = arith.constant 0 : index
    %c0_68 = arith.constant 0 : index
    %94 = vector.load %arg3[%c0_67, %c0_68] : memref<32x1xf32, #tpu.memory_space<vmem>>, vector<32x1xf32>
    %95 = vector.broadcast %94 : vector<32x1xf32> to vector<32x256xf32>
    %96 = arith.addf %93, %95 : vector<32x256xf32>
    %cst_69 = arith.constant dense<0.000000e+00> : vector<256xf32>
    %97 = vector.multi_reduction <add>, %96, %cst_69 [0] : vector<32x256xf32> to vector<256xf32>
    %98 = vector.shape_cast %97 : vector<256xf32> to vector<1x256xf32>
    %cst_70 = arith.constant 3.200000e+01 : f32
    %99 = vector.broadcast %cst_70 : f32 to vector<1x256xf32>
    %100 = arith.divf %98, %99 : vector<1x256xf32>
    %101 = vector.broadcast %100 : vector<1x256xf32> to vector<32x256xf32>
    %102 = arith.subf %96, %101 : vector<32x256xf32>
    %103 = arith.mulf %102, %102 : vector<32x256xf32>
    %cst_71 = arith.constant dense<0.000000e+00> : vector<256xf32>
    %104 = vector.multi_reduction <add>, %103, %cst_71 [0] : vector<32x256xf32> to vector<256xf32>
    %105 = vector.shape_cast %104 : vector<256xf32> to vector<1x256xf32>
    %cst_72 = arith.constant 3.200000e+01 : f32
    %106 = vector.broadcast %cst_72 : f32 to vector<1x256xf32>
    %107 = arith.divf %105, %106 : vector<1x256xf32>
    %cst_73 = arith.constant 9.99999974E-6 : f32
    %108 = vector.broadcast %cst_73 : f32 to vector<1x256xf32>
    %109 = arith.addf %107, %108 : vector<1x256xf32>
    %110 = math.rsqrt %109 : vector<1x256xf32>
    %111 = vector.broadcast %110 : vector<1x256xf32> to vector<32x256xf32>
    %112 = arith.mulf %102, %111 : vector<32x256xf32>
    %c0_74 = arith.constant 0 : index
    %c0_75 = arith.constant 0 : index
    %113 = vector.load %arg4[%c0_74, %c0_75] : memref<32x1xf32, #tpu.memory_space<vmem>>, vector<32x1xf32>
    %114 = vector.broadcast %113 : vector<32x1xf32> to vector<32x256xf32>
    %115 = arith.mulf %112, %114 : vector<32x256xf32>
    %c0_76 = arith.constant 0 : index
    %c0_77 = arith.constant 0 : index
    %116 = vector.load %arg5[%c0_76, %c0_77] : memref<32x1xf32, #tpu.memory_space<vmem>>, vector<32x1xf32>
    %117 = vector.broadcast %116 : vector<32x1xf32> to vector<32x256xf32>
    %118 = arith.addf %115, %117 : vector<32x256xf32>
    %cst_78 = arith.constant 5.000000e-01 : f32
    %119 = vector.broadcast %cst_78 : f32 to vector<32x256xf32>
    %120 = arith.mulf %119, %118 : vector<32x256xf32>
    %cst_79 = arith.constant 0.707106769 : f32
    %121 = vector.broadcast %cst_79 : f32 to vector<32x256xf32>
    %122 = arith.mulf %118, %121 : vector<32x256xf32>
    %cst_80 = arith.constant 0.000000e+00 : f32
    %123 = vector.broadcast %cst_80 : f32 to vector<32x256xf32>
    %124 = arith.cmpf olt, %122, %123 : vector<32x256xf32>
    %cst_81 = arith.constant -1.000000e+00 : f32
    %cst_82 = arith.constant 1.000000e+00 : f32
    %125 = vector.broadcast %cst_81 : f32 to vector<32x256xf32>
    %126 = vector.broadcast %cst_82 : f32 to vector<32x256xf32>
    %127 = arith.select %124, %125, %126 : vector<32x256xi1>, vector<32x256xf32>
    %128 = math.absf %122 : vector<32x256xf32>
    %cst_83 = arith.constant 0.327591091 : f32
    %129 = vector.broadcast %cst_83 : f32 to vector<32x256xf32>
    %130 = arith.mulf %129, %128 : vector<32x256xf32>
    %cst_84 = arith.constant 1.000000e+00 : f32
    %131 = vector.broadcast %cst_84 : f32 to vector<32x256xf32>
    %132 = arith.addf %131, %130 : vector<32x256xf32>
    %cst_85 = arith.constant 1.000000e+00 : f32
    %133 = vector.broadcast %cst_85 : f32 to vector<32x256xf32>
    %134 = arith.divf %133, %132 : vector<32x256xf32>
    %cst_86 = arith.constant 1.06140542 : f32
    %135 = vector.broadcast %cst_86 : f32 to vector<32x256xf32>
    %136 = arith.mulf %135, %134 : vector<32x256xf32>
    %cst_87 = arith.constant -1.45315206 : f32
    %137 = vector.broadcast %cst_87 : f32 to vector<32x256xf32>
    %138 = arith.addf %136, %137 : vector<32x256xf32>
    %139 = arith.mulf %138, %134 : vector<32x256xf32>
    %cst_88 = arith.constant 1.42141378 : f32
    %140 = vector.broadcast %cst_88 : f32 to vector<32x256xf32>
    %141 = arith.addf %139, %140 : vector<32x256xf32>
    %142 = arith.mulf %141, %134 : vector<32x256xf32>
    %cst_89 = arith.constant -0.284496725 : f32
    %143 = vector.broadcast %cst_89 : f32 to vector<32x256xf32>
    %144 = arith.addf %142, %143 : vector<32x256xf32>
    %145 = arith.mulf %144, %134 : vector<32x256xf32>
    %cst_90 = arith.constant 0.254829586 : f32
    %146 = vector.broadcast %cst_90 : f32 to vector<32x256xf32>
    %147 = arith.addf %145, %146 : vector<32x256xf32>
    %148 = arith.mulf %147, %134 : vector<32x256xf32>
    %cst_91 = arith.constant 0.000000e+00 : f32
    %149 = vector.broadcast %cst_91 : f32 to vector<32x256xf32>
    %150 = arith.subf %149, %128 : vector<32x256xf32>
    %151 = arith.mulf %150, %128 : vector<32x256xf32>
    %152 = math.exp %151 : vector<32x256xf32>
    %153 = arith.mulf %148, %152 : vector<32x256xf32>
    %cst_92 = arith.constant 1.000000e+00 : f32
    %154 = vector.broadcast %cst_92 : f32 to vector<32x256xf32>
    %155 = arith.subf %154, %153 : vector<32x256xf32>
    %156 = arith.mulf %127, %155 : vector<32x256xf32>
    %cst_93 = arith.constant 1.000000e+00 : f32
    %157 = vector.broadcast %cst_93 : f32 to vector<32x256xf32>
    %158 = arith.addf %157, %156 : vector<32x256xf32>
    %159 = arith.mulf %120, %158 : vector<32x256xf32>
    %c0_94 = arith.constant 0 : index
    %c0_95 = arith.constant 0 : index
    %160 = vector.load %arg6[%c0_94, %c0_95] : memref<2x32xf32, #tpu.memory_space<vmem>>, vector<2x32xf32>
    %cst_96 = arith.constant dense<0.000000e+00> : vector<2x256xf32>
    %161 = tpu.matmul %160, %159, %cst_96 {dimension_numbers = #tpu.dot_dimension_numbers<[1], [0], [0], [1], [0, 0, 1, 1], [], []>} : vector<2x32xf32>, vector<32x256xf32>, vector<2x256xf32> -> vector<2x256xf32>
    %c0_97 = arith.constant 0 : index
    %c0_98 = arith.constant 0 : index
    %c0_99 = arith.constant 0 : index
    %162 = vector.load %arg8[%c0_97, %c0_98, %c0_99] : memref<1x2x256xf32, #tpu.memory_space<vmem>>, vector<1x2x256xf32>
    %163 = vector.shape_cast %162 : vector<1x2x256xf32> to vector<2x256xf32>
    %164 = vector.shape_cast %161 : vector<2x256xf32> to vector<1x2x256xf32>
    tpu.vector_store %arg8[%c0_97, %c0_98, %c0_99], %164 {strides = array<i32>} : memref<1x2x256xf32, #tpu.memory_space<vmem>>, vector<1x2x256xf32>,
    return
  }
  func.func @transform_0(%arg0: i32) -> (i32, i32, i32) {
    %c0_i32 = arith.constant 0 : i32
    %c0_i32_0 = arith.constant 0 : i32
    %c0_i32_1 = arith.constant 0 : i32
    return %arg0, %c0_i32, %c0_i32_0 : i32, i32, i32
  }
  func.func @transform_1(%arg0: i32) -> (i32, i32) {
    %c0_i32 = arith.constant 0 : i32
    %c0_i32_0 = arith.constant 0 : i32
    %c0_i32_1 = arith.constant 0 : i32
    return %c0_i32, %c0_i32_0 : i32, i32
  }
  func.func @transform_2(%arg0: i32) -> (i32, i32) {
    %c0_i32 = arith.constant 0 : i32
    %c0_i32_0 = arith.constant 0 : i32
    %c0_i32_1 = arith.constant 0 : i32
    return %c0_i32, %c0_i32_0 : i32, i32
  }
  func.func @transform_3(%arg0: i32) -> (i32, i32) {
    %c0_i32 = arith.constant 0 : i32
    %c0_i32_0 = arith.constant 0 : i32
    %c0_i32_1 = arith.constant 0 : i32
    return %c0_i32, %c0_i32_0 : i32, i32
  }
  func.func @transform_4(%arg0: i32) -> (i32, i32) {
    %c0_i32 = arith.constant 0 : i32
    %c0_i32_0 = arith.constant 0 : i32
    %c0_i32_1 = arith.constant 0 : i32
    return %c0_i32, %c0_i32_0 : i32, i32
  }
  func.func @transform_5(%arg0: i32) -> (i32, i32) {
    %c0_i32 = arith.constant 0 : i32
    %c0_i32_0 = arith.constant 0 : i32
    %c0_i32_1 = arith.constant 0 : i32
    return %c0_i32, %c0_i32_0 : i32, i32
  }
  func.func @transform_6(%arg0: i32) -> (i32, i32) {
    %c0_i32 = arith.constant 0 : i32
    %c0_i32_0 = arith.constant 0 : i32
    %c0_i32_1 = arith.constant 0 : i32
    return %c0_i32, %c0_i32_0 : i32, i32
  }
  func.func @transform_7(%arg0: i32) -> (i32, i32, i32) {
    %c0_i32 = arith.constant 0 : i32
    %c0_i32_0 = arith.constant 0 : i32
    %c0_i32_1 = arith.constant 0 : i32
    return %arg0, %c0_i32, %c0_i32_0 : i32, i32, i32
  }
}

module attributes {stable_mosaic.version = 11 : i64} {
  func.func @kernel(%arg0: i32, %arg1: memref<1x2x2x64xf32, #tpu.memory_space<vmem>>, %arg2: memref<2x64xf32, #tpu.memory_space<vmem>>, %arg3: memref<1x2x512x16xf32, #tpu.memory_space<vmem>>, %arg4: memref<128x64xf32, #tpu.memory_space<vmem>>, %arg5: memref<128x1xf32, #tpu.memory_space<vmem>>, %arg6: memref<1x64x64xf32, #tpu.memory_space<vmem>>, %arg7: memref<1x64x64xf32, #tpu.memory_space<vmem>>) attributes {dimension_semantics = [#tpu.dimension_semantics<parallel>], iteration_bounds = array<i64: 2>, scalar_prefetch = 0 : i64, scratch_operands = 0 : i64, tpu.core_type = #tpu.core_type<tc>, window_params = [{transform_indices = @transform_0, window_bounds = array<i64: 1, 2, 2, 64>}, {pipeline_mode = #tpu.pipeline_mode<synchronous>, transform_indices = @transform_1, window_bounds = array<i64: 2, 64>}, {transform_indices = @transform_2, window_bounds = array<i64: 1, 2, 512, 16>}, {pipeline_mode = #tpu.pipeline_mode<synchronous>, transform_indices = @transform_3, window_bounds = array<i64: 128, 64>}, {pipeline_mode = #tpu.pipeline_mode<synchronous>, transform_indices = @transform_4, window_bounds = array<i64: 128, 1>}, {transform_indices = @transform_5, window_bounds = array<i64: 1, 64, 64>}, {transform_indices = @transform_6, window_bounds = array<i64: 1, 64, 64>}]} {
    %c0 = arith.constant 0 : index
    %c0_0 = arith.constant 0 : index
    %c0_1 = arith.constant 0 : index
    %c0_2 = arith.constant 0 : index
    %0 = vector.load %arg3[%c0, %c0_0, %c0_1, %c0_2] : memref<1x2x512x16xf32, #tpu.memory_space<vmem>>, vector<1x1x512x16xf32>
    %1 = vector.shape_cast %0 : vector<1x1x512x16xf32> to vector<512x16xf32>
    %c0_3 = arith.constant 0 : index
    %c0_4 = arith.constant 0 : index
    %c0_5 = arith.constant 0 : index
    %c0_6 = arith.constant 0 : index
    %2 = vector.load %arg1[%c0_3, %c0_4, %c0_5, %c0_6] : memref<1x2x2x64xf32, #tpu.memory_space<vmem>>, vector<1x1x2x64xf32>
    %3 = vector.shape_cast %2 : vector<1x1x2x64xf32> to vector<2x64xf32>
    %c0_7 = arith.constant 0 : index
    %c0_8 = arith.constant 0 : index
    %4 = vector.load %arg2[%c0_7, %c0_8] : memref<2x64xf32, #tpu.memory_space<vmem>>, vector<2x64xf32>
    %5 = arith.addf %3, %4 : vector<2x64xf32>
    %cst = arith.constant -1.000000e+00 : f32
    %cst_9 = arith.constant 1.000000e+00 : f32
    %6 = vector.broadcast %cst : f32 to vector<2x64xf32>
    %7 = arith.maximumf %6, %5 : vector<2x64xf32>
    %8 = vector.broadcast %cst_9 : f32 to vector<2x64xf32>
    %9 = arith.minimumf %8, %7 : vector<2x64xf32>
    %10 = vector.extract_strided_slice %9 {offsets = [0, 0], sizes = [1, 64], strides = [1, 1]} : vector<2x64xf32> to vector<1x64xf32>
    %cst_10 = arith.constant 1.000000e+00 : f32
    %11 = vector.broadcast %cst_10 : f32 to vector<1x64xf32>
    %12 = arith.addf %10, %11 : vector<1x64xf32>
    %cst_11 = arith.constant 7.500000e+00 : f32
    %13 = vector.broadcast %cst_11 : f32 to vector<1x64xf32>
    %14 = arith.mulf %12, %13 : vector<1x64xf32>
    %15 = vector.extract_strided_slice %9 {offsets = [1, 0], sizes = [1, 64], strides = [1, 1]} : vector<2x64xf32> to vector<1x64xf32>
    %cst_12 = arith.constant 1.000000e+00 : f32
    %16 = vector.broadcast %cst_12 : f32 to vector<1x64xf32>
    %17 = arith.addf %15, %16 : vector<1x64xf32>
    %cst_13 = arith.constant 7.500000e+00 : f32
    %18 = vector.broadcast %cst_13 : f32 to vector<1x64xf32>
    %19 = arith.mulf %17, %18 : vector<1x64xf32>
    %20 = math.floor %19 : vector<1x64xf32>
    %21 = math.floor %14 : vector<1x64xf32>
    %22 = arith.subf %19, %20 : vector<1x64xf32>
    %cst_14 = arith.constant 1.000000e+00 : f32
    %23 = vector.broadcast %cst_14 : f32 to vector<1x64xf32>
    %24 = arith.subf %23, %22 : vector<1x64xf32>
    %25 = arith.subf %14, %21 : vector<1x64xf32>
    %cst_15 = arith.constant 1.000000e+00 : f32
    %26 = vector.broadcast %cst_15 : f32 to vector<1x64xf32>
    %27 = arith.subf %26, %25 : vector<1x64xf32>
    %28 = arith.fptosi %20 : vector<1x64xf32> to vector<1x64xi32>
    %c0_i32 = arith.constant 0 : i32
    %c15_i32 = arith.constant 15 : i32
    %29 = vector.broadcast %c0_i32 : i32 to vector<1x64xi32>
    %30 = arith.maxsi %29, %28 : vector<1x64xi32>
    %31 = vector.broadcast %c15_i32 : i32 to vector<1x64xi32>
    %32 = arith.minsi %31, %30 : vector<1x64xi32>
    %33 = arith.fptosi %21 : vector<1x64xf32> to vector<1x64xi32>
    %c0_i32_16 = arith.constant 0 : i32
    %c15_i32_17 = arith.constant 15 : i32
    %34 = vector.broadcast %c0_i32_16 : i32 to vector<1x64xi32>
    %35 = arith.maxsi %34, %33 : vector<1x64xi32>
    %36 = vector.broadcast %c15_i32_17 : i32 to vector<1x64xi32>
    %37 = arith.minsi %36, %35 : vector<1x64xi32>
    %c1_i32 = arith.constant 1 : i32
    %38 = vector.broadcast %c1_i32 : i32 to vector<1x64xi32>
    %39 = arith.addi %32, %38 : vector<1x64xi32>
    %c15_i32_18 = arith.constant 15 : i32
    %40 = vector.broadcast %c15_i32_18 : i32 to vector<1x64xi32>
    %41 = arith.minsi %39, %40 : vector<1x64xi32>
    %c1_i32_19 = arith.constant 1 : i32
    %42 = vector.broadcast %c1_i32_19 : i32 to vector<1x64xi32>
    %43 = arith.addi %37, %42 : vector<1x64xi32>
    %c15_i32_20 = arith.constant 15 : i32
    %44 = vector.broadcast %c15_i32_20 : i32 to vector<1x64xi32>
    %45 = arith.minsi %43, %44 : vector<1x64xi32>
    %46 = tpu.iota {dimensions = array<i32: 0>} : vector<16x64xi32>
    %47 = vector.broadcast %32 : vector<1x64xi32> to vector<16x64xi32>
    %48 = arith.cmpi eq, %46, %47 : vector<16x64xi32>
    %cst_21 = arith.constant 0.000000e+00 : f32
    %49 = vector.shape_cast %24 : vector<1x64xf32> to vector<1x64xf32>
    %50 = vector.broadcast %49 : vector<1x64xf32> to vector<16x64xf32>
    %51 = vector.broadcast %cst_21 : f32 to vector<16x64xf32>
    %52 = arith.select %48, %50, %51 : vector<16x64xi1>, vector<16x64xf32>
    %53 = vector.broadcast %41 : vector<1x64xi32> to vector<16x64xi32>
    %54 = arith.cmpi eq, %46, %53 : vector<16x64xi32>
    %cst_22 = arith.constant 0.000000e+00 : f32
    %55 = vector.shape_cast %22 : vector<1x64xf32> to vector<1x64xf32>
    %56 = vector.broadcast %55 : vector<1x64xf32> to vector<16x64xf32>
    %57 = vector.broadcast %cst_22 : f32 to vector<16x64xf32>
    %58 = arith.select %54, %56, %57 : vector<16x64xi1>, vector<16x64xf32>
    %59 = arith.addf %52, %58 : vector<16x64xf32>
    %60 = tpu.iota {dimensions = array<i32: 0>} : vector<16x64xi32>
    %61 = vector.broadcast %37 : vector<1x64xi32> to vector<16x64xi32>
    %62 = arith.cmpi eq, %60, %61 : vector<16x64xi32>
    %cst_23 = arith.constant 0.000000e+00 : f32
    %63 = vector.shape_cast %27 : vector<1x64xf32> to vector<1x64xf32>
    %64 = vector.broadcast %63 : vector<1x64xf32> to vector<16x64xf32>
    %65 = vector.broadcast %cst_23 : f32 to vector<16x64xf32>
    %66 = arith.select %62, %64, %65 : vector<16x64xi1>, vector<16x64xf32>
    %67 = vector.broadcast %45 : vector<1x64xi32> to vector<16x64xi32>
    %68 = arith.cmpi eq, %60, %67 : vector<16x64xi32>
    %cst_24 = arith.constant 0.000000e+00 : f32
    %69 = vector.shape_cast %25 : vector<1x64xf32> to vector<1x64xf32>
    %70 = vector.broadcast %69 : vector<1x64xf32> to vector<16x64xf32>
    %71 = vector.broadcast %cst_24 : f32 to vector<16x64xf32>
    %72 = arith.select %68, %70, %71 : vector<16x64xi1>, vector<16x64xf32>
    %73 = arith.addf %66, %72 : vector<16x64xf32>
    %cst_25 = arith.constant dense<0.000000e+00> : vector<512x64xf32>
    %74 = tpu.matmul %1, %59, %cst_25 {dimension_numbers = #tpu.dot_dimension_numbers<[1], [0], [0], [1], [0, 0, 1, 1], [], []>} : vector<512x16xf32>, vector<16x64xf32>, vector<512x64xf32> -> vector<512x64xf32>
    %75 = vector.shape_cast %74 : vector<512x64xf32> to vector<32x16x64xf32>
    %76 = vector.shape_cast %73 : vector<16x64xf32> to vector<1x16x64xf32>
    %77 = vector.broadcast %76 : vector<1x16x64xf32> to vector<32x16x64xf32>
    %78 = arith.mulf %75, %77 : vector<32x16x64xf32>
    %cst_26 = arith.constant dense<0.000000e+00> : vector<32x64xf32>
    %79 = vector.multi_reduction <add>, %78, %cst_26 [1] : vector<32x16x64xf32> to vector<32x64xf32>
    %c0_27 = arith.constant 0 : index
    %c1 = arith.constant 1 : index
    %c0_28 = arith.constant 0 : index
    %c0_29 = arith.constant 0 : index
    %80 = vector.load %arg3[%c0_27, %c1, %c0_28, %c0_29] : memref<1x2x512x16xf32, #tpu.memory_space<vmem>>, vector<1x1x512x16xf32>
    %81 = vector.shape_cast %80 : vector<1x1x512x16xf32> to vector<512x16xf32>
    %c0_30 = arith.constant 0 : index
    %c1_31 = arith.constant 1 : index
    %c0_32 = arith.constant 0 : index
    %c0_33 = arith.constant 0 : index
    %82 = vector.load %arg1[%c0_30, %c1_31, %c0_32, %c0_33] : memref<1x2x2x64xf32, #tpu.memory_space<vmem>>, vector<1x1x2x64xf32>
    %83 = vector.shape_cast %82 : vector<1x1x2x64xf32> to vector<2x64xf32>
    %c0_34 = arith.constant 0 : index
    %c0_35 = arith.constant 0 : index
    %84 = vector.load %arg2[%c0_34, %c0_35] : memref<2x64xf32, #tpu.memory_space<vmem>>, vector<2x64xf32>
    %85 = arith.addf %83, %84 : vector<2x64xf32>
    %cst_36 = arith.constant -1.000000e+00 : f32
    %cst_37 = arith.constant 1.000000e+00 : f32
    %86 = vector.broadcast %cst_36 : f32 to vector<2x64xf32>
    %87 = arith.maximumf %86, %85 : vector<2x64xf32>
    %88 = vector.broadcast %cst_37 : f32 to vector<2x64xf32>
    %89 = arith.minimumf %88, %87 : vector<2x64xf32>
    %90 = vector.extract_strided_slice %89 {offsets = [0, 0], sizes = [1, 64], strides = [1, 1]} : vector<2x64xf32> to vector<1x64xf32>
    %cst_38 = arith.constant 1.000000e+00 : f32
    %91 = vector.broadcast %cst_38 : f32 to vector<1x64xf32>
    %92 = arith.addf %90, %91 : vector<1x64xf32>
    %cst_39 = arith.constant 7.500000e+00 : f32
    %93 = vector.broadcast %cst_39 : f32 to vector<1x64xf32>
    %94 = arith.mulf %92, %93 : vector<1x64xf32>
    %95 = vector.extract_strided_slice %89 {offsets = [1, 0], sizes = [1, 64], strides = [1, 1]} : vector<2x64xf32> to vector<1x64xf32>
    %cst_40 = arith.constant 1.000000e+00 : f32
    %96 = vector.broadcast %cst_40 : f32 to vector<1x64xf32>
    %97 = arith.addf %95, %96 : vector<1x64xf32>
    %cst_41 = arith.constant 7.500000e+00 : f32
    %98 = vector.broadcast %cst_41 : f32 to vector<1x64xf32>
    %99 = arith.mulf %97, %98 : vector<1x64xf32>
    %100 = math.floor %99 : vector<1x64xf32>
    %101 = math.floor %94 : vector<1x64xf32>
    %102 = arith.subf %99, %100 : vector<1x64xf32>
    %cst_42 = arith.constant 1.000000e+00 : f32
    %103 = vector.broadcast %cst_42 : f32 to vector<1x64xf32>
    %104 = arith.subf %103, %102 : vector<1x64xf32>
    %105 = arith.subf %94, %101 : vector<1x64xf32>
    %cst_43 = arith.constant 1.000000e+00 : f32
    %106 = vector.broadcast %cst_43 : f32 to vector<1x64xf32>
    %107 = arith.subf %106, %105 : vector<1x64xf32>
    %108 = arith.fptosi %100 : vector<1x64xf32> to vector<1x64xi32>
    %c0_i32_44 = arith.constant 0 : i32
    %c15_i32_45 = arith.constant 15 : i32
    %109 = vector.broadcast %c0_i32_44 : i32 to vector<1x64xi32>
    %110 = arith.maxsi %109, %108 : vector<1x64xi32>
    %111 = vector.broadcast %c15_i32_45 : i32 to vector<1x64xi32>
    %112 = arith.minsi %111, %110 : vector<1x64xi32>
    %113 = arith.fptosi %101 : vector<1x64xf32> to vector<1x64xi32>
    %c0_i32_46 = arith.constant 0 : i32
    %c15_i32_47 = arith.constant 15 : i32
    %114 = vector.broadcast %c0_i32_46 : i32 to vector<1x64xi32>
    %115 = arith.maxsi %114, %113 : vector<1x64xi32>
    %116 = vector.broadcast %c15_i32_47 : i32 to vector<1x64xi32>
    %117 = arith.minsi %116, %115 : vector<1x64xi32>
    %c1_i32_48 = arith.constant 1 : i32
    %118 = vector.broadcast %c1_i32_48 : i32 to vector<1x64xi32>
    %119 = arith.addi %112, %118 : vector<1x64xi32>
    %c15_i32_49 = arith.constant 15 : i32
    %120 = vector.broadcast %c15_i32_49 : i32 to vector<1x64xi32>
    %121 = arith.minsi %119, %120 : vector<1x64xi32>
    %c1_i32_50 = arith.constant 1 : i32
    %122 = vector.broadcast %c1_i32_50 : i32 to vector<1x64xi32>
    %123 = arith.addi %117, %122 : vector<1x64xi32>
    %c15_i32_51 = arith.constant 15 : i32
    %124 = vector.broadcast %c15_i32_51 : i32 to vector<1x64xi32>
    %125 = arith.minsi %123, %124 : vector<1x64xi32>
    %126 = tpu.iota {dimensions = array<i32: 0>} : vector<16x64xi32>
    %127 = vector.broadcast %112 : vector<1x64xi32> to vector<16x64xi32>
    %128 = arith.cmpi eq, %126, %127 : vector<16x64xi32>
    %cst_52 = arith.constant 0.000000e+00 : f32
    %129 = vector.shape_cast %104 : vector<1x64xf32> to vector<1x64xf32>
    %130 = vector.broadcast %129 : vector<1x64xf32> to vector<16x64xf32>
    %131 = vector.broadcast %cst_52 : f32 to vector<16x64xf32>
    %132 = arith.select %128, %130, %131 : vector<16x64xi1>, vector<16x64xf32>
    %133 = vector.broadcast %121 : vector<1x64xi32> to vector<16x64xi32>
    %134 = arith.cmpi eq, %126, %133 : vector<16x64xi32>
    %cst_53 = arith.constant 0.000000e+00 : f32
    %135 = vector.shape_cast %102 : vector<1x64xf32> to vector<1x64xf32>
    %136 = vector.broadcast %135 : vector<1x64xf32> to vector<16x64xf32>
    %137 = vector.broadcast %cst_53 : f32 to vector<16x64xf32>
    %138 = arith.select %134, %136, %137 : vector<16x64xi1>, vector<16x64xf32>
    %139 = arith.addf %132, %138 : vector<16x64xf32>
    %140 = tpu.iota {dimensions = array<i32: 0>} : vector<16x64xi32>
    %141 = vector.broadcast %117 : vector<1x64xi32> to vector<16x64xi32>
    %142 = arith.cmpi eq, %140, %141 : vector<16x64xi32>
    %cst_54 = arith.constant 0.000000e+00 : f32
    %143 = vector.shape_cast %107 : vector<1x64xf32> to vector<1x64xf32>
    %144 = vector.broadcast %143 : vector<1x64xf32> to vector<16x64xf32>
    %145 = vector.broadcast %cst_54 : f32 to vector<16x64xf32>
    %146 = arith.select %142, %144, %145 : vector<16x64xi1>, vector<16x64xf32>
    %147 = vector.broadcast %125 : vector<1x64xi32> to vector<16x64xi32>
    %148 = arith.cmpi eq, %140, %147 : vector<16x64xi32>
    %cst_55 = arith.constant 0.000000e+00 : f32
    %149 = vector.shape_cast %105 : vector<1x64xf32> to vector<1x64xf32>
    %150 = vector.broadcast %149 : vector<1x64xf32> to vector<16x64xf32>
    %151 = vector.broadcast %cst_55 : f32 to vector<16x64xf32>
    %152 = arith.select %148, %150, %151 : vector<16x64xi1>, vector<16x64xf32>
    %153 = arith.addf %146, %152 : vector<16x64xf32>
    %cst_56 = arith.constant dense<0.000000e+00> : vector<512x64xf32>
    %154 = tpu.matmul %81, %139, %cst_56 {dimension_numbers = #tpu.dot_dimension_numbers<[1], [0], [0], [1], [0, 0, 1, 1], [], []>} : vector<512x16xf32>, vector<16x64xf32>, vector<512x64xf32> -> vector<512x64xf32>
    %155 = vector.shape_cast %154 : vector<512x64xf32> to vector<32x16x64xf32>
    %156 = vector.shape_cast %153 : vector<16x64xf32> to vector<1x16x64xf32>
    %157 = vector.broadcast %156 : vector<1x16x64xf32> to vector<32x16x64xf32>
    %158 = arith.mulf %155, %157 : vector<32x16x64xf32>
    %cst_57 = arith.constant dense<0.000000e+00> : vector<32x64xf32>
    %159 = vector.multi_reduction <add>, %158, %cst_57 [1] : vector<32x16x64xf32> to vector<32x64xf32>
    %160 = tpu.concatenate %79, %159 in 0 : vector<32x64xf32>, vector<32x64xf32> -> vector<64x64xf32>
    %c0_58 = arith.constant 0 : index
    %c0_59 = arith.constant 0 : index
    %161 = vector.load %arg4[%c0_58, %c0_59] : memref<128x64xf32, #tpu.memory_space<vmem>>, vector<128x64xf32>
    %cst_60 = arith.constant dense<0.000000e+00> : vector<128x64xf32>
    %162 = tpu.matmul %161, %160, %cst_60 {dimension_numbers = #tpu.dot_dimension_numbers<[1], [0], [0], [1], [0, 0, 1, 1], [], []>} : vector<128x64xf32>, vector<64x64xf32>, vector<128x64xf32> -> vector<128x64xf32>
    %c0_61 = arith.constant 0 : index
    %c0_62 = arith.constant 0 : index
    %163 = vector.load %arg5[%c0_61, %c0_62] : memref<128x1xf32, #tpu.memory_space<vmem>>, vector<128x1xf32>
    %164 = vector.broadcast %163 : vector<128x1xf32> to vector<128x64xf32>
    %165 = arith.addf %162, %164 : vector<128x64xf32>
    %166 = vector.extract_strided_slice %165 {offsets = [0, 0], sizes = [64, 64], strides = [1, 1]} : vector<128x64xf32> to vector<64x64xf32>
    %c0_63 = arith.constant 0 : index
    %c0_64 = arith.constant 0 : index
    %c0_65 = arith.constant 0 : index
    %167 = vector.load %arg6[%c0_63, %c0_64, %c0_65] : memref<1x64x64xf32, #tpu.memory_space<vmem>>, vector<1x64x64xf32>
    %168 = vector.shape_cast %167 : vector<1x64x64xf32> to vector<64x64xf32>
    %169 = vector.shape_cast %166 : vector<64x64xf32> to vector<1x64x64xf32>
    tpu.vector_store %arg6[%c0_63, %c0_64, %c0_65], %169 {strides = array<i32>} : memref<1x64x64xf32, #tpu.memory_space<vmem>>, vector<1x64x64xf32>,
    %170 = vector.extract_strided_slice %165 {offsets = [64, 0], sizes = [64, 64], strides = [1, 1]} : vector<128x64xf32> to vector<64x64xf32>
    %c0_66 = arith.constant 0 : index
    %c0_67 = arith.constant 0 : index
    %c0_68 = arith.constant 0 : index
    %171 = vector.load %arg7[%c0_66, %c0_67, %c0_68] : memref<1x64x64xf32, #tpu.memory_space<vmem>>, vector<1x64x64xf32>
    %172 = vector.shape_cast %171 : vector<1x64x64xf32> to vector<64x64xf32>
    %173 = vector.shape_cast %170 : vector<64x64xf32> to vector<1x64x64xf32>
    tpu.vector_store %arg7[%c0_66, %c0_67, %c0_68], %173 {strides = array<i32>} : memref<1x64x64xf32, #tpu.memory_space<vmem>>, vector<1x64x64xf32>,
    return
  }
  func.func @transform_0(%arg0: i32) -> (i32, i32, i32, i32) {
    %c0_i32 = arith.constant 0 : i32
    %c0_i32_0 = arith.constant 0 : i32
    %c0_i32_1 = arith.constant 0 : i32
    %c0_i32_2 = arith.constant 0 : i32
    return %arg0, %c0_i32, %c0_i32_0, %c0_i32_1 : i32, i32, i32, i32
  }
  func.func @transform_1(%arg0: i32) -> (i32, i32) {
    %c0_i32 = arith.constant 0 : i32
    %c0_i32_0 = arith.constant 0 : i32
    %c0_i32_1 = arith.constant 0 : i32
    return %c0_i32, %c0_i32_0 : i32, i32
  }
  func.func @transform_2(%arg0: i32) -> (i32, i32, i32, i32) {
    %c0_i32 = arith.constant 0 : i32
    %c0_i32_0 = arith.constant 0 : i32
    %c0_i32_1 = arith.constant 0 : i32
    %c0_i32_2 = arith.constant 0 : i32
    return %arg0, %c0_i32, %c0_i32_0, %c0_i32_1 : i32, i32, i32, i32
  }
  func.func @transform_3(%arg0: i32) -> (i32, i32) {
    %c0_i32 = arith.constant 0 : i32
    %c0_i32_0 = arith.constant 0 : i32
    %c0_i32_1 = arith.constant 0 : i32
    return %c0_i32, %c0_i32_0 : i32, i32
  }
  func.func @transform_4(%arg0: i32) -> (i32, i32) {
    %c0_i32 = arith.constant 0 : i32
    %c0_i32_0 = arith.constant 0 : i32
    %c0_i32_1 = arith.constant 0 : i32
    return %c0_i32, %c0_i32_0 : i32, i32
  }
  func.func @transform_5(%arg0: i32) -> (i32, i32, i32) {
    %c0_i32 = arith.constant 0 : i32
    %c0_i32_0 = arith.constant 0 : i32
    %c0_i32_1 = arith.constant 0 : i32
    return %arg0, %c0_i32, %c0_i32_0 : i32, i32, i32
  }
  func.func @transform_6(%arg0: i32) -> (i32, i32, i32) {
    %c0_i32 = arith.constant 0 : i32
    %c0_i32_0 = arith.constant 0 : i32
    %c0_i32_1 = arith.constant 0 : i32
    return %arg0, %c0_i32, %c0_i32_0 : i32, i32, i32
  }
}

module attributes {stable_mosaic.version = 11 : i64} {
  func.func @kernel(%arg0: i32, %arg1: i32, %arg2: memref<1x64x256xf32, #tpu.memory_space<vmem>>, %arg3: memref<1x64x64xf32, #tpu.memory_space<vmem>>, %arg4: memref<1x64x64xf32, #tpu.memory_space<vmem>>, %arg5: memref<1x64x256xf32, #tpu.memory_space<vmem>>) attributes {dimension_semantics = [#tpu.dimension_semantics<parallel>, #tpu.dimension_semantics<parallel>], iteration_bounds = array<i64: 2, 1>, scalar_prefetch = 0 : i64, scratch_operands = 0 : i64, tpu.core_type = #tpu.core_type<tc>, window_params = [{transform_indices = @transform_0, window_bounds = array<i64: 1, 64, 256>}, {transform_indices = @transform_1, window_bounds = array<i64: 1, 64, 64>}, {transform_indices = @transform_2, window_bounds = array<i64: 1, 64, 64>}, {transform_indices = @transform_3, window_bounds = array<i64: 1, 64, 256>}]} {
    %c0 = arith.constant 0 : index
    %c0_0 = arith.constant 0 : index
    %c0_1 = arith.constant 0 : index
    %0 = vector.load %arg2[%c0, %c0_0, %c0_1] : memref<1x64x256xf32, #tpu.memory_space<vmem>>, vector<1x32x256xf32>
    %1 = vector.shape_cast %0 : vector<1x32x256xf32> to vector<32x256xf32>
    %c0_2 = arith.constant 0 : index
    %c0_3 = arith.constant 0 : index
    %c0_4 = arith.constant 0 : index
    %2 = vector.load %arg3[%c0_2, %c0_3, %c0_4] : memref<1x64x64xf32, #tpu.memory_space<vmem>>, vector<1x32x64xf32>
    %3 = vector.shape_cast %2 : vector<1x32x64xf32> to vector<32x64xf32>
    %c0_5 = arith.constant 0 : index
    %c0_6 = arith.constant 0 : index
    %c0_7 = arith.constant 0 : index
    %4 = vector.load %arg4[%c0_5, %c0_6, %c0_7] : memref<1x64x64xf32, #tpu.memory_space<vmem>>, vector<1x32x64xf32>
    %5 = vector.shape_cast %4 : vector<1x32x64xf32> to vector<32x64xf32>
    %cst = arith.constant dense<0.000000e+00> : vector<64x256xf32>
    %6 = tpu.matmul %3, %1, %cst {dimension_numbers = #tpu.dot_dimension_numbers<[0], [0], [1], [1], [0, 1, 1, 1], [], []>} : vector<32x64xf32>, vector<32x256xf32>, vector<64x256xf32> -> vector<64x256xf32>
    %cst_8 = arith.constant dense<0xFF800000> : vector<256xf32>
    %7 = vector.multi_reduction <maximumf>, %6, %cst_8 [0] : vector<64x256xf32> to vector<256xf32>
    %8 = vector.shape_cast %7 : vector<256xf32> to vector<1x256xf32>
    %9 = vector.broadcast %8 : vector<1x256xf32> to vector<64x256xf32>
    %10 = arith.subf %6, %9 : vector<64x256xf32>
    %11 = math.exp %10 : vector<64x256xf32>
    %cst_9 = arith.constant dense<0.000000e+00> : vector<256xf32>
    %12 = vector.multi_reduction <add>, %11, %cst_9 [0] : vector<64x256xf32> to vector<256xf32>
    %13 = vector.shape_cast %12 : vector<256xf32> to vector<1x256xf32>
    %14 = tpu.reciprocal %13 {approx = true} : vector<1x256xf32> -> vector<1x256xf32>
    %15 = vector.broadcast %14 : vector<1x256xf32> to vector<64x256xf32>
    %16 = arith.mulf %11, %15 : vector<64x256xf32>
    %cst_10 = arith.constant dense<0.000000e+00> : vector<32x256xf32>
    %17 = tpu.matmul %5, %16, %cst_10 {dimension_numbers = #tpu.dot_dimension_numbers<[1], [0], [0], [1], [0, 0, 1, 1], [], []>} : vector<32x64xf32>, vector<64x256xf32>, vector<32x256xf32> -> vector<32x256xf32>
    %c0_11 = arith.constant 0 : index
    %c0_12 = arith.constant 0 : index
    %c0_13 = arith.constant 0 : index
    %18 = vector.load %arg5[%c0_11, %c0_12, %c0_13] : memref<1x64x256xf32, #tpu.memory_space<vmem>>, vector<1x32x256xf32>
    %19 = vector.shape_cast %18 : vector<1x32x256xf32> to vector<32x256xf32>
    %20 = vector.shape_cast %17 : vector<32x256xf32> to vector<1x32x256xf32>
    tpu.vector_store %arg5[%c0_11, %c0_12, %c0_13], %20 {strides = array<i32>} : memref<1x64x256xf32, #tpu.memory_space<vmem>>, vector<1x32x256xf32>,
    %c0_14 = arith.constant 0 : index
    %c32 = arith.constant 32 : index
    %c0_15 = arith.constant 0 : index
    %21 = vector.load %arg2[%c0_14, %c32, %c0_15] : memref<1x64x256xf32, #tpu.memory_space<vmem>>, vector<1x32x256xf32>
    %22 = vector.shape_cast %21 : vector<1x32x256xf32> to vector<32x256xf32>
    %c0_16 = arith.constant 0 : index
    %c32_17 = arith.constant 32 : index
    %c0_18 = arith.constant 0 : index
    %23 = vector.load %arg3[%c0_16, %c32_17, %c0_18] : memref<1x64x64xf32, #tpu.memory_space<vmem>>, vector<1x32x64xf32>
    %24 = vector.shape_cast %23 : vector<1x32x64xf32> to vector<32x64xf32>
    %c0_19 = arith.constant 0 : index
    %c32_20 = arith.constant 32 : index
    %c0_21 = arith.constant 0 : index
    %25 = vector.load %arg4[%c0_19, %c32_20, %c0_21] : memref<1x64x64xf32, #tpu.memory_space<vmem>>, vector<1x32x64xf32>
    %26 = vector.shape_cast %25 : vector<1x32x64xf32> to vector<32x64xf32>
    %cst_22 = arith.constant dense<0.000000e+00> : vector<64x256xf32>
    %27 = tpu.matmul %24, %22, %cst_22 {dimension_numbers = #tpu.dot_dimension_numbers<[0], [0], [1], [1], [0, 1, 1, 1], [], []>} : vector<32x64xf32>, vector<32x256xf32>, vector<64x256xf32> -> vector<64x256xf32>
    %cst_23 = arith.constant dense<0xFF800000> : vector<256xf32>
    %28 = vector.multi_reduction <maximumf>, %27, %cst_23 [0] : vector<64x256xf32> to vector<256xf32>
    %29 = vector.shape_cast %28 : vector<256xf32> to vector<1x256xf32>
    %30 = vector.broadcast %29 : vector<1x256xf32> to vector<64x256xf32>
    %31 = arith.subf %27, %30 : vector<64x256xf32>
    %32 = math.exp %31 : vector<64x256xf32>
    %cst_24 = arith.constant dense<0.000000e+00> : vector<256xf32>
    %33 = vector.multi_reduction <add>, %32, %cst_24 [0] : vector<64x256xf32> to vector<256xf32>
    %34 = vector.shape_cast %33 : vector<256xf32> to vector<1x256xf32>
    %35 = tpu.reciprocal %34 {approx = true} : vector<1x256xf32> -> vector<1x256xf32>
    %36 = vector.broadcast %35 : vector<1x256xf32> to vector<64x256xf32>
    %37 = arith.mulf %32, %36 : vector<64x256xf32>
    %cst_25 = arith.constant dense<0.000000e+00> : vector<32x256xf32>
    %38 = tpu.matmul %26, %37, %cst_25 {dimension_numbers = #tpu.dot_dimension_numbers<[1], [0], [0], [1], [0, 0, 1, 1], [], []>} : vector<32x64xf32>, vector<64x256xf32>, vector<32x256xf32> -> vector<32x256xf32>
    %c0_26 = arith.constant 0 : index
    %c32_27 = arith.constant 32 : index
    %c0_28 = arith.constant 0 : index
    %39 = vector.load %arg5[%c0_26, %c32_27, %c0_28] : memref<1x64x256xf32, #tpu.memory_space<vmem>>, vector<1x32x256xf32>
    %40 = vector.shape_cast %39 : vector<1x32x256xf32> to vector<32x256xf32>
    %41 = vector.shape_cast %38 : vector<32x256xf32> to vector<1x32x256xf32>
    tpu.vector_store %arg5[%c0_26, %c32_27, %c0_28], %41 {strides = array<i32>} : memref<1x64x256xf32, #tpu.memory_space<vmem>>, vector<1x32x256xf32>,
    return
  }
  func.func @transform_0(%arg0: i32, %arg1: i32) -> (i32, i32, i32) {
    %c0_i32 = arith.constant 0 : i32
    %c0_i32_0 = arith.constant 0 : i32
    return %arg0, %c0_i32, %arg1 : i32, i32, i32
  }
  func.func @transform_1(%arg0: i32, %arg1: i32) -> (i32, i32, i32) {
    %c0_i32 = arith.constant 0 : i32
    %c0_i32_0 = arith.constant 0 : i32
    %c0_i32_1 = arith.constant 0 : i32
    return %arg0, %c0_i32, %c0_i32_0 : i32, i32, i32
  }
  func.func @transform_2(%arg0: i32, %arg1: i32) -> (i32, i32, i32) {
    %c0_i32 = arith.constant 0 : i32
    %c0_i32_0 = arith.constant 0 : i32
    %c0_i32_1 = arith.constant 0 : i32
    return %arg0, %c0_i32, %c0_i32_0 : i32, i32, i32
  }
  func.func @transform_3(%arg0: i32, %arg1: i32) -> (i32, i32, i32) {
    %c0_i32 = arith.constant 0 : i32
    %c0_i32_0 = arith.constant 0 : i32
    return %arg0, %c0_i32, %arg1 : i32, i32, i32
  }
}

</mosaic_0001>

<llo_original>
// kernel: dca_forward.5
$region0: #{dca_forward.5}
  #allocation0 [shape = 'u32[]', space=smem, size = 0x4, offset = 0x4, fixed_abs, tag = 'smem constant byte address 0x4 - core index']
  #allocation1 [shape = 'u32[144,128]{1,0:T(1,128)}', space=vmem, size = 0x12000, scoped, tag = 'internal scratch']
  %s0 = inlined_call_operand.vmem [shape: f32[2,64,256], index: 0, kind: input, shape index: {}]
  %s1 = inlined_call_operand.vmem [shape: f32[64,64], index: 1, kind: input, shape index: {}]
  %s2 = inlined_call_operand.vmem [shape: f32[64,1], index: 2, kind: input, shape index: {}]
  %s3 = inlined_call_operand.vmem [shape: f32[2,64,256], index: 3, kind: output, shape index: {}]
  %s4 = sld [smem:[#allocation0]]
  $region45: #{dca_forward.5} parent=0
    _
  %s6 = ssub.s32 1, %s4
  %s7 = scalar_select 0, %s6, %s4
  loop: start=0, step=1, limit=4
  $region2: #{dca_forward.5} parent=0 // loop_pre_header
    _
  $region3: #{dca_forward.5} parent=0 // loop_header
    %s9 = sphi 0, %s13
    %p10 = scmp.ge.s32.totalorder %s9, 4
    %s16 = sphi 0, %s28
    %s17 = sphi 0, %s24
    %s18 = sphi 0, %s16
    %s19 = sphi 0, %s17
    %s20 = sphi 0, %s18
    %s21 = sphi 0, %s19
    %s33 = sphi 0, %s35
    %s36 = sphi 0, %s33
    %s37 = sphi 0, %s36
    %s53 = sphi 0, %s37
    %s57 = sphi 0, %s57
    %s59 = sphi 0, %s57
    %s60 = sphi 0, %s59
    %s74 = sphi 0, %s60
    %s78 = sphi 0, %s78
    %s80 = sphi 0, %s78
    %s81 = sphi 0, %s80
    %s95 = sphi 0, %s81
    %s103 = sphi 0, %s105
    %s106 = sphi 0, %s103
    %s107 = sphi 0, %s106
    %s123 = sphi 0, %s107
  $region4: #{dca_forward.5} parent=0 // loop_header_branch
    %12 = sbr.rel (%p10) target = $region8
  $region5: #{dca_forward.5} parent=0 // loop_body
    %s14 = ssub.s32 %s9, 1
    %s15 = ssub.s32 %s9, 2
    %s22 = sadd.s32 1, %s17
    %p23 = scmp.ge.s32.totalorder %s22, 1
    %s24 = scalar_select %p23, 0, %s22
    %s25 = sadd.s32 1, %s16
    %s26 = scalar_select %p23, %s25, %s16
    %p27 = scmp.ge.s32.totalorder %s26, 2
    %s28 = scalar_select %p27, 0, %s26
    %s29 = ssub.s32 %s16, %s28
    %s30 = ssub.s32 %s17, %s24
    %s31 = sor.u32 %s29, %s30
    %p32 = scmp.eq.s32.totalorder %s31, 0
    %s34 = sadd.s32 %s33, 1
    %s35 = scalar_select %p32, %s33, %s34
    %p38 = pneg %p32
    %p39 = scmp.eq.s32.totalorder %s9, 1
    %p40 = por %p38, %p39
    %p41 = scmp.ne.s32.totalorder %s33, %s36
    %p42 = scmp.eq.s32.totalorder %s9, 0
    %p43 = por %p41, %p42
    %p44 = scmp.ne.s32.totalorder %s33, %s36
    %p45 = scmp.eq.s32.totalorder %s14, 1
    %p46 = por %p44, %p45
    %p47 = scmp.ne.s32.totalorder %s36, %s37
    %p48 = scmp.eq.s32.totalorder %s14, 0
    %p49 = por %p47, %p48
    %p50 = scmp.ne.s32.totalorder %s36, %s37
    %p51 = scmp.eq.s32.totalorder %s15, 1
    %p52 = por %p50, %p51
    %p54 = scmp.ne.s32.totalorder %s37, %s53
    %p55 = scmp.eq.s32.totalorder %s15, 0
    %p56 = por %p54, %p55
    %s58 = sadd.s32 %s57, 1
    %p61 = scmp.eq.s32.totalorder %s9, 1
    %p62 = scmp.ne.s32.totalorder %s57, %s59
    %p63 = scmp.eq.s32.totalorder %s9, 0
    %p64 = por %p62, %p63
    %p65 = scmp.ne.s32.totalorder %s57, %s59
    %p66 = scmp.eq.s32.totalorder %s14, 1
    %p67 = por %p65, %p66
    %p68 = scmp.ne.s32.totalorder %s59, %s60
    %p69 = scmp.eq.s32.totalorder %s14, 0
    %p70 = por %p68, %p69
    %p71 = scmp.ne.s32.totalorder %s59, %s60
    %p72 = scmp.eq.s32.totalorder %s15, 1
    %p73 = por %p71, %p72
    %p75 = scmp.ne.s32.totalorder %s60, %s74
    %p76 = scmp.eq.s32.totalorder %s15, 0
    %p77 = por %p75, %p76
    %s79 = sadd.s32 %s78, 1
    %p82 = scmp.eq.s32.totalorder %s9, 1
    %p83 = scmp.ne.s32.totalorder %s78, %s80
    %p84 = scmp.eq.s32.totalorder %s9, 0
    %p85 = por %p83, %p84
    %p86 = scmp.ne.s32.totalorder %s78, %s80
    %p87 = scmp.eq.s32.totalorder %s14, 1
    %p88 = por %p86, %p87
    %p89 = scmp.ne.s32.totalorder %s80, %s81
    %p90 = scmp.eq.s32.totalorder %s14, 0
    %p91 = por %p89, %p90
    %p92 = scmp.ne.s32.totalorder %s80, %s81
    %p93 = scmp.eq.s32.totalorder %s15, 1
    %p94 = por %p92, %p93
    %p96 = scmp.ne.s32.totalorder %s81, %s95
    %p97 = scmp.eq.s32.totalorder %s15, 0
    %p98 = por %p96, %p97
    %s99 = ssub.s32 %s16, %s28
    %s100 = ssub.s32 %s17, %s24
    %s101 = sor.u32 %s99, %s100
    %p102 = scmp.eq.s32.totalorder %s101, 0
    %s104 = sadd.s32 %s103, 1
    %s105 = scalar_select %p102, %s103, %s104
    %p108 = pneg %p102
    %p109 = scmp.eq.s32.totalorder %s9, 1
    %p110 = por %p108, %p109
    %p111 = scmp.ne.s32.totalorder %s103, %s106
    %p112 = scmp.eq.s32.totalorder %s9, 0
    %p113 = por %p111, %p112
    %p114 = scmp.ne.s32.totalorder %s103, %s106
    %p115 = scmp.eq.s32.totalorder %s14, 1
    %p116 = por %p114, %p115
    %p117 = scmp.ne.s32.totalorder %s106, %s107
    %p118 = scmp.eq.s32.totalorder %s14, 0
    %p119 = por %p117, %p118
    %p120 = scmp.ne.s32.totalorder %s106, %s107
    %p121 = scmp.eq.s32.totalorder %s15, 1
    %p122 = por %p120, %p121
    %p124 = scmp.ne.s32.totalorder %s107, %s123
    %p125 = scmp.eq.s32.totalorder %s15, 0
    %p126 = por %p124, %p125
    %p127 = scmp.le.s32.totalorder 1, %s9
    %p128 = scmp.lt.s32.totalorder %s9, 3
    %p129 = pnand %p127, %p128
    %p130 = pneg %p129
    // Predicated region
    $region9: #{dca_forward.5} parent=5 // pred_check
      _
    $region10: #{dca_forward.5} parent=5 // pred_check_branch
      %132 = sbr.rel (%p129) target = $region12
    $region11: #{dca_forward.5} parent=5 // pred_region
      %s133 = ssub.s32 %s9, 1
      // Predicated region
      $region13: #{dca_forward.5} parent=11 // pred_check
        %p134 = pneg %p70
      $region14: #{dca_forward.5} parent=11 // pred_check_branch
        %136 = sbr.rel (%p134) target = $region16
      $region15: #{dca_forward.5} parent=11 // pred_region
        _
      $region16: #{dca_forward.5} parent=11 // pred_fallthru
        _
      // Predicated region
      $region17: #{dca_forward.5} parent=11 // pred_check
        %p137 = pneg %p91
      $region18: #{dca_forward.5} parent=11 // pred_check_branch
        %139 = sbr.rel (%p137) target = $region20
      $region19: #{dca_forward.5} parent=11 // pred_region
        _
      $region20: #{dca_forward.5} parent=11 // pred_fallthru
        _
    $region12: #{dca_forward.5} parent=5 // pred_fallthru
      _
    %p140 = scmp.lt.s32.totalorder %s9, 2
    // Predicated region
    $region21: #{dca_forward.5} parent=5 // pred_check
      %p141 = pneg %p140
    $region22: #{dca_forward.5} parent=5 // pred_check_branch
      %143 = sbr.rel (%p141) target = $region24
    $region23: #{dca_forward.5} parent=5 // pred_region
      // Predicated region
      $region25: #{dca_forward.5} parent=23 // pred_check
        %p144 = pneg %p43
      $region26: #{dca_forward.5} parent=23 // pred_check_branch
        %146 = sbr.rel (%p144) target = $region28
      $region27: #{dca_forward.5} parent=23 // pred_region
        %s147 = smul.u32 2, %s17
        %p148 = scmp.lt.s32.totalorder %s16, 1
        %s149 = scalar_select %p148, %s16, 1
        %p150 = scmp.lt.s32.totalorder %s147, 1
        %s151 = scalar_select %p150, %s147, 1
        %s152 = smul.addr %s149, 16
        %s153 = sadd.s32 %s151, %s152
        %s154 = smul.addr %s153, 8
        %s155 = scalar_lea.vmem %s0, %s154
        %s156 = smul.u32 2, %s17
      $region28: #{dca_forward.5} parent=23 // pred_fallthru
        _
    $region24: #{dca_forward.5} parent=5 // pred_fallthru
      _
    %p157 = scmp.le.s32.totalorder 1, %s9
    %p158 = scmp.lt.s32.totalorder %s9, 3
    %p159 = pnand %p157, %p158
    %p160 = pneg %p159
    // Predicated region
    $region29: #{dca_forward.5} parent=5 // pred_check
      _
    $region30: #{dca_forward.5} parent=5 // pred_check_branch
      %162 = sbr.rel (%p159) target = $region32
    $region31: #{dca_forward.5} parent=5 // pred_region
      %s163 = ssub.s32 %s9, 1
      %s164 = smul.u32 2, %s19
      %p165 = scmp.lt.s32.totalorder %s18, 1
      %s166 = scalar_select %p165, %s18, 1
      %p167 = scmp.lt.s32.totalorder %s164, 1
      %s168 = scalar_select %p167, %s164, 1
      %s169 = smul.addr %s166, 16
      %s170 = sadd.s32 %s168, %s169
      %s171 = smul.addr %s170, 8
      %s172 = scalar_lea.vmem %s0, %s171
      %p173 = pneg %p49
      %p174 = pneg %p46
      %p175 = pneg %p70
      %p176 = pneg %p67
      %p177 = pneg %p91
      %p178 = pneg %p88
      %p179 = pneg %p119
      %p180 = pneg %p116
      %s181 = smul.u32 2, %s19
      %p182 = scmp.lt.s32.totalorder %s18, 1
      %s183 = scalar_select %p182, %s18, 1
      %p184 = scmp.lt.s32.totalorder %s181, 1
      %s185 = scalar_select %p184, %s181, 1
      %s186 = smul.addr %s183, 16
      %s187 = sadd.s32 %s185, %s186
      %s188 = smul.addr %s187, 8
      %s189 = scalar_lea.vmem %s3, %s188
      %s190 = smul.u32 2, %s19
      %p191 = scmp.lt.s32.totalorder %s18, 1
      %s192 = scalar_select %p191, %s18, 1
      %p193 = scmp.lt.s32.totalorder %s190, 1
      %s194 = scalar_select %p193, %s190, 1
      %s195 = smul.addr %s192, 16
      %s196 = sadd.s32 %s194, %s195
      %s197 = smul.addr %s196, 8
      %s198 = scalar_lea.vmem %s0, %s197
      %s199 = smul.u32 2, %s19
      %s200 = smul.u32 2, %s19
      %p201 = scmp.lt.s32.totalorder %s18, 1
      %s202 = scalar_select %p201, %s18, 1
      %p203 = scmp.lt.s32.totalorder %s200, 1
      %s204 = scalar_select %p203, %s200, 1
      %s205 = smul.addr %s202, 16
      %s206 = sadd.s32 %s204, %s205
      %s207 = smul.addr %s206, 8
      %s208 = scalar_lea.vmem %s3, %s207
      %s209 = smul.u32 2, %s19
      %v210 = vld [vmem:[%s198] sm:$0xff]
      %v211 = vld [vmem:[%s198 + $0x8] sm:$0xff]
      %v212 = vld [vmem:[%s198 + $0x10] sm:$0xff]
      %v213 = vld [vmem:[%s198 + $0x18] sm:$0xff]
      %v214 = vld [vmem:[%s198 + $0x20] sm:$0xff]
      %v215 = vld [vmem:[%s198 + $0x28] sm:$0xff]
      %v216 = vld [vmem:[%s198 + $0x30] sm:$0xff]
      %v217 = vld [vmem:[%s198 + $0x38] sm:$0xff]
      %v218 = vld [vmem:[%s198 + $0x40] sm:$0xff]
      %v219 = vld [vmem:[%s198 + $0x48] sm:$0xff]
      %v220 = vld [vmem:[%s198 + $0x50] sm:$0xff]
      %v221 = vld [vmem:[%s198 + $0x58] sm:$0xff]
      %v222 = vld [vmem:[%s198 + $0x60] sm:$0xff]
      %v223 = vld [vmem:[%s198 + $0x68] sm:$0xff]
      %v224 = vld [vmem:[%s198 + $0x70] sm:$0xff]
      %v225 = vld [vmem:[%s198 + $0x78] sm:$0xff]
      %v226 = vld [vmem:[%s1] sm:$0xff]
      %v227 = vld [vmem:[%s1 + $0x8] sm:$0xff]
      %v228 = vld [vmem:[%s1 + $0x10] sm:$0xff]
      %v229 = vld [vmem:[%s1 + $0x18] sm:$0xff]
      %v230 = vld [vmem:[%s1 + $0x20] sm:$0xff]
      %v231 = vld [vmem:[%s1 + $0x28] sm:$0xff]
      %v232 = vld [vmem:[%s1 + $0x30] sm:$0xff]
      %v233 = vld [vmem:[%s1 + $0x38] sm:$0xff]
      %v234 = vld [vmem:[%s2] sm:$0xff]
      %v235 = vld [vmem:[%s2 + $0x8] sm:$0xff]
      %v236 = vld [vmem:[%s2 + $0x10] sm:$0xff]
      %v237 = vld [vmem:[%s2 + $0x18] sm:$0xff]
      %v238 = vld [vmem:[%s2 + $0x20] sm:$0xff]
      %v239 = vld [vmem:[%s2 + $0x28] sm:$0xff]
      %v240 = vld [vmem:[%s2 + $0x30] sm:$0xff]
      %v241 = vld [vmem:[%s2 + $0x38] sm:$0xff]
      %243 = vset.pattern.permute.xlu0 0
      %244 = vperm.xlu0 %243, %v234
      %v245 = vpop.permute.xlu0 %244
      %248 = vset.pattern.permute.xlu0 0
      %249 = vperm.xlu0 %248, %v235
      %v250 = vpop.permute.xlu0 %249
      %253 = vset.pattern.permute.xlu0 0
      %254 = vperm.xlu0 %253, %v236
      %v255 = vpop.permute.xlu0 %254
      %258 = vset.pattern.permute.xlu0 0
      %259 = vperm.xlu0 %258, %v237
      %v260 = vpop.permute.xlu0 %259
      %263 = vset.pattern.permute.xlu0 0
      %264 = vperm.xlu0 %263, %v238
      %v265 = vpop.permute.xlu0 %264
      %268 = vset.pattern.permute.xlu0 0
      %269 = vperm.xlu0 %268, %v239
      %v270 = vpop.permute.xlu0 %269
      %273 = vset.pattern.permute.xlu0 0
      %274 = vperm.xlu0 %273, %v240
      %v275 = vpop.permute.xlu0 %274
      %278 = vset.pattern.permute.xlu0 0
      %279 = vperm.xlu0 %278, %v241
      %v280 = vpop.permute.xlu0 %279
      %vm282 = vcmask 523264
      %v284 = vsel %vm282, %v226, 0
      %v287 = vsel %vm282, %v227, 0
      %v290 = vsel %vm282, %v228, 0
      %v293 = vsel %vm282, %v229, 0
      %v296 = vsel %vm282, %v230, 0
      %v299 = vsel %vm282, %v231, 0
      %v302 = vsel %vm282, %v232, 0
      %v305 = vsel %vm282, %v233, 0
      %307 = vmatprep.subr.mxu0 %v211
      %308 = vmatpush1.msra.mxu0 %v210
      %309 = vmatprep.subr.mxu0 %v213
      %310 = vmatpush1.msra.mxu0 %v212
      %311 = vmatprep.subr.mxu0 %v215
      %312 = vmatpush1.msra.mxu0 %v214
      %313 = vmatprep.subr.mxu0 %v217
      %314 = vmatpush1.msra.mxu0 %v216
      %315 = vmatprep.subr.mxu0 %v219
      %316 = vmatpush1.msra.mxu0 %v218
      %317 = vmatprep.subr.mxu0 %v221
      %318 = vmatpush1.msra.mxu0 %v220
      %319 = vmatprep.subr.mxu0 %v223
      %320 = vmatpush1.msra.mxu0 %v222
      %321 = vmatprep.subr.mxu0 %v225
      %322 = vmatpush1.msra.mxu0 %v224
      %323 = vmatprep.subr.mxu0 0.0
      %324 = vmatpush1.msra.mxu0 0.0
      %325 = vmatprep.subr.mxu0 0.0
      %326 = vmatpush1.msra.mxu0 0.0
      %327 = vmatprep.subr.mxu0 0.0
      %328 = vmatpush1.msra.mxu0 0.0
      %329 = vmatprep.subr.mxu0 0.0
      %330 = vmatpush1.msra.mxu0 0.0
      %331 = vmatprep.subr.mxu0 0.0
      %332 = vmatpush1.msra.mxu0 0.0
      %333 = vmatprep.subr.mxu0 0.0
      %334 = vmatpush1.msra.mxu0 0.0
      %335 = vmatprep.subr.mxu0 0.0
      %336 = vmatpush1.msra.mxu0 0.0
      %337 = vmatprep.subr.mxu0 0.0
      %338 = vmatpush1.msra.mxu0 0.0
      %339 = vmatprep.subr.mxu0 0.0
      %340 = vmatpush1.msra.mxu0 0.0
      %341 = vmatprep.subr.mxu0 0.0
      %342 = vmatpush1.msra.mxu0 0.0
      %343 = vmatprep.subr.mxu0 0.0
      %344 = vmatpush1.msra.mxu0 0.0
      %345 = vmatprep.subr.mxu0 0.0
      %346 = vmatpush1.msra.mxu0 0.0
      %347 = vmatprep.subr.mxu0 0.0
      %348 = vmatpush1.msra.mxu0 0.0
      %349 = vmatprep.subr.mxu0 0.0
      %350 = vmatpush1.msra.mxu0 0.0
      %351 = vmatprep.subr.mxu0 0.0
      %352 = vmatpush1.msra.mxu0 0.0
      %353 = vmatprep.subr.mxu0 0.0
      %354 = vmatpush1.msra.mxu0 0.0
      %355 = vmatprep.subr.mxu0 0.0
      %356 = vmatpush1.msra.mxu0 0.0
      %357 = vmatprep.subr.mxu0 0.0
      %358 = vmatpush1.msra.mxu0 0.0
      %359 = vmatprep.subr.mxu0 0.0
      %360 = vmatpush1.msra.mxu0 0.0
      %361 = vmatprep.subr.mxu0 0.0
      %362 = vmatpush1.msra.mxu0 0.0
      %363 = vmatprep.subr.mxu0 0.0
      %364 = vmatpush1.msra.mxu0 0.0
      %365 = vmatprep.subr.mxu0 0.0
      %366 = vmatpush1.msra.mxu0 0.0
      %367 = vmatprep.subr.mxu0 0.0
      %368 = vmatpush1.msra.mxu0 0.0
      %369 = vmatprep.subr.mxu0 0.0
      %370 = vmatpush1.msra.mxu0 0.0
      %371 = vmatprep.mubr.f32.mxu0 0.0
      %372 = vmatmul.mubr.f32.gmra.mrb[0].mxu0 %v284
      %v373 = vpop.f32.mrb[0].mxu0
      %v374 = vadd.f32 %v245, %v373
      %v375 = vpop.f32.mrb[0].mxu0
      %v376 = vadd.f32 %v245, %v375
      %377 = vmatprep.mubr.f32.mxu0 0.0
      %378 = vmatmul.mubr.f32.gmra.mrb[0].mxu0 %v287
      %v379 = vpop.f32.mrb[0].mxu0
      %v380 = vadd.f32 %v250, %v379
      %v381 = vpop.f32.mrb[0].mxu0
      %v382 = vadd.f32 %v250, %v381
      %383 = vmatprep.mubr.f32.mxu0 0.0
      %384 = vmatmul.mubr.f32.gmra.mrb[0].mxu0 %v290
      %v385 = vpop.f32.mrb[0].mxu0
      %v386 = vadd.f32 %v255, %v385
      %v387 = vpop.f32.mrb[0].mxu0
      %v388 = vadd.f32 %v255, %v387
      %389 = vmatprep.mubr.f32.mxu0 0.0
      %390 = vmatmul.mubr.f32.gmra.mrb[0].mxu0 %v293
      %v391 = vpop.f32.mrb[0].mxu0
      %v392 = vadd.f32 %v260, %v391
      %v393 = vpop.f32.mrb[0].mxu0
      %v394 = vadd.f32 %v260, %v393
      %395 = vmatprep.mubr.f32.mxu0 0.0
      %396 = vmatmul.mubr.f32.gmra.mrb[0].mxu0 %v296
      %v397 = vpop.f32.mrb[0].mxu0
      %v398 = vadd.f32 %v265, %v397
      %v399 = vpop.f32.mrb[0].mxu0
      %v400 = vadd.f32 %v265, %v399
      %401 = vmatprep.mubr.f32.mxu0 0.0
      %402 = vmatmul.mubr.f32.gmra.mrb[0].mxu0 %v299
      %v403 = vpop.f32.mrb[0].mxu0
      %v404 = vadd.f32 %v270, %v403
      %v405 = vpop.f32.mrb[0].mxu0
      %v406 = vadd.f32 %v270, %v405
      %407 = vmatprep.mubr.f32.mxu0 0.0
      %408 = vmatmul.mubr.f32.gmra.mrb[0].mxu0 %v302
      %v409 = vpop.f32.mrb[0].mxu0
      %v410 = vadd.f32 %v275, %v409
      %v411 = vpop.f32.mrb[0].mxu0
      %v412 = vadd.f32 %v275, %v411
      %413 = vmatprep.mubr.f32.mxu0 0.0
      %414 = vmatmul.mubr.f32.gmra.mrb[0].mxu0 %v305
      %v415 = vpop.f32.mrb[0].mxu0
      %v416 = vadd.f32 %v280, %v415
      %v417 = vpop.f32.mrb[0].mxu0
      %v418 = vadd.f32 %v280, %v417
      %419 = vdwg.mxu0
      %420 = vst [vmem:[%s208] sm:$0xff] %v374
      %421 = vst [vmem:[%s208 + $0x8] sm:$0xff] %v376
      %422 = vst [vmem:[%s208 + $0x10] sm:$0xff] %v380
      %423 = vst [vmem:[%s208 + $0x18] sm:$0xff] %v382
      %424 = vst [vmem:[%s208 + $0x20] sm:$0xff] %v386
      %425 = vst [vmem:[%s208 + $0x28] sm:$0xff] %v388
      %426 = vst [vmem:[%s208 + $0x30] sm:$0xff] %v392
      %427 = vst [vmem:[%s208 + $0x38] sm:$0xff] %v394
      %428 = vst [vmem:[%s208 + $0x40] sm:$0xff] %v398
      %429 = vst [vmem:[%s208 + $0x48] sm:$0xff] %v400
      %430 = vst [vmem:[%s208 + $0x50] sm:$0xff] %v404
      %431 = vst [vmem:[%s208 + $0x58] sm:$0xff] %v406
      %432 = vst [vmem:[%s208 + $0x60] sm:$0xff] %v410
      %433 = vst [vmem:[%s208 + $0x68] sm:$0xff] %v412
      %434 = vst [vmem:[%s208 + $0x70] sm:$0xff] %v416
      %435 = vst [vmem:[%s208 + $0x78] sm:$0xff] %v418
      %s436 = smul.u32 2, %s19
      %p437 = scmp.lt.s32.totalorder %s18, 1
      %s438 = scalar_select %p437, %s18, 1
      %p439 = scmp.lt.s32.totalorder %s436, 1
      %s440 = scalar_select %p439, %s436, 1
      %s441 = smul.addr %s438, 16
      %s442 = sadd.s32 %s440, %s441
      %s443 = smul.addr %s442, 8
      %s444 = scalar_lea.vmem %s3, %s443
      // Predicated region
      $region33: #{dca_forward.5} parent=31 // pred_check
        %p445 = pneg %p116
      $region34: #{dca_forward.5} parent=31 // pred_check_branch
        %447 = sbr.rel (%p445) target = $region36
      $region35: #{dca_forward.5} parent=31 // pred_region
        %s448 = smul.u32 2, %s19
      $region36: #{dca_forward.5} parent=31 // pred_fallthru
        _
    $region32: #{dca_forward.5} parent=5 // pred_fallthru
      _
    %p449 = scmp.le.s32.totalorder 2, %s9
    // Predicated region
    $region37: #{dca_forward.5} parent=5 // pred_check
      %p450 = pneg %p449
    $region38: #{dca_forward.5} parent=5 // pred_check_branch
      %452 = sbr.rel (%p450) target = $region40
    $region39: #{dca_forward.5} parent=5 // pred_region
      %s453 = ssub.s32 %s9, 2
      // Predicated region
      $region41: #{dca_forward.5} parent=39 // pred_check
        %p454 = pneg %p122
      $region42: #{dca_forward.5} parent=39 // pred_check_branch
        %456 = sbr.rel (%p454) target = $region44
      $region43: #{dca_forward.5} parent=39 // pred_region
        %s457 = smul.u32 2, %s21
        %p458 = scmp.lt.s32.totalorder %s20, 1
        %s459 = scalar_select %p458, %s20, 1
        %p460 = scmp.lt.s32.totalorder %s457, 1
        %s461 = scalar_select %p460, %s457, 1
        %s462 = smul.addr %s459, 16
        %s463 = sadd.s32 %s461, %s462
        %s464 = smul.addr %s463, 8
        %s465 = scalar_lea.vmem %s3, %s464
      $region44: #{dca_forward.5} parent=39 // pred_fallthru
        _
    $region40: #{dca_forward.5} parent=5 // pred_fallthru
      _
  $region6: #{dca_forward.5} parent=0 // loop_footer
    %s13 = sadd.s32 1, %s9
  $region7: #{dca_forward.5} parent=0 // loop_footer_branch
    %8 = sbr.rel target = $region3
  $region8: #{dca_forward.5} parent=0 // loop_exit
    _

// kernel: dca_forward.6
$region0: #{dca_forward.6}
  #allocation0 [shape = 'u32[]', space=smem, size = 0x4, offset = 0x4, fixed_abs, tag = 'smem constant byte address 0x4 - core index']
  #allocation1 [shape = 'u32[144,128]{1,0:T(1,128)}', space=vmem, size = 0x12000, scoped, tag = 'internal scratch']
  #allocation2 [shape = 'f32[32,256]{1,0:T(8,128)}', space=vmem, size = 0x8000, scoped, tag = 'scratch operand']
  %s0 = inlined_call_operand.vmem [shape: f32[4,32,256], index: 0, kind: input, shape index: {}]
  %s1 = inlined_call_operand.vmem [shape: f32[32,9], index: 1, kind: input, shape index: {}]
  %s2 = inlined_call_operand.vmem [shape: f32[32,1], index: 2, kind: input, shape index: {}]
  %s3 = inlined_call_operand.vmem [shape: f32[32,1], index: 3, kind: input, shape index: {}]
  %s4 = inlined_call_operand.vmem [shape: f32[32,1], index: 4, kind: input, shape index: {}]
  %s5 = inlined_call_operand.vmem [shape: f32[2,32], index: 5, kind: input, shape index: {}]
  %s6 = inlined_call_operand.vmem [shape: f32[9,256], index: 6, kind: input, shape index: {}]
  %s7 = inlined_call_operand.vmem [shape: f32[4,2,256], index: 7, kind: output, shape index: {}]
  %s8 = sld [smem:[#allocation0]]
  $region61: #{dca_forward.6} parent=0
    _
  %s10 = ssub.s32 1, %s8
  %s11 = scalar_select 0, %s10, %s8
  loop: start=0, step=1, limit=6
  $region2: #{dca_forward.6} parent=0 // loop_pre_header
    _
  $region3: #{dca_forward.6} parent=0 // loop_header
    %s13 = sphi 0, %s17
    %p14 = scmp.ge.s32.totalorder %s13, 6
    %s23 = sphi 0, %s25
    %s26 = sphi 0, %s23
    %s27 = sphi 0, %s26
    %s43 = sphi 0, %s27
    %s47 = sphi 0, %s47
    %s49 = sphi 0, %s47
    %s50 = sphi 0, %s49
    %s64 = sphi 0, %s50
    %s68 = sphi 0, %s68
    %s70 = sphi 0, %s68
    %s71 = sphi 0, %s70
    %s85 = sphi 0, %s71
    %s89 = sphi 0, %s89
    %s91 = sphi 0, %s89
    %s92 = sphi 0, %s91
    %s106 = sphi 0, %s92
    %s110 = sphi 0, %s110
    %s112 = sphi 0, %s110
    %s113 = sphi 0, %s112
    %s127 = sphi 0, %s113
    %s131 = sphi 0, %s131
    %s133 = sphi 0, %s131
    %s134 = sphi 0, %s133
    %s148 = sphi 0, %s134
    %s152 = sphi 0, %s152
    %s154 = sphi 0, %s152
    %s155 = sphi 0, %s154
    %s169 = sphi 0, %s155
    %s175 = sphi 0, %s177
    %s178 = sphi 0, %s175
    %s179 = sphi 0, %s178
    %s195 = sphi 0, %s179
  $region4: #{dca_forward.6} parent=0 // loop_header_branch
    %16 = sbr.rel (%p14) target = $region8
  $region5: #{dca_forward.6} parent=0 // loop_body
    %s18 = ssub.s32 %s13, 1
    %s19 = ssub.s32 %s13, 2
    %s20 = sadd.s32 %s13, 1
    %s21 = ssub.s32 %s13, %s20
    %p22 = scmp.eq.s32.totalorder %s21, 0
    %s24 = sadd.s32 %s23, 1
    %s25 = scalar_select %p22, %s23, %s24
    %p28 = pneg %p22
    %p29 = scmp.eq.s32.totalorder %s13, 3
    %p30 = por %p28, %p29
    %p31 = scmp.ne.s32.totalorder %s23, %s26
    %p32 = scmp.eq.s32.totalorder %s13, 0
    %p33 = por %p31, %p32
    %p34 = scmp.ne.s32.totalorder %s23, %s26
    %p35 = scmp.eq.s32.totalorder %s18, 3
    %p36 = por %p34, %p35
    %p37 = scmp.ne.s32.totalorder %s26, %s27
    %p38 = scmp.eq.s32.totalorder %s18, 0
    %p39 = por %p37, %p38
    %p40 = scmp.ne.s32.totalorder %s26, %s27
    %p41 = scmp.eq.s32.totalorder %s19, 3
    %p42 = por %p40, %p41
    %p44 = scmp.ne.s32.totalorder %s27, %s43
    %p45 = scmp.eq.s32.totalorder %s19, 0
    %p46 = por %p44, %p45
    %s48 = sadd.s32 %s47, 1
    %p51 = scmp.eq.s32.totalorder %s13, 3
    %p52 = scmp.ne.s32.totalorder %s47, %s49
    %p53 = scmp.eq.s32.totalorder %s13, 0
    %p54 = por %p52, %p53
    %p55 = scmp.ne.s32.totalorder %s47, %s49
    %p56 = scmp.eq.s32.totalorder %s18, 3
    %p57 = por %p55, %p56
    %p58 = scmp.ne.s32.totalorder %s49, %s50
    %p59 = scmp.eq.s32.totalorder %s18, 0
    %p60 = por %p58, %p59
    %p61 = scmp.ne.s32.totalorder %s49, %s50
    %p62 = scmp.eq.s32.totalorder %s19, 3
    %p63 = por %p61, %p62
    %p65 = scmp.ne.s32.totalorder %s50, %s64
    %p66 = scmp.eq.s32.totalorder %s19, 0
    %p67 = por %p65, %p66
    %s69 = sadd.s32 %s68, 1
    %p72 = scmp.eq.s32.totalorder %s13, 3
    %p73 = scmp.ne.s32.totalorder %s68, %s70
    %p74 = scmp.eq.s32.totalorder %s13, 0
    %p75 = por %p73, %p74
    %p76 = scmp.ne.s32.totalorder %s68, %s70
    %p77 = scmp.eq.s32.totalorder %s18, 3
    %p78 = por %p76, %p77
    %p79 = scmp.ne.s32.totalorder %s70, %s71
    %p80 = scmp.eq.s32.totalorder %s18, 0
    %p81 = por %p79, %p80
    %p82 = scmp.ne.s32.totalorder %s70, %s71
    %p83 = scmp.eq.s32.totalorder %s19, 3
    %p84 = por %p82, %p83
    %p86 = scmp.ne.s32.totalorder %s71, %s85
    %p87 = scmp.eq.s32.totalorder %s19, 0
    %p88 = por %p86, %p87
    %s90 = sadd.s32 %s89, 1
    %p93 = scmp.eq.s32.totalorder %s13, 3
    %p94 = scmp.ne.s32.totalorder %s89, %s91
    %p95 = scmp.eq.s32.totalorder %s13, 0
    %p96 = por %p94, %p95
    %p97 = scmp.ne.s32.totalorder %s89, %s91
    %p98 = scmp.eq.s32.totalorder %s18, 3
    %p99 = por %p97, %p98
    %p100 = scmp.ne.s32.totalorder %s91, %s92
    %p101 = scmp.eq.s32.totalorder %s18, 0
    %p102 = por %p100, %p101
    %p103 = scmp.ne.s32.totalorder %s91, %s92
    %p104 = scmp.eq.s32.totalorder %s19, 3
    %p105 = por %p103, %p104
    %p107 = scmp.ne.s32.totalorder %s92, %s106
    %p108 = scmp.eq.s32.totalorder %s19, 0
    %p109 = por %p107, %p108
    %s111 = sadd.s32 %s110, 1
    %p114 = scmp.eq.s32.totalorder %s13, 3
    %p115 = scmp.ne.s32.totalorder %s110, %s112
    %p116 = scmp.eq.s32.totalorder %s13, 0
    %p117 = por %p115, %p116
    %p118 = scmp.ne.s32.totalorder %s110, %s112
    %p119 = scmp.eq.s32.totalorder %s18, 3
    %p120 = por %p118, %p119
    %p121 = scmp.ne.s32.totalorder %s112, %s113
    %p122 = scmp.eq.s32.totalorder %s18, 0
    %p123 = por %p121, %p122
    %p124 = scmp.ne.s32.totalorder %s112, %s113
    %p125 = scmp.eq.s32.totalorder %s19, 3
    %p126 = por %p124, %p125
    %p128 = scmp.ne.s32.totalorder %s113, %s127
    %p129 = scmp.eq.s32.totalorder %s19, 0
    %p130 = por %p128, %p129
    %s132 = sadd.s32 %s131, 1
    %p135 = scmp.eq.s32.totalorder %s13, 3
    %p136 = scmp.ne.s32.totalorder %s131, %s133
    %p137 = scmp.eq.s32.totalorder %s13, 0
    %p138 = por %p136, %p137
    %p139 = scmp.ne.s32.totalorder %s131, %s133
    %p140 = scmp.eq.s32.totalorder %s18, 3
    %p141 = por %p139, %p140
    %p142 = scmp.ne.s32.totalorder %s133, %s134
    %p143 = scmp.eq.s32.totalorder %s18, 0
    %p144 = por %p142, %p143
    %p145 = scmp.ne.s32.totalorder %s133, %s134
    %p146 = scmp.eq.s32.totalorder %s19, 3
    %p147 = por %p145, %p146
    %p149 = scmp.ne.s32.totalorder %s134, %s148
    %p150 = scmp.eq.s32.totalorder %s19, 0
    %p151 = por %p149, %p150
    %s153 = sadd.s32 %s152, 1
    %p156 = scmp.eq.s32.totalorder %s13, 3
    %p157 = scmp.ne.s32.totalorder %s152, %s154
    %p158 = scmp.eq.s32.totalorder %s13, 0
    %p159 = por %p157, %p158
    %p160 = scmp.ne.s32.totalorder %s152, %s154
    %p161 = scmp.eq.s32.totalorder %s18, 3
    %p162 = por %p160, %p161
    %p163 = scmp.ne.s32.totalorder %s154, %s155
    %p164 = scmp.eq.s32.totalorder %s18, 0
    %p165 = por %p163, %p164
    %p166 = scmp.ne.s32.totalorder %s154, %s155
    %p167 = scmp.eq.s32.totalorder %s19, 3
    %p168 = por %p166, %p167
    %p170 = scmp.ne.s32.totalorder %s155, %s169
    %p171 = scmp.eq.s32.totalorder %s19, 0
    %p172 = por %p170, %p171
    %s173 = ssub.s32 %s13, %s20
    %p174 = scmp.eq.s32.totalorder %s173, 0
    %s176 = sadd.s32 %s175, 1
    %s177 = scalar_select %p174, %s175, %s176
    %p180 = pneg %p174
    %p181 = scmp.eq.s32.totalorder %s13, 3
    %p182 = por %p180, %p181
    %p183 = scmp.ne.s32.totalorder %s175, %s178
    %p184 = scmp.eq.s32.totalorder %s13, 0
    %p185 = por %p183, %p184
    %p186 = scmp.ne.s32.totalorder %s175, %s178
    %p187 = scmp.eq.s32.totalorder %s18, 3
    %p188 = por %p186, %p187
    %p189 = scmp.ne.s32.totalorder %s178, %s179
    %p190 = scmp.eq.s32.totalorder %s18, 0
    %p191 = por %p189, %p190
    %p192 = scmp.ne.s32.totalorder %s178, %s179
    %p193 = scmp.eq.s32.totalorder %s19, 3
    %p194 = por %p192, %p193
    %p196 = scmp.ne.s32.totalorder %s179, %s195
    %p197 = scmp.eq.s32.totalorder %s19, 0
    %p198 = por %p196, %p197
    %p199 = scmp.le.s32.totalorder 1, %s13
    %p200 = scmp.lt.s32.totalorder %s13, 5
    %p201 = pnand %p199, %p200
    %p202 = pneg %p201
    // Predicated region
    $region9: #{dca_forward.6} parent=5 // pred_check
      _
    $region10: #{dca_forward.6} parent=5 // pred_check_branch
      %204 = sbr.rel (%p201) target = $region12
    $region11: #{dca_forward.6} parent=5 // pred_region
      %s205 = ssub.s32 %s13, 1
      // Predicated region
      $region13: #{dca_forward.6} parent=11 // pred_check
        %p206 = pneg %p60
      $region14: #{dca_forward.6} parent=11 // pred_check_branch
        %208 = sbr.rel (%p206) target = $region16
      $region15: #{dca_forward.6} parent=11 // pred_region
        _
      $region16: #{dca_forward.6} parent=11 // pred_fallthru
        _
      // Predicated region
      $region17: #{dca_forward.6} parent=11 // pred_check
        %p209 = pneg %p81
      $region18: #{dca_forward.6} parent=11 // pred_check_branch
        %211 = sbr.rel (%p209) target = $region20
      $region19: #{dca_forward.6} parent=11 // pred_region
        _
      $region20: #{dca_forward.6} parent=11 // pred_fallthru
        _
      // Predicated region
      $region21: #{dca_forward.6} parent=11 // pred_check
        %p212 = pneg %p102
      $region22: #{dca_forward.6} parent=11 // pred_check_branch
        %214 = sbr.rel (%p212) target = $region24
      $region23: #{dca_forward.6} parent=11 // pred_region
        _
      $region24: #{dca_forward.6} parent=11 // pred_fallthru
        _
      // Predicated region
      $region25: #{dca_forward.6} parent=11 // pred_check
        %p215 = pneg %p123
      $region26: #{dca_forward.6} parent=11 // pred_check_branch
        %217 = sbr.rel (%p215) target = $region28
      $region27: #{dca_forward.6} parent=11 // pred_region
        _
      $region28: #{dca_forward.6} parent=11 // pred_fallthru
        _
      // Predicated region
      $region29: #{dca_forward.6} parent=11 // pred_check
        %p218 = pneg %p144
      $region30: #{dca_forward.6} parent=11 // pred_check_branch
        %220 = sbr.rel (%p218) target = $region32
      $region31: #{dca_forward.6} parent=11 // pred_region
        _
      $region32: #{dca_forward.6} parent=11 // pred_fallthru
        _
      // Predicated region
      $region33: #{dca_forward.6} parent=11 // pred_check
        %p221 = pneg %p165
      $region34: #{dca_forward.6} parent=11 // pred_check_branch
        %223 = sbr.rel (%p221) target = $region36
      $region35: #{dca_forward.6} parent=11 // pred_region
        _
      $region36: #{dca_forward.6} parent=11 // pred_fallthru
        _
    $region12: #{dca_forward.6} parent=5 // pred_fallthru
      _
    %p224 = scmp.lt.s32.totalorder %s13, 4
    // Predicated region
    $region37: #{dca_forward.6} parent=5 // pred_check
      %p225 = pneg %p224
    $region38: #{dca_forward.6} parent=5 // pred_check_branch
      %227 = sbr.rel (%p225) target = $region40
    $region39: #{dca_forward.6} parent=5 // pred_region
      // Predicated region
      $region41: #{dca_forward.6} parent=39 // pred_check
        %p228 = pneg %p33
      $region42: #{dca_forward.6} parent=39 // pred_check_branch
        %230 = sbr.rel (%p228) target = $region44
      $region43: #{dca_forward.6} parent=39 // pred_region
        %p231 = scmp.lt.s32.totalorder %s13, 3
        %s232 = scalar_select %p231, %s13, 3
        %s233 = smul.addr %s232, 8
        %s234 = smul.addr %s233, 8
        %s235 = scalar_lea.vmem %s0, %s234
      $region44: #{dca_forward.6} parent=39 // pred_fallthru
        _
    $region40: #{dca_forward.6} parent=5 // pred_fallthru
      _
    %p236 = scmp.le.s32.totalorder 1, %s13
    %p237 = scmp.lt.s32.totalorder %s13, 5
    %p238 = pnand %p236, %p237
    %p239 = pneg %p238
    // Predicated region
    $region45: #{dca_forward.6} parent=5 // pred_check
      _
    $region46: #{dca_forward.6} parent=5 // pred_check_branch
      %241 = sbr.rel (%p238) target = $region48
    $region47: #{dca_forward.6} parent=5 // pred_region
      %s242 = ssub.s32 %s13, 1
      %p243 = scmp.lt.s32.totalorder %s18, 3
      %s244 = scalar_select %p243, %s18, 3
      %s245 = smul.addr %s244, 8
      %s246 = smul.addr %s245, 8
      %s247 = scalar_lea.vmem %s0, %s246
      %p248 = pneg %p39
      %p249 = pneg %p36
      %p250 = pneg %p60
      %p251 = pneg %p57
      %p252 = pneg %p81
      %p253 = pneg %p78
      %p254 = pneg %p102
      %p255 = pneg %p99
      %p256 = pneg %p123
      %p257 = pneg %p120
      %p258 = pneg %p144
      %p259 = pneg %p141
      %p260 = pneg %p165
      %p261 = pneg %p162
      %p262 = pneg %p191
      %p263 = pneg %p188
      %p264 = scmp.lt.s32.totalorder %s18, 3
      %s265 = scalar_select %p264, %s18, 3
      %s266 = smul.addr %s265, 2
      %s267 = smul.addr %s266, 2
      %s268 = scalar_lea.vmem %s7, %s267
      %p269 = scmp.lt.s32.totalorder %s18, 3
      %s270 = scalar_select %p269, %s18, 3
      %s271 = smul.addr %s270, 8
      %s272 = smul.addr %s271, 8
      %s273 = scalar_lea.vmem %s0, %s272
      %p274 = scmp.lt.s32.totalorder %s18, 3
      %s275 = scalar_select %p274, %s18, 3
      %s276 = smul.addr %s275, 2
      %s277 = smul.addr %s276, 2
      %s278 = scalar_lea.vmem %s7, %s277
      %v279 = vld [vmem:[%s273] sm:$0xff]
      %v280 = vld [vmem:[%s273 + $0x8] sm:$0xff]
      %v281 = vld [vmem:[%s273 + $0x10] sm:$0xff]
      %v282 = vld [vmem:[%s273 + $0x18] sm:$0xff]
      %v283 = vld [vmem:[%s273 + $0x20] sm:$0xff]
      %v284 = vld [vmem:[%s273 + $0x28] sm:$0xff]
      %v285 = vld [vmem:[%s273 + $0x30] sm:$0xff]
      %v286 = vld [vmem:[%s273 + $0x38] sm:$0xff]
      %287 = vst [vmem:[#allocation2] sm:$0xff] 0.0
      %288 = vst [vmem:[#allocation2 + $0x8] sm:$0xff] 0.0
      %289 = vst [vmem:[#allocation2 + $0x10] sm:$0xff] 0.0
      %290 = vst [vmem:[#allocation2 + $0x18] sm:$0xff] 0.0
      %291 = vst [vmem:[#allocation2 + $0x20] sm:$0xff] 0.0
      %292 = vst [vmem:[#allocation2 + $0x28] sm:$0xff] 0.0
      %293 = vst [vmem:[#allocation2 + $0x30] sm:$0xff] 0.0
      %294 = vst [vmem:[#allocation2 + $0x38] sm:$0xff] 0.0
      %v295 = vld [vmem:[%s6] ss:$8 sm:$0x3]
      %v297 = vlaneseq
      %v298 = vshrl.u32 %v297, 7
      %v299 = vsub.s32 0, %v298
      %v300 = vrot.slane %v295, %v299
      %v301 = vlaneseq
      %v302 = vshrl.u32 %v301, 7
      %v303 = vsub.s32 1, %v302
      %v304 = vrot.slane %v295, %v303
      %305 = vrot.lane.b32.xlu0 %v300, 111
      %v306 = vpop.permute.xlu0 %305
      %307 = vrot.lane.b32.xlu0 %v304, 111
      %v308 = vpop.permute.xlu0 %307
      %vm309 = vcmask 908288
      %v310 = vsel %vm309, %v306, %v308
      %v313 = vmul.f32 %v279, %v310
      %v314 = vmul.f32 %v280, %v308
      %v315 = vmul.f32 %v281, %v310
      %v316 = vmul.f32 %v282, %v308
      %v317 = vmul.f32 %v283, %v310
      %v318 = vmul.f32 %v284, %v308
      %v319 = vmul.f32 %v285, %v310
      %v320 = vmul.f32 %v286, %v308
      %v321 = vld [vmem:[%s1] sm:$0xff]
      %v322 = vld [vmem:[%s1 + $0x8] sm:$0xff]
      %v323 = vld [vmem:[%s1 + $0x10] sm:$0xff]
      %v324 = vld [vmem:[%s1 + $0x18] sm:$0xff]
      %326 = vset.pattern.permute.xlu0 0
      %327 = vperm.xlu0 %326, %v321
      %v328 = vpop.permute.xlu0 %327
      %331 = vset.pattern.permute.xlu0 0
      %332 = vperm.xlu0 %331, %v322
      %v333 = vpop.permute.xlu0 %332
      %336 = vset.pattern.permute.xlu0 0
      %337 = vperm.xlu0 %336, %v323
      %v338 = vpop.permute.xlu0 %337
      %341 = vset.pattern.permute.xlu0 0
      %342 = vperm.xlu0 %341, %v324
      %v343 = vpop.permute.xlu0 %342
      %v345 = vmul.f32 %v313, %v328
      %v346 = vmul.f32 %v314, %v328
      %v347 = vmul.f32 %v315, %v333
      %v348 = vmul.f32 %v316, %v333
      %v349 = vmul.f32 %v317, %v338
      %v350 = vmul.f32 %v318, %v338
      %v351 = vmul.f32 %v319, %v343
      %v352 = vmul.f32 %v320, %v343
      %v353 = vld [vmem:[#allocation2] sm:$0xff]
      %v354 = vld [vmem:[#allocation2 + $0x8] sm:$0xff]
      %v355 = vld [vmem:[#allocation2 + $0x10] sm:$0xff]
      %v356 = vld [vmem:[#allocation2 + $0x18] sm:$0xff]
      %v357 = vld [vmem:[#allocation2 + $0x20] sm:$0xff]
      %v358 = vld [vmem:[#allocation2 + $0x28] sm:$0xff]
      %v359 = vld [vmem:[#allocation2 + $0x30] sm:$0xff]
      %v360 = vld [vmem:[#allocation2 + $0x38] sm:$0xff]
      %369 = vrot.lane.b32.xlu0 %v345, 17
      %v370 = vpop.permute.xlu0 %369
      %371 = vrot.lane.b32.xlu0 %v346, 17
      %v372 = vpop.permute.xlu0 %371
      %373 = vrot.lane.b32.xlu0 %v347, 17
      %v374 = vpop.permute.xlu0 %373
      %375 = vrot.lane.b32.xlu0 %v348, 17
      %v376 = vpop.permute.xlu0 %375
      %377 = vrot.lane.b32.xlu0 %v349, 17
      %v378 = vpop.permute.xlu0 %377
      %379 = vrot.lane.b32.xlu0 %v350, 17
      %v380 = vpop.permute.xlu0 %379
      %381 = vrot.lane.b32.xlu0 %v351, 17
      %v382 = vpop.permute.xlu0 %381
      %383 = vrot.lane.b32.xlu0 %v352, 17
      %v384 = vpop.permute.xlu0 %383
      %vm385 = vcmask 138240
      %v386 = vsel %vm385, %v370, %v372
      %v387 = vsel %vm385, %v374, %v376
      %v388 = vsel %vm385, %v378, %v380
      %v389 = vsel %vm385, %v382, %v384
      %v398 = vadd.f32 %v353, %v370
      %v399 = vadd.f32 %v354, %v386
      %v400 = vadd.f32 %v355, %v374
      %v401 = vadd.f32 %v356, %v387
      %v402 = vadd.f32 %v357, %v378
      %v403 = vadd.f32 %v358, %v388
      %v404 = vadd.f32 %v359, %v382
      %v405 = vadd.f32 %v360, %v389
      %vm406 = vcmask 1047688
      %407 = vst.msk [vmem:[#allocation2] sm:$0xff] %vm406, %v398
      %408 = vst [vmem:[#allocation2 + $0x8] sm:$0xff] %v399
      %409 = vst.msk [vmem:[#allocation2 + $0x10] sm:$0xff] %vm406, %v400
      %410 = vst [vmem:[#allocation2 + $0x18] sm:$0xff] %v401
      %411 = vst.msk [vmem:[#allocation2 + $0x20] sm:$0xff] %vm406, %v402
      %412 = vst [vmem:[#allocation2 + $0x28] sm:$0xff] %v403
      %413 = vst.msk [vmem:[#allocation2 + $0x30] sm:$0xff] %vm406, %v404
      %414 = vst [vmem:[#allocation2 + $0x38] sm:$0xff] %v405
      %s415 = scalar_lea.vmem %s6, 1
      %v416 = vld [vmem:[%s415] ss:$8 sm:$0x3]
      %v418 = vlaneseq
      %v419 = vshrl.u32 %v418, 7
      %v420 = vsub.s32 0, %v419
      %v421 = vrot.slane %v416, %v420
      %v422 = vlaneseq
      %v423 = vshrl.u32 %v422, 7
      %v424 = vsub.s32 1, %v423
      %v425 = vrot.slane %v416, %v424
      %426 = vrot.lane.b32.xlu0 %v421, 112
      %v427 = vpop.permute.xlu0 %426
      %428 = vrot.lane.b32.xlu0 %v425, 112
      %v429 = vpop.permute.xlu0 %428
      %vm430 = vcmask 916480
      %v431 = vsel %vm430, %v427, %v429
      %v434 = vmul.f32 %v279, %v431
      %v435 = vmul.f32 %v280, %v429
      %v436 = vmul.f32 %v281, %v431
      %v437 = vmul.f32 %v282, %v429
      %v438 = vmul.f32 %v283, %v431
      %v439 = vmul.f32 %v284, %v429
      %v440 = vmul.f32 %v285, %v431
      %v441 = vmul.f32 %v286, %v429
      %v442 = vld [vmem:[%s1] sm:$0xff]
      %v443 = vld [vmem:[%s1 + $0x8] sm:$0xff]
      %v444 = vld [vmem:[%s1 + $0x10] sm:$0xff]
      %v445 = vld [vmem:[%s1 + $0x18] sm:$0xff]
      %447 = vset.pattern.permute.xlu0 1
      %448 = vperm.xlu0 %447, %v442
      %v449 = vpop.permute.xlu0 %448
      %452 = vset.pattern.permute.xlu0 1
      %453 = vperm.xlu0 %452, %v443
      %v454 = vpop.permute.xlu0 %453
      %457 = vset.pattern.permute.xlu0 1
      %458 = vperm.xlu0 %457, %v444
      %v459 = vpop.permute.xlu0 %458
      %462 = vset.pattern.permute.xlu0 1
      %463 = vperm.xlu0 %462, %v445
      %v464 = vpop.permute.xlu0 %463
      %v466 = vmul.f32 %v434, %v449
      %v467 = vmul.f32 %v435, %v449
      %v468 = vmul.f32 %v436, %v454
      %v469 = vmul.f32 %v437, %v454
      %v470 = vmul.f32 %v438, %v459
      %v471 = vmul.f32 %v439, %v459
      %v472 = vmul.f32 %v440, %v464
      %v473 = vmul.f32 %v441, %v464
      %v474 = vld [vmem:[#allocation2] sm:$0xff]
      %v475 = vld [vmem:[#allocation2 + $0x8] sm:$0xff]
      %v476 = vld [vmem:[#allocation2 + $0x10] sm:$0xff]
      %v477 = vld [vmem:[#allocation2 + $0x18] sm:$0xff]
      %v478 = vld [vmem:[#allocation2 + $0x20] sm:$0xff]
      %v479 = vld [vmem:[#allocation2 + $0x28] sm:$0xff]
      %v480 = vld [vmem:[#allocation2 + $0x30] sm:$0xff]
      %v481 = vld [vmem:[#allocation2 + $0x38] sm:$0xff]
      %490 = vrot.lane.b32.xlu0 %v466, 16
      %v491 = vpop.permute.xlu0 %490
      %492 = vrot.lane.b32.xlu0 %v467, 16
      %v493 = vpop.permute.xlu0 %492
      %494 = vrot.lane.b32.xlu0 %v468, 16
      %v495 = vpop.permute.xlu0 %494
      %496 = vrot.lane.b32.xlu0 %v469, 16
      %v497 = vpop.permute.xlu0 %496
      %498 = vrot.lane.b32.xlu0 %v470, 16
      %v499 = vpop.permute.xlu0 %498
      %500 = vrot.lane.b32.xlu0 %v471, 16
      %v501 = vpop.permute.xlu0 %500
      %502 = vrot.lane.b32.xlu0 %v472, 16
      %v503 = vpop.permute.xlu0 %502
      %504 = vrot.lane.b32.xlu0 %v473, 16
      %v505 = vpop.permute.xlu0 %504
      %vm506 = vcmask 130048
      %v507 = vsel %vm506, %v491, %v493
      %v508 = vsel %vm506, %v495, %v497
      %v509 = vsel %vm506, %v499, %v501
      %v510 = vsel %vm506, %v503, %v505
      %v519 = vadd.f32 %v474, %v491
      %v520 = vadd.f32 %v475, %v507
      %v521 = vadd.f32 %v476, %v495
      %v522 = vadd.f32 %v477, %v508
      %v523 = vadd.f32 %v478, %v499
      %v524 = vadd.f32 %v479, %v509
      %v525 = vadd.f32 %v480, %v503
      %v526 = vadd.f32 %v481, %v510
      %vm527 = vcmask 1047680
      %528 = vst.msk [vmem:[#allocation2] sm:$0xff] %vm527, %v519
      %529 = vst [vmem:[#allocation2 + $0x8] sm:$0xff] %v520
      %530 = vst.msk [vmem:[#allocation2 + $0x10] sm:$0xff] %vm527, %v521
      %531 = vst [vmem:[#allocation2 + $0x18] sm:$0xff] %v522
      %532 = vst.msk [vmem:[#allocation2 + $0x20] sm:$0xff] %vm527, %v523
      %533 = vst [vmem:[#allocation2 + $0x28] sm:$0xff] %v524
      %534 = vst.msk [vmem:[#allocation2 + $0x30] sm:$0xff] %vm527, %v525
      %535 = vst [vmem:[#allocation2 + $0x38] sm:$0xff] %v526
      %s536 = scalar_lea.vmem %s6, 2
      %v537 = vld [vmem:[%s536] ss:$8 sm:$0x3]
      %v539 = vlaneseq
      %v540 = vshrl.u32 %v539, 7
      %v541 = vsub.s32 0, %v540
      %v542 = vrot.slane %v537, %v541
      %v543 = vlaneseq
      %v544 = vshrl.u32 %v543, 7
      %v545 = vsub.s32 1, %v544
      %v546 = vrot.slane %v537, %v545
      %547 = vrot.lane.b32.xlu0 %v542, 113
      %v548 = vpop.permute.xlu0 %547
      %549 = vrot.lane.b32.xlu0 %v546, 113
      %v550 = vpop.permute.xlu0 %549
      %vm551 = vcmask 924672
      %v552 = vsel %vm551, %v548, %v550
      %v555 = vmul.f32 %v279, %v552
      %v556 = vmul.f32 %v280, %v550
      %v557 = vmul.f32 %v281, %v552
      %v558 = vmul.f32 %v282, %v550
      %v559 = vmul.f32 %v283, %v552
      %v560 = vmul.f32 %v284, %v550
      %v561 = vmul.f32 %v285, %v552
      %v562 = vmul.f32 %v286, %v550
      %v563 = vld [vmem:[%s1] sm:$0xff]
      %v564 = vld [vmem:[%s1 + $0x8] sm:$0xff]
      %v565 = vld [vmem:[%s1 + $0x10] sm:$0xff]
      %v566 = vld [vmem:[%s1 + $0x18] sm:$0xff]
      %568 = vset.pattern.permute.xlu0 2
      %569 = vperm.xlu0 %568, %v563
      %v570 = vpop.permute.xlu0 %569
      %573 = vset.pattern.permute.xlu0 2
      %574 = vperm.xlu0 %573, %v564
      %v575 = vpop.permute.xlu0 %574
      %578 = vset.pattern.permute.xlu0 2
      %579 = vperm.xlu0 %578, %v565
      %v580 = vpop.permute.xlu0 %579
      %583 = vset.pattern.permute.xlu0 2
      %584 = vperm.xlu0 %583, %v566
      %v585 = vpop.permute.xlu0 %584
      %v587 = vmul.f32 %v555, %v570
      %v588 = vmul.f32 %v556, %v570
      %v589 = vmul.f32 %v557, %v575
      %v590 = vmul.f32 %v558, %v575
      %v591 = vmul.f32 %v559, %v580
      %v592 = vmul.f32 %v560, %v580
      %v593 = vmul.f32 %v561, %v585
      %v594 = vmul.f32 %v562, %v585
      %v595 = vld [vmem:[#allocation2] sm:$0xff]
      %v596 = vld [vmem:[#allocation2 + $0x8] sm:$0xff]
      %v597 = vld [vmem:[#allocation2 + $0x10] sm:$0xff]
      %v598 = vld [vmem:[#allocation2 + $0x18] sm:$0xff]
      %v599 = vld [vmem:[#allocation2 + $0x20] sm:$0xff]
      %v600 = vld [vmem:[#allocation2 + $0x28] sm:$0xff]
      %v601 = vld [vmem:[#allocation2 + $0x30] sm:$0xff]
      %v602 = vld [vmem:[#allocation2 + $0x38] sm:$0xff]
      %611 = vrot.lane.b32.xlu0 %v587, 15
      %v612 = vpop.permute.xlu0 %611
      %613 = vrot.lane.b32.xlu0 %v588, 15
      %v614 = vpop.permute.xlu0 %613
      %615 = vrot.lane.b32.xlu0 %v589, 15
      %v616 = vpop.permute.xlu0 %615
      %617 = vrot.lane.b32.xlu0 %v590, 15
      %v618 = vpop.permute.xlu0 %617
      %619 = vrot.lane.b32.xlu0 %v591, 15
      %v620 = vpop.permute.xlu0 %619
      %621 = vrot.lane.b32.xlu0 %v592, 15
      %v622 = vpop.permute.xlu0 %621
      %623 = vrot.lane.b32.xlu0 %v593, 15
      %v624 = vpop.permute.xlu0 %623
      %625 = vrot.lane.b32.xlu0 %v594, 15
      %v626 = vpop.permute.xlu0 %625
      %vm627 = vcmask 121856
      %v628 = vsel %vm627, %v612, %v614
      %v629 = vsel %vm627, %v616, %v618
      %v630 = vsel %vm627, %v620, %v622
      %v631 = vsel %vm627, %v624, %v626
      %v640 = vadd.f32 %v595, %v612
      %v641 = vadd.f32 %v596, %v628
      %v642 = vadd.f32 %v597, %v616
      %v643 = vadd.f32 %v598, %v629
      %v644 = vadd.f32 %v599, %v620
      %v645 = vadd.f32 %v600, %v630
      %v646 = vadd.f32 %v601, %v624
      %v647 = vadd.f32 %v602, %v631
      %vm648 = vcmask 1047672
      %649 = vst.msk [vmem:[#allocation2] sm:$0xff] %vm648, %v640
      %650 = vst [vmem:[#allocation2 + $0x8] sm:$0xff] %v641
      %651 = vst.msk [vmem:[#allocation2 + $0x10] sm:$0xff] %vm648, %v642
      %652 = vst [vmem:[#allocation2 + $0x18] sm:$0xff] %v643
      %653 = vst.msk [vmem:[#allocation2 + $0x20] sm:$0xff] %vm648, %v644
      %654 = vst [vmem:[#allocation2 + $0x28] sm:$0xff] %v645
      %655 = vst.msk [vmem:[#allocation2 + $0x30] sm:$0xff] %vm648, %v646
      %656 = vst [vmem:[#allocation2 + $0x38] sm:$0xff] %v647
      %s657 = scalar_lea.vmem %s6, 3
      %v658 = vld [vmem:[%s657] ss:$8 sm:$0x3]
      %v660 = vlaneseq
      %v661 = vshrl.u32 %v660, 7
      %v662 = vsub.s32 0, %v661
      %v663 = vrot.slane %v658, %v662
      %v664 = vlaneseq
      %v665 = vshrl.u32 %v664, 7
      %v666 = vsub.s32 1, %v665
      %v667 = vrot.slane %v658, %v666
      %668 = vrot.lane.b32.xlu0 %v663, 127
      %v669 = vpop.permute.xlu0 %668
      %670 = vrot.lane.b32.xlu0 %v667, 127
      %v671 = vpop.permute.xlu0 %670
      %vm672 = vcmask 1039360
      %v673 = vsel %vm672, %v669, %v671
      %v676 = vmul.f32 %v279, %v673
      %v677 = vmul.f32 %v280, %v671
      %v678 = vmul.f32 %v281, %v673
      %v679 = vmul.f32 %v282, %v671
      %v680 = vmul.f32 %v283, %v673
      %v681 = vmul.f32 %v284, %v671
      %v682 = vmul.f32 %v285, %v673
      %v683 = vmul.f32 %v286, %v671
      %v684 = vld [vmem:[%s1] sm:$0xff]
      %v685 = vld [vmem:[%s1 + $0x8] sm:$0xff]
      %v686 = vld [vmem:[%s1 + $0x10] sm:$0xff]
      %v687 = vld [vmem:[%s1 + $0x18] sm:$0xff]
      %689 = vset.pattern.permute.xlu0 3
      %690 = vperm.xlu0 %689, %v684
      %v691 = vpop.permute.xlu0 %690
      %694 = vset.pattern.permute.xlu0 3
      %695 = vperm.xlu0 %694, %v685
      %v696 = vpop.permute.xlu0 %695
      %699 = vset.pattern.permute.xlu0 3
      %700 = vperm.xlu0 %699, %v686
      %v701 = vpop.permute.xlu0 %700
      %704 = vset.pattern.permute.xlu0 3
      %705 = vperm.xlu0 %704, %v687
      %v706 = vpop.permute.xlu0 %705
      %v708 = vmul.f32 %v676, %v691
      %v709 = vmul.f32 %v677, %v691
      %v710 = vmul.f32 %v678, %v696
      %v711 = vmul.f32 %v679, %v696
      %v712 = vmul.f32 %v680, %v701
      %v713 = vmul.f32 %v681, %v701
      %v714 = vmul.f32 %v682, %v706
      %v715 = vmul.f32 %v683, %v706
      %v716 = vld [vmem:[#allocation2] sm:$0xff]
      %v717 = vld [vmem:[#allocation2 + $0x8] sm:$0xff]
      %v718 = vld [vmem:[#allocation2 + $0x10] sm:$0xff]
      %v719 = vld [vmem:[#allocation2 + $0x18] sm:$0xff]
      %v720 = vld [vmem:[#allocation2 + $0x20] sm:$0xff]
      %v721 = vld [vmem:[#allocation2 + $0x28] sm:$0xff]
      %v722 = vld [vmem:[#allocation2 + $0x30] sm:$0xff]
      %v723 = vld [vmem:[#allocation2 + $0x38] sm:$0xff]
      %732 = vrot.lane.b32.xlu0 %v708, 1
      %v733 = vpop.permute.xlu0 %732
      %734 = vrot.lane.b32.xlu0 %v709, 1
      %v735 = vpop.permute.xlu0 %734
      %736 = vrot.lane.b32.xlu0 %v710, 1
      %v737 = vpop.permute.xlu0 %736
      %738 = vrot.lane.b32.xlu0 %v711, 1
      %v739 = vpop.permute.xlu0 %738
      %740 = vrot.lane.b32.xlu0 %v712, 1
      %v741 = vpop.permute.xlu0 %740
      %742 = vrot.lane.b32.xlu0 %v713, 1
      %v743 = vpop.permute.xlu0 %742
      %744 = vrot.lane.b32.xlu0 %v714, 1
      %v745 = vpop.permute.xlu0 %744
      %746 = vrot.lane.b32.xlu0 %v715, 1
      %v747 = vpop.permute.xlu0 %746
      %vm748 = vcmask 7168
      %v749 = vsel %vm748, %v733, %v735
      %v750 = vsel %vm748, %v737, %v739
      %v751 = vsel %vm748, %v741, %v743
      %v752 = vsel %vm748, %v745, %v747
      %v761 = vadd.f32 %v716, %v733
      %v762 = vadd.f32 %v717, %v749
      %v763 = vadd.f32 %v718, %v737
      %v764 = vadd.f32 %v719, %v750
      %v765 = vadd.f32 %v720, %v741
      %v766 = vadd.f32 %v721, %v751
      %v767 = vadd.f32 %v722, %v745
      %v768 = vadd.f32 %v723, %v752
      %vm769 = vcmask 1047560
      %770 = vst.msk [vmem:[#allocation2] sm:$0xff] %vm769, %v761
      %771 = vst [vmem:[#allocation2 + $0x8] sm:$0xff] %v762
      %772 = vst.msk [vmem:[#allocation2 + $0x10] sm:$0xff] %vm769, %v763
      %773 = vst [vmem:[#allocation2 + $0x18] sm:$0xff] %v764
      %774 = vst.msk [vmem:[#allocation2 + $0x20] sm:$0xff] %vm769, %v765
      %775 = vst [vmem:[#allocation2 + $0x28] sm:$0xff] %v766
      %776 = vst.msk [vmem:[#allocation2 + $0x30] sm:$0xff] %vm769, %v767
      %777 = vst [vmem:[#allocation2 + $0x38] sm:$0xff] %v768
      %s778 = scalar_lea.vmem %s6, 4
      %v779 = vld [vmem:[%s778] ss:$8 sm:$0x3]
      %v781 = vlaneseq
      %v782 = vshrl.u32 %v781, 7
      %v783 = vsub.s32 0, %v782
      %v784 = vrot.slane %v779, %v783
      %v785 = vlaneseq
      %v786 = vshrl.u32 %v785, 7
      %v787 = vsub.s32 1, %v786
      %v788 = vrot.slane %v779, %v787
      %v791 = vmul.f32 %v279, %v784
      %v792 = vmul.f32 %v280, %v788
      %v793 = vmul.f32 %v281, %v784
      %v794 = vmul.f32 %v282, %v788
      %v795 = vmul.f32 %v283, %v784
      %v796 = vmul.f32 %v284, %v788
      %v797 = vmul.f32 %v285, %v784
      %v798 = vmul.f32 %v286, %v788
      %v799 = vld [vmem:[%s1] sm:$0xff]
      %v800 = vld [vmem:[%s1 + $0x8] sm:$0xff]
      %v801 = vld [vmem:[%s1 + $0x10] sm:$0xff]
      %v802 = vld [vmem:[%s1 + $0x18] sm:$0xff]
      %804 = vset.pattern.permute.xlu0 4
      %805 = vperm.xlu0 %804, %v799
      %v806 = vpop.permute.xlu0 %805
      %809 = vset.pattern.permute.xlu0 4
      %810 = vperm.xlu0 %809, %v800
      %v811 = vpop.permute.xlu0 %810
      %814 = vset.pattern.permute.xlu0 4
      %815 = vperm.xlu0 %814, %v801
      %v816 = vpop.permute.xlu0 %815
      %819 = vset.pattern.permute.xlu0 4
      %820 = vperm.xlu0 %819, %v802
      %v821 = vpop.permute.xlu0 %820
      %v823 = vmul.f32 %v791, %v806
      %v824 = vmul.f32 %v792, %v806
      %v825 = vmul.f32 %v793, %v811
      %v826 = vmul.f32 %v794, %v811
      %v827 = vmul.f32 %v795, %v816
      %v828 = vmul.f32 %v796, %v816
      %v829 = vmul.f32 %v797, %v821
      %v830 = vmul.f32 %v798, %v821
      %v831 = vld [vmem:[#allocation2] sm:$0xff]
      %v832 = vld [vmem:[#allocation2 + $0x8] sm:$0xff]
      %v833 = vld [vmem:[#allocation2 + $0x10] sm:$0xff]
      %v834 = vld [vmem:[#allocation2 + $0x18] sm:$0xff]
      %v835 = vld [vmem:[#allocation2 + $0x20] sm:$0xff]
      %v836 = vld [vmem:[#allocation2 + $0x28] sm:$0xff]
      %v837 = vld [vmem:[#allocation2 + $0x30] sm:$0xff]
      %v838 = vld [vmem:[#allocation2 + $0x38] sm:$0xff]
      %v839 = vadd.f32 %v831, %v823
      %v840 = vadd.f32 %v832, %v824
      %v841 = vadd.f32 %v833, %v825
      %v842 = vadd.f32 %v834, %v826
      %v843 = vadd.f32 %v835, %v827
      %v844 = vadd.f32 %v836, %v828
      %v845 = vadd.f32 %v837, %v829
      %v846 = vadd.f32 %v838, %v830
      %847 = vst [vmem:[#allocation2] sm:$0xff] %v839
      %848 = vst [vmem:[#allocation2 + $0x8] sm:$0xff] %v840
      %849 = vst [vmem:[#allocation2 + $0x10] sm:$0xff] %v841
      %850 = vst [vmem:[#allocation2 + $0x18] sm:$0xff] %v842
      %851 = vst [vmem:[#allocation2 + $0x20] sm:$0xff] %v843
      %852 = vst [vmem:[#allocation2 + $0x28] sm:$0xff] %v844
      %853 = vst [vmem:[#allocation2 + $0x30] sm:$0xff] %v845
      %854 = vst [vmem:[#allocation2 + $0x38] sm:$0xff] %v846
      %s855 = scalar_lea.vmem %s6, 5
      %v856 = vld [vmem:[%s855] ss:$8 sm:$0x3]
      %v858 = vlaneseq
      %v859 = vshrl.u32 %v858, 7
      %v860 = vsub.s32 0, %v859
      %v861 = vrot.slane %v856, %v860
      %v862 = vlaneseq
      %v863 = vshrl.u32 %v862, 7
      %v864 = vsub.s32 1, %v863
      %v865 = vrot.slane %v856, %v864
      %866 = vrot.lane.b32.xlu0 %v861, 1
      %v867 = vpop.permute.xlu0 %866
      %868 = vrot.lane.b32.xlu0 %v865, 1
      %v869 = vpop.permute.xlu0 %868
      %v870 = vsel %vm748, %v867, %v869
      %v873 = vmul.f32 %v279, %v867
      %v874 = vmul.f32 %v280, %v870
      %v875 = vmul.f32 %v281, %v867
      %v876 = vmul.f32 %v282, %v870
      %v877 = vmul.f32 %v283, %v867
      %v878 = vmul.f32 %v284, %v870
      %v879 = vmul.f32 %v285, %v867
      %v880 = vmul.f32 %v286, %v870
      %v881 = vld [vmem:[%s1] sm:$0xff]
      %v882 = vld [vmem:[%s1 + $0x8] sm:$0xff]
      %v883 = vld [vmem:[%s1 + $0x10] sm:$0xff]
      %v884 = vld [vmem:[%s1 + $0x18] sm:$0xff]
      %886 = vset.pattern.permute.xlu0 5
      %887 = vperm.xlu0 %886, %v881
      %v888 = vpop.permute.xlu0 %887
      %891 = vset.pattern.permute.xlu0 5
      %892 = vperm.xlu0 %891, %v882
      %v893 = vpop.permute.xlu0 %892
      %896 = vset.pattern.permute.xlu0 5
      %897 = vperm.xlu0 %896, %v883
      %v898 = vpop.permute.xlu0 %897
      %901 = vset.pattern.permute.xlu0 5
      %902 = vperm.xlu0 %901, %v884
      %v903 = vpop.permute.xlu0 %902
      %v905 = vmul.f32 %v873, %v888
      %v906 = vmul.f32 %v874, %v888
      %v907 = vmul.f32 %v875, %v893
      %v908 = vmul.f32 %v876, %v893
      %v909 = vmul.f32 %v877, %v898
      %v910 = vmul.f32 %v878, %v898
      %v911 = vmul.f32 %v879, %v903
      %v912 = vmul.f32 %v880, %v903
      %v913 = vld [vmem:[#allocation2] sm:$0xff]
      %v914 = vld [vmem:[#allocation2 + $0x8] sm:$0xff]
      %v915 = vld [vmem:[#allocation2 + $0x10] sm:$0xff]
      %v916 = vld [vmem:[#allocation2 + $0x18] sm:$0xff]
      %v917 = vld [vmem:[#allocation2 + $0x20] sm:$0xff]
      %v918 = vld [vmem:[#allocation2 + $0x28] sm:$0xff]
      %v919 = vld [vmem:[#allocation2 + $0x30] sm:$0xff]
      %v920 = vld [vmem:[#allocation2 + $0x38] sm:$0xff]
      %929 = vrot.lane.b32.xlu0 %v905, 127
      %v930 = vpop.permute.xlu0 %929
      %931 = vrot.lane.b32.xlu0 %v906, 127
      %v932 = vpop.permute.xlu0 %931
      %933 = vrot.lane.b32.xlu0 %v907, 127
      %v934 = vpop.permute.xlu0 %933
      %935 = vrot.lane.b32.xlu0 %v908, 127
      %v936 = vpop.permute.xlu0 %935
      %937 = vrot.lane.b32.xlu0 %v909, 127
      %v938 = vpop.permute.xlu0 %937
      %939 = vrot.lane.b32.xlu0 %v910, 127
      %v940 = vpop.permute.xlu0 %939
      %941 = vrot.lane.b32.xlu0 %v911, 127
      %v942 = vpop.permute.xlu0 %941
      %943 = vrot.lane.b32.xlu0 %v912, 127
      %v944 = vpop.permute.xlu0 %943
      %v945 = vsel %vm672, %v930, %v932
      %v946 = vsel %vm672, %v934, %v936
      %v947 = vsel %vm672, %v938, %v940
      %v948 = vsel %vm672, %v942, %v944
      %v957 = vadd.f32 %v913, %v945
      %v958 = vadd.f32 %v914, %v932
      %v959 = vadd.f32 %v915, %v946
      %v960 = vadd.f32 %v916, %v936
      %v961 = vadd.f32 %v917, %v947
      %v962 = vadd.f32 %v918, %v940
      %v963 = vadd.f32 %v919, %v948
      %v964 = vadd.f32 %v920, %v944
      %965 = vst [vmem:[#allocation2] sm:$0xff] %v957
      %966 = vst.msk [vmem:[#allocation2 + $0x8] sm:$0xff] %vm672, %v958
      %967 = vst [vmem:[#allocation2 + $0x10] sm:$0xff] %v959
      %968 = vst.msk [vmem:[#allocation2 + $0x18] sm:$0xff] %vm672, %v960
      %969 = vst [vmem:[#allocation2 + $0x20] sm:$0xff] %v961
      %970 = vst.msk [vmem:[#allocation2 + $0x28] sm:$0xff] %vm672, %v962
      %971 = vst [vmem:[#allocation2 + $0x30] sm:$0xff] %v963
      %972 = vst.msk [vmem:[#allocation2 + $0x38] sm:$0xff] %vm672, %v964
      %s973 = scalar_lea.vmem %s6, 6
      %v974 = vld [vmem:[%s973] ss:$8 sm:$0x3]
      %v976 = vlaneseq
      %v977 = vshrl.u32 %v976, 7
      %v978 = vsub.s32 0, %v977
      %v979 = vrot.slane %v974, %v978
      %v980 = vlaneseq
      %v981 = vshrl.u32 %v980, 7
      %v982 = vsub.s32 1, %v981
      %v983 = vrot.slane %v974, %v982
      %984 = vrot.lane.b32.xlu0 %v979, 15
      %v985 = vpop.permute.xlu0 %984
      %986 = vrot.lane.b32.xlu0 %v983, 15
      %v987 = vpop.permute.xlu0 %986
      %v988 = vsel %vm627, %v985, %v987
      %v991 = vmul.f32 %v279, %v985
      %v992 = vmul.f32 %v280, %v988
      %v993 = vmul.f32 %v281, %v985
      %v994 = vmul.f32 %v282, %v988
      %v995 = vmul.f32 %v283, %v985
      %v996 = vmul.f32 %v284, %v988
      %v997 = vmul.f32 %v285, %v985
      %v998 = vmul.f32 %v286, %v988
      %v999 = vld [vmem:[%s1] sm:$0xff]
      %v1000 = vld [vmem:[%s1 + $0x8] sm:$0xff]
      %v1001 = vld [vmem:[%s1 + $0x10] sm:$0xff]
      %v1002 = vld [vmem:[%s1 + $0x18] sm:$0xff]
      %1004 = vset.pattern.permute.xlu0 6
      %1005 = vperm.xlu0 %1004, %v999
      %v1006 = vpop.permute.xlu0 %1005
      %1009 = vset.pattern.permute.xlu0 6
      %1010 = vperm.xlu0 %1009, %v1000
      %v1011 = vpop.permute.xlu0 %1010
      %1014 = vset.pattern.permute.xlu0 6
      %1015 = vperm.xlu0 %1014, %v1001
      %v1016 = vpop.permute.xlu0 %1015
      %1019 = vset.pattern.permute.xlu0 6
      %1020 = vperm.xlu0 %1019, %v1002
      %v1021 = vpop.permute.xlu0 %1020
      %v1023 = vmul.f32 %v991, %v1006
      %v1024 = vmul.f32 %v992, %v1006
      %v1025 = vmul.f32 %v993, %v1011
      %v1026 = vmul.f32 %v994, %v1011
      %v1027 = vmul.f32 %v995, %v1016
      %v1028 = vmul.f32 %v996, %v1016
      %v1029 = vmul.f32 %v997, %v1021
      %v1030 = vmul.f32 %v998, %v1021
      %v1031 = vld [vmem:[#allocation2] sm:$0xff]
      %v1032 = vld [vmem:[#allocation2 + $0x8] sm:$0xff]
      %v1033 = vld [vmem:[#allocation2 + $0x10] sm:$0xff]
      %v1034 = vld [vmem:[#allocation2 + $0x18] sm:$0xff]
      %v1035 = vld [vmem:[#allocation2 + $0x20] sm:$0xff]
      %v1036 = vld [vmem:[#allocation2 + $0x28] sm:$0xff]
      %v1037 = vld [vmem:[#allocation2 + $0x30] sm:$0xff]
      %v1038 = vld [vmem:[#allocation2 + $0x38] sm:$0xff]
      %1047 = vrot.lane.b32.xlu0 %v1023, 113
      %v1048 = vpop.permute.xlu0 %1047
      %1049 = vrot.lane.b32.xlu0 %v1024, 113
      %v1050 = vpop.permute.xlu0 %1049
      %1051 = vrot.lane.b32.xlu0 %v1025, 113
      %v1052 = vpop.permute.xlu0 %1051
      %1053 = vrot.lane.b32.xlu0 %v1026, 113
      %v1054 = vpop.permute.xlu0 %1053
      %1055 = vrot.lane.b32.xlu0 %v1027, 113
      %v1056 = vpop.permute.xlu0 %1055
      %1057 = vrot.lane.b32.xlu0 %v1028, 113
      %v1058 = vpop.permute.xlu0 %1057
      %1059 = vrot.lane.b32.xlu0 %v1029, 113
      %v1060 = vpop.permute.xlu0 %1059
      %1061 = vrot.lane.b32.xlu0 %v1030, 113
      %v1062 = vpop.permute.xlu0 %1061
      %v1063 = vsel %vm551, %v1048, %v1050
      %v1064 = vsel %vm551, %v1052, %v1054
      %v1065 = vsel %vm551, %v1056, %v1058
      %v1066 = vsel %vm551, %v1060, %v1062
      %v1075 = vadd.f32 %v1031, %v1063
      %v1076 = vadd.f32 %v1032, %v1050
      %v1077 = vadd.f32 %v1033, %v1064
      %v1078 = vadd.f32 %v1034, %v1054
      %v1079 = vadd.f32 %v1035, %v1065
      %v1080 = vadd.f32 %v1036, %v1058
      %v1081 = vadd.f32 %v1037, %v1066
      %v1082 = vadd.f32 %v1038, %v1062
      %1083 = vst [vmem:[#allocation2] sm:$0xff] %v1075
      %1084 = vst.msk [vmem:[#allocation2 + $0x8] sm:$0xff] %vm551, %v1076
      %1085 = vst [vmem:[#allocation2 + $0x10] sm:$0xff] %v1077
      %1086 = vst.msk [vmem:[#allocation2 + $0x18] sm:$0xff] %vm551, %v1078
      %1087 = vst [vmem:[#allocation2 + $0x20] sm:$0xff] %v1079
      %1088 = vst.msk [vmem:[#allocation2 + $0x28] sm:$0xff] %vm551, %v1080
      %1089 = vst [vmem:[#allocation2 + $0x30] sm:$0xff] %v1081
      %1090 = vst.msk [vmem:[#allocation2 + $0x38] sm:$0xff] %vm551, %v1082
      %s1091 = scalar_lea.vmem %s6, 7
      %v1092 = vld [vmem:[%s1091] ss:$8 sm:$0x3]
      %v1094 = vlaneseq
      %v1095 = vshrl.u32 %v1094, 7
      %v1096 = vsub.s32 0, %v1095
      %v1097 = vrot.slane %v1092, %v1096
      %v1098 = vlaneseq
      %v1099 = vshrl.u32 %v1098, 7
      %v1100 = vsub.s32 1, %v1099
      %v1101 = vrot.slane %v1092, %v1100
      %1102 = vrot.lane.b32.xlu0 %v1097, 16
      %v1103 = vpop.permute.xlu0 %1102
      %1104 = vrot.lane.b32.xlu0 %v1101, 16
      %v1105 = vpop.permute.xlu0 %1104
      %v1106 = vsel %vm506, %v1103, %v1105
      %v1109 = vmul.f32 %v279, %v1103
      %v1110 = vmul.f32 %v280, %v1106
      %v1111 = vmul.f32 %v281, %v1103
      %v1112 = vmul.f32 %v282, %v1106
      %v1113 = vmul.f32 %v283, %v1103
      %v1114 = vmul.f32 %v284, %v1106
      %v1115 = vmul.f32 %v285, %v1103
      %v1116 = vmul.f32 %v286, %v1106
      %v1117 = vld [vmem:[%s1] sm:$0xff]
      %v1118 = vld [vmem:[%s1 + $0x8] sm:$0xff]
      %v1119 = vld [vmem:[%s1 + $0x10] sm:$0xff]
      %v1120 = vld [vmem:[%s1 + $0x18] sm:$0xff]
      %1122 = vset.pattern.permute.xlu0 7
      %1123 = vperm.xlu0 %1122, %v1117
      %v1124 = vpop.permute.xlu0 %1123
      %1127 = vset.pattern.permute.xlu0 7
      %1128 = vperm.xlu0 %1127, %v1118
      %v1129 = vpop.permute.xlu0 %1128
      %1132 = vset.pattern.permute.xlu0 7
      %1133 = vperm.xlu0 %1132, %v1119
      %v1134 = vpop.permute.xlu0 %1133
      %1137 = vset.pattern.permute.xlu0 7
      %1138 = vperm.xlu0 %1137, %v1120
      %v1139 = vpop.permute.xlu0 %1138
      %v1141 = vmul.f32 %v1109, %v1124
      %v1142 = vmul.f32 %v1110, %v1124
      %v1143 = vmul.f32 %v1111, %v1129
      %v1144 = vmul.f32 %v1112, %v1129
      %v1145 = vmul.f32 %v1113, %v1134
      %v1146 = vmul.f32 %v1114, %v1134
      %v1147 = vmul.f32 %v1115, %v1139
      %v1148 = vmul.f32 %v1116, %v1139
      %v1149 = vld [vmem:[#allocation2] sm:$0xff]
      %v1150 = vld [vmem:[#allocation2 + $0x8] sm:$0xff]
      %v1151 = vld [vmem:[#allocation2 + $0x10] sm:$0xff]
      %v1152 = vld [vmem:[#allocation2 + $0x18] sm:$0xff]
      %v1153 = vld [vmem:[#allocation2 + $0x20] sm:$0xff]
      %v1154 = vld [vmem:[#allocation2 + $0x28] sm:$0xff]
      %v1155 = vld [vmem:[#allocation2 + $0x30] sm:$0xff]
      %v1156 = vld [vmem:[#allocation2 + $0x38] sm:$0xff]
      %1165 = vrot.lane.b32.xlu0 %v1141, 112
      %v1166 = vpop.permute.xlu0 %1165
      %1167 = vrot.lane.b32.xlu0 %v1142, 112
      %v1168 = vpop.permute.xlu0 %1167
      %1169 = vrot.lane.b32.xlu0 %v1143, 112
      %v1170 = vpop.permute.xlu0 %1169
      %1171 = vrot.lane.b32.xlu0 %v1144, 112
      %v1172 = vpop.permute.xlu0 %1171
      %1173 = vrot.lane.b32.xlu0 %v1145, 112
      %v1174 = vpop.permute.xlu0 %1173
      %1175 = vrot.lane.b32.xlu0 %v1146, 112
      %v1176 = vpop.permute.xlu0 %1175
      %1177 = vrot.lane.b32.xlu0 %v1147, 112
      %v1178 = vpop.permute.xlu0 %1177
      %1179 = vrot.lane.b32.xlu0 %v1148, 112
      %v1180 = vpop.permute.xlu0 %1179
      %v1181 = vsel %vm430, %v1166, %v1168
      %v1182 = vsel %vm430, %v1170, %v1172
      %v1183 = vsel %vm430, %v1174, %v1176
      %v1184 = vsel %vm430, %v1178, %v1180
      %v1193 = vadd.f32 %v1149, %v1181
      %v1194 = vadd.f32 %v1150, %v1168
      %v1195 = vadd.f32 %v1151, %v1182
      %v1196 = vadd.f32 %v1152, %v1172
      %v1197 = vadd.f32 %v1153, %v1183
      %v1198 = vadd.f32 %v1154, %v1176
      %v1199 = vadd.f32 %v1155, %v1184
      %v1200 = vadd.f32 %v1156, %v1180
      %1201 = vst [vmem:[#allocation2] sm:$0xff] %v1193
      %1202 = vst.msk [vmem:[#allocation2 + $0x8] sm:$0xff] %vm430, %v1194
      %1203 = vst [vmem:[#allocation2 + $0x10] sm:$0xff] %v1195
      %1204 = vst.msk [vmem:[#allocation2 + $0x18] sm:$0xff] %vm430, %v1196
      %1205 = vst [vmem:[#allocation2 + $0x20] sm:$0xff] %v1197
      %1206 = vst.msk [vmem:[#allocation2 + $0x28] sm:$0xff] %vm430, %v1198
      %1207 = vst [vmem:[#allocation2 + $0x30] sm:$0xff] %v1199
      %1208 = vst.msk [vmem:[#allocation2 + $0x38] sm:$0xff] %vm430, %v1200
      %s1209 = scalar_lea.vmem %s6, 16
      %v1210 = vld [vmem:[%s1209] ss:$8 sm:$0x3]
      %v1212 = vlaneseq
      %v1213 = vshrl.u32 %v1212, 7
      %v1214 = vsub.s32 0, %v1213
      %v1215 = vrot.slane %v1210, %v1214
      %v1216 = vlaneseq
      %v1217 = vshrl.u32 %v1216, 7
      %v1218 = vsub.s32 1, %v1217
      %v1219 = vrot.slane %v1210, %v1218
      %1220 = vrot.lane.b32.xlu0 %v1215, 17
      %v1221 = vpop.permute.xlu0 %1220
      %1222 = vrot.lane.b32.xlu0 %v1219, 17
      %v1223 = vpop.permute.xlu0 %1222
      %v1224 = vsel %vm385, %v1221, %v1223
      %v1227 = vmul.f32 %v279, %v1221
      %v1228 = vmul.f32 %v280, %v1224
      %v1229 = vmul.f32 %v281, %v1221
      %v1230 = vmul.f32 %v282, %v1224
      %v1231 = vmul.f32 %v283, %v1221
      %v1232 = vmul.f32 %v284, %v1224
      %v1233 = vmul.f32 %v285, %v1221
      %v1234 = vmul.f32 %v286, %v1224
      %v1235 = vld [vmem:[%s1] sm:$0xff]
      %v1236 = vld [vmem:[%s1 + $0x8] sm:$0xff]
      %v1237 = vld [vmem:[%s1 + $0x10] sm:$0xff]
      %v1238 = vld [vmem:[%s1 + $0x18] sm:$0xff]
      %1240 = vset.pattern.permute.xlu0 8
      %1241 = vperm.xlu0 %1240, %v1235
      %v1242 = vpop.permute.xlu0 %1241
      %1245 = vset.pattern.permute.xlu0 8
      %1246 = vperm.xlu0 %1245, %v1236
      %v1247 = vpop.permute.xlu0 %1246
      %1250 = vset.pattern.permute.xlu0 8
      %1251 = vperm.xlu0 %1250, %v1237
      %v1252 = vpop.permute.xlu0 %1251
      %1255 = vset.pattern.permute.xlu0 8
      %1256 = vperm.xlu0 %1255, %v1238
      %v1257 = vpop.permute.xlu0 %1256
      %v1259 = vmul.f32 %v1227, %v1242
      %v1260 = vmul.f32 %v1228, %v1242
      %v1261 = vmul.f32 %v1229, %v1247
      %v1262 = vmul.f32 %v1230, %v1247
      %v1263 = vmul.f32 %v1231, %v1252
      %v1264 = vmul.f32 %v1232, %v1252
      %v1265 = vmul.f32 %v1233, %v1257
      %v1266 = vmul.f32 %v1234, %v1257
      %v1267 = vld [vmem:[#allocation2] sm:$0xff]
      %v1268 = vld [vmem:[#allocation2 + $0x8] sm:$0xff]
      %v1269 = vld [vmem:[#allocation2 + $0x10] sm:$0xff]
      %v1270 = vld [vmem:[#allocation2 + $0x18] sm:$0xff]
      %v1271 = vld [vmem:[#allocation2 + $0x20] sm:$0xff]
      %v1272 = vld [vmem:[#allocation2 + $0x28] sm:$0xff]
      %v1273 = vld [vmem:[#allocation2 + $0x30] sm:$0xff]
      %v1274 = vld [vmem:[#allocation2 + $0x38] sm:$0xff]
      %1283 = vrot.lane.b32.xlu0 %v1259, 111
      %v1284 = vpop.permute.xlu0 %1283
      %1285 = vrot.lane.b32.xlu0 %v1260, 111
      %v1286 = vpop.permute.xlu0 %1285
      %1287 = vrot.lane.b32.xlu0 %v1261, 111
      %v1288 = vpop.permute.xlu0 %1287
      %1289 = vrot.lane.b32.xlu0 %v1262, 111
      %v1290 = vpop.permute.xlu0 %1289
      %1291 = vrot.lane.b32.xlu0 %v1263, 111
      %v1292 = vpop.permute.xlu0 %1291
      %1293 = vrot.lane.b32.xlu0 %v1264, 111
      %v1294 = vpop.permute.xlu0 %1293
      %1295 = vrot.lane.b32.xlu0 %v1265, 111
      %v1296 = vpop.permute.xlu0 %1295
      %1297 = vrot.lane.b32.xlu0 %v1266, 111
      %v1298 = vpop.permute.xlu0 %1297
      %v1299 = vsel %vm309, %v1284, %v1286
      %v1300 = vsel %vm309, %v1288, %v1290
      %v1301 = vsel %vm309, %v1292, %v1294
      %v1302 = vsel %vm309, %v1296, %v1298
      %v1311 = vadd.f32 %v1267, %v1299
      %v1312 = vadd.f32 %v1268, %v1286
      %v1313 = vadd.f32 %v1269, %v1300
      %v1314 = vadd.f32 %v1270, %v1290
      %v1315 = vadd.f32 %v1271, %v1301
      %v1316 = vadd.f32 %v1272, %v1294
      %v1317 = vadd.f32 %v1273, %v1302
      %v1318 = vadd.f32 %v1274, %v1298
      %1319 = vst [vmem:[#allocation2] sm:$0xff] %v1311
      %1320 = vst.msk [vmem:[#allocation2 + $0x8] sm:$0xff] %vm309, %v1312
      %1321 = vst [vmem:[#allocation2 + $0x10] sm:$0xff] %v1313
      %1322 = vst.msk [vmem:[#allocation2 + $0x18] sm:$0xff] %vm309, %v1314
      %1323 = vst [vmem:[#allocation2 + $0x20] sm:$0xff] %v1315
      %1324 = vst.msk [vmem:[#allocation2 + $0x28] sm:$0xff] %vm309, %v1316
      %1325 = vst [vmem:[#allocation2 + $0x30] sm:$0xff] %v1317
      %1326 = vst.msk [vmem:[#allocation2 + $0x38] sm:$0xff] %vm309, %v1318
      %v1327 = vld [vmem:[#allocation2] sm:$0xff]
      %v1328 = vld [vmem:[#allocation2 + $0x8] sm:$0xff]
      %v1329 = vld [vmem:[#allocation2 + $0x10] sm:$0xff]
      %v1330 = vld [vmem:[#allocation2 + $0x18] sm:$0xff]
      %v1331 = vld [vmem:[#allocation2 + $0x20] sm:$0xff]
      %v1332 = vld [vmem:[#allocation2 + $0x28] sm:$0xff]
      %v1333 = vld [vmem:[#allocation2 + $0x30] sm:$0xff]
      %v1334 = vld [vmem:[#allocation2 + $0x38] sm:$0xff]
      %v1335 = vld [vmem:[%s2] sm:$0xff]
      %v1336 = vld [vmem:[%s2 + $0x8] sm:$0xff]
      %v1337 = vld [vmem:[%s2 + $0x10] sm:$0xff]
      %v1338 = vld [vmem:[%s2 + $0x18] sm:$0xff]
      %1340 = vset.pattern.permute.xlu0 0
      %1341 = vperm.xlu0 %1340, %v1335
      %v1342 = vpop.permute.xlu0 %1341
      %1345 = vset.pattern.permute.xlu0 0
      %1346 = vperm.xlu0 %1345, %v1336
      %v1347 = vpop.permute.xlu0 %1346
      %1350 = vset.pattern.permute.xlu0 0
      %1351 = vperm.xlu0 %1350, %v1337
      %v1352 = vpop.permute.xlu0 %1351
      %1355 = vset.pattern.permute.xlu0 0
      %1356 = vperm.xlu0 %1355, %v1338
      %v1357 = vpop.permute.xlu0 %1356
      %v1359 = vadd.f32 %v1327, %v1342
      %v1360 = vadd.f32 %v1328, %v1342
      %v1361 = vadd.f32 %v1329, %v1347
      %v1362 = vadd.f32 %v1330, %v1347
      %v1363 = vadd.f32 %v1331, %v1352
      %v1364 = vadd.f32 %v1332, %v1352
      %v1365 = vadd.f32 %v1333, %v1357
      %v1366 = vadd.f32 %v1334, %v1357
      %v1367 = vadd.f32 %v1359, %v1361
      %v1368 = vadd.f32 %v1367, %v1363
      %v1369 = vadd.f32 %v1368, %v1365
      %v1370 = vrot.slane %v1369, 4
      %v1371 = vadd.f32 %v1369, %v1370
      %v1372 = vrot.slane %v1371, 2
      %v1373 = vadd.f32 %v1371, %v1372
      %v1374 = vrot.slane %v1373, 1
      %v1375 = vadd.f32 %v1373, %v1374
      %v1376 = vadd.f32 %v1360, %v1362
      %v1377 = vadd.f32 %v1376, %v1364
      %v1378 = vadd.f32 %v1377, %v1366
      %v1379 = vrot.slane %v1378, 4
      %v1380 = vadd.f32 %v1378, %v1379
      %v1381 = vrot.slane %v1380, 2
      %v1382 = vadd.f32 %v1380, %v1381
      %v1383 = vrot.slane %v1382, 1
      %v1384 = vadd.f32 %v1382, %v1383
      %v1385 = vrcp.pop 32.0
      %v1386 = vmul.f32 %v1375, %v1385
      %v1387 = vmul.f32 %v1384, %v1385
      %v1388 = vsub.f32 %v1359, %v1386
      %v1389 = vsub.f32 %v1360, %v1387
      %v1390 = vsub.f32 %v1361, %v1386
      %v1391 = vsub.f32 %v1362, %v1387
      %v1392 = vsub.f32 %v1363, %v1386
      %v1393 = vsub.f32 %v1364, %v1387
      %v1394 = vsub.f32 %v1365, %v1386
      %v1395 = vsub.f32 %v1366, %v1387
      %v1396 = vmul.f32 %v1388, %v1388
      %v1397 = vmul.f32 %v1389, %v1389
      %v1398 = vmul.f32 %v1390, %v1390
      %v1399 = vmul.f32 %v1391, %v1391
      %v1400 = vmul.f32 %v1392, %v1392
      %v1401 = vmul.f32 %v1393, %v1393
      %v1402 = vmul.f32 %v1394, %v1394
      %v1403 = vmul.f32 %v1395, %v1395
      %v1404 = vadd.f32 %v1396, %v1398
      %v1405 = vadd.f32 %v1404, %v1400
      %v1406 = vadd.f32 %v1405, %v1402
      %v1407 = vrot.slane %v1406, 4
      %v1408 = vadd.f32 %v1406, %v1407
      %v1409 = vrot.slane %v1408, 2
      %v1410 = vadd.f32 %v1408, %v1409
      %v1411 = vrot.slane %v1410, 1
      %v1412 = vadd.f32 %v1410, %v1411
      %v1413 = vadd.f32 %v1397, %v1399
      %v1414 = vadd.f32 %v1413, %v1401
      %v1415 = vadd.f32 %v1414, %v1403
      %v1416 = vrot.slane %v1415, 4
      %v1417 = vadd.f32 %v1415, %v1416
      %v1418 = vrot.slane %v1417, 2
      %v1419 = vadd.f32 %v1417, %v1418
      %v1420 = vrot.slane %v1419, 1
      %v1421 = vadd.f32 %v1419, %v1420
      %v1422 = vmul.f32 %v1412, %v1385
      %v1423 = vmul.f32 %v1421, %v1385
      %v1424 = vadd.f32 %v1422, 1e-05
      %v1425 = vadd.f32 %v1423, 1e-05
      %v1426 = vrsqrt.pop %v1424
      %v1427 = vrsqrt.pop %v1425
      %v1428 = vmul.f32 %v1388, %v1426
      %v1429 = vmul.f32 %v1389, %v1427
      %v1430 = vmul.f32 %v1390, %v1426
      %v1431 = vmul.f32 %v1391, %v1427
      %v1432 = vmul.f32 %v1392, %v1426
      %v1433 = vmul.f32 %v1393, %v1427
      %v1434 = vmul.f32 %v1394, %v1426
      %v1435 = vmul.f32 %v1395, %v1427
      %v1436 = vld [vmem:[%s3] sm:$0xff]
      %v1437 = vld [vmem:[%s3 + $0x8] sm:$0xff]
      %v1438 = vld [vmem:[%s3 + $0x10] sm:$0xff]
      %v1439 = vld [vmem:[%s3 + $0x18] sm:$0xff]
      %1441 = vset.pattern.permute.xlu0 0
      %1442 = vperm.xlu0 %1441, %v1436
      %v1443 = vpop.permute.xlu0 %1442
      %1446 = vset.pattern.permute.xlu0 0
      %1447 = vperm.xlu0 %1446, %v1437
      %v1448 = vpop.permute.xlu0 %1447
      %1451 = vset.pattern.permute.xlu0 0
      %1452 = vperm.xlu0 %1451, %v1438
      %v1453 = vpop.permute.xlu0 %1452
      %1456 = vset.pattern.permute.xlu0 0
      %1457 = vperm.xlu0 %1456, %v1439
      %v1458 = vpop.permute.xlu0 %1457
      %v1460 = vmul.f32 %v1428, %v1443
      %v1461 = vmul.f32 %v1429, %v1443
      %v1462 = vmul.f32 %v1430, %v1448
      %v1463 = vmul.f32 %v1431, %v1448
      %v1464 = vmul.f32 %v1432, %v1453
      %v1465 = vmul.f32 %v1433, %v1453
      %v1466 = vmul.f32 %v1434, %v1458
      %v1467 = vmul.f32 %v1435, %v1458
      %v1468 = vld [vmem:[%s4] sm:$0xff]
      %v1469 = vld [vmem:[%s4 + $0x8] sm:$0xff]
      %v1470 = vld [vmem:[%s4 + $0x10] sm:$0xff]
      %v1471 = vld [vmem:[%s4 + $0x18] sm:$0xff]
      %1473 = vset.pattern.permute.xlu0 0
      %1474 = vperm.xlu0 %1473, %v1468
      %v1475 = vpop.permute.xlu0 %1474
      %1478 = vset.pattern.permute.xlu0 0
      %1479 = vperm.xlu0 %1478, %v1469
      %v1480 = vpop.permute.xlu0 %1479
      %1483 = vset.pattern.permute.xlu0 0
      %1484 = vperm.xlu0 %1483, %v1470
      %v1485 = vpop.permute.xlu0 %1484
      %1488 = vset.pattern.permute.xlu0 0
      %1489 = vperm.xlu0 %1488, %v1471
      %v1490 = vpop.permute.xlu0 %1489
      %v1492 = vadd.f32 %v1460, %v1475
      %v1493 = vadd.f32 %v1461, %v1475
      %v1494 = vadd.f32 %v1462, %v1480
      %v1495 = vadd.f32 %v1463, %v1480
      %v1496 = vadd.f32 %v1464, %v1485
      %v1497 = vadd.f32 %v1465, %v1485
      %v1498 = vadd.f32 %v1466, %v1490
      %v1499 = vadd.f32 %v1467, %v1490
      %v1500 = vmul.f32 %v1492, 0.5
      %v1501 = vmul.f32 %v1493, 0.5
      %v1502 = vmul.f32 %v1494, 0.5
      %v1503 = vmul.f32 %v1495, 0.5
      %v1504 = vmul.f32 %v1496, 0.5
      %v1505 = vmul.f32 %v1497, 0.5
      %v1506 = vmul.f32 %v1498, 0.5
      %v1507 = vmul.f32 %v1499, 0.5
      %v1508 = vmul.f32 %v1492, 0.70710677
      %v1509 = vmul.f32 %v1493, 0.70710677
      %v1510 = vmul.f32 %v1494, 0.70710677
      %v1511 = vmul.f32 %v1495, 0.70710677
      %v1512 = vmul.f32 %v1496, 0.70710677
      %v1513 = vmul.f32 %v1497, 0.70710677
      %v1514 = vmul.f32 %v1498, 0.70710677
      %v1515 = vmul.f32 %v1499, 0.70710677
      %vm1516 = vcmp.lt.f32.partialorder %v1508, 0.0
      %vm1517 = vcmp.lt.f32.partialorder %v1509, 0.0
      %vm1518 = vcmp.lt.f32.partialorder %v1510, 0.0
      %vm1519 = vcmp.lt.f32.partialorder %v1511, 0.0
      %vm1520 = vcmp.lt.f32.partialorder %v1512, 0.0
      %vm1521 = vcmp.lt.f32.partialorder %v1513, 0.0
      %vm1522 = vcmp.lt.f32.partialorder %v1514, 0.0
      %vm1523 = vcmp.lt.f32.partialorder %v1515, 0.0
      %v1524 = vsel %vm1516, -1.0, 1.0
      %v1525 = vsel %vm1517, -1.0, 1.0
      %v1526 = vsel %vm1518, -1.0, 1.0
      %v1527 = vsel %vm1519, -1.0, 1.0
      %v1528 = vsel %vm1520, -1.0, 1.0
      %v1529 = vsel %vm1521, -1.0, 1.0
      %v1530 = vsel %vm1522, -1.0, 1.0
      %v1531 = vsel %vm1523, -1.0, 1.0
      %v1532 = vand.u32 2147483647, %v1508
      %v1533 = vand.u32 2147483647, %v1509
      %v1534 = vand.u32 2147483647, %v1510
      %v1535 = vand.u32 2147483647, %v1511
      %v1536 = vand.u32 2147483647, %v1512
      %v1537 = vand.u32 2147483647, %v1513
      %v1538 = vand.u32 2147483647, %v1514
      %v1539 = vand.u32 2147483647, %v1515
      %v1540 = vmul.f32 %v1532, 0.3275911
      %v1541 = vmul.f32 %v1533, 0.3275911
      %v1542 = vmul.f32 %v1534, 0.3275911
      %v1543 = vmul.f32 %v1535, 0.3275911
      %v1544 = vmul.f32 %v1536, 0.3275911
      %v1545 = vmul.f32 %v1537, 0.3275911
      %v1546 = vmul.f32 %v1538, 0.3275911
      %v1547 = vmul.f32 %v1539, 0.3275911
      %v1548 = vadd.f32 %v1540, 1.0
      %v1549 = vadd.f32 %v1541, 1.0
      %v1550 = vadd.f32 %v1542, 1.0
      %v1551 = vadd.f32 %v1543, 1.0
      %v1552 = vadd.f32 %v1544, 1.0
      %v1553 = vadd.f32 %v1545, 1.0
      %v1554 = vadd.f32 %v1546, 1.0
      %v1555 = vadd.f32 %v1547, 1.0
      %v1556 = vrcp.pop %v1548
      %v1557 = vmul.f32 1.0, %v1556
      %v1558 = vrcp.pop %v1549
      %v1559 = vmul.f32 1.0, %v1558
      %v1560 = vrcp.pop %v1550
      %v1561 = vmul.f32 1.0, %v1560
      %v1562 = vrcp.pop %v1551
      %v1563 = vmul.f32 1.0, %v1562
      %v1564 = vrcp.pop %v1552
      %v1565 = vmul.f32 1.0, %v1564
      %v1566 = vrcp.pop %v1553
      %v1567 = vmul.f32 1.0, %v1566
      %v1568 = vrcp.pop %v1554
      %v1569 = vmul.f32 1.0, %v1568
      %v1570 = vrcp.pop %v1555
      %v1571 = vmul.f32 1.0, %v1570
      %v1572 = vmul.f32 %v1557, 1.0614054
      %v1573 = vmul.f32 %v1559, 1.0614054
      %v1574 = vmul.f32 %v1561, 1.0614054
      %v1575 = vmul.f32 %v1563, 1.0614054
      %v1576 = vmul.f32 %v1565, 1.0614054
      %v1577 = vmul.f32 %v1567, 1.0614054
      %v1578 = vmul.f32 %v1569, 1.0614054
      %v1579 = vmul.f32 %v1571, 1.0614054
      %v1580 = vadd.f32 %v1572, -1.4531521
      %v1581 = vadd.f32 %v1573, -1.4531521
      %v1582 = vadd.f32 %v1574, -1.4531521
      %v1583 = vadd.f32 %v1575, -1.4531521
      %v1584 = vadd.f32 %v1576, -1.4531521
      %v1585 = vadd.f32 %v1577, -1.4531521
      %v1586 = vadd.f32 %v1578, -1.4531521
      %v1587 = vadd.f32 %v1579, -1.4531521
      %v1588 = vmul.f32 %v1580, %v1557
      %v1589 = vmul.f32 %v1581, %v1559
      %v1590 = vmul.f32 %v1582, %v1561
      %v1591 = vmul.f32 %v1583, %v1563
      %v1592 = vmul.f32 %v1584, %v1565
      %v1593 = vmul.f32 %v1585, %v1567
      %v1594 = vmul.f32 %v1586, %v1569
      %v1595 = vmul.f32 %v1587, %v1571
      %v1596 = vadd.f32 %v1588, 1.4214138
      %v1597 = vadd.f32 %v1589, 1.4214138
      %v1598 = vadd.f32 %v1590, 1.4214138
      %v1599 = vadd.f32 %v1591, 1.4214138
      %v1600 = vadd.f32 %v1592, 1.4214138
      %v1601 = vadd.f32 %v1593, 1.4214138
      %v1602 = vadd.f32 %v1594, 1.4214138
      %v1603 = vadd.f32 %v1595, 1.4214138
      %v1604 = vmul.f32 %v1596, %v1557
      %v1605 = vmul.f32 %v1597, %v1559
      %v1606 = vmul.f32 %v1598, %v1561
      %v1607 = vmul.f32 %v1599, %v1563
      %v1608 = vmul.f32 %v1600, %v1565
      %v1609 = vmul.f32 %v1601, %v1567
      %v1610 = vmul.f32 %v1602, %v1569
      %v1611 = vmul.f32 %v1603, %v1571
      %v1612 = vadd.f32 %v1604, -0.28449672
      %v1613 = vadd.f32 %v1605, -0.28449672
      %v1614 = vadd.f32 %v1606, -0.28449672
      %v1615 = vadd.f32 %v1607, -0.28449672
      %v1616 = vadd.f32 %v1608, -0.28449672
      %v1617 = vadd.f32 %v1609, -0.28449672
      %v1618 = vadd.f32 %v1610, -0.28449672
      %v1619 = vadd.f32 %v1611, -0.28449672
      %v1620 = vmul.f32 %v1612, %v1557
      %v1621 = vmul.f32 %v1613, %v1559
      %v1622 = vmul.f32 %v1614, %v1561
      %v1623 = vmul.f32 %v1615, %v1563
      %v1624 = vmul.f32 %v1616, %v1565
      %v1625 = vmul.f32 %v1617, %v1567
      %v1626 = vmul.f32 %v1618, %v1569
      %v1627 = vmul.f32 %v1619, %v1571
      %v1628 = vadd.f32 %v1620, 0.2548296
      %v1629 = vadd.f32 %v1621, 0.2548296
      %v1630 = vadd.f32 %v1622, 0.2548296
      %v1631 = vadd.f32 %v1623, 0.2548296
      %v1632 = vadd.f32 %v1624, 0.2548296
      %v1633 = vadd.f32 %v1625, 0.2548296
      %v1634 = vadd.f32 %v1626, 0.2548296
      %v1635 = vadd.f32 %v1627, 0.2548296
      %v1636 = vmul.f32 %v1628, %v1557
      %v1637 = vmul.f32 %v1629, %v1559
      %v1638 = vmul.f32 %v1630, %v1561
      %v1639 = vmul.f32 %v1631, %v1563
      %v1640 = vmul.f32 %v1632, %v1565
      %v1641 = vmul.f32 %v1633, %v1567
      %v1642 = vmul.f32 %v1634, %v1569
      %v1643 = vmul.f32 %v1635, %v1571
      %v1644 = vsub.f32 0.0, %v1532
      %v1645 = vsub.f32 0.0, %v1533
      %v1646 = vsub.f32 0.0, %v1534
      %v1647 = vsub.f32 0.0, %v1535
      %v1648 = vsub.f32 0.0, %v1536
      %v1649 = vsub.f32 0.0, %v1537
      %v1650 = vsub.f32 0.0, %v1538
      %v1651 = vsub.f32 0.0, %v1539
      %v1652 = vmul.f32 %v1644, %v1532
      %v1653 = vmul.f32 %v1645, %v1533
      %v1654 = vmul.f32 %v1646, %v1534
      %v1655 = vmul.f32 %v1647, %v1535
      %v1656 = vmul.f32 %v1648, %v1536
      %v1657 = vmul.f32 %v1649, %v1537
      %v1658 = vmul.f32 %v1650, %v1538
      %v1659 = vmul.f32 %v1651, %v1539
      %v1660 = vmul.f32 %v1652, 1.442695
      %v1661 = vpow.pop %v1660
      %v1662 = vmul.f32 %v1653, 1.442695
      %v1663 = vpow.pop %v1662
      %v1664 = vmul.f32 %v1654, 1.442695
      %v1665 = vpow.pop %v1664
      %v1666 = vmul.f32 %v1655, 1.442695
      %v1667 = vpow.pop %v1666
      %v1668 = vmul.f32 %v1656, 1.442695
      %v1669 = vpow.pop %v1668
      %v1670 = vmul.f32 %v1657, 1.442695
      %v1671 = vpow.pop %v1670
      %v1672 = vmul.f32 %v1658, 1.442695
      %v1673 = vpow.pop %v1672
      %v1674 = vmul.f32 %v1659, 1.442695
      %v1675 = vpow.pop %v1674
      %v1676 = vmul.f32 %v1636, %v1661
      %v1677 = vmul.f32 %v1637, %v1663
      %v1678 = vmul.f32 %v1638, %v1665
      %v1679 = vmul.f32 %v1639, %v1667
      %v1680 = vmul.f32 %v1640, %v1669
      %v1681 = vmul.f32 %v1641, %v1671
      %v1682 = vmul.f32 %v1642, %v1673
      %v1683 = vmul.f32 %v1643, %v1675
      %v1684 = vsub.f32 1.0, %v1676
      %v1685 = vsub.f32 1.0, %v1677
      %v1686 = vsub.f32 1.0, %v1678
      %v1687 = vsub.f32 1.0, %v1679
      %v1688 = vsub.f32 1.0, %v1680
      %v1689 = vsub.f32 1.0, %v1681
      %v1690 = vsub.f32 1.0, %v1682
      %v1691 = vsub.f32 1.0, %v1683
      %v1692 = vmul.f32 %v1524, %v1684
      %v1693 = vmul.f32 %v1525, %v1685
      %v1694 = vmul.f32 %v1526, %v1686
      %v1695 = vmul.f32 %v1527, %v1687
      %v1696 = vmul.f32 %v1528, %v1688
      %v1697 = vmul.f32 %v1529, %v1689
      %v1698 = vmul.f32 %v1530, %v1690
      %v1699 = vmul.f32 %v1531, %v1691
      %v1700 = vadd.f32 %v1692, 1.0
      %v1701 = vadd.f32 %v1693, 1.0
      %v1702 = vadd.f32 %v1694, 1.0
      %v1703 = vadd.f32 %v1695, 1.0
      %v1704 = vadd.f32 %v1696, 1.0
      %v1705 = vadd.f32 %v1697, 1.0
      %v1706 = vadd.f32 %v1698, 1.0
      %v1707 = vadd.f32 %v1699, 1.0
      %v1708 = vmul.f32 %v1500, %v1700
      %v1709 = vmul.f32 %v1501, %v1701
      %v1710 = vmul.f32 %v1502, %v1702
      %v1711 = vmul.f32 %v1503, %v1703
      %v1712 = vmul.f32 %v1504, %v1704
      %v1713 = vmul.f32 %v1505, %v1705
      %v1714 = vmul.f32 %v1506, %v1706
      %v1715 = vmul.f32 %v1507, %v1707
      %v1716 = vld [vmem:[%s5] sm:$0x3]
      %vm1717 = vcmask 261120
      %v1719 = vsel %vm1717, %v1716, 0
      %1721 = vmatprep.subr.mxu0 %v1709
      %1722 = vmatpush1.msra.mxu0 %v1708
      %1723 = vmatprep.subr.mxu0 %v1711
      %1724 = vmatpush1.msra.mxu0 %v1710
      %1725 = vmatprep.subr.mxu0 %v1713
      %1726 = vmatpush1.msra.mxu0 %v1712
      %1727 = vmatprep.subr.mxu0 %v1715
      %1728 = vmatpush1.msra.mxu0 %v1714
      %1729 = vmatprep.subr.mxu0 0.0
      %1730 = vmatpush1.msra.mxu0 0.0
      %1731 = vmatprep.subr.mxu0 0.0
      %1732 = vmatpush1.msra.mxu0 0.0
      %1733 = vmatprep.subr.mxu0 0.0
      %1734 = vmatpush1.msra.mxu0 0.0
      %1735 = vmatprep.subr.mxu0 0.0
      %1736 = vmatpush1.msra.mxu0 0.0
      %1737 = vmatprep.subr.mxu0 0.0
      %1738 = vmatpush1.msra.mxu0 0.0
      %1739 = vmatprep.subr.mxu0 0.0
      %1740 = vmatpush1.msra.mxu0 0.0
      %1741 = vmatprep.subr.mxu0 0.0
      %1742 = vmatpush1.msra.mxu0 0.0
      %1743 = vmatprep.subr.mxu0 0.0
      %1744 = vmatpush1.msra.mxu0 0.0
      %1745 = vmatprep.subr.mxu0 0.0
      %1746 = vmatpush1.msra.mxu0 0.0
      %1747 = vmatprep.subr.mxu0 0.0
      %1748 = vmatpush1.msra.mxu0 0.0
      %1749 = vmatprep.subr.mxu0 0.0
      %1750 = vmatpush1.msra.mxu0 0.0
      %1751 = vmatprep.subr.mxu0 0.0
      %1752 = vmatpush1.msra.mxu0 0.0
      %1753 = vmatprep.subr.mxu0 0.0
      %1754 = vmatpush1.msra.mxu0 0.0
      %1755 = vmatprep.subr.mxu0 0.0
      %1756 = vmatpush1.msra.mxu0 0.0
      %1757 = vmatprep.subr.mxu0 0.0
      %1758 = vmatpush1.msra.mxu0 0.0
      %1759 = vmatprep.subr.mxu0 0.0
      %1760 = vmatpush1.msra.mxu0 0.0
      %1761 = vmatprep.subr.mxu0 0.0
      %1762 = vmatpush1.msra.mxu0 0.0
      %1763 = vmatprep.subr.mxu0 0.0
      %1764 = vmatpush1.msra.mxu0 0.0
      %1765 = vmatprep.subr.mxu0 0.0
      %1766 = vmatpush1.msra.mxu0 0.0
      %1767 = vmatprep.subr.mxu0 0.0
      %1768 = vmatpush1.msra.mxu0 0.0
      %1769 = vmatprep.subr.mxu0 0.0
      %1770 = vmatpush1.msra.mxu0 0.0
      %1771 = vmatprep.subr.mxu0 0.0
      %1772 = vmatpush1.msra.mxu0 0.0
      %1773 = vmatprep.subr.mxu0 0.0
      %1774 = vmatpush1.msra.mxu0 0.0
      %1775 = vmatprep.subr.mxu0 0.0
      %1776 = vmatpush1.msra.mxu0 0.0
      %1777 = vmatprep.subr.mxu0 0.0
      %1778 = vmatpush1.msra.mxu0 0.0
      %1779 = vmatprep.subr.mxu0 0.0
      %1780 = vmatpush1.msra.mxu0 0.0
      %1781 = vmatprep.subr.mxu0 0.0
      %1782 = vmatpush1.msra.mxu0 0.0
      %1783 = vmatprep.subr.mxu0 0.0
      %1784 = vmatpush1.msra.mxu0 0.0
      %1785 = vmatprep.mubr.f32.mxu0 0.0
      %1786 = vmatmul.mubr.f32.gmra.mrb[0].mxu0 %v1719
      %v1787 = vpop.f32.mrb[0].mxu0
      %v1788 = vadd.f32 0.0, %v1787
      %v1789 = vpop.f32.mrb[0].mxu0
      %v1790 = vadd.f32 0.0, %v1789
      %1791 = vdwg.mxu0
      %v1794 = vcombine.low %v1788, %v1790
      %v1796 = vunpack.c.l.s4 1983009808
      %v1797 = vunpack.c.0.s8 %v1796
      %v1798 = vlaneseq
      %v1799 = vshrl.u32 %v1798, 7
      %v1800 = vsub.s32 %v1797, %v1799
      %v1801 = vrot.slane %v1794, %v1800
      %1803 = vst [vmem:[%s278] sm:$0xf] %v1801
      %p1804 = scmp.lt.s32.totalorder %s18, 3
      %s1805 = scalar_select %p1804, %s18, 3
      %s1806 = smul.addr %s1805, 2
      %s1807 = smul.addr %s1806, 2
      %s1808 = scalar_lea.vmem %s7, %s1807
      // Predicated region
      $region49: #{dca_forward.6} parent=47 // pred_check
        %p1809 = pneg %p188
      $region50: #{dca_forward.6} parent=47 // pred_check_branch
        %1811 = sbr.rel (%p1809) target = $region52
      $region51: #{dca_forward.6} parent=47 // pred_region
        _
      $region52: #{dca_forward.6} parent=47 // pred_fallthru
        _
    $region48: #{dca_forward.6} parent=5 // pred_fallthru
      _
    %p1812 = scmp.le.s32.totalorder 2, %s13
    // Predicated region
    $region53: #{dca_forward.6} parent=5 // pred_check
      %p1813 = pneg %p1812
    $region54: #{dca_forward.6} parent=5 // pred_check_branch
      %1815 = sbr.rel (%p1813) target = $region56
    $region55: #{dca_forward.6} parent=5 // pred_region
      %s1816 = ssub.s32 %s13, 2
      // Predicated region
      $region57: #{dca_forward.6} parent=55 // pred_check
        %p1817 = pneg %p194
      $region58: #{dca_forward.6} parent=55 // pred_check_branch
        %1819 = sbr.rel (%p1817) target = $region60
      $region59: #{dca_forward.6} parent=55 // pred_region
        %p1820 = scmp.lt.s32.totalorder %s19, 3
        %s1821 = scalar_select %p1820, %s19, 3
        %s1822 = smul.addr %s1821, 2
        %s1823 = smul.addr %s1822, 2
        %s1824 = scalar_lea.vmem %s7, %s1823
      $region60: #{dca_forward.6} parent=55 // pred_fallthru
        _
    $region56: #{dca_forward.6} parent=5 // pred_fallthru
      _
  $region6: #{dca_forward.6} parent=0 // loop_footer
    %s17 = sadd.s32 1, %s13
  $region7: #{dca_forward.6} parent=0 // loop_footer_branch
    %12 = sbr.rel target = $region3
  $region8: #{dca_forward.6} parent=0 // loop_exit
    _

// kernel: dca_forward.8
$region0: #{dca_forward.8}
  #allocation0 [shape = 'u32[]', space=smem, size = 0x4, offset = 0x4, fixed_abs, tag = 'smem constant byte address 0x4 - core index']
  #allocation1 [shape = 'u32[144,128]{1,0:T(1,128)}', space=vmem, size = 0x12000, scoped, tag = 'internal scratch']
  %s0 = inlined_call_operand.vmem [shape: f32[2,64,256], index: 0, kind: input, shape index: {}]
  %s1 = inlined_call_operand.vmem [shape: f32[2,64,64], index: 1, kind: input, shape index: {}]
  %s2 = inlined_call_operand.vmem [shape: f32[2,64,64], index: 2, kind: input, shape index: {}]
  %s3 = inlined_call_operand.vmem [shape: f32[2,64,256], index: 3, kind: output, shape index: {}]
  %s4 = sld [smem:[#allocation0]]
  $region45: #{dca_forward.8} parent=0
    _
  %s6 = ssub.s32 1, %s4
  %s7 = scalar_select 0, %s6, %s4
  loop: start=0, step=1, limit=4
  $region2: #{dca_forward.8} parent=0 // loop_pre_header
    _
  $region3: #{dca_forward.8} parent=0 // loop_header
    %s9 = sphi 0, %s13
    %p10 = scmp.ge.s32.totalorder %s9, 4
    %s16 = sphi 0, %s28
    %s17 = sphi 0, %s24
    %s18 = sphi 0, %s16
    %s19 = sphi 0, %s17
    %s20 = sphi 0, %s18
    %s21 = sphi 0, %s19
    %s33 = sphi 0, %s35
    %s36 = sphi 0, %s33
    %s37 = sphi 0, %s36
    %s53 = sphi 0, %s37
    %s59 = sphi 0, %s61
    %s62 = sphi 0, %s59
    %s63 = sphi 0, %s62
    %s79 = sphi 0, %s63
    %s85 = sphi 0, %s87
    %s88 = sphi 0, %s85
    %s89 = sphi 0, %s88
    %s105 = sphi 0, %s89
    %s113 = sphi 0, %s115
    %s116 = sphi 0, %s113
    %s117 = sphi 0, %s116
    %s133 = sphi 0, %s117
  $region4: #{dca_forward.8} parent=0 // loop_header_branch
    %12 = sbr.rel (%p10) target = $region8
  $region5: #{dca_forward.8} parent=0 // loop_body
    %s14 = ssub.s32 %s9, 1
    %s15 = ssub.s32 %s9, 2
    %s22 = sadd.s32 1, %s17
    %p23 = scmp.ge.s32.totalorder %s22, 1
    %s24 = scalar_select %p23, 0, %s22
    %s25 = sadd.s32 1, %s16
    %s26 = scalar_select %p23, %s25, %s16
    %p27 = scmp.ge.s32.totalorder %s26, 2
    %s28 = scalar_select %p27, 0, %s26
    %s29 = ssub.s32 %s16, %s28
    %s30 = ssub.s32 %s17, %s24
    %s31 = sor.u32 %s29, %s30
    %p32 = scmp.eq.s32.totalorder %s31, 0
    %s34 = sadd.s32 %s33, 1
    %s35 = scalar_select %p32, %s33, %s34
    %p38 = pneg %p32
    %p39 = scmp.eq.s32.totalorder %s9, 1
    %p40 = por %p38, %p39
    %p41 = scmp.ne.s32.totalorder %s33, %s36
    %p42 = scmp.eq.s32.totalorder %s9, 0
    %p43 = por %p41, %p42
    %p44 = scmp.ne.s32.totalorder %s33, %s36
    %p45 = scmp.eq.s32.totalorder %s14, 1
    %p46 = por %p44, %p45
    %p47 = scmp.ne.s32.totalorder %s36, %s37
    %p48 = scmp.eq.s32.totalorder %s14, 0
    %p49 = por %p47, %p48
    %p50 = scmp.ne.s32.totalorder %s36, %s37
    %p51 = scmp.eq.s32.totalorder %s15, 1
    %p52 = por %p50, %p51
    %p54 = scmp.ne.s32.totalorder %s37, %s53
    %p55 = scmp.eq.s32.totalorder %s15, 0
    %p56 = por %p54, %p55
    %s57 = ssub.s32 %s16, %s28
    %p58 = scmp.eq.s32.totalorder %s57, 0
    %s60 = sadd.s32 %s59, 1
    %s61 = scalar_select %p58, %s59, %s60
    %p64 = pneg %p58
    %p65 = scmp.eq.s32.totalorder %s9, 1
    %p66 = por %p64, %p65
    %p67 = scmp.ne.s32.totalorder %s59, %s62
    %p68 = scmp.eq.s32.totalorder %s9, 0
    %p69 = por %p67, %p68
    %p70 = scmp.ne.s32.totalorder %s59, %s62
    %p71 = scmp.eq.s32.totalorder %s14, 1
    %p72 = por %p70, %p71
    %p73 = scmp.ne.s32.totalorder %s62, %s63
    %p74 = scmp.eq.s32.totalorder %s14, 0
    %p75 = por %p73, %p74
    %p76 = scmp.ne.s32.totalorder %s62, %s63
    %p77 = scmp.eq.s32.totalorder %s15, 1
    %p78 = por %p76, %p77
    %p80 = scmp.ne.s32.totalorder %s63, %s79
    %p81 = scmp.eq.s32.totalorder %s15, 0
    %p82 = por %p80, %p81
    %s83 = ssub.s32 %s16, %s28
    %p84 = scmp.eq.s32.totalorder %s83, 0
    %s86 = sadd.s32 %s85, 1
    %s87 = scalar_select %p84, %s85, %s86
    %p90 = pneg %p84
    %p91 = scmp.eq.s32.totalorder %s9, 1
    %p92 = por %p90, %p91
    %p93 = scmp.ne.s32.totalorder %s85, %s88
    %p94 = scmp.eq.s32.totalorder %s9, 0
    %p95 = por %p93, %p94
    %p96 = scmp.ne.s32.totalorder %s85, %s88
    %p97 = scmp.eq.s32.totalorder %s14, 1
    %p98 = por %p96, %p97
    %p99 = scmp.ne.s32.totalorder %s88, %s89
    %p100 = scmp.eq.s32.totalorder %s14, 0
    %p101 = por %p99, %p100
    %p102 = scmp.ne.s32.totalorder %s88, %s89
    %p103 = scmp.eq.s32.totalorder %s15, 1
    %p104 = por %p102, %p103
    %p106 = scmp.ne.s32.totalorder %s89, %s105
    %p107 = scmp.eq.s32.totalorder %s15, 0
    %p108 = por %p106, %p107
    %s109 = ssub.s32 %s16, %s28
    %s110 = ssub.s32 %s17, %s24
    %s111 = sor.u32 %s109, %s110
    %p112 = scmp.eq.s32.totalorder %s111, 0
    %s114 = sadd.s32 %s113, 1
    %s115 = scalar_select %p112, %s113, %s114
    %p118 = pneg %p112
    %p119 = scmp.eq.s32.totalorder %s9, 1
    %p120 = por %p118, %p119
    %p121 = scmp.ne.s32.totalorder %s113, %s116
    %p122 = scmp.eq.s32.totalorder %s9, 0
    %p123 = por %p121, %p122
    %p124 = scmp.ne.s32.totalorder %s113, %s116
    %p125 = scmp.eq.s32.totalorder %s14, 1
    %p126 = por %p124, %p125
    %p127 = scmp.ne.s32.totalorder %s116, %s117
    %p128 = scmp.eq.s32.totalorder %s14, 0
    %p129 = por %p127, %p128
    %p130 = scmp.ne.s32.totalorder %s116, %s117
    %p131 = scmp.eq.s32.totalorder %s15, 1
    %p132 = por %p130, %p131
    %p134 = scmp.ne.s32.totalorder %s117, %s133
    %p135 = scmp.eq.s32.totalorder %s15, 0
    %p136 = por %p134, %p135
    %p137 = scmp.le.s32.totalorder 1, %s9
    %p138 = scmp.lt.s32.totalorder %s9, 3
    %p139 = pnand %p137, %p138
    %p140 = pneg %p139
    // Predicated region
    $region9: #{dca_forward.8} parent=5 // pred_check
      _
    $region10: #{dca_forward.8} parent=5 // pred_check_branch
      %142 = sbr.rel (%p139) target = $region12
    $region11: #{dca_forward.8} parent=5 // pred_region
      %s143 = ssub.s32 %s9, 1
    $region12: #{dca_forward.8} parent=5 // pred_fallthru
      _
    %p144 = scmp.lt.s32.totalorder %s9, 2
    // Predicated region
    $region13: #{dca_forward.8} parent=5 // pred_check
      %p145 = pneg %p144
    $region14: #{dca_forward.8} parent=5 // pred_check_branch
      %147 = sbr.rel (%p145) target = $region16
    $region15: #{dca_forward.8} parent=5 // pred_region
      // Predicated region
      $region17: #{dca_forward.8} parent=15 // pred_check
        %p148 = pneg %p43
      $region18: #{dca_forward.8} parent=15 // pred_check_branch
        %150 = sbr.rel (%p148) target = $region20
      $region19: #{dca_forward.8} parent=15 // pred_region
        %s151 = smul.u32 2, %s17
        %p152 = scmp.lt.s32.totalorder %s16, 1
        %s153 = scalar_select %p152, %s16, 1
        %p154 = scmp.lt.s32.totalorder %s151, 1
        %s155 = scalar_select %p154, %s151, 1
        %s156 = smul.addr %s153, 16
        %s157 = sadd.s32 %s155, %s156
        %s158 = smul.addr %s157, 8
        %s159 = scalar_lea.vmem %s0, %s158
        %s160 = smul.u32 2, %s17
      $region20: #{dca_forward.8} parent=15 // pred_fallthru
        _
      // Predicated region
      $region21: #{dca_forward.8} parent=15 // pred_check
        %p161 = pneg %p69
      $region22: #{dca_forward.8} parent=15 // pred_check_branch
        %163 = sbr.rel (%p161) target = $region24
      $region23: #{dca_forward.8} parent=15 // pred_region
        %p164 = scmp.lt.s32.totalorder %s16, 1
        %s165 = scalar_select %p164, %s16, 1
        %s166 = smul.addr %s165, 8
        %s167 = smul.addr %s166, 8
        %s168 = scalar_lea.vmem %s1, %s167
      $region24: #{dca_forward.8} parent=15 // pred_fallthru
        _
      // Predicated region
      $region25: #{dca_forward.8} parent=15 // pred_check
        %p169 = pneg %p95
      $region26: #{dca_forward.8} parent=15 // pred_check_branch
        %171 = sbr.rel (%p169) target = $region28
      $region27: #{dca_forward.8} parent=15 // pred_region
        %p172 = scmp.lt.s32.totalorder %s16, 1
        %s173 = scalar_select %p172, %s16, 1
        %s174 = smul.addr %s173, 8
        %s175 = smul.addr %s174, 8
        %s176 = scalar_lea.vmem %s2, %s175
      $region28: #{dca_forward.8} parent=15 // pred_fallthru
        _
    $region16: #{dca_forward.8} parent=5 // pred_fallthru
      _
    %p177 = scmp.le.s32.totalorder 1, %s9
    %p178 = scmp.lt.s32.totalorder %s9, 3
    %p179 = pnand %p177, %p178
    %p180 = pneg %p179
    // Predicated region
    $region29: #{dca_forward.8} parent=5 // pred_check
      _
    $region30: #{dca_forward.8} parent=5 // pred_check_branch
      %182 = sbr.rel (%p179) target = $region32
    $region31: #{dca_forward.8} parent=5 // pred_region
      %s183 = ssub.s32 %s9, 1
      %s184 = smul.u32 2, %s19
      %p185 = scmp.lt.s32.totalorder %s18, 1
      %s186 = scalar_select %p185, %s18, 1
      %p187 = scmp.lt.s32.totalorder %s184, 1
      %s188 = scalar_select %p187, %s184, 1
      %s189 = smul.addr %s186, 16
      %s190 = sadd.s32 %s188, %s189
      %s191 = smul.addr %s190, 8
      %s192 = scalar_lea.vmem %s0, %s191
      %p193 = pneg %p49
      %p194 = pneg %p46
      %p195 = scmp.lt.s32.totalorder %s18, 1
      %s196 = scalar_select %p195, %s18, 1
      %s197 = smul.addr %s196, 8
      %s198 = smul.addr %s197, 8
      %s199 = scalar_lea.vmem %s1, %s198
      %p200 = pneg %p75
      %p201 = pneg %p72
      %p202 = scmp.lt.s32.totalorder %s18, 1
      %s203 = scalar_select %p202, %s18, 1
      %s204 = smul.addr %s203, 8
      %s205 = smul.addr %s204, 8
      %s206 = scalar_lea.vmem %s2, %s205
      %p207 = pneg %p101
      %p208 = pneg %p98
      %p209 = pneg %p129
      %p210 = pneg %p126
      %s211 = smul.u32 2, %s19
      %p212 = scmp.lt.s32.totalorder %s18, 1
      %s213 = scalar_select %p212, %s18, 1
      %p214 = scmp.lt.s32.totalorder %s211, 1
      %s215 = scalar_select %p214, %s211, 1
      %s216 = smul.addr %s213, 16
      %s217 = sadd.s32 %s215, %s216
      %s218 = smul.addr %s217, 8
      %s219 = scalar_lea.vmem %s3, %s218
      %s220 = smul.u32 2, %s19
      %p221 = scmp.lt.s32.totalorder %s18, 1
      %s222 = scalar_select %p221, %s18, 1
      %p223 = scmp.lt.s32.totalorder %s220, 1
      %s224 = scalar_select %p223, %s220, 1
      %s225 = smul.addr %s222, 16
      %s226 = sadd.s32 %s224, %s225
      %s227 = smul.addr %s226, 8
      %s228 = scalar_lea.vmem %s0, %s227
      %s229 = smul.u32 2, %s19
      %p230 = scmp.lt.s32.totalorder %s18, 1
      %s231 = scalar_select %p230, %s18, 1
      %s232 = smul.addr %s231, 8
      %s233 = smul.addr %s232, 8
      %s234 = scalar_lea.vmem %s1, %s233
      %p235 = scmp.lt.s32.totalorder %s18, 1
      %s236 = scalar_select %p235, %s18, 1
      %s237 = smul.addr %s236, 8
      %s238 = smul.addr %s237, 8
      %s239 = scalar_lea.vmem %s2, %s238
      %s240 = smul.u32 2, %s19
      %p241 = scmp.lt.s32.totalorder %s18, 1
      %s242 = scalar_select %p241, %s18, 1
      %p243 = scmp.lt.s32.totalorder %s240, 1
      %s244 = scalar_select %p243, %s240, 1
      %s245 = smul.addr %s242, 16
      %s246 = sadd.s32 %s244, %s245
      %s247 = smul.addr %s246, 8
      %s248 = scalar_lea.vmem %s3, %s247
      %s249 = smul.u32 2, %s19
      %v250 = vld [vmem:[%s228] sm:$0xff]
      %v251 = vld [vmem:[%s228 + $0x8] sm:$0xff]
      %v252 = vld [vmem:[%s228 + $0x10] sm:$0xff]
      %v253 = vld [vmem:[%s228 + $0x18] sm:$0xff]
      %v254 = vld [vmem:[%s228 + $0x20] sm:$0xff]
      %v255 = vld [vmem:[%s228 + $0x28] sm:$0xff]
      %v256 = vld [vmem:[%s228 + $0x30] sm:$0xff]
      %v257 = vld [vmem:[%s228 + $0x38] sm:$0xff]
      %v258 = vld [vmem:[%s234] sm:$0xff]
      %v259 = vld [vmem:[%s234 + $0x8] sm:$0xff]
      %v260 = vld [vmem:[%s234 + $0x10] sm:$0xff]
      %v261 = vld [vmem:[%s234 + $0x18] sm:$0xff]
      %v262 = vld [vmem:[%s239] sm:$0xff]
      %v263 = vld [vmem:[%s239 + $0x8] sm:$0xff]
      %v264 = vld [vmem:[%s239 + $0x10] sm:$0xff]
      %v265 = vld [vmem:[%s239 + $0x18] sm:$0xff]
      %266 = vxpose.xlu0.b32.start [1/16] %v258, 128
      %267 = vxpose.xlu0.b32.cont [2/16] %v259, 128
      %268 = vxpose.xlu0.b32.cont [3/16] %v260, 128
      %269 = vxpose.xlu0.b32.cont [4/16] %v261, 128
      %270 = vxpose.xlu0.b32.cont [5/16] 0.0, 128
      %271 = vxpose.xlu0.b32.cont [6/16] 0.0, 128
      %272 = vxpose.xlu0.b32.cont [7/16] 0.0, 128
      %273 = vxpose.xlu0.b32.cont [8/16] 0.0, 128
      %274 = vxpose.xlu0.b32.cont [9/16] 0.0, 128
      %275 = vxpose.xlu0.b32.cont [10/16] 0.0, 128
      %276 = vxpose.xlu0.b32.cont [11/16] 0.0, 128
      %277 = vxpose.xlu0.b32.cont [12/16] 0.0, 128
      %278 = vxpose.xlu0.b32.cont [13/16] 0.0, 128
      %279 = vxpose.xlu0.b32.cont [14/16] 0.0, 128
      %280 = vxpose.xlu0.b32.cont [15/16] 0.0, 128
      %281 = vxpose.xlu0.b32.end [16/16] 0.0, 128
      %v282 = vpop.trf.xlu0
      %v283 = vpop.trf.xlu0
      %v284 = vpop.trf.xlu0
      %v285 = vpop.trf.xlu0
      %v286 = vpop.trf.xlu0
      %v287 = vpop.trf.xlu0
      %v288 = vpop.trf.xlu0
      %v289 = vpop.trf.xlu0
      %v290 = vpop.trf.xlu0
      %v291 = vpop.trf.xlu0
      %v292 = vpop.trf.xlu0
      %v293 = vpop.trf.xlu0
      %v294 = vpop.trf.xlu0
      %v295 = vpop.trf.xlu0
      %v296 = vpop.trf.xlu0
      %v297 = vpop.trf.xlu0
      %vm298 = vcmask 261120
      %v300 = vsel %vm298, %v282, 0
      %v303 = vsel %vm298, %v283, 0
      %v306 = vsel %vm298, %v284, 0
      %v309 = vsel %vm298, %v285, 0
      %v312 = vsel %vm298, %v286, 0
      %v315 = vsel %vm298, %v287, 0
      %v318 = vsel %vm298, %v288, 0
      %v321 = vsel %vm298, %v289, 0
      %323 = vmatprep.subr.mxu0 %v251
      %324 = vmatpush1.msra.mxu0 %v250
      %325 = vmatprep.subr.mxu0 %v253
      %326 = vmatpush1.msra.mxu0 %v252
      %327 = vmatprep.subr.mxu0 %v255
      %328 = vmatpush1.msra.mxu0 %v254
      %329 = vmatprep.subr.mxu0 %v257
      %330 = vmatpush1.msra.mxu0 %v256
      %331 = vmatprep.subr.mxu0 0.0
      %332 = vmatpush1.msra.mxu0 0.0
      %333 = vmatprep.subr.mxu0 0.0
      %334 = vmatpush1.msra.mxu0 0.0
      %335 = vmatprep.subr.mxu0 0.0
      %336 = vmatpush1.msra.mxu0 0.0
      %337 = vmatprep.subr.mxu0 0.0
      %338 = vmatpush1.msra.mxu0 0.0
      %339 = vmatprep.subr.mxu0 0.0
      %340 = vmatpush1.msra.mxu0 0.0
      %341 = vmatprep.subr.mxu0 0.0
      %342 = vmatpush1.msra.mxu0 0.0
      %343 = vmatprep.subr.mxu0 0.0
      %344 = vmatpush1.msra.mxu0 0.0
      %345 = vmatprep.subr.mxu0 0.0
      %346 = vmatpush1.msra.mxu0 0.0
      %347 = vmatprep.subr.mxu0 0.0
      %348 = vmatpush1.msra.mxu0 0.0
      %349 = vmatprep.subr.mxu0 0.0
      %350 = vmatpush1.msra.mxu0 0.0
      %351 = vmatprep.subr.mxu0 0.0
      %352 = vmatpush1.msra.mxu0 0.0
      %353 = vmatprep.subr.mxu0 0.0
      %354 = vmatpush1.msra.mxu0 0.0
      %355 = vmatprep.subr.mxu0 0.0
      %356 = vmatpush1.msra.mxu0 0.0
      %357 = vmatprep.subr.mxu0 0.0
      %358 = vmatpush1.msra.mxu0 0.0
      %359 = vmatprep.subr.mxu0 0.0
      %360 = vmatpush1.msra.mxu0 0.0
      %361 = vmatprep.subr.mxu0 0.0
      %362 = vmatpush1.msra.mxu0 0.0
      %363 = vmatprep.subr.mxu0 0.0
      %364 = vmatpush1.msra.mxu0 0.0
      %365 = vmatprep.subr.mxu0 0.0
      %366 = vmatpush1.msra.mxu0 0.0
      %367 = vmatprep.subr.mxu0 0.0
      %368 = vmatpush1.msra.mxu0 0.0
      %369 = vmatprep.subr.mxu0 0.0
      %370 = vmatpush1.msra.mxu0 0.0
      %371 = vmatprep.subr.mxu0 0.0
      %372 = vmatpush1.msra.mxu0 0.0
      %373 = vmatprep.subr.mxu0 0.0
      %374 = vmatpush1.msra.mxu0 0.0
      %375 = vmatprep.subr.mxu0 0.0
      %376 = vmatpush1.msra.mxu0 0.0
      %377 = vmatprep.subr.mxu0 0.0
      %378 = vmatpush1.msra.mxu0 0.0
      %379 = vmatprep.subr.mxu0 0.0
      %380 = vmatpush1.msra.mxu0 0.0
      %381 = vmatprep.subr.mxu0 0.0
      %382 = vmatpush1.msra.mxu0 0.0
      %383 = vmatprep.subr.mxu0 0.0
      %384 = vmatpush1.msra.mxu0 0.0
      %385 = vmatprep.subr.mxu0 0.0
      %386 = vmatpush1.msra.mxu0 0.0
      %387 = vmatprep.mubr.f32.mxu0 0.0
      %388 = vmatmul.mubr.f32.gmra.mrb[0].mxu0 %v300
      %v389 = vpop.f32.mrb[0].mxu0
      %v390 = vadd.f32 0.0, %v389
      %v391 = vpop.f32.mrb[0].mxu0
      %v392 = vadd.f32 0.0, %v391
      %393 = vmatprep.mubr.f32.mxu0 0.0
      %394 = vmatmul.mubr.f32.gmra.mrb[0].mxu0 %v303
      %v395 = vpop.f32.mrb[0].mxu0
      %v396 = vadd.f32 0.0, %v395
      %v397 = vpop.f32.mrb[0].mxu0
      %v398 = vadd.f32 0.0, %v397
      %399 = vmatprep.mubr.f32.mxu0 0.0
      %400 = vmatmul.mubr.f32.gmra.mrb[0].mxu0 %v306
      %v401 = vpop.f32.mrb[0].mxu0
      %v402 = vadd.f32 0.0, %v401
      %v403 = vpop.f32.mrb[0].mxu0
      %v404 = vadd.f32 0.0, %v403
      %405 = vmatprep.mubr.f32.mxu0 0.0
      %406 = vmatmul.mubr.f32.gmra.mrb[0].mxu0 %v309
      %v407 = vpop.f32.mrb[0].mxu0
      %v408 = vadd.f32 0.0, %v407
      %v409 = vpop.f32.mrb[0].mxu0
      %v410 = vadd.f32 0.0, %v409
      %411 = vmatprep.mubr.f32.mxu0 0.0
      %412 = vmatmul.mubr.f32.gmra.mrb[0].mxu0 %v312
      %v413 = vpop.f32.mrb[0].mxu0
      %v414 = vadd.f32 0.0, %v413
      %v415 = vpop.f32.mrb[0].mxu0
      %v416 = vadd.f32 0.0, %v415
      %417 = vmatprep.mubr.f32.mxu0 0.0
      %418 = vmatmul.mubr.f32.gmra.mrb[0].mxu0 %v315
      %v419 = vpop.f32.mrb[0].mxu0
      %v420 = vadd.f32 0.0, %v419
      %v421 = vpop.f32.mrb[0].mxu0
      %v422 = vadd.f32 0.0, %v421
      %423 = vmatprep.mubr.f32.mxu0 0.0
      %424 = vmatmul.mubr.f32.gmra.mrb[0].mxu0 %v318
      %v425 = vpop.f32.mrb[0].mxu0
      %v426 = vadd.f32 0.0, %v425
      %v427 = vpop.f32.mrb[0].mxu0
      %v428 = vadd.f32 0.0, %v427
      %429 = vmatprep.mubr.f32.mxu0 0.0
      %430 = vmatmul.mubr.f32.gmra.mrb[0].mxu0 %v321
      %v431 = vpop.f32.mrb[0].mxu0
      %v432 = vadd.f32 0.0, %v431
      %v433 = vpop.f32.mrb[0].mxu0
      %v434 = vadd.f32 0.0, %v433
      %435 = vdwg.mxu0
      %v436 = vmax.f32 %v390, %v402
      %v437 = vmax.f32 %v396, %v408
      %v438 = vmax.f32 %v436, %v414
      %v439 = vmax.f32 %v437, %v420
      %v440 = vmax.f32 %v438, %v426
      %v441 = vmax.f32 %v439, %v432
      %v442 = vmax.f32 %v440, %v441
      %v443 = vrot.slane %v442, 4
      %v444 = vmax.f32 %v442, %v443
      %v445 = vrot.slane %v444, 2
      %v446 = vmax.f32 %v444, %v445
      %v447 = vrot.slane %v446, 1
      %v448 = vmax.f32 %v446, %v447
      %v449 = vmax.f32 %v392, %v404
      %v450 = vmax.f32 %v398, %v410
      %v451 = vmax.f32 %v449, %v416
      %v452 = vmax.f32 %v450, %v422
      %v453 = vmax.f32 %v451, %v428
      %v454 = vmax.f32 %v452, %v434
      %v455 = vmax.f32 %v453, %v454
      %v456 = vrot.slane %v455, 4
      %v457 = vmax.f32 %v455, %v456
      %v458 = vrot.slane %v457, 2
      %v459 = vmax.f32 %v457, %v458
      %v460 = vrot.slane %v459, 1
      %v461 = vmax.f32 %v459, %v460
      %v462 = vsub.f32 %v390, %v448
      %v463 = vsub.f32 %v392, %v461
      %v464 = vsub.f32 %v396, %v448
      %v465 = vsub.f32 %v398, %v461
      %v466 = vsub.f32 %v402, %v448
      %v467 = vsub.f32 %v404, %v461
      %v468 = vsub.f32 %v408, %v448
      %v469 = vsub.f32 %v410, %v461
      %v470 = vsub.f32 %v414, %v448
      %v471 = vsub.f32 %v416, %v461
      %v472 = vsub.f32 %v420, %v448
      %v473 = vsub.f32 %v422, %v461
      %v474 = vsub.f32 %v426, %v448
      %v475 = vsub.f32 %v428, %v461
      %v476 = vsub.f32 %v432, %v448
      %v477 = vsub.f32 %v434, %v461
      %v478 = vmul.f32 %v462, 1.442695
      %v479 = vpow.pop %v478
      %v480 = vmul.f32 %v463, 1.442695
      %v481 = vpow.pop %v480
      %v482 = vmul.f32 %v464, 1.442695
      %v483 = vpow.pop %v482
      %v484 = vmul.f32 %v465, 1.442695
      %v485 = vpow.pop %v484
      %v486 = vmul.f32 %v466, 1.442695
      %v487 = vpow.pop %v486
      %v488 = vmul.f32 %v467, 1.442695
      %v489 = vpow.pop %v488
      %v490 = vmul.f32 %v468, 1.442695
      %v491 = vpow.pop %v490
      %v492 = vmul.f32 %v469, 1.442695
      %v493 = vpow.pop %v492
      %v494 = vmul.f32 %v470, 1.442695
      %v495 = vpow.pop %v494
      %v496 = vmul.f32 %v471, 1.442695
      %v497 = vpow.pop %v496
      %v498 = vmul.f32 %v472, 1.442695
      %v499 = vpow.pop %v498
      %v500 = vmul.f32 %v473, 1.442695
      %v501 = vpow.pop %v500
      %v502 = vmul.f32 %v474, 1.442695
      %v503 = vpow.pop %v502
      %v504 = vmul.f32 %v475, 1.442695
      %v505 = vpow.pop %v504
      %v506 = vmul.f32 %v476, 1.442695
      %v507 = vpow.pop %v506
      %v508 = vmul.f32 %v477, 1.442695
      %v509 = vpow.pop %v508
      %v510 = vadd.f32 %v479, %v483
      %v511 = vadd.f32 %v510, %v487
      %v512 = vadd.f32 %v511, %v491
      %v513 = vadd.f32 %v512, %v495
      %v514 = vadd.f32 %v513, %v499
      %v515 = vadd.f32 %v514, %v503
      %v516 = vadd.f32 %v515, %v507
      %v517 = vrot.slane %v516, 4
      %v518 = vadd.f32 %v516, %v517
      %v519 = vrot.slane %v518, 2
      %v520 = vadd.f32 %v518, %v519
      %v521 = vrot.slane %v520, 1
      %v522 = vadd.f32 %v520, %v521
      %v523 = vadd.f32 %v481, %v485
      %v524 = vadd.f32 %v523, %v489
      %v525 = vadd.f32 %v524, %v493
      %v526 = vadd.f32 %v525, %v497
      %v527 = vadd.f32 %v526, %v501
      %v528 = vadd.f32 %v527, %v505
      %v529 = vadd.f32 %v528, %v509
      %v530 = vrot.slane %v529, 4
      %v531 = vadd.f32 %v529, %v530
      %v532 = vrot.slane %v531, 2
      %v533 = vadd.f32 %v531, %v532
      %v534 = vrot.slane %v533, 1
      %v535 = vadd.f32 %v533, %v534
      %v536 = vrcp.pop %v522
      %v537 = vrcp.pop %v535
      %v538 = vmul.f32 %v479, %v536
      %v539 = vmul.f32 %v481, %v537
      %v540 = vmul.f32 %v483, %v536
      %v541 = vmul.f32 %v485, %v537
      %v542 = vmul.f32 %v487, %v536
      %v543 = vmul.f32 %v489, %v537
      %v544 = vmul.f32 %v491, %v536
      %v545 = vmul.f32 %v493, %v537
      %v546 = vmul.f32 %v495, %v536
      %v547 = vmul.f32 %v497, %v537
      %v548 = vmul.f32 %v499, %v536
      %v549 = vmul.f32 %v501, %v537
      %v550 = vmul.f32 %v503, %v536
      %v551 = vmul.f32 %v505, %v537
      %v552 = vmul.f32 %v507, %v536
      %v553 = vmul.f32 %v509, %v537
      %vm554 = vcmask 523264
      %v556 = vsel %vm554, %v262, 0
      %v559 = vsel %vm554, %v263, 0
      %v562 = vsel %vm554, %v264, 0
      %v565 = vsel %vm554, %v265, 0
      %567 = vmatprep.subr.mxu0 %v539
      %568 = vmatpush1.msra.mxu0 %v538
      %569 = vmatprep.subr.mxu0 %v541
      %570 = vmatpush1.msra.mxu0 %v540
      %571 = vmatprep.subr.mxu0 %v543
      %572 = vmatpush1.msra.mxu0 %v542
      %573 = vmatprep.subr.mxu0 %v545
      %574 = vmatpush1.msra.mxu0 %v544
      %575 = vmatprep.subr.mxu0 %v547
      %576 = vmatpush1.msra.mxu0 %v546
      %577 = vmatprep.subr.mxu0 %v549
      %578 = vmatpush1.msra.mxu0 %v548
      %579 = vmatprep.subr.mxu0 %v551
      %580 = vmatpush1.msra.mxu0 %v550
      %581 = vmatprep.subr.mxu0 %v553
      %582 = vmatpush1.msra.mxu0 %v552
      %583 = vmatprep.subr.mxu0 0.0
      %584 = vmatpush1.msra.mxu0 0.0
      %585 = vmatprep.subr.mxu0 0.0
      %586 = vmatpush1.msra.mxu0 0.0
      %587 = vmatprep.subr.mxu0 0.0
      %588 = vmatpush1.msra.mxu0 0.0
      %589 = vmatprep.subr.mxu0 0.0
      %590 = vmatpush1.msra.mxu0 0.0
      %591 = vmatprep.subr.mxu0 0.0
      %592 = vmatpush1.msra.mxu0 0.0
      %593 = vmatprep.subr.mxu0 0.0
      %594 = vmatpush1.msra.mxu0 0.0
      %595 = vmatprep.subr.mxu0 0.0
      %596 = vmatpush1.msra.mxu0 0.0
      %597 = vmatprep.subr.mxu0 0.0
      %598 = vmatpush1.msra.mxu0 0.0
      %599 = vmatprep.subr.mxu0 0.0
      %600 = vmatpush1.msra.mxu0 0.0
      %601 = vmatprep.subr.mxu0 0.0
      %602 = vmatpush1.msra.mxu0 0.0
      %603 = vmatprep.subr.mxu0 0.0
      %604 = vmatpush1.msra.mxu0 0.0
      %605 = vmatprep.subr.mxu0 0.0
      %606 = vmatpush1.msra.mxu0 0.0
      %607 = vmatprep.subr.mxu0 0.0
      %608 = vmatpush1.msra.mxu0 0.0
      %609 = vmatprep.subr.mxu0 0.0
      %610 = vmatpush1.msra.mxu0 0.0
      %611 = vmatprep.subr.mxu0 0.0
      %612 = vmatpush1.msra.mxu0 0.0
      %613 = vmatprep.subr.mxu0 0.0
      %614 = vmatpush1.msra.mxu0 0.0
      %615 = vmatprep.subr.mxu0 0.0
      %616 = vmatpush1.msra.mxu0 0.0
      %617 = vmatprep.subr.mxu0 0.0
      %618 = vmatpush1.msra.mxu0 0.0
      %619 = vmatprep.subr.mxu0 0.0
      %620 = vmatpush1.msra.mxu0 0.0
      %621 = vmatprep.subr.mxu0 0.0
      %622 = vmatpush1.msra.mxu0 0.0
      %623 = vmatprep.subr.mxu0 0.0
      %624 = vmatpush1.msra.mxu0 0.0
      %625 = vmatprep.subr.mxu0 0.0
      %626 = vmatpush1.msra.mxu0 0.0
      %627 = vmatprep.subr.mxu0 0.0
      %628 = vmatpush1.msra.mxu0 0.0
      %629 = vmatprep.subr.mxu0 0.0
      %630 = vmatpush1.msra.mxu0 0.0
      %631 = vmatprep.mubr.f32.mxu0 0.0
      %632 = vmatmul.mubr.f32.gmra.mrb[0].mxu0 %v556
      %v633 = vpop.f32.mrb[0].mxu0
      %v634 = vadd.f32 0.0, %v633
      %v635 = vpop.f32.mrb[0].mxu0
      %v636 = vadd.f32 0.0, %v635
      %637 = vmatprep.mubr.f32.mxu0 0.0
      %638 = vmatmul.mubr.f32.gmra.mrb[0].mxu0 %v559
      %v639 = vpop.f32.mrb[0].mxu0
      %v640 = vadd.f32 0.0, %v639
      %v641 = vpop.f32.mrb[0].mxu0
      %v642 = vadd.f32 0.0, %v641
      %643 = vmatprep.mubr.f32.mxu0 0.0
      %644 = vmatmul.mubr.f32.gmra.mrb[0].mxu0 %v562
      %v645 = vpop.f32.mrb[0].mxu0
      %v646 = vadd.f32 0.0, %v645
      %v647 = vpop.f32.mrb[0].mxu0
      %v648 = vadd.f32 0.0, %v647
      %649 = vmatprep.mubr.f32.mxu0 0.0
      %650 = vmatmul.mubr.f32.gmra.mrb[0].mxu0 %v565
      %v651 = vpop.f32.mrb[0].mxu0
      %v652 = vadd.f32 0.0, %v651
      %v653 = vpop.f32.mrb[0].mxu0
      %v654 = vadd.f32 0.0, %v653
      %655 = vdwg.mxu0
      %656 = vst [vmem:[%s248] sm:$0xff] %v634
      %657 = vst [vmem:[%s248 + $0x8] sm:$0xff] %v636
      %658 = vst [vmem:[%s248 + $0x10] sm:$0xff] %v640
      %659 = vst [vmem:[%s248 + $0x18] sm:$0xff] %v642
      %660 = vst [vmem:[%s248 + $0x20] sm:$0xff] %v646
      %661 = vst [vmem:[%s248 + $0x28] sm:$0xff] %v648
      %662 = vst [vmem:[%s248 + $0x30] sm:$0xff] %v652
      %663 = vst [vmem:[%s248 + $0x38] sm:$0xff] %v654
      %v664 = vld [vmem:[%s228 + $0x40] sm:$0xff]
      %v665 = vld [vmem:[%s228 + $0x48] sm:$0xff]
      %v666 = vld [vmem:[%s228 + $0x50] sm:$0xff]
      %v667 = vld [vmem:[%s228 + $0x58] sm:$0xff]
      %v668 = vld [vmem:[%s228 + $0x60] sm:$0xff]
      %v669 = vld [vmem:[%s228 + $0x68] sm:$0xff]
      %v670 = vld [vmem:[%s228 + $0x70] sm:$0xff]
      %v671 = vld [vmem:[%s228 + $0x78] sm:$0xff]
      %v672 = vld [vmem:[%s234 + $0x20] sm:$0xff]
      %v673 = vld [vmem:[%s234 + $0x28] sm:$0xff]
      %v674 = vld [vmem:[%s234 + $0x30] sm:$0xff]
      %v675 = vld [vmem:[%s234 + $0x38] sm:$0xff]
      %v676 = vld [vmem:[%s239 + $0x20] sm:$0xff]
      %v677 = vld [vmem:[%s239 + $0x28] sm:$0xff]
      %v678 = vld [vmem:[%s239 + $0x30] sm:$0xff]
      %v679 = vld [vmem:[%s239 + $0x38] sm:$0xff]
      %680 = vxpose.xlu0.b32.start [1/16] %v672, 128
      %681 = vxpose.xlu0.b32.cont [2/16] %v673, 128
      %682 = vxpose.xlu0.b32.cont [3/16] %v674, 128
      %683 = vxpose.xlu0.b32.cont [4/16] %v675, 128
      %684 = vxpose.xlu0.b32.cont [5/16] 0.0, 128
      %685 = vxpose.xlu0.b32.cont [6/16] 0.0, 128
      %686 = vxpose.xlu0.b32.cont [7/16] 0.0, 128
      %687 = vxpose.xlu0.b32.cont [8/16] 0.0, 128
      %688 = vxpose.xlu0.b32.cont [9/16] 0.0, 128
      %689 = vxpose.xlu0.b32.cont [10/16] 0.0, 128
      %690 = vxpose.xlu0.b32.cont [11/16] 0.0, 128
      %691 = vxpose.xlu0.b32.cont [12/16] 0.0, 128
      %692 = vxpose.xlu0.b32.cont [13/16] 0.0, 128
      %693 = vxpose.xlu0.b32.cont [14/16] 0.0, 128
      %694 = vxpose.xlu0.b32.cont [15/16] 0.0, 128
      %695 = vxpose.xlu0.b32.end [16/16] 0.0, 128
      %v696 = vpop.trf.xlu0
      %v697 = vpop.trf.xlu0
      %v698 = vpop.trf.xlu0
      %v699 = vpop.trf.xlu0
      %v700 = vpop.trf.xlu0
      %v701 = vpop.trf.xlu0
      %v702 = vpop.trf.xlu0
      %v703 = vpop.trf.xlu0
      %v704 = vpop.trf.xlu0
      %v705 = vpop.trf.xlu0
      %v706 = vpop.trf.xlu0
      %v707 = vpop.trf.xlu0
      %v708 = vpop.trf.xlu0
      %v709 = vpop.trf.xlu0
      %v710 = vpop.trf.xlu0
      %v711 = vpop.trf.xlu0
      %v713 = vsel %vm298, %v696, 0
      %v716 = vsel %vm298, %v697, 0
      %v719 = vsel %vm298, %v698, 0
      %v722 = vsel %vm298, %v699, 0
      %v725 = vsel %vm298, %v700, 0
      %v728 = vsel %vm298, %v701, 0
      %v731 = vsel %vm298, %v702, 0
      %v734 = vsel %vm298, %v703, 0
      %736 = vmatprep.subr.mxu0 %v665
      %737 = vmatpush1.msra.mxu0 %v664
      %738 = vmatprep.subr.mxu0 %v667
      %739 = vmatpush1.msra.mxu0 %v666
      %740 = vmatprep.subr.mxu0 %v669
      %741 = vmatpush1.msra.mxu0 %v668
      %742 = vmatprep.subr.mxu0 %v671
      %743 = vmatpush1.msra.mxu0 %v670
      %744 = vmatprep.subr.mxu0 0.0
      %745 = vmatpush1.msra.mxu0 0.0
      %746 = vmatprep.subr.mxu0 0.0
      %747 = vmatpush1.msra.mxu0 0.0
      %748 = vmatprep.subr.mxu0 0.0
      %749 = vmatpush1.msra.mxu0 0.0
      %750 = vmatprep.subr.mxu0 0.0
      %751 = vmatpush1.msra.mxu0 0.0
      %752 = vmatprep.subr.mxu0 0.0
      %753 = vmatpush1.msra.mxu0 0.0
      %754 = vmatprep.subr.mxu0 0.0
      %755 = vmatpush1.msra.mxu0 0.0
      %756 = vmatprep.subr.mxu0 0.0
      %757 = vmatpush1.msra.mxu0 0.0
      %758 = vmatprep.subr.mxu0 0.0
      %759 = vmatpush1.msra.mxu0 0.0
      %760 = vmatprep.subr.mxu0 0.0
      %761 = vmatpush1.msra.mxu0 0.0
      %762 = vmatprep.subr.mxu0 0.0
      %763 = vmatpush1.msra.mxu0 0.0
      %764 = vmatprep.subr.mxu0 0.0
      %765 = vmatpush1.msra.mxu0 0.0
      %766 = vmatprep.subr.mxu0 0.0
      %767 = vmatpush1.msra.mxu0 0.0
      %768 = vmatprep.subr.mxu0 0.0
      %769 = vmatpush1.msra.mxu0 0.0
      %770 = vmatprep.subr.mxu0 0.0
      %771 = vmatpush1.msra.mxu0 0.0
      %772 = vmatprep.subr.mxu0 0.0
      %773 = vmatpush1.msra.mxu0 0.0
      %774 = vmatprep.subr.mxu0 0.0
      %775 = vmatpush1.msra.mxu0 0.0
      %776 = vmatprep.subr.mxu0 0.0
      %777 = vmatpush1.msra.mxu0 0.0
      %778 = vmatprep.subr.mxu0 0.0
      %779 = vmatpush1.msra.mxu0 0.0
      %780 = vmatprep.subr.mxu0 0.0
      %781 = vmatpush1.msra.mxu0 0.0
      %782 = vmatprep.subr.mxu0 0.0
      %783 = vmatpush1.msra.mxu0 0.0
      %784 = vmatprep.subr.mxu0 0.0
      %785 = vmatpush1.msra.mxu0 0.0
      %786 = vmatprep.subr.mxu0 0.0
      %787 = vmatpush1.msra.mxu0 0.0
      %788 = vmatprep.subr.mxu0 0.0
      %789 = vmatpush1.msra.mxu0 0.0
      %790 = vmatprep.subr.mxu0 0.0
      %791 = vmatpush1.msra.mxu0 0.0
      %792 = vmatprep.subr.mxu0 0.0
      %793 = vmatpush1.msra.mxu0 0.0
      %794 = vmatprep.subr.mxu0 0.0
      %795 = vmatpush1.msra.mxu0 0.0
      %796 = vmatprep.subr.mxu0 0.0
      %797 = vmatpush1.msra.mxu0 0.0
      %798 = vmatprep.subr.mxu0 0.0
      %799 = vmatpush1.msra.mxu0 0.0
      %800 = vmatprep.mubr.f32.mxu0 0.0
      %801 = vmatmul.mubr.f32.gmra.mrb[0].mxu0 %v713
      %v802 = vpop.f32.mrb[0].mxu0
      %v803 = vadd.f32 0.0, %v802
      %v804 = vpop.f32.mrb[0].mxu0
      %v805 = vadd.f32 0.0, %v804
      %806 = vmatprep.mubr.f32.mxu0 0.0
      %807 = vmatmul.mubr.f32.gmra.mrb[0].mxu0 %v716
      %v808 = vpop.f32.mrb[0].mxu0
      %v809 = vadd.f32 0.0, %v808
      %v810 = vpop.f32.mrb[0].mxu0
      %v811 = vadd.f32 0.0, %v810
      %812 = vmatprep.mubr.f32.mxu0 0.0
      %813 = vmatmul.mubr.f32.gmra.mrb[0].mxu0 %v719
      %v814 = vpop.f32.mrb[0].mxu0
      %v815 = vadd.f32 0.0, %v814
      %v816 = vpop.f32.mrb[0].mxu0
      %v817 = vadd.f32 0.0, %v816
      %818 = vmatprep.mubr.f32.mxu0 0.0
      %819 = vmatmul.mubr.f32.gmra.mrb[0].mxu0 %v722
      %v820 = vpop.f32.mrb[0].mxu0
      %v821 = vadd.f32 0.0, %v820
      %v822 = vpop.f32.mrb[0].mxu0
      %v823 = vadd.f32 0.0, %v822
      %824 = vmatprep.mubr.f32.mxu0 0.0
      %825 = vmatmul.mubr.f32.gmra.mrb[0].mxu0 %v725
      %v826 = vpop.f32.mrb[0].mxu0
      %v827 = vadd.f32 0.0, %v826
      %v828 = vpop.f32.mrb[0].mxu0
      %v829 = vadd.f32 0.0, %v828
      %830 = vmatprep.mubr.f32.mxu0 0.0
      %831 = vmatmul.mubr.f32.gmra.mrb[0].mxu0 %v728
      %v832 = vpop.f32.mrb[0].mxu0
      %v833 = vadd.f32 0.0, %v832
      %v834 = vpop.f32.mrb[0].mxu0
      %v835 = vadd.f32 0.0, %v834
      %836 = vmatprep.mubr.f32.mxu0 0.0
      %837 = vmatmul.mubr.f32.gmra.mrb[0].mxu0 %v731
      %v838 = vpop.f32.mrb[0].mxu0
      %v839 = vadd.f32 0.0, %v838
      %v840 = vpop.f32.mrb[0].mxu0
      %v841 = vadd.f32 0.0, %v840
      %842 = vmatprep.mubr.f32.mxu0 0.0
      %843 = vmatmul.mubr.f32.gmra.mrb[0].mxu0 %v734
      %v844 = vpop.f32.mrb[0].mxu0
      %v845 = vadd.f32 0.0, %v844
      %v846 = vpop.f32.mrb[0].mxu0
      %v847 = vadd.f32 0.0, %v846
      %848 = vdwg.mxu0
      %v849 = vmax.f32 %v803, %v815
      %v850 = vmax.f32 %v809, %v821
      %v851 = vmax.f32 %v849, %v827
      %v852 = vmax.f32 %v850, %v833
      %v853 = vmax.f32 %v851, %v839
      %v854 = vmax.f32 %v852, %v845
      %v855 = vmax.f32 %v853, %v854
      %v856 = vrot.slane %v855, 4
      %v857 = vmax.f32 %v855, %v856
      %v858 = vrot.slane %v857, 2
      %v859 = vmax.f32 %v857, %v858
      %v860 = vrot.slane %v859, 1
      %v861 = vmax.f32 %v859, %v860
      %v862 = vmax.f32 %v805, %v817
      %v863 = vmax.f32 %v811, %v823
      %v864 = vmax.f32 %v862, %v829
      %v865 = vmax.f32 %v863, %v835
      %v866 = vmax.f32 %v864, %v841
      %v867 = vmax.f32 %v865, %v847
      %v868 = vmax.f32 %v866, %v867
      %v869 = vrot.slane %v868, 4
      %v870 = vmax.f32 %v868, %v869
      %v871 = vrot.slane %v870, 2
      %v872 = vmax.f32 %v870, %v871
      %v873 = vrot.slane %v872, 1
      %v874 = vmax.f32 %v872, %v873
      %v875 = vsub.f32 %v803, %v861
      %v876 = vsub.f32 %v805, %v874
      %v877 = vsub.f32 %v809, %v861
      %v878 = vsub.f32 %v811, %v874
      %v879 = vsub.f32 %v815, %v861
      %v880 = vsub.f32 %v817, %v874
      %v881 = vsub.f32 %v821, %v861
      %v882 = vsub.f32 %v823, %v874
      %v883 = vsub.f32 %v827, %v861
      %v884 = vsub.f32 %v829, %v874
      %v885 = vsub.f32 %v833, %v861
      %v886 = vsub.f32 %v835, %v874
      %v887 = vsub.f32 %v839, %v861
      %v888 = vsub.f32 %v841, %v874
      %v889 = vsub.f32 %v845, %v861
      %v890 = vsub.f32 %v847, %v874
      %v891 = vmul.f32 %v875, 1.442695
      %v892 = vpow.pop %v891
      %v893 = vmul.f32 %v876, 1.442695
      %v894 = vpow.pop %v893
      %v895 = vmul.f32 %v877, 1.442695
      %v896 = vpow.pop %v895
      %v897 = vmul.f32 %v878, 1.442695
      %v898 = vpow.pop %v897
      %v899 = vmul.f32 %v879, 1.442695
      %v900 = vpow.pop %v899
      %v901 = vmul.f32 %v880, 1.442695
      %v902 = vpow.pop %v901
      %v903 = vmul.f32 %v881, 1.442695
      %v904 = vpow.pop %v903
      %v905 = vmul.f32 %v882, 1.442695
      %v906 = vpow.pop %v905
      %v907 = vmul.f32 %v883, 1.442695
      %v908 = vpow.pop %v907
      %v909 = vmul.f32 %v884, 1.442695
      %v910 = vpow.pop %v909
      %v911 = vmul.f32 %v885, 1.442695
      %v912 = vpow.pop %v911
      %v913 = vmul.f32 %v886, 1.442695
      %v914 = vpow.pop %v913
      %v915 = vmul.f32 %v887, 1.442695
      %v916 = vpow.pop %v915
      %v917 = vmul.f32 %v888, 1.442695
      %v918 = vpow.pop %v917
      %v919 = vmul.f32 %v889, 1.442695
      %v920 = vpow.pop %v919
      %v921 = vmul.f32 %v890, 1.442695
      %v922 = vpow.pop %v921
      %v923 = vadd.f32 %v892, %v896
      %v924 = vadd.f32 %v923, %v900
      %v925 = vadd.f32 %v924, %v904
      %v926 = vadd.f32 %v925, %v908
      %v927 = vadd.f32 %v926, %v912
      %v928 = vadd.f32 %v927, %v916
      %v929 = vadd.f32 %v928, %v920
      %v930 = vrot.slane %v929, 4
      %v931 = vadd.f32 %v929, %v930
      %v932 = vrot.slane %v931, 2
      %v933 = vadd.f32 %v931, %v932
      %v934 = vrot.slane %v933, 1
      %v935 = vadd.f32 %v933, %v934
      %v936 = vadd.f32 %v894, %v898
      %v937 = vadd.f32 %v936, %v902
      %v938 = vadd.f32 %v937, %v906
      %v939 = vadd.f32 %v938, %v910
      %v940 = vadd.f32 %v939, %v914
      %v941 = vadd.f32 %v940, %v918
      %v942 = vadd.f32 %v941, %v922
      %v943 = vrot.slane %v942, 4
      %v944 = vadd.f32 %v942, %v943
      %v945 = vrot.slane %v944, 2
      %v946 = vadd.f32 %v944, %v945
      %v947 = vrot.slane %v946, 1
      %v948 = vadd.f32 %v946, %v947
      %v949 = vrcp.pop %v935
      %v950 = vrcp.pop %v948
      %v951 = vmul.f32 %v892, %v949
      %v952 = vmul.f32 %v894, %v950
      %v953 = vmul.f32 %v896, %v949
      %v954 = vmul.f32 %v898, %v950
      %v955 = vmul.f32 %v900, %v949
      %v956 = vmul.f32 %v902, %v950
      %v957 = vmul.f32 %v904, %v949
      %v958 = vmul.f32 %v906, %v950
      %v959 = vmul.f32 %v908, %v949
      %v960 = vmul.f32 %v910, %v950
      %v961 = vmul.f32 %v912, %v949
      %v962 = vmul.f32 %v914, %v950
      %v963 = vmul.f32 %v916, %v949
      %v964 = vmul.f32 %v918, %v950
      %v965 = vmul.f32 %v920, %v949
      %v966 = vmul.f32 %v922, %v950
      %v968 = vsel %vm554, %v676, 0
      %v971 = vsel %vm554, %v677, 0
      %v974 = vsel %vm554, %v678, 0
      %v977 = vsel %vm554, %v679, 0
      %979 = vmatprep.subr.mxu0 %v952
      %980 = vmatpush1.msra.mxu0 %v951
      %981 = vmatprep.subr.mxu0 %v954
      %982 = vmatpush1.msra.mxu0 %v953
      %983 = vmatprep.subr.mxu0 %v956
      %984 = vmatpush1.msra.mxu0 %v955
      %985 = vmatprep.subr.mxu0 %v958
      %986 = vmatpush1.msra.mxu0 %v957
      %987 = vmatprep.subr.mxu0 %v960
      %988 = vmatpush1.msra.mxu0 %v959
      %989 = vmatprep.subr.mxu0 %v962
      %990 = vmatpush1.msra.mxu0 %v961
      %991 = vmatprep.subr.mxu0 %v964
      %992 = vmatpush1.msra.mxu0 %v963
      %993 = vmatprep.subr.mxu0 %v966
      %994 = vmatpush1.msra.mxu0 %v965
      %995 = vmatprep.subr.mxu0 0.0
      %996 = vmatpush1.msra.mxu0 0.0
      %997 = vmatprep.subr.mxu0 0.0
      %998 = vmatpush1.msra.mxu0 0.0
      %999 = vmatprep.subr.mxu0 0.0
      %1000 = vmatpush1.msra.mxu0 0.0
      %1001 = vmatprep.subr.mxu0 0.0
      %1002 = vmatpush1.msra.mxu0 0.0
      %1003 = vmatprep.subr.mxu0 0.0
      %1004 = vmatpush1.msra.mxu0 0.0
      %1005 = vmatprep.subr.mxu0 0.0
      %1006 = vmatpush1.msra.mxu0 0.0
      %1007 = vmatprep.subr.mxu0 0.0
      %1008 = vmatpush1.msra.mxu0 0.0
      %1009 = vmatprep.subr.mxu0 0.0
      %1010 = vmatpush1.msra.mxu0 0.0
      %1011 = vmatprep.subr.mxu0 0.0
      %1012 = vmatpush1.msra.mxu0 0.0
      %1013 = vmatprep.subr.mxu0 0.0
      %1014 = vmatpush1.msra.mxu0 0.0
      %1015 = vmatprep.subr.mxu0 0.0
      %1016 = vmatpush1.msra.mxu0 0.0
      %1017 = vmatprep.subr.mxu0 0.0
      %1018 = vmatpush1.msra.mxu0 0.0
      %1019 = vmatprep.subr.mxu0 0.0
      %1020 = vmatpush1.msra.mxu0 0.0
      %1021 = vmatprep.subr.mxu0 0.0
      %1022 = vmatpush1.msra.mxu0 0.0
      %1023 = vmatprep.subr.mxu0 0.0
      %1024 = vmatpush1.msra.mxu0 0.0
      %1025 = vmatprep.subr.mxu0 0.0
      %1026 = vmatpush1.msra.mxu0 0.0
      %1027 = vmatprep.subr.mxu0 0.0
      %1028 = vmatpush1.msra.mxu0 0.0
      %1029 = vmatprep.subr.mxu0 0.0
      %1030 = vmatpush1.msra.mxu0 0.0
      %1031 = vmatprep.subr.mxu0 0.0
      %1032 = vmatpush1.msra.mxu0 0.0
      %1033 = vmatprep.subr.mxu0 0.0
      %1034 = vmatpush1.msra.mxu0 0.0
      %1035 = vmatprep.subr.mxu0 0.0
      %1036 = vmatpush1.msra.mxu0 0.0
      %1037 = vmatprep.subr.mxu0 0.0
      %1038 = vmatpush1.msra.mxu0 0.0
      %1039 = vmatprep.subr.mxu0 0.0
      %1040 = vmatpush1.msra.mxu0 0.0
      %1041 = vmatprep.subr.mxu0 0.0
      %1042 = vmatpush1.msra.mxu0 0.0
      %1043 = vmatprep.mubr.f32.mxu0 0.0
      %1044 = vmatmul.mubr.f32.gmra.mrb[0].mxu0 %v968
      %v1045 = vpop.f32.mrb[0].mxu0
      %v1046 = vadd.f32 0.0, %v1045
      %v1047 = vpop.f32.mrb[0].mxu0
      %v1048 = vadd.f32 0.0, %v1047
      %1049 = vmatprep.mubr.f32.mxu0 0.0
      %1050 = vmatmul.mubr.f32.gmra.mrb[0].mxu0 %v971
      %v1051 = vpop.f32.mrb[0].mxu0
      %v1052 = vadd.f32 0.0, %v1051
      %v1053 = vpop.f32.mrb[0].mxu0
      %v1054 = vadd.f32 0.0, %v1053
      %1055 = vmatprep.mubr.f32.mxu0 0.0
      %1056 = vmatmul.mubr.f32.gmra.mrb[0].mxu0 %v974
      %v1057 = vpop.f32.mrb[0].mxu0
      %v1058 = vadd.f32 0.0, %v1057
      %v1059 = vpop.f32.mrb[0].mxu0
      %v1060 = vadd.f32 0.0, %v1059
      %1061 = vmatprep.mubr.f32.mxu0 0.0
      %1062 = vmatmul.mubr.f32.gmra.mrb[0].mxu0 %v977
      %v1063 = vpop.f32.mrb[0].mxu0
      %v1064 = vadd.f32 0.0, %v1063
      %v1065 = vpop.f32.mrb[0].mxu0
      %v1066 = vadd.f32 0.0, %v1065
      %1067 = vdwg.mxu0
      %1068 = vst [vmem:[%s248 + $0x40] sm:$0xff] %v1046
      %1069 = vst [vmem:[%s248 + $0x48] sm:$0xff] %v1048
      %1070 = vst [vmem:[%s248 + $0x50] sm:$0xff] %v1052
      %1071 = vst [vmem:[%s248 + $0x58] sm:$0xff] %v1054
      %1072 = vst [vmem:[%s248 + $0x60] sm:$0xff] %v1058
      %1073 = vst [vmem:[%s248 + $0x68] sm:$0xff] %v1060
      %1074 = vst [vmem:[%s248 + $0x70] sm:$0xff] %v1064
      %1075 = vst [vmem:[%s248 + $0x78] sm:$0xff] %v1066
      %s1076 = smul.u32 2, %s19
      %p1077 = scmp.lt.s32.totalorder %s18, 1
      %s1078 = scalar_select %p1077, %s18, 1
      %p1079 = scmp.lt.s32.totalorder %s1076, 1
      %s1080 = scalar_select %p1079, %s1076, 1
      %s1081 = smul.addr %s1078, 16
      %s1082 = sadd.s32 %s1080, %s1081
      %s1083 = smul.addr %s1082, 8
      %s1084 = scalar_lea.vmem %s3, %s1083
      // Predicated region
      $region33: #{dca_forward.8} parent=31 // pred_check
        %p1085 = pneg %p126
      $region34: #{dca_forward.8} parent=31 // pred_check_branch
        %1087 = sbr.rel (%p1085) target = $region36
      $region35: #{dca_forward.8} parent=31 // pred_region
        %s1088 = smul.u32 2, %s19
      $region36: #{dca_forward.8} parent=31 // pred_fallthru
        _
    $region32: #{dca_forward.8} parent=5 // pred_fallthru
      _
    %p1089 = scmp.le.s32.totalorder 2, %s9
    // Predicated region
    $region37: #{dca_forward.8} parent=5 // pred_check
      %p1090 = pneg %p1089
    $region38: #{dca_forward.8} parent=5 // pred_check_branch
      %1092 = sbr.rel (%p1090) target = $region40
    $region39: #{dca_forward.8} parent=5 // pred_region
      %s1093 = ssub.s32 %s9, 2
      // Predicated region
      $region41: #{dca_forward.8} parent=39 // pred_check
        %p1094 = pneg %p132
      $region42: #{dca_forward.8} parent=39 // pred_check_branch
        %1096 = sbr.rel (%p1094) target = $region44
      $region43: #{dca_forward.8} parent=39 // pred_region
        %s1097 = smul.u32 2, %s21
        %p1098 = scmp.lt.s32.totalorder %s20, 1
        %s1099 = scalar_select %p1098, %s20, 1
        %p1100 = scmp.lt.s32.totalorder %s1097, 1
        %s1101 = scalar_select %p1100, %s1097, 1
        %s1102 = smul.addr %s1099, 16
        %s1103 = sadd.s32 %s1101, %s1102
        %s1104 = smul.addr %s1103, 8
        %s1105 = scalar_lea.vmem %s3, %s1104
      $region44: #{dca_forward.8} parent=39 // pred_fallthru
        _
    $region40: #{dca_forward.8} parent=5 // pred_fallthru
      _
  $region6: #{dca_forward.8} parent=0 // loop_footer
    %s13 = sadd.s32 1, %s9
  $region7: #{dca_forward.8} parent=0 // loop_footer_branch
    %8 = sbr.rel target = $region3
  $region8: #{dca_forward.8} parent=0 // loop_exit
    _

// kernel: dca_forward.7
$region0: #{dca_forward.7}
  #allocation0 [shape = 'u32[]', space=smem, size = 0x4, offset = 0x4, fixed_abs, tag = 'smem constant byte address 0x4 - core index']
  #allocation1 [shape = 'u32[144,128]{1,0:T(1,128)}', space=vmem, size = 0x12000, scoped, tag = 'internal scratch']
  %s0 = inlined_call_operand.vmem [shape: f32[2,2,2,64], index: 0, kind: input, shape index: {}]
  %s1 = inlined_call_operand.vmem [shape: f32[2,64], index: 1, kind: input, shape index: {}]
  %s2 = inlined_call_operand.vmem [shape: f32[2,2,512,16], index: 2, kind: input, shape index: {}]
  %s3 = inlined_call_operand.vmem [shape: f32[128,64], index: 3, kind: input, shape index: {}]
  %s4 = inlined_call_operand.vmem [shape: f32[128,1], index: 4, kind: input, shape index: {}]
  %s5 = inlined_call_operand.vmem [shape: f32[2,64,64], index: 5, kind: output, shape index: {0}]
  %s6 = inlined_call_operand.vmem [shape: f32[2,64,64], index: 6, kind: output, shape index: {1}]
  %7 = xla_tuple %s5, %s6
  %s8 = sld [smem:[#allocation0]]
  $region61: #{dca_forward.7} parent=0
    _
  %s10 = ssub.s32 1, %s8
  %s11 = scalar_select 0, %s10, %s8
  loop: start=0, step=1, limit=4
  $region2: #{dca_forward.7} parent=0 // loop_pre_header
    _
  $region3: #{dca_forward.7} parent=0 // loop_header
    %s13 = sphi 0, %s17
    %p14 = scmp.ge.s32.totalorder %s13, 4
    %s23 = sphi 0, %s25
    %s26 = sphi 0, %s23
    %s27 = sphi 0, %s26
    %s43 = sphi 0, %s27
    %s47 = sphi 0, %s47
    %s49 = sphi 0, %s47
    %s50 = sphi 0, %s49
    %s64 = sphi 0, %s50
    %s70 = sphi 0, %s72
    %s73 = sphi 0, %s70
    %s74 = sphi 0, %s73
    %s90 = sphi 0, %s74
    %s94 = sphi 0, %s94
    %s96 = sphi 0, %s94
    %s97 = sphi 0, %s96
    %s111 = sphi 0, %s97
    %s115 = sphi 0, %s115
    %s117 = sphi 0, %s115
    %s118 = sphi 0, %s117
    %s132 = sphi 0, %s118
    %s138 = sphi 0, %s140
    %s141 = sphi 0, %s138
    %s142 = sphi 0, %s141
    %s158 = sphi 0, %s142
    %s164 = sphi 0, %s166
    %s167 = sphi 0, %s164
    %s168 = sphi 0, %s167
    %s184 = sphi 0, %s168
  $region4: #{dca_forward.7} parent=0 // loop_header_branch
    %16 = sbr.rel (%p14) target = $region8
  $region5: #{dca_forward.7} parent=0 // loop_body
    %s18 = ssub.s32 %s13, 1
    %s19 = ssub.s32 %s13, 2
    %s20 = sadd.s32 %s13, 1
    %s21 = ssub.s32 %s13, %s20
    %p22 = scmp.eq.s32.totalorder %s21, 0
    %s24 = sadd.s32 %s23, 1
    %s25 = scalar_select %p22, %s23, %s24
    %p28 = pneg %p22
    %p29 = scmp.eq.s32.totalorder %s13, 1
    %p30 = por %p28, %p29
    %p31 = scmp.ne.s32.totalorder %s23, %s26
    %p32 = scmp.eq.s32.totalorder %s13, 0
    %p33 = por %p31, %p32
    %p34 = scmp.ne.s32.totalorder %s23, %s26
    %p35 = scmp.eq.s32.totalorder %s18, 1
    %p36 = por %p34, %p35
    %p37 = scmp.ne.s32.totalorder %s26, %s27
    %p38 = scmp.eq.s32.totalorder %s18, 0
    %p39 = por %p37, %p38
    %p40 = scmp.ne.s32.totalorder %s26, %s27
    %p41 = scmp.eq.s32.totalorder %s19, 1
    %p42 = por %p40, %p41
    %p44 = scmp.ne.s32.totalorder %s27, %s43
    %p45 = scmp.eq.s32.totalorder %s19, 0
    %p46 = por %p44, %p45
    %s48 = sadd.s32 %s47, 1
    %p51 = scmp.eq.s32.totalorder %s13, 1
    %p52 = scmp.ne.s32.totalorder %s47, %s49
    %p53 = scmp.eq.s32.totalorder %s13, 0
    %p54 = por %p52, %p53
    %p55 = scmp.ne.s32.totalorder %s47, %s49
    %p56 = scmp.eq.s32.totalorder %s18, 1
    %p57 = por %p55, %p56
    %p58 = scmp.ne.s32.totalorder %s49, %s50
    %p59 = scmp.eq.s32.totalorder %s18, 0
    %p60 = por %p58, %p59
    %p61 = scmp.ne.s32.totalorder %s49, %s50
    %p62 = scmp.eq.s32.totalorder %s19, 1
    %p63 = por %p61, %p62
    %p65 = scmp.ne.s32.totalorder %s50, %s64
    %p66 = scmp.eq.s32.totalorder %s19, 0
    %p67 = por %p65, %p66
    %s68 = ssub.s32 %s13, %s20
    %p69 = scmp.eq.s32.totalorder %s68, 0
    %s71 = sadd.s32 %s70, 1
    %s72 = scalar_select %p69, %s70, %s71
    %p75 = pneg %p69
    %p76 = scmp.eq.s32.totalorder %s13, 1
    %p77 = por %p75, %p76
    %p78 = scmp.ne.s32.totalorder %s70, %s73
    %p79 = scmp.eq.s32.totalorder %s13, 0
    %p80 = por %p78, %p79
    %p81 = scmp.ne.s32.totalorder %s70, %s73
    %p82 = scmp.eq.s32.totalorder %s18, 1
    %p83 = por %p81, %p82
    %p84 = scmp.ne.s32.totalorder %s73, %s74
    %p85 = scmp.eq.s32.totalorder %s18, 0
    %p86 = por %p84, %p85
    %p87 = scmp.ne.s32.totalorder %s73, %s74
    %p88 = scmp.eq.s32.totalorder %s19, 1
    %p89 = por %p87, %p88
    %p91 = scmp.ne.s32.totalorder %s74, %s90
    %p92 = scmp.eq.s32.totalorder %s19, 0
    %p93 = por %p91, %p92
    %s95 = sadd.s32 %s94, 1
    %p98 = scmp.eq.s32.totalorder %s13, 1
    %p99 = scmp.ne.s32.totalorder %s94, %s96
    %p100 = scmp.eq.s32.totalorder %s13, 0
    %p101 = por %p99, %p100
    %p102 = scmp.ne.s32.totalorder %s94, %s96
    %p103 = scmp.eq.s32.totalorder %s18, 1
    %p104 = por %p102, %p103
    %p105 = scmp.ne.s32.totalorder %s96, %s97
    %p106 = scmp.eq.s32.totalorder %s18, 0
    %p107 = por %p105, %p106
    %p108 = scmp.ne.s32.totalorder %s96, %s97
    %p109 = scmp.eq.s32.totalorder %s19, 1
    %p110 = por %p108, %p109
    %p112 = scmp.ne.s32.totalorder %s97, %s111
    %p113 = scmp.eq.s32.totalorder %s19, 0
    %p114 = por %p112, %p113
    %s116 = sadd.s32 %s115, 1
    %p119 = scmp.eq.s32.totalorder %s13, 1
    %p120 = scmp.ne.s32.totalorder %s115, %s117
    %p121 = scmp.eq.s32.totalorder %s13, 0
    %p122 = por %p120, %p121
    %p123 = scmp.ne.s32.totalorder %s115, %s117
    %p124 = scmp.eq.s32.totalorder %s18, 1
    %p125 = por %p123, %p124
    %p126 = scmp.ne.s32.totalorder %s117, %s118
    %p127 = scmp.eq.s32.totalorder %s18, 0
    %p128 = por %p126, %p127
    %p129 = scmp.ne.s32.totalorder %s117, %s118
    %p130 = scmp.eq.s32.totalorder %s19, 1
    %p131 = por %p129, %p130
    %p133 = scmp.ne.s32.totalorder %s118, %s132
    %p134 = scmp.eq.s32.totalorder %s19, 0
    %p135 = por %p133, %p134
    %s136 = ssub.s32 %s13, %s20
    %p137 = scmp.eq.s32.totalorder %s136, 0
    %s139 = sadd.s32 %s138, 1
    %s140 = scalar_select %p137, %s138, %s139
    %p143 = pneg %p137
    %p144 = scmp.eq.s32.totalorder %s13, 1
    %p145 = por %p143, %p144
    %p146 = scmp.ne.s32.totalorder %s138, %s141
    %p147 = scmp.eq.s32.totalorder %s13, 0
    %p148 = por %p146, %p147
    %p149 = scmp.ne.s32.totalorder %s138, %s141
    %p150 = scmp.eq.s32.totalorder %s18, 1
    %p151 = por %p149, %p150
    %p152 = scmp.ne.s32.totalorder %s141, %s142
    %p153 = scmp.eq.s32.totalorder %s18, 0
    %p154 = por %p152, %p153
    %p155 = scmp.ne.s32.totalorder %s141, %s142
    %p156 = scmp.eq.s32.totalorder %s19, 1
    %p157 = por %p155, %p156
    %p159 = scmp.ne.s32.totalorder %s142, %s158
    %p160 = scmp.eq.s32.totalorder %s19, 0
    %p161 = por %p159, %p160
    %s162 = ssub.s32 %s13, %s20
    %p163 = scmp.eq.s32.totalorder %s162, 0
    %s165 = sadd.s32 %s164, 1
    %s166 = scalar_select %p163, %s164, %s165
    %p169 = pneg %p163
    %p170 = scmp.eq.s32.totalorder %s13, 1
    %p171 = por %p169, %p170
    %p172 = scmp.ne.s32.totalorder %s164, %s167
    %p173 = scmp.eq.s32.totalorder %s13, 0
    %p174 = por %p172, %p173
    %p175 = scmp.ne.s32.totalorder %s164, %s167
    %p176 = scmp.eq.s32.totalorder %s18, 1
    %p177 = por %p175, %p176
    %p178 = scmp.ne.s32.totalorder %s167, %s168
    %p179 = scmp.eq.s32.totalorder %s18, 0
    %p180 = por %p178, %p179
    %p181 = scmp.ne.s32.totalorder %s167, %s168
    %p182 = scmp.eq.s32.totalorder %s19, 1
    %p183 = por %p181, %p182
    %p185 = scmp.ne.s32.totalorder %s168, %s184
    %p186 = scmp.eq.s32.totalorder %s19, 0
    %p187 = por %p185, %p186
    %p188 = scmp.le.s32.totalorder 1, %s13
    %p189 = scmp.lt.s32.totalorder %s13, 3
    %p190 = pnand %p188, %p189
    %p191 = pneg %p190
    // Predicated region
    $region9: #{dca_forward.7} parent=5 // pred_check
      _
    $region10: #{dca_forward.7} parent=5 // pred_check_branch
      %193 = sbr.rel (%p190) target = $region12
    $region11: #{dca_forward.7} parent=5 // pred_region
      %s194 = ssub.s32 %s13, 1
      // Predicated region
      $region13: #{dca_forward.7} parent=11 // pred_check
        %p195 = pneg %p60
      $region14: #{dca_forward.7} parent=11 // pred_check_branch
        %197 = sbr.rel (%p195) target = $region16
      $region15: #{dca_forward.7} parent=11 // pred_region
        _
      $region16: #{dca_forward.7} parent=11 // pred_fallthru
        _
      // Predicated region
      $region17: #{dca_forward.7} parent=11 // pred_check
        %p198 = pneg %p107
      $region18: #{dca_forward.7} parent=11 // pred_check_branch
        %200 = sbr.rel (%p198) target = $region20
      $region19: #{dca_forward.7} parent=11 // pred_region
        _
      $region20: #{dca_forward.7} parent=11 // pred_fallthru
        _
      // Predicated region
      $region21: #{dca_forward.7} parent=11 // pred_check
        %p201 = pneg %p128
      $region22: #{dca_forward.7} parent=11 // pred_check_branch
        %203 = sbr.rel (%p201) target = $region24
      $region23: #{dca_forward.7} parent=11 // pred_region
        _
      $region24: #{dca_forward.7} parent=11 // pred_fallthru
        _
    $region12: #{dca_forward.7} parent=5 // pred_fallthru
      _
    %p204 = scmp.lt.s32.totalorder %s13, 2
    // Predicated region
    $region25: #{dca_forward.7} parent=5 // pred_check
      %p205 = pneg %p204
    $region26: #{dca_forward.7} parent=5 // pred_check_branch
      %207 = sbr.rel (%p205) target = $region28
    $region27: #{dca_forward.7} parent=5 // pred_region
      // Predicated region
      $region29: #{dca_forward.7} parent=27 // pred_check
        %p208 = pneg %p33
      $region30: #{dca_forward.7} parent=27 // pred_check_branch
        %210 = sbr.rel (%p208) target = $region32
      $region31: #{dca_forward.7} parent=27 // pred_region
        %p211 = scmp.lt.s32.totalorder %s13, 1
        %s212 = scalar_select %p211, %s13, 1
        %s213 = smul.addr %s212, 2
        %s214 = smul.addr %s213, 2
        %s215 = scalar_lea.vmem %s0, %s214
      $region32: #{dca_forward.7} parent=27 // pred_fallthru
        _
      // Predicated region
      $region33: #{dca_forward.7} parent=27 // pred_check
        %p216 = pneg %p80
      $region34: #{dca_forward.7} parent=27 // pred_check_branch
        %218 = sbr.rel (%p216) target = $region36
      $region35: #{dca_forward.7} parent=27 // pred_region
        %p219 = scmp.lt.s32.totalorder %s13, 1
        %s220 = scalar_select %p219, %s13, 1
        %s221 = smul.addr %s220, 128
        %s222 = smul.addr %s221, 8
        %s223 = scalar_lea.vmem %s2, %s222
      $region36: #{dca_forward.7} parent=27 // pred_fallthru
        _
    $region28: #{dca_forward.7} parent=5 // pred_fallthru
      _
    %p224 = scmp.le.s32.totalorder 1, %s13
    %p225 = scmp.lt.s32.totalorder %s13, 3
    %p226 = pnand %p224, %p225
    %p227 = pneg %p226
    // Predicated region
    $region37: #{dca_forward.7} parent=5 // pred_check
      _
    $region38: #{dca_forward.7} parent=5 // pred_check_branch
      %229 = sbr.rel (%p226) target = $region40
    $region39: #{dca_forward.7} parent=5 // pred_region
      %s230 = ssub.s32 %s13, 1
      %p231 = scmp.lt.s32.totalorder %s18, 1
      %s232 = scalar_select %p231, %s18, 1
      %s233 = smul.addr %s232, 2
      %s234 = smul.addr %s233, 2
      %s235 = scalar_lea.vmem %s0, %s234
      %p236 = pneg %p39
      %p237 = pneg %p36
      %p238 = pneg %p60
      %p239 = pneg %p57
      %p240 = scmp.lt.s32.totalorder %s18, 1
      %s241 = scalar_select %p240, %s18, 1
      %s242 = smul.addr %s241, 128
      %s243 = smul.addr %s242, 8
      %s244 = scalar_lea.vmem %s2, %s243
      %p245 = pneg %p86
      %p246 = pneg %p83
      %p247 = pneg %p107
      %p248 = pneg %p104
      %p249 = pneg %p128
      %p250 = pneg %p125
      %p251 = pneg %p154
      %p252 = pneg %p151
      %p253 = scmp.lt.s32.totalorder %s18, 1
      %s254 = scalar_select %p253, %s18, 1
      %s255 = smul.addr %s254, 8
      %s256 = smul.addr %s255, 8
      %s257 = scalar_lea.vmem %s5, %s256
      %p258 = pneg %p180
      %p259 = pneg %p177
      %p260 = scmp.lt.s32.totalorder %s18, 1
      %s261 = scalar_select %p260, %s18, 1
      %s262 = smul.addr %s261, 8
      %s263 = smul.addr %s262, 8
      %s264 = scalar_lea.vmem %s6, %s263
      %p265 = scmp.lt.s32.totalorder %s18, 1
      %s266 = scalar_select %p265, %s18, 1
      %s267 = smul.addr %s266, 2
      %s268 = smul.addr %s267, 2
      %s269 = scalar_lea.vmem %s0, %s268
      %p270 = scmp.lt.s32.totalorder %s18, 1
      %s271 = scalar_select %p270, %s18, 1
      %s272 = smul.addr %s271, 128
      %s273 = smul.addr %s272, 8
      %s274 = scalar_lea.vmem %s2, %s273
      %p275 = scmp.lt.s32.totalorder %s18, 1
      %s276 = scalar_select %p275, %s18, 1
      %s277 = smul.addr %s276, 8
      %s278 = smul.addr %s277, 8
      %s279 = scalar_lea.vmem %s5, %s278
      %p280 = scmp.lt.s32.totalorder %s18, 1
      %s281 = scalar_select %p280, %s18, 1
      %s282 = smul.addr %s281, 8
      %s283 = smul.addr %s282, 8
      %s284 = scalar_lea.vmem %s6, %s283
      %v285 = vld [vmem:[%s274] sm:$0xff]
      %v286 = vld [vmem:[%s274 + $0x8] sm:$0xff]
      %v287 = vld [vmem:[%s274 + $0x10] sm:$0xff]
      %v288 = vld [vmem:[%s274 + $0x18] sm:$0xff]
      %v289 = vld [vmem:[%s274 + $0x20] sm:$0xff]
      %v290 = vld [vmem:[%s274 + $0x28] sm:$0xff]
      %v291 = vld [vmem:[%s274 + $0x30] sm:$0xff]
      %v292 = vld [vmem:[%s274 + $0x38] sm:$0xff]
      %v293 = vld [vmem:[%s274 + $0x40] sm:$0xff]
      %v294 = vld [vmem:[%s274 + $0x48] sm:$0xff]
      %v295 = vld [vmem:[%s274 + $0x50] sm:$0xff]
      %v296 = vld [vmem:[%s274 + $0x58] sm:$0xff]
      %v297 = vld [vmem:[%s274 + $0x60] sm:$0xff]
      %v298 = vld [vmem:[%s274 + $0x68] sm:$0xff]
      %v299 = vld [vmem:[%s274 + $0x70] sm:$0xff]
      %v300 = vld [vmem:[%s274 + $0x78] sm:$0xff]
      %v301 = vld [vmem:[%s274 + $0x80] sm:$0xff]
      %v302 = vld [vmem:[%s274 + $0x88] sm:$0xff]
      %v303 = vld [vmem:[%s274 + $0x90] sm:$0xff]
      %v304 = vld [vmem:[%s274 + $0x98] sm:$0xff]
      %v305 = vld [vmem:[%s274 + $0xa0] sm:$0xff]
      %v306 = vld [vmem:[%s274 + $0xa8] sm:$0xff]
      %v307 = vld [vmem:[%s274 + $0xb0] sm:$0xff]
      %v308 = vld [vmem:[%s274 + $0xb8] sm:$0xff]
      %v309 = vld [vmem:[%s274 + $0xc0] sm:$0xff]
      %v310 = vld [vmem:[%s274 + $0xc8] sm:$0xff]
      %v311 = vld [vmem:[%s274 + $0xd0] sm:$0xff]
      %v312 = vld [vmem:[%s274 + $0xd8] sm:$0xff]
      %v313 = vld [vmem:[%s274 + $0xe0] sm:$0xff]
      %v314 = vld [vmem:[%s274 + $0xe8] sm:$0xff]
      %v315 = vld [vmem:[%s274 + $0xf0] sm:$0xff]
      %v316 = vld [vmem:[%s274 + $0xf8] sm:$0xff]
      %v317 = vld [vmem:[%s274 + $0x100] sm:$0xff]
      %v318 = vld [vmem:[%s274 + $0x108] sm:$0xff]
      %v319 = vld [vmem:[%s274 + $0x110] sm:$0xff]
      %v320 = vld [vmem:[%s274 + $0x118] sm:$0xff]
      %v321 = vld [vmem:[%s274 + $0x120] sm:$0xff]
      %v322 = vld [vmem:[%s274 + $0x128] sm:$0xff]
      %v323 = vld [vmem:[%s274 + $0x130] sm:$0xff]
      %v324 = vld [vmem:[%s274 + $0x138] sm:$0xff]
      %v325 = vld [vmem:[%s274 + $0x140] sm:$0xff]
      %v326 = vld [vmem:[%s274 + $0x148] sm:$0xff]
      %v327 = vld [vmem:[%s274 + $0x150] sm:$0xff]
      %v328 = vld [vmem:[%s274 + $0x158] sm:$0xff]
      %v329 = vld [vmem:[%s274 + $0x160] sm:$0xff]
      %v330 = vld [vmem:[%s274 + $0x168] sm:$0xff]
      %v331 = vld [vmem:[%s274 + $0x170] sm:$0xff]
      %v332 = vld [vmem:[%s274 + $0x178] sm:$0xff]
      %v333 = vld [vmem:[%s274 + $0x180] sm:$0xff]
      %v334 = vld [vmem:[%s274 + $0x188] sm:$0xff]
      %v335 = vld [vmem:[%s274 + $0x190] sm:$0xff]
      %v336 = vld [vmem:[%s274 + $0x198] sm:$0xff]
      %v337 = vld [vmem:[%s274 + $0x1a0] sm:$0xff]
      %v338 = vld [vmem:[%s274 + $0x1a8] sm:$0xff]
      %v339 = vld [vmem:[%s274 + $0x1b0] sm:$0xff]
      %v340 = vld [vmem:[%s274 + $0x1b8] sm:$0xff]
      %v341 = vld [vmem:[%s274 + $0x1c0] sm:$0xff]
      %v342 = vld [vmem:[%s274 + $0x1c8] sm:$0xff]
      %v343 = vld [vmem:[%s274 + $0x1d0] sm:$0xff]
      %v344 = vld [vmem:[%s274 + $0x1d8] sm:$0xff]
      %v345 = vld [vmem:[%s274 + $0x1e0] sm:$0xff]
      %v346 = vld [vmem:[%s274 + $0x1e8] sm:$0xff]
      %v347 = vld [vmem:[%s274 + $0x1f0] sm:$0xff]
      %v348 = vld [vmem:[%s274 + $0x1f8] sm:$0xff]
      %v349 = vld [vmem:[%s269] sm:$0x3]
      %v350 = vld [vmem:[%s1] sm:$0x3]
      %v351 = vadd.f32 %v349, %v350
      %v352 = vmax.f32 %v351, -1.0
      %v353 = vmin.f32 %v352, 1.0
      %v354 = vadd.f32 %v353, 1.0
      %v355 = vmul.f32 %v354, 7.5
      %v356 = vfloor.f32 %v355
      %v357 = vsub.f32 %v355, %v356
      %v358 = vsub.f32 1.0, %v357
      %v359 = vcvt.f32.s32.to.zero.pseudo %v356
      %vm360 = vcmp.gt.s32.totalorder %v359, 0
      %v361 = vsel %vm360, %v359, 0
      %vm362 = vcmp.lt.s32.totalorder %v361, 15
      %v363 = vsel %vm362, %v361, 15
      %v364 = vadd.s32 %v363, 1
      %vm365 = vcmp.lt.s32.totalorder %v364, 15
      %v366 = vsel %vm365, %v364, 15
      %v367 = vlaneseq
      %v368 = vshrl.u32 %v367, 7
      %v369 = vadd.s32 %v368, 8
      %v370 = vlaneseq
      %v371 = vshrl.u32 %v370, 7
      %v372 = vsub.s32 1, %v371
      %v373 = vrot.slane %v363, %v372
      %vm374 = vcmp.eq.s32.totalorder %v368, %v373
      %vm375 = vcmp.eq.s32.totalorder %v369, %v373
      %v376 = vlaneseq
      %v377 = vshrl.u32 %v376, 7
      %v378 = vsub.s32 1, %v377
      %v379 = vrot.slane %v358, %v378
      %v380 = vsel %vm374, %v379, 0.0
      %v381 = vsel %vm375, %v379, 0.0
      %v382 = vlaneseq
      %v383 = vshrl.u32 %v382, 7
      %v384 = vsub.s32 1, %v383
      %v385 = vrot.slane %v366, %v384
      %vm386 = vcmp.eq.s32.totalorder %v368, %v385
      %vm387 = vcmp.eq.s32.totalorder %v369, %v385
      %v388 = vlaneseq
      %v389 = vshrl.u32 %v388, 7
      %v390 = vsub.s32 1, %v389
      %v391 = vrot.slane %v357, %v390
      %v392 = vsel %vm386, %v391, 0.0
      %v393 = vsel %vm387, %v391, 0.0
      %v394 = vadd.f32 %v380, %v392
      %v395 = vadd.f32 %v381, %v393
      %v396 = vlaneseq
      %v397 = vshrl.u32 %v396, 7
      %v398 = vsub.s32 0, %v397
      %v399 = vrot.slane %v363, %v398
      %vm400 = vcmp.eq.s32.totalorder %v368, %v399
      %vm401 = vcmp.eq.s32.totalorder %v369, %v399
      %v402 = vlaneseq
      %v403 = vshrl.u32 %v402, 7
      %v404 = vsub.s32 0, %v403
      %v405 = vrot.slane %v358, %v404
      %v406 = vsel %vm400, %v405, 0.0
      %v407 = vsel %vm401, %v405, 0.0
      %v408 = vlaneseq
      %v409 = vshrl.u32 %v408, 7
      %v410 = vsub.s32 0, %v409
      %v411 = vrot.slane %v366, %v410
      %vm412 = vcmp.eq.s32.totalorder %v368, %v411
      %vm413 = vcmp.eq.s32.totalorder %v369, %v411
      %v414 = vlaneseq
      %v415 = vshrl.u32 %v414, 7
      %v416 = vsub.s32 0, %v415
      %v417 = vrot.slane %v357, %v416
      %v418 = vsel %vm412, %v417, 0.0
      %v419 = vsel %vm413, %v417, 0.0
      %v420 = vadd.f32 %v406, %v418
      %v421 = vadd.f32 %v407, %v419
      %vm422 = vcmask 130048
      %v424 = vsel %vm422, %v285, 0
      %v427 = vsel %vm422, %v286, 0
      %v430 = vsel %vm422, %v287, 0
      %v433 = vsel %vm422, %v288, 0
      %v436 = vsel %vm422, %v289, 0
      %v439 = vsel %vm422, %v290, 0
      %v442 = vsel %vm422, %v291, 0
      %v445 = vsel %vm422, %v292, 0
      %v448 = vsel %vm422, %v293, 0
      %v451 = vsel %vm422, %v294, 0
      %v454 = vsel %vm422, %v295, 0
      %v457 = vsel %vm422, %v296, 0
      %v460 = vsel %vm422, %v297, 0
      %v463 = vsel %vm422, %v298, 0
      %v466 = vsel %vm422, %v299, 0
      %v469 = vsel %vm422, %v300, 0
      %v472 = vsel %vm422, %v301, 0
      %v475 = vsel %vm422, %v302, 0
      %v478 = vsel %vm422, %v303, 0
      %v481 = vsel %vm422, %v304, 0
      %v484 = vsel %vm422, %v305, 0
      %v487 = vsel %vm422, %v306, 0
      %v490 = vsel %vm422, %v307, 0
      %v493 = vsel %vm422, %v308, 0
      %v496 = vsel %vm422, %v309, 0
      %v499 = vsel %vm422, %v310, 0
      %v502 = vsel %vm422, %v311, 0
      %v505 = vsel %vm422, %v312, 0
      %v508 = vsel %vm422, %v313, 0
      %v511 = vsel %vm422, %v314, 0
      %v514 = vsel %vm422, %v315, 0
      %v517 = vsel %vm422, %v316, 0
      %v520 = vsel %vm422, %v317, 0
      %v523 = vsel %vm422, %v318, 0
      %v526 = vsel %vm422, %v319, 0
      %v529 = vsel %vm422, %v320, 0
      %v532 = vsel %vm422, %v321, 0
      %v535 = vsel %vm422, %v322, 0
      %v538 = vsel %vm422, %v323, 0
      %v541 = vsel %vm422, %v324, 0
      %v544 = vsel %vm422, %v325, 0
      %v547 = vsel %vm422, %v326, 0
      %v550 = vsel %vm422, %v327, 0
      %v553 = vsel %vm422, %v328, 0
      %v556 = vsel %vm422, %v329, 0
      %v559 = vsel %vm422, %v330, 0
      %v562 = vsel %vm422, %v331, 0
      %v565 = vsel %vm422, %v332, 0
      %v568 = vsel %vm422, %v333, 0
      %v571 = vsel %vm422, %v334, 0
      %v574 = vsel %vm422, %v335, 0
      %v577 = vsel %vm422, %v336, 0
      %v580 = vsel %vm422, %v337, 0
      %v583 = vsel %vm422, %v338, 0
      %v586 = vsel %vm422, %v339, 0
      %v589 = vsel %vm422, %v340, 0
      %v592 = vsel %vm422, %v341, 0
      %v595 = vsel %vm422, %v342, 0
      %v598 = vsel %vm422, %v343, 0
      %v601 = vsel %vm422, %v344, 0
      %v604 = vsel %vm422, %v345, 0
      %v607 = vsel %vm422, %v346, 0
      %v610 = vsel %vm422, %v347, 0
      %v613 = vsel %vm422, %v348, 0
      %615 = vmatprep.subr.mxu0 0.0
      %616 = vmatpush1.msra.mxu0 %v394
      %617 = vmatprep.subr.mxu0 0.0
      %618 = vmatpush1.msra.mxu0 %v395
      %619 = vmatprep.subr.mxu0 0.0
      %620 = vmatpush1.msra.mxu0 0.0
      %621 = vmatprep.subr.mxu0 0.0
      %622 = vmatpush1.msra.mxu0 0.0
      %623 = vmatprep.subr.mxu0 0.0
      %624 = vmatpush1.msra.mxu0 0.0
      %625 = vmatprep.subr.mxu0 0.0
      %626 = vmatpush1.msra.mxu0 0.0
      %627 = vmatprep.subr.mxu0 0.0
      %628 = vmatpush1.msra.mxu0 0.0
      %629 = vmatprep.subr.mxu0 0.0
      %630 = vmatpush1.msra.mxu0 0.0
      %631 = vmatprep.subr.mxu0 0.0
      %632 = vmatpush1.msra.mxu0 0.0
      %633 = vmatprep.subr.mxu0 0.0
      %634 = vmatpush1.msra.mxu0 0.0
      %635 = vmatprep.subr.mxu0 0.0
      %636 = vmatpush1.msra.mxu0 0.0
      %637 = vmatprep.subr.mxu0 0.0
      %638 = vmatpush1.msra.mxu0 0.0
      %639 = vmatprep.subr.mxu0 0.0
      %640 = vmatpush1.msra.mxu0 0.0
      %641 = vmatprep.subr.mxu0 0.0
      %642 = vmatpush1.msra.mxu0 0.0
      %643 = vmatprep.subr.mxu0 0.0
      %644 = vmatpush1.msra.mxu0 0.0
      %645 = vmatprep.subr.mxu0 0.0
      %646 = vmatpush1.msra.mxu0 0.0
      %647 = vmatprep.subr.mxu0 0.0
      %648 = vmatpush1.msra.mxu0 0.0
      %649 = vmatprep.subr.mxu0 0.0
      %650 = vmatpush1.msra.mxu0 0.0
      %651 = vmatprep.subr.mxu0 0.0
      %652 = vmatpush1.msra.mxu0 0.0
      %653 = vmatprep.subr.mxu0 0.0
      %654 = vmatpush1.msra.mxu0 0.0
      %655 = vmatprep.subr.mxu0 0.0
      %656 = vmatpush1.msra.mxu0 0.0
      %657 = vmatprep.subr.mxu0 0.0
      %658 = vmatpush1.msra.mxu0 0.0
      %659 = vmatprep.subr.mxu0 0.0
      %660 = vmatpush1.msra.mxu0 0.0
      %661 = vmatprep.subr.mxu0 0.0
      %662 = vmatpush1.msra.mxu0 0.0
      %663 = vmatprep.subr.mxu0 0.0
      %664 = vmatpush1.msra.mxu0 0.0
      %665 = vmatprep.subr.mxu0 0.0
      %666 = vmatpush1.msra.mxu0 0.0
      %667 = vmatprep.subr.mxu0 0.0
      %668 = vmatpush1.msra.mxu0 0.0
      %669 = vmatprep.subr.mxu0 0.0
      %670 = vmatpush1.msra.mxu0 0.0
      %671 = vmatprep.subr.mxu0 0.0
      %672 = vmatpush1.msra.mxu0 0.0
      %673 = vmatprep.subr.mxu0 0.0
      %674 = vmatpush1.msra.mxu0 0.0
      %675 = vmatprep.subr.mxu0 0.0
      %676 = vmatpush1.msra.mxu0 0.0
      %677 = vmatprep.subr.mxu0 0.0
      %678 = vmatpush1.msra.mxu0 0.0
      %679 = vmatprep.mubr.f32.mxu0 0.0
      %680 = vmatmul.mubr.f32.gmra.mrb[0].mxu0 %v424
      %v681 = vpop.f32.mrb[0].mxu0
      %v682 = vadd.f32 0.0, %v681
      %v683 = vpop.f32.mrb[0].mxu0
      %684 = vmatprep.mubr.f32.mxu0 0.0
      %685 = vmatmul.mubr.f32.gmra.mrb[0].mxu0 %v427
      %v686 = vpop.f32.mrb[0].mxu0
      %v687 = vadd.f32 0.0, %v686
      %v688 = vpop.f32.mrb[0].mxu0
      %689 = vmatprep.mubr.f32.mxu0 0.0
      %690 = vmatmul.mubr.f32.gmra.mrb[0].mxu0 %v430
      %v691 = vpop.f32.mrb[0].mxu0
      %v692 = vadd.f32 0.0, %v691
      %v693 = vpop.f32.mrb[0].mxu0
      %694 = vmatprep.mubr.f32.mxu0 0.0
      %695 = vmatmul.mubr.f32.gmra.mrb[0].mxu0 %v433
      %v696 = vpop.f32.mrb[0].mxu0
      %v697 = vadd.f32 0.0, %v696
      %v698 = vpop.f32.mrb[0].mxu0
      %699 = vmatprep.mubr.f32.mxu0 0.0
      %700 = vmatmul.mubr.f32.gmra.mrb[0].mxu0 %v436
      %v701 = vpop.f32.mrb[0].mxu0
      %v702 = vadd.f32 0.0, %v701
      %v703 = vpop.f32.mrb[0].mxu0
      %704 = vmatprep.mubr.f32.mxu0 0.0
      %705 = vmatmul.mubr.f32.gmra.mrb[0].mxu0 %v439
      %v706 = vpop.f32.mrb[0].mxu0
      %v707 = vadd.f32 0.0, %v706
      %v708 = vpop.f32.mrb[0].mxu0
      %709 = vmatprep.mubr.f32.mxu0 0.0
      %710 = vmatmul.mubr.f32.gmra.mrb[0].mxu0 %v442
      %v711 = vpop.f32.mrb[0].mxu0
      %v712 = vadd.f32 0.0, %v711
      %v713 = vpop.f32.mrb[0].mxu0
      %714 = vmatprep.mubr.f32.mxu0 0.0
      %715 = vmatmul.mubr.f32.gmra.mrb[0].mxu0 %v445
      %v716 = vpop.f32.mrb[0].mxu0
      %v717 = vadd.f32 0.0, %v716
      %v718 = vpop.f32.mrb[0].mxu0
      %719 = vmatprep.mubr.f32.mxu0 0.0
      %720 = vmatmul.mubr.f32.gmra.mrb[0].mxu0 %v448
      %v721 = vpop.f32.mrb[0].mxu0
      %v722 = vadd.f32 0.0, %v721
      %v723 = vpop.f32.mrb[0].mxu0
      %724 = vmatprep.mubr.f32.mxu0 0.0
      %725 = vmatmul.mubr.f32.gmra.mrb[0].mxu0 %v451
      %v726 = vpop.f32.mrb[0].mxu0
      %v727 = vadd.f32 0.0, %v726
      %v728 = vpop.f32.mrb[0].mxu0
      %729 = vmatprep.mubr.f32.mxu0 0.0
      %730 = vmatmul.mubr.f32.gmra.mrb[0].mxu0 %v454
      %v731 = vpop.f32.mrb[0].mxu0
      %v732 = vadd.f32 0.0, %v731
      %v733 = vpop.f32.mrb[0].mxu0
      %734 = vmatprep.mubr.f32.mxu0 0.0
      %735 = vmatmul.mubr.f32.gmra.mrb[0].mxu0 %v457
      %v736 = vpop.f32.mrb[0].mxu0
      %v737 = vadd.f32 0.0, %v736
      %v738 = vpop.f32.mrb[0].mxu0
      %739 = vmatprep.mubr.f32.mxu0 0.0
      %740 = vmatmul.mubr.f32.gmra.mrb[0].mxu0 %v460
      %v741 = vpop.f32.mrb[0].mxu0
      %v742 = vadd.f32 0.0, %v741
      %v743 = vpop.f32.mrb[0].mxu0
      %744 = vmatprep.mubr.f32.mxu0 0.0
      %745 = vmatmul.mubr.f32.gmra.mrb[0].mxu0 %v463
      %v746 = vpop.f32.mrb[0].mxu0
      %v747 = vadd.f32 0.0, %v746
      %v748 = vpop.f32.mrb[0].mxu0
      %749 = vmatprep.mubr.f32.mxu0 0.0
      %750 = vmatmul.mubr.f32.gmra.mrb[0].mxu0 %v466
      %v751 = vpop.f32.mrb[0].mxu0
      %v752 = vadd.f32 0.0, %v751
      %v753 = vpop.f32.mrb[0].mxu0
      %754 = vmatprep.mubr.f32.mxu0 0.0
      %755 = vmatmul.mubr.f32.gmra.mrb[0].mxu0 %v469
      %v756 = vpop.f32.mrb[0].mxu0
      %v757 = vadd.f32 0.0, %v756
      %v758 = vpop.f32.mrb[0].mxu0
      %759 = vmatprep.mubr.f32.mxu0 0.0
      %760 = vmatmul.mubr.f32.gmra.mrb[0].mxu0 %v472
      %v761 = vpop.f32.mrb[0].mxu0
      %v762 = vadd.f32 0.0, %v761
      %v763 = vpop.f32.mrb[0].mxu0
      %764 = vmatprep.mubr.f32.mxu0 0.0
      %765 = vmatmul.mubr.f32.gmra.mrb[0].mxu0 %v475
      %v766 = vpop.f32.mrb[0].mxu0
      %v767 = vadd.f32 0.0, %v766
      %v768 = vpop.f32.mrb[0].mxu0
      %769 = vmatprep.mubr.f32.mxu0 0.0
      %770 = vmatmul.mubr.f32.gmra.mrb[0].mxu0 %v478
      %v771 = vpop.f32.mrb[0].mxu0
      %v772 = vadd.f32 0.0, %v771
      %v773 = vpop.f32.mrb[0].mxu0
      %774 = vmatprep.mubr.f32.mxu0 0.0
      %775 = vmatmul.mubr.f32.gmra.mrb[0].mxu0 %v481
      %v776 = vpop.f32.mrb[0].mxu0
      %v777 = vadd.f32 0.0, %v776
      %v778 = vpop.f32.mrb[0].mxu0
      %779 = vmatprep.mubr.f32.mxu0 0.0
      %780 = vmatmul.mubr.f32.gmra.mrb[0].mxu0 %v484
      %v781 = vpop.f32.mrb[0].mxu0
      %v782 = vadd.f32 0.0, %v781
      %v783 = vpop.f32.mrb[0].mxu0
      %784 = vmatprep.mubr.f32.mxu0 0.0
      %785 = vmatmul.mubr.f32.gmra.mrb[0].mxu0 %v487
      %v786 = vpop.f32.mrb[0].mxu0
      %v787 = vadd.f32 0.0, %v786
      %v788 = vpop.f32.mrb[0].mxu0
      %789 = vmatprep.mubr.f32.mxu0 0.0
      %790 = vmatmul.mubr.f32.gmra.mrb[0].mxu0 %v490
      %v791 = vpop.f32.mrb[0].mxu0
      %v792 = vadd.f32 0.0, %v791
      %v793 = vpop.f32.mrb[0].mxu0
      %794 = vmatprep.mubr.f32.mxu0 0.0
      %795 = vmatmul.mubr.f32.gmra.mrb[0].mxu0 %v493
      %v796 = vpop.f32.mrb[0].mxu0
      %v797 = vadd.f32 0.0, %v796
      %v798 = vpop.f32.mrb[0].mxu0
      %799 = vmatprep.mubr.f32.mxu0 0.0
      %800 = vmatmul.mubr.f32.gmra.mrb[0].mxu0 %v496
      %v801 = vpop.f32.mrb[0].mxu0
      %v802 = vadd.f32 0.0, %v801
      %v803 = vpop.f32.mrb[0].mxu0
      %804 = vmatprep.mubr.f32.mxu0 0.0
      %805 = vmatmul.mubr.f32.gmra.mrb[0].mxu0 %v499
      %v806 = vpop.f32.mrb[0].mxu0
      %v807 = vadd.f32 0.0, %v806
      %v808 = vpop.f32.mrb[0].mxu0
      %809 = vmatprep.mubr.f32.mxu0 0.0
      %810 = vmatmul.mubr.f32.gmra.mrb[0].mxu0 %v502
      %v811 = vpop.f32.mrb[0].mxu0
      %v812 = vadd.f32 0.0, %v811
      %v813 = vpop.f32.mrb[0].mxu0
      %814 = vmatprep.mubr.f32.mxu0 0.0
      %815 = vmatmul.mubr.f32.gmra.mrb[0].mxu0 %v505
      %v816 = vpop.f32.mrb[0].mxu0
      %v817 = vadd.f32 0.0, %v816
      %v818 = vpop.f32.mrb[0].mxu0
      %819 = vmatprep.mubr.f32.mxu0 0.0
      %820 = vmatmul.mubr.f32.gmra.mrb[0].mxu0 %v508
      %v821 = vpop.f32.mrb[0].mxu0
      %v822 = vadd.f32 0.0, %v821
      %v823 = vpop.f32.mrb[0].mxu0
      %824 = vmatprep.mubr.f32.mxu0 0.0
      %825 = vmatmul.mubr.f32.gmra.mrb[0].mxu0 %v511
      %v826 = vpop.f32.mrb[0].mxu0
      %v827 = vadd.f32 0.0, %v826
      %v828 = vpop.f32.mrb[0].mxu0
      %829 = vmatprep.mubr.f32.mxu0 0.0
      %830 = vmatmul.mubr.f32.gmra.mrb[0].mxu0 %v514
      %v831 = vpop.f32.mrb[0].mxu0
      %v832 = vadd.f32 0.0, %v831
      %v833 = vpop.f32.mrb[0].mxu0
      %834 = vmatprep.mubr.f32.mxu0 0.0
      %835 = vmatmul.mubr.f32.gmra.mrb[0].mxu0 %v517
      %v836 = vpop.f32.mrb[0].mxu0
      %v837 = vadd.f32 0.0, %v836
      %v838 = vpop.f32.mrb[0].mxu0
      %839 = vmatprep.mubr.f32.mxu0 0.0
      %840 = vmatmul.mubr.f32.gmra.mrb[0].mxu0 %v520
      %v841 = vpop.f32.mrb[0].mxu0
      %v842 = vadd.f32 0.0, %v841
      %v843 = vpop.f32.mrb[0].mxu0
      %844 = vmatprep.mubr.f32.mxu0 0.0
      %845 = vmatmul.mubr.f32.gmra.mrb[0].mxu0 %v523
      %v846 = vpop.f32.mrb[0].mxu0
      %v847 = vadd.f32 0.0, %v846
      %v848 = vpop.f32.mrb[0].mxu0
      %849 = vmatprep.mubr.f32.mxu0 0.0
      %850 = vmatmul.mubr.f32.gmra.mrb[0].mxu0 %v526
      %v851 = vpop.f32.mrb[0].mxu0
      %v852 = vadd.f32 0.0, %v851
      %v853 = vpop.f32.mrb[0].mxu0
      %854 = vmatprep.mubr.f32.mxu0 0.0
      %855 = vmatmul.mubr.f32.gmra.mrb[0].mxu0 %v529
      %v856 = vpop.f32.mrb[0].mxu0
      %v857 = vadd.f32 0.0, %v856
      %v858 = vpop.f32.mrb[0].mxu0
      %859 = vmatprep.mubr.f32.mxu0 0.0
      %860 = vmatmul.mubr.f32.gmra.mrb[0].mxu0 %v532
      %v861 = vpop.f32.mrb[0].mxu0
      %v862 = vadd.f32 0.0, %v861
      %v863 = vpop.f32.mrb[0].mxu0
      %864 = vmatprep.mubr.f32.mxu0 0.0
      %865 = vmatmul.mubr.f32.gmra.mrb[0].mxu0 %v535
      %v866 = vpop.f32.mrb[0].mxu0
      %v867 = vadd.f32 0.0, %v866
      %v868 = vpop.f32.mrb[0].mxu0
      %869 = vmatprep.mubr.f32.mxu0 0.0
      %870 = vmatmul.mubr.f32.gmra.mrb[0].mxu0 %v538
      %v871 = vpop.f32.mrb[0].mxu0
      %v872 = vadd.f32 0.0, %v871
      %v873 = vpop.f32.mrb[0].mxu0
      %874 = vmatprep.mubr.f32.mxu0 0.0
      %875 = vmatmul.mubr.f32.gmra.mrb[0].mxu0 %v541
      %v876 = vpop.f32.mrb[0].mxu0
      %v877 = vadd.f32 0.0, %v876
      %v878 = vpop.f32.mrb[0].mxu0
      %879 = vmatprep.mubr.f32.mxu0 0.0
      %880 = vmatmul.mubr.f32.gmra.mrb[0].mxu0 %v544
      %v881 = vpop.f32.mrb[0].mxu0
      %v882 = vadd.f32 0.0, %v881
      %v883 = vpop.f32.mrb[0].mxu0
      %884 = vmatprep.mubr.f32.mxu0 0.0
      %885 = vmatmul.mubr.f32.gmra.mrb[0].mxu0 %v547
      %v886 = vpop.f32.mrb[0].mxu0
      %v887 = vadd.f32 0.0, %v886
      %v888 = vpop.f32.mrb[0].mxu0
      %889 = vmatprep.mubr.f32.mxu0 0.0
      %890 = vmatmul.mubr.f32.gmra.mrb[0].mxu0 %v550
      %v891 = vpop.f32.mrb[0].mxu0
      %v892 = vadd.f32 0.0, %v891
      %v893 = vpop.f32.mrb[0].mxu0
      %894 = vmatprep.mubr.f32.mxu0 0.0
      %895 = vmatmul.mubr.f32.gmra.mrb[0].mxu0 %v553
      %v896 = vpop.f32.mrb[0].mxu0
      %v897 = vadd.f32 0.0, %v896
      %v898 = vpop.f32.mrb[0].mxu0
      %899 = vmatprep.mubr.f32.mxu0 0.0
      %900 = vmatmul.mubr.f32.gmra.mrb[0].mxu0 %v556
      %v901 = vpop.f32.mrb[0].mxu0
      %v902 = vadd.f32 0.0, %v901
      %v903 = vpop.f32.mrb[0].mxu0
      %904 = vmatprep.mubr.f32.mxu0 0.0
      %905 = vmatmul.mubr.f32.gmra.mrb[0].mxu0 %v559
      %v906 = vpop.f32.mrb[0].mxu0
      %v907 = vadd.f32 0.0, %v906
      %v908 = vpop.f32.mrb[0].mxu0
      %909 = vmatprep.mubr.f32.mxu0 0.0
      %910 = vmatmul.mubr.f32.gmra.mrb[0].mxu0 %v562
      %v911 = vpop.f32.mrb[0].mxu0
      %v912 = vadd.f32 0.0, %v911
      %v913 = vpop.f32.mrb[0].mxu0
      %914 = vmatprep.mubr.f32.mxu0 0.0
      %915 = vmatmul.mubr.f32.gmra.mrb[0].mxu0 %v565
      %v916 = vpop.f32.mrb[0].mxu0
      %v917 = vadd.f32 0.0, %v916
      %v918 = vpop.f32.mrb[0].mxu0
      %919 = vmatprep.mubr.f32.mxu0 0.0
      %920 = vmatmul.mubr.f32.gmra.mrb[0].mxu0 %v568
      %v921 = vpop.f32.mrb[0].mxu0
      %v922 = vadd.f32 0.0, %v921
      %v923 = vpop.f32.mrb[0].mxu0
      %924 = vmatprep.mubr.f32.mxu0 0.0
      %925 = vmatmul.mubr.f32.gmra.mrb[0].mxu0 %v571
      %v926 = vpop.f32.mrb[0].mxu0
      %v927 = vadd.f32 0.0, %v926
      %v928 = vpop.f32.mrb[0].mxu0
      %929 = vmatprep.mubr.f32.mxu0 0.0
      %930 = vmatmul.mubr.f32.gmra.mrb[0].mxu0 %v574
      %v931 = vpop.f32.mrb[0].mxu0
      %v932 = vadd.f32 0.0, %v931
      %v933 = vpop.f32.mrb[0].mxu0
      %934 = vmatprep.mubr.f32.mxu0 0.0
      %935 = vmatmul.mubr.f32.gmra.mrb[0].mxu0 %v577
      %v936 = vpop.f32.mrb[0].mxu0
      %v937 = vadd.f32 0.0, %v936
      %v938 = vpop.f32.mrb[0].mxu0
      %939 = vmatprep.mubr.f32.mxu0 0.0
      %940 = vmatmul.mubr.f32.gmra.mrb[0].mxu0 %v580
      %v941 = vpop.f32.mrb[0].mxu0
      %v942 = vadd.f32 0.0, %v941
      %v943 = vpop.f32.mrb[0].mxu0
      %944 = vmatprep.mubr.f32.mxu0 0.0
      %945 = vmatmul.mubr.f32.gmra.mrb[0].mxu0 %v583
      %v946 = vpop.f32.mrb[0].mxu0
      %v947 = vadd.f32 0.0, %v946
      %v948 = vpop.f32.mrb[0].mxu0
      %949 = vmatprep.mubr.f32.mxu0 0.0
      %950 = vmatmul.mubr.f32.gmra.mrb[0].mxu0 %v586
      %v951 = vpop.f32.mrb[0].mxu0
      %v952 = vadd.f32 0.0, %v951
      %v953 = vpop.f32.mrb[0].mxu0
      %954 = vmatprep.mubr.f32.mxu0 0.0
      %955 = vmatmul.mubr.f32.gmra.mrb[0].mxu0 %v589
      %v956 = vpop.f32.mrb[0].mxu0
      %v957 = vadd.f32 0.0, %v956
      %v958 = vpop.f32.mrb[0].mxu0
      %959 = vmatprep.mubr.f32.mxu0 0.0
      %960 = vmatmul.mubr.f32.gmra.mrb[0].mxu0 %v592
      %v961 = vpop.f32.mrb[0].mxu0
      %v962 = vadd.f32 0.0, %v961
      %v963 = vpop.f32.mrb[0].mxu0
      %964 = vmatprep.mubr.f32.mxu0 0.0
      %965 = vmatmul.mubr.f32.gmra.mrb[0].mxu0 %v595
      %v966 = vpop.f32.mrb[0].mxu0
      %v967 = vadd.f32 0.0, %v966
      %v968 = vpop.f32.mrb[0].mxu0
      %969 = vmatprep.mubr.f32.mxu0 0.0
      %970 = vmatmul.mubr.f32.gmra.mrb[0].mxu0 %v598
      %v971 = vpop.f32.mrb[0].mxu0
      %v972 = vadd.f32 0.0, %v971
      %v973 = vpop.f32.mrb[0].mxu0
      %974 = vmatprep.mubr.f32.mxu0 0.0
      %975 = vmatmul.mubr.f32.gmra.mrb[0].mxu0 %v601
      %v976 = vpop.f32.mrb[0].mxu0
      %v977 = vadd.f32 0.0, %v976
      %v978 = vpop.f32.mrb[0].mxu0
      %979 = vmatprep.mubr.f32.mxu0 0.0
      %980 = vmatmul.mubr.f32.gmra.mrb[0].mxu0 %v604
      %v981 = vpop.f32.mrb[0].mxu0
      %v982 = vadd.f32 0.0, %v981
      %v983 = vpop.f32.mrb[0].mxu0
      %984 = vmatprep.mubr.f32.mxu0 0.0
      %985 = vmatmul.mubr.f32.gmra.mrb[0].mxu0 %v607
      %v986 = vpop.f32.mrb[0].mxu0
      %v987 = vadd.f32 0.0, %v986
      %v988 = vpop.f32.mrb[0].mxu0
      %989 = vmatprep.mubr.f32.mxu0 0.0
      %990 = vmatmul.mubr.f32.gmra.mrb[0].mxu0 %v610
      %v991 = vpop.f32.mrb[0].mxu0
      %v992 = vadd.f32 0.0, %v991
      %v993 = vpop.f32.mrb[0].mxu0
      %994 = vmatprep.mubr.f32.mxu0 0.0
      %995 = vmatmul.mubr.f32.gmra.mrb[0].mxu0 %v613
      %v996 = vpop.f32.mrb[0].mxu0
      %v997 = vadd.f32 0.0, %v996
      %v998 = vpop.f32.mrb[0].mxu0
      %999 = vdwg.mxu0
      %v1000 = vmul.f32 %v682, %v420
      %v1001 = vmul.f32 %v687, %v421
      %v1002 = vmul.f32 %v692, %v420
      %v1003 = vmul.f32 %v697, %v421
      %v1004 = vmul.f32 %v702, %v420
      %v1005 = vmul.f32 %v707, %v421
      %v1006 = vmul.f32 %v712, %v420
      %v1007 = vmul.f32 %v717, %v421
      %v1008 = vmul.f32 %v722, %v420
      %v1009 = vmul.f32 %v727, %v421
      %v1010 = vmul.f32 %v732, %v420
      %v1011 = vmul.f32 %v737, %v421
      %v1012 = vmul.f32 %v742, %v420
      %v1013 = vmul.f32 %v747, %v421
      %v1014 = vmul.f32 %v752, %v420
      %v1015 = vmul.f32 %v757, %v421
      %v1016 = vmul.f32 %v762, %v420
      %v1017 = vmul.f32 %v767, %v421
      %v1018 = vmul.f32 %v772, %v420
      %v1019 = vmul.f32 %v777, %v421
      %v1020 = vmul.f32 %v782, %v420
      %v1021 = vmul.f32 %v787, %v421
      %v1022 = vmul.f32 %v792, %v420
      %v1023 = vmul.f32 %v797, %v421
      %v1024 = vmul.f32 %v802, %v420
      %v1025 = vmul.f32 %v807, %v421
      %v1026 = vmul.f32 %v812, %v420
      %v1027 = vmul.f32 %v817, %v421
      %v1028 = vmul.f32 %v822, %v420
      %v1029 = vmul.f32 %v827, %v421
      %v1030 = vmul.f32 %v832, %v420
      %v1031 = vmul.f32 %v837, %v421
      %v1032 = vmul.f32 %v842, %v420
      %v1033 = vmul.f32 %v847, %v421
      %v1034 = vmul.f32 %v852, %v420
      %v1035 = vmul.f32 %v857, %v421
      %v1036 = vmul.f32 %v862, %v420
      %v1037 = vmul.f32 %v867, %v421
      %v1038 = vmul.f32 %v872, %v420
      %v1039 = vmul.f32 %v877, %v421
      %v1040 = vmul.f32 %v882, %v420
      %v1041 = vmul.f32 %v887, %v421
      %v1042 = vmul.f32 %v892, %v420
      %v1043 = vmul.f32 %v897, %v421
      %v1044 = vmul.f32 %v902, %v420
      %v1045 = vmul.f32 %v907, %v421
      %v1046 = vmul.f32 %v912, %v420
      %v1047 = vmul.f32 %v917, %v421
      %v1048 = vmul.f32 %v922, %v420
      %v1049 = vmul.f32 %v927, %v421
      %v1050 = vmul.f32 %v932, %v420
      %v1051 = vmul.f32 %v937, %v421
      %v1052 = vmul.f32 %v942, %v420
      %v1053 = vmul.f32 %v947, %v421
      %v1054 = vmul.f32 %v952, %v420
      %v1055 = vmul.f32 %v957, %v421
      %v1056 = vmul.f32 %v962, %v420
      %v1057 = vmul.f32 %v967, %v421
      %v1058 = vmul.f32 %v972, %v420
      %v1059 = vmul.f32 %v977, %v421
      %v1060 = vmul.f32 %v982, %v420
      %v1061 = vmul.f32 %v987, %v421
      %v1062 = vmul.f32 %v992, %v420
      %v1063 = vmul.f32 %v997, %v421
      %vm1064 = vcmask 523264
      %v1065 = vsel %vm1064, %v1000, 0.0
      %v1066 = vsel %vm1064, %v1001, 0.0
      %v1067 = vadd.f32 %v1065, %v1066
      %v1068 = vrot.slane %v1067, 4
      %v1069 = vadd.f32 %v1067, %v1068
      %v1070 = vrot.slane %v1069, 2
      %v1071 = vadd.f32 %v1069, %v1070
      %v1072 = vrot.slane %v1071, 1
      %v1073 = vadd.f32 %v1071, %v1072
      %v1074 = vsel %vm1064, %v1002, 0.0
      %v1075 = vsel %vm1064, %v1003, 0.0
      %v1076 = vadd.f32 %v1074, %v1075
      %v1077 = vrot.slane %v1076, 4
      %v1078 = vadd.f32 %v1076, %v1077
      %v1079 = vrot.slane %v1078, 2
      %v1080 = vadd.f32 %v1078, %v1079
      %v1081 = vrot.slane %v1080, 1
      %v1082 = vadd.f32 %v1080, %v1081
      %v1083 = vsel %vm1064, %v1004, 0.0
      %v1084 = vsel %vm1064, %v1005, 0.0
      %v1085 = vadd.f32 %v1083, %v1084
      %v1086 = vrot.slane %v1085, 4
      %v1087 = vadd.f32 %v1085, %v1086
      %v1088 = vrot.slane %v1087, 2
      %v1089 = vadd.f32 %v1087, %v1088
      %v1090 = vrot.slane %v1089, 1
      %v1091 = vadd.f32 %v1089, %v1090
      %v1092 = vsel %vm1064, %v1006, 0.0
      %v1093 = vsel %vm1064, %v1007, 0.0
      %v1094 = vadd.f32 %v1092, %v1093
      %v1095 = vrot.slane %v1094, 4
      %v1096 = vadd.f32 %v1094, %v1095
      %v1097 = vrot.slane %v1096, 2
      %v1098 = vadd.f32 %v1096, %v1097
      %v1099 = vrot.slane %v1098, 1
      %v1100 = vadd.f32 %v1098, %v1099
      %v1101 = vsel %vm1064, %v1008, 0.0
      %v1102 = vsel %vm1064, %v1009, 0.0
      %v1103 = vadd.f32 %v1101, %v1102
      %v1104 = vrot.slane %v1103, 4
      %v1105 = vadd.f32 %v1103, %v1104
      %v1106 = vrot.slane %v1105, 2
      %v1107 = vadd.f32 %v1105, %v1106
      %v1108 = vrot.slane %v1107, 1
      %v1109 = vadd.f32 %v1107, %v1108
      %v1110 = vsel %vm1064, %v1010, 0.0
      %v1111 = vsel %vm1064, %v1011, 0.0
      %v1112 = vadd.f32 %v1110, %v1111
      %v1113 = vrot.slane %v1112, 4
      %v1114 = vadd.f32 %v1112, %v1113
      %v1115 = vrot.slane %v1114, 2
      %v1116 = vadd.f32 %v1114, %v1115
      %v1117 = vrot.slane %v1116, 1
      %v1118 = vadd.f32 %v1116, %v1117
      %v1119 = vsel %vm1064, %v1012, 0.0
      %v1120 = vsel %vm1064, %v1013, 0.0
      %v1121 = vadd.f32 %v1119, %v1120
      %v1122 = vrot.slane %v1121, 4
      %v1123 = vadd.f32 %v1121, %v1122
      %v1124 = vrot.slane %v1123, 2
      %v1125 = vadd.f32 %v1123, %v1124
      %v1126 = vrot.slane %v1125, 1
      %v1127 = vadd.f32 %v1125, %v1126
      %v1128 = vsel %vm1064, %v1014, 0.0
      %v1129 = vsel %vm1064, %v1015, 0.0
      %v1130 = vadd.f32 %v1128, %v1129
      %v1131 = vrot.slane %v1130, 4
      %v1132 = vadd.f32 %v1130, %v1131
      %v1133 = vrot.slane %v1132, 2
      %v1134 = vadd.f32 %v1132, %v1133
      %v1135 = vrot.slane %v1134, 1
      %v1136 = vadd.f32 %v1134, %v1135
      %v1137 = vsel %vm1064, %v1016, 0.0
      %v1138 = vsel %vm1064, %v1017, 0.0
      %v1139 = vadd.f32 %v1137, %v1138
      %v1140 = vrot.slane %v1139, 4
      %v1141 = vadd.f32 %v1139, %v1140
      %v1142 = vrot.slane %v1141, 2
      %v1143 = vadd.f32 %v1141, %v1142
      %v1144 = vrot.slane %v1143, 1
      %v1145 = vadd.f32 %v1143, %v1144
      %v1146 = vsel %vm1064, %v1018, 0.0
      %v1147 = vsel %vm1064, %v1019, 0.0
      %v1148 = vadd.f32 %v1146, %v1147
      %v1149 = vrot.slane %v1148, 4
      %v1150 = vadd.f32 %v1148, %v1149
      %v1151 = vrot.slane %v1150, 2
      %v1152 = vadd.f32 %v1150, %v1151
      %v1153 = vrot.slane %v1152, 1
      %v1154 = vadd.f32 %v1152, %v1153
      %v1155 = vsel %vm1064, %v1020, 0.0
      %v1156 = vsel %vm1064, %v1021, 0.0
      %v1157 = vadd.f32 %v1155, %v1156
      %v1158 = vrot.slane %v1157, 4
      %v1159 = vadd.f32 %v1157, %v1158
      %v1160 = vrot.slane %v1159, 2
      %v1161 = vadd.f32 %v1159, %v1160
      %v1162 = vrot.slane %v1161, 1
      %v1163 = vadd.f32 %v1161, %v1162
      %v1164 = vsel %vm1064, %v1022, 0.0
      %v1165 = vsel %vm1064, %v1023, 0.0
      %v1166 = vadd.f32 %v1164, %v1165
      %v1167 = vrot.slane %v1166, 4
      %v1168 = vadd.f32 %v1166, %v1167
      %v1169 = vrot.slane %v1168, 2
      %v1170 = vadd.f32 %v1168, %v1169
      %v1171 = vrot.slane %v1170, 1
      %v1172 = vadd.f32 %v1170, %v1171
      %v1173 = vsel %vm1064, %v1024, 0.0
      %v1174 = vsel %vm1064, %v1025, 0.0
      %v1175 = vadd.f32 %v1173, %v1174
      %v1176 = vrot.slane %v1175, 4
      %v1177 = vadd.f32 %v1175, %v1176
      %v1178 = vrot.slane %v1177, 2
      %v1179 = vadd.f32 %v1177, %v1178
      %v1180 = vrot.slane %v1179, 1
      %v1181 = vadd.f32 %v1179, %v1180
      %v1182 = vsel %vm1064, %v1026, 0.0
      %v1183 = vsel %vm1064, %v1027, 0.0
      %v1184 = vadd.f32 %v1182, %v1183
      %v1185 = vrot.slane %v1184, 4
      %v1186 = vadd.f32 %v1184, %v1185
      %v1187 = vrot.slane %v1186, 2
      %v1188 = vadd.f32 %v1186, %v1187
      %v1189 = vrot.slane %v1188, 1
      %v1190 = vadd.f32 %v1188, %v1189
      %v1191 = vsel %vm1064, %v1028, 0.0
      %v1192 = vsel %vm1064, %v1029, 0.0
      %v1193 = vadd.f32 %v1191, %v1192
      %v1194 = vrot.slane %v1193, 4
      %v1195 = vadd.f32 %v1193, %v1194
      %v1196 = vrot.slane %v1195, 2
      %v1197 = vadd.f32 %v1195, %v1196
      %v1198 = vrot.slane %v1197, 1
      %v1199 = vadd.f32 %v1197, %v1198
      %v1200 = vsel %vm1064, %v1030, 0.0
      %v1201 = vsel %vm1064, %v1031, 0.0
      %v1202 = vadd.f32 %v1200, %v1201
      %v1203 = vrot.slane %v1202, 4
      %v1204 = vadd.f32 %v1202, %v1203
      %v1205 = vrot.slane %v1204, 2
      %v1206 = vadd.f32 %v1204, %v1205
      %v1207 = vrot.slane %v1206, 1
      %v1208 = vadd.f32 %v1206, %v1207
      %v1209 = vsel %vm1064, %v1032, 0.0
      %v1210 = vsel %vm1064, %v1033, 0.0
      %v1211 = vadd.f32 %v1209, %v1210
      %v1212 = vrot.slane %v1211, 4
      %v1213 = vadd.f32 %v1211, %v1212
      %v1214 = vrot.slane %v1213, 2
      %v1215 = vadd.f32 %v1213, %v1214
      %v1216 = vrot.slane %v1215, 1
      %v1217 = vadd.f32 %v1215, %v1216
      %v1218 = vsel %vm1064, %v1034, 0.0
      %v1219 = vsel %vm1064, %v1035, 0.0
      %v1220 = vadd.f32 %v1218, %v1219
      %v1221 = vrot.slane %v1220, 4
      %v1222 = vadd.f32 %v1220, %v1221
      %v1223 = vrot.slane %v1222, 2
      %v1224 = vadd.f32 %v1222, %v1223
      %v1225 = vrot.slane %v1224, 1
      %v1226 = vadd.f32 %v1224, %v1225
      %v1227 = vsel %vm1064, %v1036, 0.0
      %v1228 = vsel %vm1064, %v1037, 0.0
      %v1229 = vadd.f32 %v1227, %v1228
      %v1230 = vrot.slane %v1229, 4
      %v1231 = vadd.f32 %v1229, %v1230
      %v1232 = vrot.slane %v1231, 2
      %v1233 = vadd.f32 %v1231, %v1232
      %v1234 = vrot.slane %v1233, 1
      %v1235 = vadd.f32 %v1233, %v1234
      %v1236 = vsel %vm1064, %v1038, 0.0
      %v1237 = vsel %vm1064, %v1039, 0.0
      %v1238 = vadd.f32 %v1236, %v1237
      %v1239 = vrot.slane %v1238, 4
      %v1240 = vadd.f32 %v1238, %v1239
      %v1241 = vrot.slane %v1240, 2
      %v1242 = vadd.f32 %v1240, %v1241
      %v1243 = vrot.slane %v1242, 1
      %v1244 = vadd.f32 %v1242, %v1243
      %v1245 = vsel %vm1064, %v1040, 0.0
      %v1246 = vsel %vm1064, %v1041, 0.0
      %v1247 = vadd.f32 %v1245, %v1246
      %v1248 = vrot.slane %v1247, 4
      %v1249 = vadd.f32 %v1247, %v1248
      %v1250 = vrot.slane %v1249, 2
      %v1251 = vadd.f32 %v1249, %v1250
      %v1252 = vrot.slane %v1251, 1
      %v1253 = vadd.f32 %v1251, %v1252
      %v1254 = vsel %vm1064, %v1042, 0.0
      %v1255 = vsel %vm1064, %v1043, 0.0
      %v1256 = vadd.f32 %v1254, %v1255
      %v1257 = vrot.slane %v1256, 4
      %v1258 = vadd.f32 %v1256, %v1257
      %v1259 = vrot.slane %v1258, 2
      %v1260 = vadd.f32 %v1258, %v1259
      %v1261 = vrot.slane %v1260, 1
      %v1262 = vadd.f32 %v1260, %v1261
      %v1263 = vsel %vm1064, %v1044, 0.0
      %v1264 = vsel %vm1064, %v1045, 0.0
      %v1265 = vadd.f32 %v1263, %v1264
      %v1266 = vrot.slane %v1265, 4
      %v1267 = vadd.f32 %v1265, %v1266
      %v1268 = vrot.slane %v1267, 2
      %v1269 = vadd.f32 %v1267, %v1268
      %v1270 = vrot.slane %v1269, 1
      %v1271 = vadd.f32 %v1269, %v1270
      %v1272 = vsel %vm1064, %v1046, 0.0
      %v1273 = vsel %vm1064, %v1047, 0.0
      %v1274 = vadd.f32 %v1272, %v1273
      %v1275 = vrot.slane %v1274, 4
      %v1276 = vadd.f32 %v1274, %v1275
      %v1277 = vrot.slane %v1276, 2
      %v1278 = vadd.f32 %v1276, %v1277
      %v1279 = vrot.slane %v1278, 1
      %v1280 = vadd.f32 %v1278, %v1279
      %v1281 = vsel %vm1064, %v1048, 0.0
      %v1282 = vsel %vm1064, %v1049, 0.0
      %v1283 = vadd.f32 %v1281, %v1282
      %v1284 = vrot.slane %v1283, 4
      %v1285 = vadd.f32 %v1283, %v1284
      %v1286 = vrot.slane %v1285, 2
      %v1287 = vadd.f32 %v1285, %v1286
      %v1288 = vrot.slane %v1287, 1
      %v1289 = vadd.f32 %v1287, %v1288
      %v1290 = vsel %vm1064, %v1050, 0.0
      %v1291 = vsel %vm1064, %v1051, 0.0
      %v1292 = vadd.f32 %v1290, %v1291
      %v1293 = vrot.slane %v1292, 4
      %v1294 = vadd.f32 %v1292, %v1293
      %v1295 = vrot.slane %v1294, 2
      %v1296 = vadd.f32 %v1294, %v1295
      %v1297 = vrot.slane %v1296, 1
      %v1298 = vadd.f32 %v1296, %v1297
      %v1299 = vsel %vm1064, %v1052, 0.0
      %v1300 = vsel %vm1064, %v1053, 0.0
      %v1301 = vadd.f32 %v1299, %v1300
      %v1302 = vrot.slane %v1301, 4
      %v1303 = vadd.f32 %v1301, %v1302
      %v1304 = vrot.slane %v1303, 2
      %v1305 = vadd.f32 %v1303, %v1304
      %v1306 = vrot.slane %v1305, 1
      %v1307 = vadd.f32 %v1305, %v1306
      %v1308 = vsel %vm1064, %v1054, 0.0
      %v1309 = vsel %vm1064, %v1055, 0.0
      %v1310 = vadd.f32 %v1308, %v1309
      %v1311 = vrot.slane %v1310, 4
      %v1312 = vadd.f32 %v1310, %v1311
      %v1313 = vrot.slane %v1312, 2
      %v1314 = vadd.f32 %v1312, %v1313
      %v1315 = vrot.slane %v1314, 1
      %v1316 = vadd.f32 %v1314, %v1315
      %v1317 = vsel %vm1064, %v1056, 0.0
      %v1318 = vsel %vm1064, %v1057, 0.0
      %v1319 = vadd.f32 %v1317, %v1318
      %v1320 = vrot.slane %v1319, 4
      %v1321 = vadd.f32 %v1319, %v1320
      %v1322 = vrot.slane %v1321, 2
      %v1323 = vadd.f32 %v1321, %v1322
      %v1324 = vrot.slane %v1323, 1
      %v1325 = vadd.f32 %v1323, %v1324
      %v1326 = vsel %vm1064, %v1058, 0.0
      %v1327 = vsel %vm1064, %v1059, 0.0
      %v1328 = vadd.f32 %v1326, %v1327
      %v1329 = vrot.slane %v1328, 4
      %v1330 = vadd.f32 %v1328, %v1329
      %v1331 = vrot.slane %v1330, 2
      %v1332 = vadd.f32 %v1330, %v1331
      %v1333 = vrot.slane %v1332, 1
      %v1334 = vadd.f32 %v1332, %v1333
      %v1335 = vsel %vm1064, %v1060, 0.0
      %v1336 = vsel %vm1064, %v1061, 0.0
      %v1337 = vadd.f32 %v1335, %v1336
      %v1338 = vrot.slane %v1337, 4
      %v1339 = vadd.f32 %v1337, %v1338
      %v1340 = vrot.slane %v1339, 2
      %v1341 = vadd.f32 %v1339, %v1340
      %v1342 = vrot.slane %v1341, 1
      %v1343 = vadd.f32 %v1341, %v1342
      %v1344 = vsel %vm1064, %v1062, 0.0
      %v1345 = vsel %vm1064, %v1063, 0.0
      %v1346 = vadd.f32 %v1344, %v1345
      %v1347 = vrot.slane %v1346, 4
      %v1348 = vadd.f32 %v1346, %v1347
      %v1349 = vrot.slane %v1348, 2
      %v1350 = vadd.f32 %v1348, %v1349
      %v1351 = vrot.slane %v1350, 1
      %v1352 = vadd.f32 %v1350, %v1351
      %s1353 = scalar_lea.vmem %s274, 512
      %v1354 = vld [vmem:[%s1353] sm:$0xff]
      %v1355 = vld [vmem:[%s1353 + $0x8] sm:$0xff]
      %v1356 = vld [vmem:[%s1353 + $0x10] sm:$0xff]
      %v1357 = vld [vmem:[%s1353 + $0x18] sm:$0xff]
      %v1358 = vld [vmem:[%s1353 + $0x20] sm:$0xff]
      %v1359 = vld [vmem:[%s1353 + $0x28] sm:$0xff]
      %v1360 = vld [vmem:[%s1353 + $0x30] sm:$0xff]
      %v1361 = vld [vmem:[%s1353 + $0x38] sm:$0xff]
      %v1362 = vld [vmem:[%s1353 + $0x40] sm:$0xff]
      %v1363 = vld [vmem:[%s1353 + $0x48] sm:$0xff]
      %v1364 = vld [vmem:[%s1353 + $0x50] sm:$0xff]
      %v1365 = vld [vmem:[%s1353 + $0x58] sm:$0xff]
      %v1366 = vld [vmem:[%s1353 + $0x60] sm:$0xff]
      %v1367 = vld [vmem:[%s1353 + $0x68] sm:$0xff]
      %v1368 = vld [vmem:[%s1353 + $0x70] sm:$0xff]
      %v1369 = vld [vmem:[%s1353 + $0x78] sm:$0xff]
      %v1370 = vld [vmem:[%s1353 + $0x80] sm:$0xff]
      %v1371 = vld [vmem:[%s1353 + $0x88] sm:$0xff]
      %v1372 = vld [vmem:[%s1353 + $0x90] sm:$0xff]
      %v1373 = vld [vmem:[%s1353 + $0x98] sm:$0xff]
      %v1374 = vld [vmem:[%s1353 + $0xa0] sm:$0xff]
      %v1375 = vld [vmem:[%s1353 + $0xa8] sm:$0xff]
      %v1376 = vld [vmem:[%s1353 + $0xb0] sm:$0xff]
      %v1377 = vld [vmem:[%s1353 + $0xb8] sm:$0xff]
      %v1378 = vld [vmem:[%s1353 + $0xc0] sm:$0xff]
      %v1379 = vld [vmem:[%s1353 + $0xc8] sm:$0xff]
      %v1380 = vld [vmem:[%s1353 + $0xd0] sm:$0xff]
      %v1381 = vld [vmem:[%s1353 + $0xd8] sm:$0xff]
      %v1382 = vld [vmem:[%s1353 + $0xe0] sm:$0xff]
      %v1383 = vld [vmem:[%s1353 + $0xe8] sm:$0xff]
      %v1384 = vld [vmem:[%s1353 + $0xf0] sm:$0xff]
      %v1385 = vld [vmem:[%s1353 + $0xf8] sm:$0xff]
      %v1386 = vld [vmem:[%s1353 + $0x100] sm:$0xff]
      %v1387 = vld [vmem:[%s1353 + $0x108] sm:$0xff]
      %v1388 = vld [vmem:[%s1353 + $0x110] sm:$0xff]
      %v1389 = vld [vmem:[%s1353 + $0x118] sm:$0xff]
      %v1390 = vld [vmem:[%s1353 + $0x120] sm:$0xff]
      %v1391 = vld [vmem:[%s1353 + $0x128] sm:$0xff]
      %v1392 = vld [vmem:[%s1353 + $0x130] sm:$0xff]
      %v1393 = vld [vmem:[%s1353 + $0x138] sm:$0xff]
      %v1394 = vld [vmem:[%s1353 + $0x140] sm:$0xff]
      %v1395 = vld [vmem:[%s1353 + $0x148] sm:$0xff]
      %v1396 = vld [vmem:[%s1353 + $0x150] sm:$0xff]
      %v1397 = vld [vmem:[%s1353 + $0x158] sm:$0xff]
      %v1398 = vld [vmem:[%s1353 + $0x160] sm:$0xff]
      %v1399 = vld [vmem:[%s1353 + $0x168] sm:$0xff]
      %v1400 = vld [vmem:[%s1353 + $0x170] sm:$0xff]
      %v1401 = vld [vmem:[%s1353 + $0x178] sm:$0xff]
      %v1402 = vld [vmem:[%s1353 + $0x180] sm:$0xff]
      %v1403 = vld [vmem:[%s1353 + $0x188] sm:$0xff]
      %v1404 = vld [vmem:[%s1353 + $0x190] sm:$0xff]
      %v1405 = vld [vmem:[%s1353 + $0x198] sm:$0xff]
      %v1406 = vld [vmem:[%s1353 + $0x1a0] sm:$0xff]
      %v1407 = vld [vmem:[%s1353 + $0x1a8] sm:$0xff]
      %v1408 = vld [vmem:[%s1353 + $0x1b0] sm:$0xff]
      %v1409 = vld [vmem:[%s1353 + $0x1b8] sm:$0xff]
      %v1410 = vld [vmem:[%s1353 + $0x1c0] sm:$0xff]
      %v1411 = vld [vmem:[%s1353 + $0x1c8] sm:$0xff]
      %v1412 = vld [vmem:[%s1353 + $0x1d0] sm:$0xff]
      %v1413 = vld [vmem:[%s1353 + $0x1d8] sm:$0xff]
      %v1414 = vld [vmem:[%s1353 + $0x1e0] sm:$0xff]
      %v1415 = vld [vmem:[%s1353 + $0x1e8] sm:$0xff]
      %v1416 = vld [vmem:[%s1353 + $0x1f0] sm:$0xff]
      %v1417 = vld [vmem:[%s1353 + $0x1f8] sm:$0xff]
      %s1418 = scalar_lea.vmem %s269, 2
      %v1419 = vld [vmem:[%s1418] sm:$0x3]
      %v1420 = vadd.f32 %v1419, %v350
      %v1421 = vmax.f32 %v1420, -1.0
      %v1422 = vmin.f32 %v1421, 1.0
      %v1423 = vadd.f32 %v1422, 1.0
      %v1424 = vmul.f32 %v1423, 7.5
      %v1425 = vfloor.f32 %v1424
      %v1426 = vsub.f32 %v1424, %v1425
      %v1427 = vsub.f32 1.0, %v1426
      %v1428 = vcvt.f32.s32.to.zero.pseudo %v1425
      %vm1429 = vcmp.gt.s32.totalorder %v1428, 0
      %v1430 = vsel %vm1429, %v1428, 0
      %vm1431 = vcmp.lt.s32.totalorder %v1430, 15
      %v1432 = vsel %vm1431, %v1430, 15
      %v1433 = vadd.s32 %v1432, 1
      %vm1434 = vcmp.lt.s32.totalorder %v1433, 15
      %v1435 = vsel %vm1434, %v1433, 15
      %v1436 = vlaneseq
      %v1437 = vshrl.u32 %v1436, 7
      %v1438 = vsub.s32 1, %v1437
      %v1439 = vrot.slane %v1432, %v1438
      %vm1440 = vcmp.eq.s32.totalorder %v368, %v1439
      %vm1441 = vcmp.eq.s32.totalorder %v369, %v1439
      %v1442 = vlaneseq
      %v1443 = vshrl.u32 %v1442, 7
      %v1444 = vsub.s32 1, %v1443
      %v1445 = vrot.slane %v1427, %v1444
      %v1446 = vsel %vm1440, %v1445, 0.0
      %v1447 = vsel %vm1441, %v1445, 0.0
      %v1448 = vlaneseq
      %v1449 = vshrl.u32 %v1448, 7
      %v1450 = vsub.s32 1, %v1449
      %v1451 = vrot.slane %v1435, %v1450
      %vm1452 = vcmp.eq.s32.totalorder %v368, %v1451
      %vm1453 = vcmp.eq.s32.totalorder %v369, %v1451
      %v1454 = vlaneseq
      %v1455 = vshrl.u32 %v1454, 7
      %v1456 = vsub.s32 1, %v1455
      %v1457 = vrot.slane %v1426, %v1456
      %v1458 = vsel %vm1452, %v1457, 0.0
      %v1459 = vsel %vm1453, %v1457, 0.0
      %v1460 = vadd.f32 %v1446, %v1458
      %v1461 = vadd.f32 %v1447, %v1459
      %v1462 = vlaneseq
      %v1463 = vshrl.u32 %v1462, 7
      %v1464 = vsub.s32 0, %v1463
      %v1465 = vrot.slane %v1432, %v1464
      %vm1466 = vcmp.eq.s32.totalorder %v368, %v1465
      %vm1467 = vcmp.eq.s32.totalorder %v369, %v1465
      %v1468 = vlaneseq
      %v1469 = vshrl.u32 %v1468, 7
      %v1470 = vsub.s32 0, %v1469
      %v1471 = vrot.slane %v1427, %v1470
      %v1472 = vsel %vm1466, %v1471, 0.0
      %v1473 = vsel %vm1467, %v1471, 0.0
      %v1474 = vlaneseq
      %v1475 = vshrl.u32 %v1474, 7
      %v1476 = vsub.s32 0, %v1475
      %v1477 = vrot.slane %v1435, %v1476
      %vm1478 = vcmp.eq.s32.totalorder %v368, %v1477
      %vm1479 = vcmp.eq.s32.totalorder %v369, %v1477
      %v1480 = vlaneseq
      %v1481 = vshrl.u32 %v1480, 7
      %v1482 = vsub.s32 0, %v1481
      %v1483 = vrot.slane %v1426, %v1482
      %v1484 = vsel %vm1478, %v1483, 0.0
      %v1485 = vsel %vm1479, %v1483, 0.0
      %v1486 = vadd.f32 %v1472, %v1484
      %v1487 = vadd.f32 %v1473, %v1485
      %v1489 = vsel %vm422, %v1354, 0
      %v1492 = vsel %vm422, %v1355, 0
      %v1495 = vsel %vm422, %v1356, 0
      %v1498 = vsel %vm422, %v1357, 0
      %v1501 = vsel %vm422, %v1358, 0
      %v1504 = vsel %vm422, %v1359, 0
      %v1507 = vsel %vm422, %v1360, 0
      %v1510 = vsel %vm422, %v1361, 0
      %v1513 = vsel %vm422, %v1362, 0
      %v1516 = vsel %vm422, %v1363, 0
      %v1519 = vsel %vm422, %v1364, 0
      %v1522 = vsel %vm422, %v1365, 0
      %v1525 = vsel %vm422, %v1366, 0
      %v1528 = vsel %vm422, %v1367, 0
      %v1531 = vsel %vm422, %v1368, 0
      %v1534 = vsel %vm422, %v1369, 0
      %v1537 = vsel %vm422, %v1370, 0
      %v1540 = vsel %vm422, %v1371, 0
      %v1543 = vsel %vm422, %v1372, 0
      %v1546 = vsel %vm422, %v1373, 0
      %v1549 = vsel %vm422, %v1374, 0
      %v1552 = vsel %vm422, %v1375, 0
      %v1555 = vsel %vm422, %v1376, 0
      %v1558 = vsel %vm422, %v1377, 0
      %v1561 = vsel %vm422, %v1378, 0
      %v1564 = vsel %vm422, %v1379, 0
      %v1567 = vsel %vm422, %v1380, 0
      %v1570 = vsel %vm422, %v1381, 0
      %v1573 = vsel %vm422, %v1382, 0
      %v1576 = vsel %vm422, %v1383, 0
      %v1579 = vsel %vm422, %v1384, 0
      %v1582 = vsel %vm422, %v1385, 0
      %v1585 = vsel %vm422, %v1386, 0
      %v1588 = vsel %vm422, %v1387, 0
      %v1591 = vsel %vm422, %v1388, 0
      %v1594 = vsel %vm422, %v1389, 0
      %v1597 = vsel %vm422, %v1390, 0
      %v1600 = vsel %vm422, %v1391, 0
      %v1603 = vsel %vm422, %v1392, 0
      %v1606 = vsel %vm422, %v1393, 0
      %v1609 = vsel %vm422, %v1394, 0
      %v1612 = vsel %vm422, %v1395, 0
      %v1615 = vsel %vm422, %v1396, 0
      %v1618 = vsel %vm422, %v1397, 0
      %v1621 = vsel %vm422, %v1398, 0
      %v1624 = vsel %vm422, %v1399, 0
      %v1627 = vsel %vm422, %v1400, 0
      %v1630 = vsel %vm422, %v1401, 0
      %v1633 = vsel %vm422, %v1402, 0
      %v1636 = vsel %vm422, %v1403, 0
      %v1639 = vsel %vm422, %v1404, 0
      %v1642 = vsel %vm422, %v1405, 0
      %v1645 = vsel %vm422, %v1406, 0
      %v1648 = vsel %vm422, %v1407, 0
      %v1651 = vsel %vm422, %v1408, 0
      %v1654 = vsel %vm422, %v1409, 0
      %v1657 = vsel %vm422, %v1410, 0
      %v1660 = vsel %vm422, %v1411, 0
      %v1663 = vsel %vm422, %v1412, 0
      %v1666 = vsel %vm422, %v1413, 0
      %v1669 = vsel %vm422, %v1414, 0
      %v1672 = vsel %vm422, %v1415, 0
      %v1675 = vsel %vm422, %v1416, 0
      %v1678 = vsel %vm422, %v1417, 0
      %1680 = vmatprep.subr.mxu0 0.0
      %1681 = vmatpush1.msra.mxu0 %v1460
      %1682 = vmatprep.subr.mxu0 0.0
      %1683 = vmatpush1.msra.mxu0 %v1461
      %1684 = vmatprep.subr.mxu0 0.0
      %1685 = vmatpush1.msra.mxu0 0.0
      %1686 = vmatprep.subr.mxu0 0.0
      %1687 = vmatpush1.msra.mxu0 0.0
      %1688 = vmatprep.subr.mxu0 0.0
      %1689 = vmatpush1.msra.mxu0 0.0
      %1690 = vmatprep.subr.mxu0 0.0
      %1691 = vmatpush1.msra.mxu0 0.0
      %1692 = vmatprep.subr.mxu0 0.0
      %1693 = vmatpush1.msra.mxu0 0.0
      %1694 = vmatprep.subr.mxu0 0.0
      %1695 = vmatpush1.msra.mxu0 0.0
      %1696 = vmatprep.subr.mxu0 0.0
      %1697 = vmatpush1.msra.mxu0 0.0
      %1698 = vmatprep.subr.mxu0 0.0
      %1699 = vmatpush1.msra.mxu0 0.0
      %1700 = vmatprep.subr.mxu0 0.0
      %1701 = vmatpush1.msra.mxu0 0.0
      %1702 = vmatprep.subr.mxu0 0.0
      %1703 = vmatpush1.msra.mxu0 0.0
      %1704 = vmatprep.subr.mxu0 0.0
      %1705 = vmatpush1.msra.mxu0 0.0
      %1706 = vmatprep.subr.mxu0 0.0
      %1707 = vmatpush1.msra.mxu0 0.0
      %1708 = vmatprep.subr.mxu0 0.0
      %1709 = vmatpush1.msra.mxu0 0.0
      %1710 = vmatprep.subr.mxu0 0.0
      %1711 = vmatpush1.msra.mxu0 0.0
      %1712 = vmatprep.subr.mxu0 0.0
      %1713 = vmatpush1.msra.mxu0 0.0
      %1714 = vmatprep.subr.mxu0 0.0
      %1715 = vmatpush1.msra.mxu0 0.0
      %1716 = vmatprep.subr.mxu0 0.0
      %1717 = vmatpush1.msra.mxu0 0.0
      %1718 = vmatprep.subr.mxu0 0.0
      %1719 = vmatpush1.msra.mxu0 0.0
      %1720 = vmatprep.subr.mxu0 0.0
      %1721 = vmatpush1.msra.mxu0 0.0
      %1722 = vmatprep.subr.mxu0 0.0
      %1723 = vmatpush1.msra.mxu0 0.0
      %1724 = vmatprep.subr.mxu0 0.0
      %1725 = vmatpush1.msra.mxu0 0.0
      %1726 = vmatprep.subr.mxu0 0.0
      %1727 = vmatpush1.msra.mxu0 0.0
      %1728 = vmatprep.subr.mxu0 0.0
      %1729 = vmatpush1.msra.mxu0 0.0
      %1730 = vmatprep.subr.mxu0 0.0
      %1731 = vmatpush1.msra.mxu0 0.0
      %1732 = vmatprep.subr.mxu0 0.0
      %1733 = vmatpush1.msra.mxu0 0.0
      %1734 = vmatprep.subr.mxu0 0.0
      %1735 = vmatpush1.msra.mxu0 0.0
      %1736 = vmatprep.subr.mxu0 0.0
      %1737 = vmatpush1.msra.mxu0 0.0
      %1738 = vmatprep.subr.mxu0 0.0
      %1739 = vmatpush1.msra.mxu0 0.0
      %1740 = vmatprep.subr.mxu0 0.0
      %1741 = vmatpush1.msra.mxu0 0.0
      %1742 = vmatprep.subr.mxu0 0.0
      %1743 = vmatpush1.msra.mxu0 0.0
      %1744 = vmatprep.mubr.f32.mxu0 0.0
      %1745 = vmatmul.mubr.f32.gmra.mrb[0].mxu0 %v1489
      %v1746 = vpop.f32.mrb[0].mxu0
      %v1747 = vadd.f32 0.0, %v1746
      %v1748 = vpop.f32.mrb[0].mxu0
      %1749 = vmatprep.mubr.f32.mxu0 0.0
      %1750 = vmatmul.mubr.f32.gmra.mrb[0].mxu0 %v1492
      %v1751 = vpop.f32.mrb[0].mxu0
      %v1752 = vadd.f32 0.0, %v1751
      %v1753 = vpop.f32.mrb[0].mxu0
      %1754 = vmatprep.mubr.f32.mxu0 0.0
      %1755 = vmatmul.mubr.f32.gmra.mrb[0].mxu0 %v1495
      %v1756 = vpop.f32.mrb[0].mxu0
      %v1757 = vadd.f32 0.0, %v1756
      %v1758 = vpop.f32.mrb[0].mxu0
      %1759 = vmatprep.mubr.f32.mxu0 0.0
      %1760 = vmatmul.mubr.f32.gmra.mrb[0].mxu0 %v1498
      %v1761 = vpop.f32.mrb[0].mxu0
      %v1762 = vadd.f32 0.0, %v1761
      %v1763 = vpop.f32.mrb[0].mxu0
      %1764 = vmatprep.mubr.f32.mxu0 0.0
      %1765 = vmatmul.mubr.f32.gmra.mrb[0].mxu0 %v1501
      %v1766 = vpop.f32.mrb[0].mxu0
      %v1767 = vadd.f32 0.0, %v1766
      %v1768 = vpop.f32.mrb[0].mxu0
      %1769 = vmatprep.mubr.f32.mxu0 0.0
      %1770 = vmatmul.mubr.f32.gmra.mrb[0].mxu0 %v1504
      %v1771 = vpop.f32.mrb[0].mxu0
      %v1772 = vadd.f32 0.0, %v1771
      %v1773 = vpop.f32.mrb[0].mxu0
      %1774 = vmatprep.mubr.f32.mxu0 0.0
      %1775 = vmatmul.mubr.f32.gmra.mrb[0].mxu0 %v1507
      %v1776 = vpop.f32.mrb[0].mxu0
      %v1777 = vadd.f32 0.0, %v1776
      %v1778 = vpop.f32.mrb[0].mxu0
      %1779 = vmatprep.mubr.f32.mxu0 0.0
      %1780 = vmatmul.mubr.f32.gmra.mrb[0].mxu0 %v1510
      %v1781 = vpop.f32.mrb[0].mxu0
      %v1782 = vadd.f32 0.0, %v1781
      %v1783 = vpop.f32.mrb[0].mxu0
      %1784 = vmatprep.mubr.f32.mxu0 0.0
      %1785 = vmatmul.mubr.f32.gmra.mrb[0].mxu0 %v1513
      %v1786 = vpop.f32.mrb[0].mxu0
      %v1787 = vadd.f32 0.0, %v1786
      %v1788 = vpop.f32.mrb[0].mxu0
      %1789 = vmatprep.mubr.f32.mxu0 0.0
      %1790 = vmatmul.mubr.f32.gmra.mrb[0].mxu0 %v1516
      %v1791 = vpop.f32.mrb[0].mxu0
      %v1792 = vadd.f32 0.0, %v1791
      %v1793 = vpop.f32.mrb[0].mxu0
      %1794 = vmatprep.mubr.f32.mxu0 0.0
      %1795 = vmatmul.mubr.f32.gmra.mrb[0].mxu0 %v1519
      %v1796 = vpop.f32.mrb[0].mxu0
      %v1797 = vadd.f32 0.0, %v1796
      %v1798 = vpop.f32.mrb[0].mxu0
      %1799 = vmatprep.mubr.f32.mxu0 0.0
      %1800 = vmatmul.mubr.f32.gmra.mrb[0].mxu0 %v1522
      %v1801 = vpop.f32.mrb[0].mxu0
      %v1802 = vadd.f32 0.0, %v1801
      %v1803 = vpop.f32.mrb[0].mxu0
      %1804 = vmatprep.mubr.f32.mxu0 0.0
      %1805 = vmatmul.mubr.f32.gmra.mrb[0].mxu0 %v1525
      %v1806 = vpop.f32.mrb[0].mxu0
      %v1807 = vadd.f32 0.0, %v1806
      %v1808 = vpop.f32.mrb[0].mxu0
      %1809 = vmatprep.mubr.f32.mxu0 0.0
      %1810 = vmatmul.mubr.f32.gmra.mrb[0].mxu0 %v1528
      %v1811 = vpop.f32.mrb[0].mxu0
      %v1812 = vadd.f32 0.0, %v1811
      %v1813 = vpop.f32.mrb[0].mxu0
      %1814 = vmatprep.mubr.f32.mxu0 0.0
      %1815 = vmatmul.mubr.f32.gmra.mrb[0].mxu0 %v1531
      %v1816 = vpop.f32.mrb[0].mxu0
      %v1817 = vadd.f32 0.0, %v1816
      %v1818 = vpop.f32.mrb[0].mxu0
      %1819 = vmatprep.mubr.f32.mxu0 0.0
      %1820 = vmatmul.mubr.f32.gmra.mrb[0].mxu0 %v1534
      %v1821 = vpop.f32.mrb[0].mxu0
      %v1822 = vadd.f32 0.0, %v1821
      %v1823 = vpop.f32.mrb[0].mxu0
      %1824 = vmatprep.mubr.f32.mxu0 0.0
      %1825 = vmatmul.mubr.f32.gmra.mrb[0].mxu0 %v1537
      %v1826 = vpop.f32.mrb[0].mxu0
      %v1827 = vadd.f32 0.0, %v1826
      %v1828 = vpop.f32.mrb[0].mxu0
      %1829 = vmatprep.mubr.f32.mxu0 0.0
      %1830 = vmatmul.mubr.f32.gmra.mrb[0].mxu0 %v1540
      %v1831 = vpop.f32.mrb[0].mxu0
      %v1832 = vadd.f32 0.0, %v1831
      %v1833 = vpop.f32.mrb[0].mxu0
      %1834 = vmatprep.mubr.f32.mxu0 0.0
      %1835 = vmatmul.mubr.f32.gmra.mrb[0].mxu0 %v1543
      %v1836 = vpop.f32.mrb[0].mxu0
      %v1837 = vadd.f32 0.0, %v1836
      %v1838 = vpop.f32.mrb[0].mxu0
      %1839 = vmatprep.mubr.f32.mxu0 0.0
      %1840 = vmatmul.mubr.f32.gmra.mrb[0].mxu0 %v1546
      %v1841 = vpop.f32.mrb[0].mxu0
      %v1842 = vadd.f32 0.0, %v1841
      %v1843 = vpop.f32.mrb[0].mxu0
      %1844 = vmatprep.mubr.f32.mxu0 0.0
      %1845 = vmatmul.mubr.f32.gmra.mrb[0].mxu0 %v1549
      %v1846 = vpop.f32.mrb[0].mxu0
      %v1847 = vadd.f32 0.0, %v1846
      %v1848 = vpop.f32.mrb[0].mxu0
      %1849 = vmatprep.mubr.f32.mxu0 0.0
      %1850 = vmatmul.mubr.f32.gmra.mrb[0].mxu0 %v1552
      %v1851 = vpop.f32.mrb[0].mxu0
      %v1852 = vadd.f32 0.0, %v1851
      %v1853 = vpop.f32.mrb[0].mxu0
      %1854 = vmatprep.mubr.f32.mxu0 0.0
      %1855 = vmatmul.mubr.f32.gmra.mrb[0].mxu0 %v1555
      %v1856 = vpop.f32.mrb[0].mxu0
      %v1857 = vadd.f32 0.0, %v1856
      %v1858 = vpop.f32.mrb[0].mxu0
      %1859 = vmatprep.mubr.f32.mxu0 0.0
      %1860 = vmatmul.mubr.f32.gmra.mrb[0].mxu0 %v1558
      %v1861 = vpop.f32.mrb[0].mxu0
      %v1862 = vadd.f32 0.0, %v1861
      %v1863 = vpop.f32.mrb[0].mxu0
      %1864 = vmatprep.mubr.f32.mxu0 0.0
      %1865 = vmatmul.mubr.f32.gmra.mrb[0].mxu0 %v1561
      %v1866 = vpop.f32.mrb[0].mxu0
      %v1867 = vadd.f32 0.0, %v1866
      %v1868 = vpop.f32.mrb[0].mxu0
      %1869 = vmatprep.mubr.f32.mxu0 0.0
      %1870 = vmatmul.mubr.f32.gmra.mrb[0].mxu0 %v1564
      %v1871 = vpop.f32.mrb[0].mxu0
      %v1872 = vadd.f32 0.0, %v1871
      %v1873 = vpop.f32.mrb[0].mxu0
      %1874 = vmatprep.mubr.f32.mxu0 0.0
      %1875 = vmatmul.mubr.f32.gmra.mrb[0].mxu0 %v1567
      %v1876 = vpop.f32.mrb[0].mxu0
      %v1877 = vadd.f32 0.0, %v1876
      %v1878 = vpop.f32.mrb[0].mxu0
      %1879 = vmatprep.mubr.f32.mxu0 0.0
      %1880 = vmatmul.mubr.f32.gmra.mrb[0].mxu0 %v1570
      %v1881 = vpop.f32.mrb[0].mxu0
      %v1882 = vadd.f32 0.0, %v1881
      %v1883 = vpop.f32.mrb[0].mxu0
      %1884 = vmatprep.mubr.f32.mxu0 0.0
      %1885 = vmatmul.mubr.f32.gmra.mrb[0].mxu0 %v1573
      %v1886 = vpop.f32.mrb[0].mxu0
      %v1887 = vadd.f32 0.0, %v1886
      %v1888 = vpop.f32.mrb[0].mxu0
      %1889 = vmatprep.mubr.f32.mxu0 0.0
      %1890 = vmatmul.mubr.f32.gmra.mrb[0].mxu0 %v1576
      %v1891 = vpop.f32.mrb[0].mxu0
      %v1892 = vadd.f32 0.0, %v1891
      %v1893 = vpop.f32.mrb[0].mxu0
      %1894 = vmatprep.mubr.f32.mxu0 0.0
      %1895 = vmatmul.mubr.f32.gmra.mrb[0].mxu0 %v1579
      %v1896 = vpop.f32.mrb[0].mxu0
      %v1897 = vadd.f32 0.0, %v1896
      %v1898 = vpop.f32.mrb[0].mxu0
      %1899 = vmatprep.mubr.f32.mxu0 0.0
      %1900 = vmatmul.mubr.f32.gmra.mrb[0].mxu0 %v1582
      %v1901 = vpop.f32.mrb[0].mxu0
      %v1902 = vadd.f32 0.0, %v1901
      %v1903 = vpop.f32.mrb[0].mxu0
      %1904 = vmatprep.mubr.f32.mxu0 0.0
      %1905 = vmatmul.mubr.f32.gmra.mrb[0].mxu0 %v1585
      %v1906 = vpop.f32.mrb[0].mxu0
      %v1907 = vadd.f32 0.0, %v1906
      %v1908 = vpop.f32.mrb[0].mxu0
      %1909 = vmatprep.mubr.f32.mxu0 0.0
      %1910 = vmatmul.mubr.f32.gmra.mrb[0].mxu0 %v1588
      %v1911 = vpop.f32.mrb[0].mxu0
      %v1912 = vadd.f32 0.0, %v1911
      %v1913 = vpop.f32.mrb[0].mxu0
      %1914 = vmatprep.mubr.f32.mxu0 0.0
      %1915 = vmatmul.mubr.f32.gmra.mrb[0].mxu0 %v1591
      %v1916 = vpop.f32.mrb[0].mxu0
      %v1917 = vadd.f32 0.0, %v1916
      %v1918 = vpop.f32.mrb[0].mxu0
      %1919 = vmatprep.mubr.f32.mxu0 0.0
      %1920 = vmatmul.mubr.f32.gmra.mrb[0].mxu0 %v1594
      %v1921 = vpop.f32.mrb[0].mxu0
      %v1922 = vadd.f32 0.0, %v1921
      %v1923 = vpop.f32.mrb[0].mxu0
      %1924 = vmatprep.mubr.f32.mxu0 0.0
      %1925 = vmatmul.mubr.f32.gmra.mrb[0].mxu0 %v1597
      %v1926 = vpop.f32.mrb[0].mxu0
      %v1927 = vadd.f32 0.0, %v1926
      %v1928 = vpop.f32.mrb[0].mxu0
      %1929 = vmatprep.mubr.f32.mxu0 0.0
      %1930 = vmatmul.mubr.f32.gmra.mrb[0].mxu0 %v1600
      %v1931 = vpop.f32.mrb[0].mxu0
      %v1932 = vadd.f32 0.0, %v1931
      %v1933 = vpop.f32.mrb[0].mxu0
      %1934 = vmatprep.mubr.f32.mxu0 0.0
      %1935 = vmatmul.mubr.f32.gmra.mrb[0].mxu0 %v1603
      %v1936 = vpop.f32.mrb[0].mxu0
      %v1937 = vadd.f32 0.0, %v1936
      %v1938 = vpop.f32.mrb[0].mxu0
      %1939 = vmatprep.mubr.f32.mxu0 0.0
      %1940 = vmatmul.mubr.f32.gmra.mrb[0].mxu0 %v1606
      %v1941 = vpop.f32.mrb[0].mxu0
      %v1942 = vadd.f32 0.0, %v1941
      %v1943 = vpop.f32.mrb[0].mxu0
      %1944 = vmatprep.mubr.f32.mxu0 0.0
      %1945 = vmatmul.mubr.f32.gmra.mrb[0].mxu0 %v1609
      %v1946 = vpop.f32.mrb[0].mxu0
      %v1947 = vadd.f32 0.0, %v1946
      %v1948 = vpop.f32.mrb[0].mxu0
      %1949 = vmatprep.mubr.f32.mxu0 0.0
      %1950 = vmatmul.mubr.f32.gmra.mrb[0].mxu0 %v1612
      %v1951 = vpop.f32.mrb[0].mxu0
      %v1952 = vadd.f32 0.0, %v1951
      %v1953 = vpop.f32.mrb[0].mxu0
      %1954 = vmatprep.mubr.f32.mxu0 0.0
      %1955 = vmatmul.mubr.f32.gmra.mrb[0].mxu0 %v1615
      %v1956 = vpop.f32.mrb[0].mxu0
      %v1957 = vadd.f32 0.0, %v1956
      %v1958 = vpop.f32.mrb[0].mxu0
      %1959 = vmatprep.mubr.f32.mxu0 0.0
      %1960 = vmatmul.mubr.f32.gmra.mrb[0].mxu0 %v1618
      %v1961 = vpop.f32.mrb[0].mxu0
      %v1962 = vadd.f32 0.0, %v1961
      %v1963 = vpop.f32.mrb[0].mxu0
      %1964 = vmatprep.mubr.f32.mxu0 0.0
      %1965 = vmatmul.mubr.f32.gmra.mrb[0].mxu0 %v1621
      %v1966 = vpop.f32.mrb[0].mxu0
      %v1967 = vadd.f32 0.0, %v1966
      %v1968 = vpop.f32.mrb[0].mxu0
      %1969 = vmatprep.mubr.f32.mxu0 0.0
      %1970 = vmatmul.mubr.f32.gmra.mrb[0].mxu0 %v1624
      %v1971 = vpop.f32.mrb[0].mxu0
      %v1972 = vadd.f32 0.0, %v1971
      %v1973 = vpop.f32.mrb[0].mxu0
      %1974 = vmatprep.mubr.f32.mxu0 0.0
      %1975 = vmatmul.mubr.f32.gmra.mrb[0].mxu0 %v1627
      %v1976 = vpop.f32.mrb[0].mxu0
      %v1977 = vadd.f32 0.0, %v1976
      %v1978 = vpop.f32.mrb[0].mxu0
      %1979 = vmatprep.mubr.f32.mxu0 0.0
      %1980 = vmatmul.mubr.f32.gmra.mrb[0].mxu0 %v1630
      %v1981 = vpop.f32.mrb[0].mxu0
      %v1982 = vadd.f32 0.0, %v1981
      %v1983 = vpop.f32.mrb[0].mxu0
      %1984 = vmatprep.mubr.f32.mxu0 0.0
      %1985 = vmatmul.mubr.f32.gmra.mrb[0].mxu0 %v1633
      %v1986 = vpop.f32.mrb[0].mxu0
      %v1987 = vadd.f32 0.0, %v1986
      %v1988 = vpop.f32.mrb[0].mxu0
      %1989 = vmatprep.mubr.f32.mxu0 0.0
      %1990 = vmatmul.mubr.f32.gmra.mrb[0].mxu0 %v1636
      %v1991 = vpop.f32.mrb[0].mxu0
      %v1992 = vadd.f32 0.0, %v1991
      %v1993 = vpop.f32.mrb[0].mxu0
      %1994 = vmatprep.mubr.f32.mxu0 0.0
      %1995 = vmatmul.mubr.f32.gmra.mrb[0].mxu0 %v1639
      %v1996 = vpop.f32.mrb[0].mxu0
      %v1997 = vadd.f32 0.0, %v1996
      %v1998 = vpop.f32.mrb[0].mxu0
      %1999 = vmatprep.mubr.f32.mxu0 0.0
      %2000 = vmatmul.mubr.f32.gmra.mrb[0].mxu0 %v1642
      %v2001 = vpop.f32.mrb[0].mxu0
      %v2002 = vadd.f32 0.0, %v2001
      %v2003 = vpop.f32.mrb[0].mxu0
      %2004 = vmatprep.mubr.f32.mxu0 0.0
      %2005 = vmatmul.mubr.f32.gmra.mrb[0].mxu0 %v1645
      %v2006 = vpop.f32.mrb[0].mxu0
      %v2007 = vadd.f32 0.0, %v2006
      %v2008 = vpop.f32.mrb[0].mxu0
      %2009 = vmatprep.mubr.f32.mxu0 0.0
      %2010 = vmatmul.mubr.f32.gmra.mrb[0].mxu0 %v1648
      %v2011 = vpop.f32.mrb[0].mxu0
      %v2012 = vadd.f32 0.0, %v2011
      %v2013 = vpop.f32.mrb[0].mxu0
      %2014 = vmatprep.mubr.f32.mxu0 0.0
      %2015 = vmatmul.mubr.f32.gmra.mrb[0].mxu0 %v1651
      %v2016 = vpop.f32.mrb[0].mxu0
      %v2017 = vadd.f32 0.0, %v2016
      %v2018 = vpop.f32.mrb[0].mxu0
      %2019 = vmatprep.mubr.f32.mxu0 0.0
      %2020 = vmatmul.mubr.f32.gmra.mrb[0].mxu0 %v1654
      %v2021 = vpop.f32.mrb[0].mxu0
      %v2022 = vadd.f32 0.0, %v2021
      %v2023 = vpop.f32.mrb[0].mxu0
      %2024 = vmatprep.mubr.f32.mxu0 0.0
      %2025 = vmatmul.mubr.f32.gmra.mrb[0].mxu0 %v1657
      %v2026 = vpop.f32.mrb[0].mxu0
      %v2027 = vadd.f32 0.0, %v2026
      %v2028 = vpop.f32.mrb[0].mxu0
      %2029 = vmatprep.mubr.f32.mxu0 0.0
      %2030 = vmatmul.mubr.f32.gmra.mrb[0].mxu0 %v1660
      %v2031 = vpop.f32.mrb[0].mxu0
      %v2032 = vadd.f32 0.0, %v2031
      %v2033 = vpop.f32.mrb[0].mxu0
      %2034 = vmatprep.mubr.f32.mxu0 0.0
      %2035 = vmatmul.mubr.f32.gmra.mrb[0].mxu0 %v1663
      %v2036 = vpop.f32.mrb[0].mxu0
      %v2037 = vadd.f32 0.0, %v2036
      %v2038 = vpop.f32.mrb[0].mxu0
      %2039 = vmatprep.mubr.f32.mxu0 0.0
      %2040 = vmatmul.mubr.f32.gmra.mrb[0].mxu0 %v1666
      %v2041 = vpop.f32.mrb[0].mxu0
      %v2042 = vadd.f32 0.0, %v2041
      %v2043 = vpop.f32.mrb[0].mxu0
      %2044 = vmatprep.mubr.f32.mxu0 0.0
      %2045 = vmatmul.mubr.f32.gmra.mrb[0].mxu0 %v1669
      %v2046 = vpop.f32.mrb[0].mxu0
      %v2047 = vadd.f32 0.0, %v2046
      %v2048 = vpop.f32.mrb[0].mxu0
      %2049 = vmatprep.mubr.f32.mxu0 0.0
      %2050 = vmatmul.mubr.f32.gmra.mrb[0].mxu0 %v1672
      %v2051 = vpop.f32.mrb[0].mxu0
      %v2052 = vadd.f32 0.0, %v2051
      %v2053 = vpop.f32.mrb[0].mxu0
      %2054 = vmatprep.mubr.f32.mxu0 0.0
      %2055 = vmatmul.mubr.f32.gmra.mrb[0].mxu0 %v1675
      %v2056 = vpop.f32.mrb[0].mxu0
      %v2057 = vadd.f32 0.0, %v2056
      %v2058 = vpop.f32.mrb[0].mxu0
      %2059 = vmatprep.mubr.f32.mxu0 0.0
      %2060 = vmatmul.mubr.f32.gmra.mrb[0].mxu0 %v1678
      %v2061 = vpop.f32.mrb[0].mxu0
      %v2062 = vadd.f32 0.0, %v2061
      %v2063 = vpop.f32.mrb[0].mxu0
      %2064 = vdwg.mxu0
      %v2065 = vmul.f32 %v1747, %v1486
      %v2066 = vmul.f32 %v1752, %v1487
      %v2067 = vmul.f32 %v1757, %v1486
      %v2068 = vmul.f32 %v1762, %v1487
      %v2069 = vmul.f32 %v1767, %v1486
      %v2070 = vmul.f32 %v1772, %v1487
      %v2071 = vmul.f32 %v1777, %v1486
      %v2072 = vmul.f32 %v1782, %v1487
      %v2073 = vmul.f32 %v1787, %v1486
      %v2074 = vmul.f32 %v1792, %v1487
      %v2075 = vmul.f32 %v1797, %v1486
      %v2076 = vmul.f32 %v1802, %v1487
      %v2077 = vmul.f32 %v1807, %v1486
      %v2078 = vmul.f32 %v1812, %v1487
      %v2079 = vmul.f32 %v1817, %v1486
      %v2080 = vmul.f32 %v1822, %v1487
      %v2081 = vmul.f32 %v1827, %v1486
      %v2082 = vmul.f32 %v1832, %v1487
      %v2083 = vmul.f32 %v1837, %v1486
      %v2084 = vmul.f32 %v1842, %v1487
      %v2085 = vmul.f32 %v1847, %v1486
      %v2086 = vmul.f32 %v1852, %v1487
      %v2087 = vmul.f32 %v1857, %v1486
      %v2088 = vmul.f32 %v1862, %v1487
      %v2089 = vmul.f32 %v1867, %v1486
      %v2090 = vmul.f32 %v1872, %v1487
      %v2091 = vmul.f32 %v1877, %v1486
      %v2092 = vmul.f32 %v1882, %v1487
      %v2093 = vmul.f32 %v1887, %v1486
      %v2094 = vmul.f32 %v1892, %v1487
      %v2095 = vmul.f32 %v1897, %v1486
      %v2096 = vmul.f32 %v1902, %v1487
      %v2097 = vmul.f32 %v1907, %v1486
      %v2098 = vmul.f32 %v1912, %v1487
      %v2099 = vmul.f32 %v1917, %v1486
      %v2100 = vmul.f32 %v1922, %v1487
      %v2101 = vmul.f32 %v1927, %v1486
      %v2102 = vmul.f32 %v1932, %v1487
      %v2103 = vmul.f32 %v1937, %v1486
      %v2104 = vmul.f32 %v1942, %v1487
      %v2105 = vmul.f32 %v1947, %v1486
      %v2106 = vmul.f32 %v1952, %v1487
      %v2107 = vmul.f32 %v1957, %v1486
      %v2108 = vmul.f32 %v1962, %v1487
      %v2109 = vmul.f32 %v1967, %v1486
      %v2110 = vmul.f32 %v1972, %v1487
      %v2111 = vmul.f32 %v1977, %v1486
      %v2112 = vmul.f32 %v1982, %v1487
      %v2113 = vmul.f32 %v1987, %v1486
      %v2114 = vmul.f32 %v1992, %v1487
      %v2115 = vmul.f32 %v1997, %v1486
      %v2116 = vmul.f32 %v2002, %v1487
      %v2117 = vmul.f32 %v2007, %v1486
      %v2118 = vmul.f32 %v2012, %v1487
      %v2119 = vmul.f32 %v2017, %v1486
      %v2120 = vmul.f32 %v2022, %v1487
      %v2121 = vmul.f32 %v2027, %v1486
      %v2122 = vmul.f32 %v2032, %v1487
      %v2123 = vmul.f32 %v2037, %v1486
      %v2124 = vmul.f32 %v2042, %v1487
      %v2125 = vmul.f32 %v2047, %v1486
      %v2126 = vmul.f32 %v2052, %v1487
      %v2127 = vmul.f32 %v2057, %v1486
      %v2128 = vmul.f32 %v2062, %v1487
      %v2129 = vsel %vm1064, %v2065, 0.0
      %v2130 = vsel %vm1064, %v2066, 0.0
      %v2131 = vadd.f32 %v2129, %v2130
      %v2132 = vrot.slane %v2131, 4
      %v2133 = vadd.f32 %v2131, %v2132
      %v2134 = vrot.slane %v2133, 2
      %v2135 = vadd.f32 %v2133, %v2134
      %v2136 = vrot.slane %v2135, 1
      %v2137 = vadd.f32 %v2135, %v2136
      %v2138 = vsel %vm1064, %v2067, 0.0
      %v2139 = vsel %vm1064, %v2068, 0.0
      %v2140 = vadd.f32 %v2138, %v2139
      %v2141 = vrot.slane %v2140, 4
      %v2142 = vadd.f32 %v2140, %v2141
      %v2143 = vrot.slane %v2142, 2
      %v2144 = vadd.f32 %v2142, %v2143
      %v2145 = vrot.slane %v2144, 1
      %v2146 = vadd.f32 %v2144, %v2145
      %v2147 = vsel %vm1064, %v2069, 0.0
      %v2148 = vsel %vm1064, %v2070, 0.0
      %v2149 = vadd.f32 %v2147, %v2148
      %v2150 = vrot.slane %v2149, 4
      %v2151 = vadd.f32 %v2149, %v2150
      %v2152 = vrot.slane %v2151, 2
      %v2153 = vadd.f32 %v2151, %v2152
      %v2154 = vrot.slane %v2153, 1
      %v2155 = vadd.f32 %v2153, %v2154
      %v2156 = vsel %vm1064, %v2071, 0.0
      %v2157 = vsel %vm1064, %v2072, 0.0
      %v2158 = vadd.f32 %v2156, %v2157
      %v2159 = vrot.slane %v2158, 4
      %v2160 = vadd.f32 %v2158, %v2159
      %v2161 = vrot.slane %v2160, 2
      %v2162 = vadd.f32 %v2160, %v2161
      %v2163 = vrot.slane %v2162, 1
      %v2164 = vadd.f32 %v2162, %v2163
      %v2165 = vsel %vm1064, %v2073, 0.0
      %v2166 = vsel %vm1064, %v2074, 0.0
      %v2167 = vadd.f32 %v2165, %v2166
      %v2168 = vrot.slane %v2167, 4
      %v2169 = vadd.f32 %v2167, %v2168
      %v2170 = vrot.slane %v2169, 2
      %v2171 = vadd.f32 %v2169, %v2170
      %v2172 = vrot.slane %v2171, 1
      %v2173 = vadd.f32 %v2171, %v2172
      %v2174 = vsel %vm1064, %v2075, 0.0
      %v2175 = vsel %vm1064, %v2076, 0.0
      %v2176 = vadd.f32 %v2174, %v2175
      %v2177 = vrot.slane %v2176, 4
      %v2178 = vadd.f32 %v2176, %v2177
      %v2179 = vrot.slane %v2178, 2
      %v2180 = vadd.f32 %v2178, %v2179
      %v2181 = vrot.slane %v2180, 1
      %v2182 = vadd.f32 %v2180, %v2181
      %v2183 = vsel %vm1064, %v2077, 0.0
      %v2184 = vsel %vm1064, %v2078, 0.0
      %v2185 = vadd.f32 %v2183, %v2184
      %v2186 = vrot.slane %v2185, 4
      %v2187 = vadd.f32 %v2185, %v2186
      %v2188 = vrot.slane %v2187, 2
      %v2189 = vadd.f32 %v2187, %v2188
      %v2190 = vrot.slane %v2189, 1
      %v2191 = vadd.f32 %v2189, %v2190
      %v2192 = vsel %vm1064, %v2079, 0.0
      %v2193 = vsel %vm1064, %v2080, 0.0
      %v2194 = vadd.f32 %v2192, %v2193
      %v2195 = vrot.slane %v2194, 4
      %v2196 = vadd.f32 %v2194, %v2195
      %v2197 = vrot.slane %v2196, 2
      %v2198 = vadd.f32 %v2196, %v2197
      %v2199 = vrot.slane %v2198, 1
      %v2200 = vadd.f32 %v2198, %v2199
      %v2201 = vsel %vm1064, %v2081, 0.0
      %v2202 = vsel %vm1064, %v2082, 0.0
      %v2203 = vadd.f32 %v2201, %v2202
      %v2204 = vrot.slane %v2203, 4
      %v2205 = vadd.f32 %v2203, %v2204
      %v2206 = vrot.slane %v2205, 2
      %v2207 = vadd.f32 %v2205, %v2206
      %v2208 = vrot.slane %v2207, 1
      %v2209 = vadd.f32 %v2207, %v2208
      %v2210 = vsel %vm1064, %v2083, 0.0
      %v2211 = vsel %vm1064, %v2084, 0.0
      %v2212 = vadd.f32 %v2210, %v2211
      %v2213 = vrot.slane %v2212, 4
      %v2214 = vadd.f32 %v2212, %v2213
      %v2215 = vrot.slane %v2214, 2
      %v2216 = vadd.f32 %v2214, %v2215
      %v2217 = vrot.slane %v2216, 1
      %v2218 = vadd.f32 %v2216, %v2217
      %v2219 = vsel %vm1064, %v2085, 0.0
      %v2220 = vsel %vm1064, %v2086, 0.0
      %v2221 = vadd.f32 %v2219, %v2220
      %v2222 = vrot.slane %v2221, 4
      %v2223 = vadd.f32 %v2221, %v2222
      %v2224 = vrot.slane %v2223, 2
      %v2225 = vadd.f32 %v2223, %v2224
      %v2226 = vrot.slane %v2225, 1
      %v2227 = vadd.f32 %v2225, %v2226
      %v2228 = vsel %vm1064, %v2087, 0.0
      %v2229 = vsel %vm1064, %v2088, 0.0
      %v2230 = vadd.f32 %v2228, %v2229
      %v2231 = vrot.slane %v2230, 4
      %v2232 = vadd.f32 %v2230, %v2231
      %v2233 = vrot.slane %v2232, 2
      %v2234 = vadd.f32 %v2232, %v2233
      %v2235 = vrot.slane %v2234, 1
      %v2236 = vadd.f32 %v2234, %v2235
      %v2237 = vsel %vm1064, %v2089, 0.0
      %v2238 = vsel %vm1064, %v2090, 0.0
      %v2239 = vadd.f32 %v2237, %v2238
      %v2240 = vrot.slane %v2239, 4
      %v2241 = vadd.f32 %v2239, %v2240
      %v2242 = vrot.slane %v2241, 2
      %v2243 = vadd.f32 %v2241, %v2242
      %v2244 = vrot.slane %v2243, 1
      %v2245 = vadd.f32 %v2243, %v2244
      %v2246 = vsel %vm1064, %v2091, 0.0
      %v2247 = vsel %vm1064, %v2092, 0.0
      %v2248 = vadd.f32 %v2246, %v2247
      %v2249 = vrot.slane %v2248, 4
      %v2250 = vadd.f32 %v2248, %v2249
      %v2251 = vrot.slane %v2250, 2
      %v2252 = vadd.f32 %v2250, %v2251
      %v2253 = vrot.slane %v2252, 1
      %v2254 = vadd.f32 %v2252, %v2253
      %v2255 = vsel %vm1064, %v2093, 0.0
      %v2256 = vsel %vm1064, %v2094, 0.0
      %v2257 = vadd.f32 %v2255, %v2256
      %v2258 = vrot.slane %v2257, 4
      %v2259 = vadd.f32 %v2257, %v2258
      %v2260 = vrot.slane %v2259, 2
      %v2261 = vadd.f32 %v2259, %v2260
      %v2262 = vrot.slane %v2261, 1
      %v2263 = vadd.f32 %v2261, %v2262
      %v2264 = vsel %vm1064, %v2095, 0.0
      %v2265 = vsel %vm1064, %v2096, 0.0
      %v2266 = vadd.f32 %v2264, %v2265
      %v2267 = vrot.slane %v2266, 4
      %v2268 = vadd.f32 %v2266, %v2267
      %v2269 = vrot.slane %v2268, 2
      %v2270 = vadd.f32 %v2268, %v2269
      %v2271 = vrot.slane %v2270, 1
      %v2272 = vadd.f32 %v2270, %v2271
      %v2273 = vsel %vm1064, %v2097, 0.0
      %v2274 = vsel %vm1064, %v2098, 0.0
      %v2275 = vadd.f32 %v2273, %v2274
      %v2276 = vrot.slane %v2275, 4
      %v2277 = vadd.f32 %v2275, %v2276
      %v2278 = vrot.slane %v2277, 2
      %v2279 = vadd.f32 %v2277, %v2278
      %v2280 = vrot.slane %v2279, 1
      %v2281 = vadd.f32 %v2279, %v2280
      %v2282 = vsel %vm1064, %v2099, 0.0
      %v2283 = vsel %vm1064, %v2100, 0.0
      %v2284 = vadd.f32 %v2282, %v2283
      %v2285 = vrot.slane %v2284, 4
      %v2286 = vadd.f32 %v2284, %v2285
      %v2287 = vrot.slane %v2286, 2
      %v2288 = vadd.f32 %v2286, %v2287
      %v2289 = vrot.slane %v2288, 1
      %v2290 = vadd.f32 %v2288, %v2289
      %v2291 = vsel %vm1064, %v2101, 0.0
      %v2292 = vsel %vm1064, %v2102, 0.0
      %v2293 = vadd.f32 %v2291, %v2292
      %v2294 = vrot.slane %v2293, 4
      %v2295 = vadd.f32 %v2293, %v2294
      %v2296 = vrot.slane %v2295, 2
      %v2297 = vadd.f32 %v2295, %v2296
      %v2298 = vrot.slane %v2297, 1
      %v2299 = vadd.f32 %v2297, %v2298
      %v2300 = vsel %vm1064, %v2103, 0.0
      %v2301 = vsel %vm1064, %v2104, 0.0
      %v2302 = vadd.f32 %v2300, %v2301
      %v2303 = vrot.slane %v2302, 4
      %v2304 = vadd.f32 %v2302, %v2303
      %v2305 = vrot.slane %v2304, 2
      %v2306 = vadd.f32 %v2304, %v2305
      %v2307 = vrot.slane %v2306, 1
      %v2308 = vadd.f32 %v2306, %v2307
      %v2309 = vsel %vm1064, %v2105, 0.0
      %v2310 = vsel %vm1064, %v2106, 0.0
      %v2311 = vadd.f32 %v2309, %v2310
      %v2312 = vrot.slane %v2311, 4
      %v2313 = vadd.f32 %v2311, %v2312
      %v2314 = vrot.slane %v2313, 2
      %v2315 = vadd.f32 %v2313, %v2314
      %v2316 = vrot.slane %v2315, 1
      %v2317 = vadd.f32 %v2315, %v2316
      %v2318 = vsel %vm1064, %v2107, 0.0
      %v2319 = vsel %vm1064, %v2108, 0.0
      %v2320 = vadd.f32 %v2318, %v2319
      %v2321 = vrot.slane %v2320, 4
      %v2322 = vadd.f32 %v2320, %v2321
      %v2323 = vrot.slane %v2322, 2
      %v2324 = vadd.f32 %v2322, %v2323
      %v2325 = vrot.slane %v2324, 1
      %v2326 = vadd.f32 %v2324, %v2325
      %v2327 = vsel %vm1064, %v2109, 0.0
      %v2328 = vsel %vm1064, %v2110, 0.0
      %v2329 = vadd.f32 %v2327, %v2328
      %v2330 = vrot.slane %v2329, 4
      %v2331 = vadd.f32 %v2329, %v2330
      %v2332 = vrot.slane %v2331, 2
      %v2333 = vadd.f32 %v2331, %v2332
      %v2334 = vrot.slane %v2333, 1
      %v2335 = vadd.f32 %v2333, %v2334
      %v2336 = vsel %vm1064, %v2111, 0.0
      %v2337 = vsel %vm1064, %v2112, 0.0
      %v2338 = vadd.f32 %v2336, %v2337
      %v2339 = vrot.slane %v2338, 4
      %v2340 = vadd.f32 %v2338, %v2339
      %v2341 = vrot.slane %v2340, 2
      %v2342 = vadd.f32 %v2340, %v2341
      %v2343 = vrot.slane %v2342, 1
      %v2344 = vadd.f32 %v2342, %v2343
      %v2345 = vsel %vm1064, %v2113, 0.0
      %v2346 = vsel %vm1064, %v2114, 0.0
      %v2347 = vadd.f32 %v2345, %v2346
      %v2348 = vrot.slane %v2347, 4
      %v2349 = vadd.f32 %v2347, %v2348
      %v2350 = vrot.slane %v2349, 2
      %v2351 = vadd.f32 %v2349, %v2350
      %v2352 = vrot.slane %v2351, 1
      %v2353 = vadd.f32 %v2351, %v2352
      %v2354 = vsel %vm1064, %v2115, 0.0
      %v2355 = vsel %vm1064, %v2116, 0.0
      %v2356 = vadd.f32 %v2354, %v2355
      %v2357 = vrot.slane %v2356, 4
      %v2358 = vadd.f32 %v2356, %v2357
      %v2359 = vrot.slane %v2358, 2
      %v2360 = vadd.f32 %v2358, %v2359
      %v2361 = vrot.slane %v2360, 1
      %v2362 = vadd.f32 %v2360, %v2361
      %v2363 = vsel %vm1064, %v2117, 0.0
      %v2364 = vsel %vm1064, %v2118, 0.0
      %v2365 = vadd.f32 %v2363, %v2364
      %v2366 = vrot.slane %v2365, 4
      %v2367 = vadd.f32 %v2365, %v2366
      %v2368 = vrot.slane %v2367, 2
      %v2369 = vadd.f32 %v2367, %v2368
      %v2370 = vrot.slane %v2369, 1
      %v2371 = vadd.f32 %v2369, %v2370
      %v2372 = vsel %vm1064, %v2119, 0.0
      %v2373 = vsel %vm1064, %v2120, 0.0
      %v2374 = vadd.f32 %v2372, %v2373
      %v2375 = vrot.slane %v2374, 4
      %v2376 = vadd.f32 %v2374, %v2375
      %v2377 = vrot.slane %v2376, 2
      %v2378 = vadd.f32 %v2376, %v2377
      %v2379 = vrot.slane %v2378, 1
      %v2380 = vadd.f32 %v2378, %v2379
      %v2381 = vsel %vm1064, %v2121, 0.0
      %v2382 = vsel %vm1064, %v2122, 0.0
      %v2383 = vadd.f32 %v2381, %v2382
      %v2384 = vrot.slane %v2383, 4
      %v2385 = vadd.f32 %v2383, %v2384
      %v2386 = vrot.slane %v2385, 2
      %v2387 = vadd.f32 %v2385, %v2386
      %v2388 = vrot.slane %v2387, 1
      %v2389 = vadd.f32 %v2387, %v2388
      %v2390 = vsel %vm1064, %v2123, 0.0
      %v2391 = vsel %vm1064, %v2124, 0.0
      %v2392 = vadd.f32 %v2390, %v2391
      %v2393 = vrot.slane %v2392, 4
      %v2394 = vadd.f32 %v2392, %v2393
      %v2395 = vrot.slane %v2394, 2
      %v2396 = vadd.f32 %v2394, %v2395
      %v2397 = vrot.slane %v2396, 1
      %v2398 = vadd.f32 %v2396, %v2397
      %v2399 = vsel %vm1064, %v2125, 0.0
      %v2400 = vsel %vm1064, %v2126, 0.0
      %v2401 = vadd.f32 %v2399, %v2400
      %v2402 = vrot.slane %v2401, 4
      %v2403 = vadd.f32 %v2401, %v2402
      %v2404 = vrot.slane %v2403, 2
      %v2405 = vadd.f32 %v2403, %v2404
      %v2406 = vrot.slane %v2405, 1
      %v2407 = vadd.f32 %v2405, %v2406
      %v2408 = vsel %vm1064, %v2127, 0.0
      %v2409 = vsel %vm1064, %v2128, 0.0
      %v2410 = vadd.f32 %v2408, %v2409
      %v2411 = vrot.slane %v2410, 4
      %v2412 = vadd.f32 %v2410, %v2411
      %v2413 = vrot.slane %v2412, 2
      %v2414 = vadd.f32 %v2412, %v2413
      %v2415 = vrot.slane %v2414, 1
      %v2416 = vadd.f32 %v2414, %v2415
      %vm2449 = vcmask 1041409
      %v2450 = vsel %vm2449, %v1082, %v1073
      %vm2451 = vcmask 1042434
      %v2452 = vsel %vm2451, %v1091, %v2450
      %vm2453 = vcmask 1043459
      %v2454 = vsel %vm2453, %v1100, %v2452
      %vm2455 = vcmask 1044484
      %v2456 = vsel %vm2455, %v1109, %v2454
      %vm2457 = vcmask 1045509
      %v2458 = vsel %vm2457, %v1118, %v2456
      %vm2459 = vcmask 1046534
      %v2460 = vsel %vm2459, %v1127, %v2458
      %vm2461 = vcmask 1047559
      %v2462 = vsel %vm2461, %v1136, %v2460
      %v2463 = vsel %vm2449, %v1154, %v1145
      %v2464 = vsel %vm2451, %v1163, %v2463
      %v2465 = vsel %vm2453, %v1172, %v2464
      %v2466 = vsel %vm2455, %v1181, %v2465
      %v2467 = vsel %vm2457, %v1190, %v2466
      %v2468 = vsel %vm2459, %v1199, %v2467
      %v2469 = vsel %vm2461, %v1208, %v2468
      %v2470 = vsel %vm2449, %v1226, %v1217
      %v2471 = vsel %vm2451, %v1235, %v2470
      %v2472 = vsel %vm2453, %v1244, %v2471
      %v2473 = vsel %vm2455, %v1253, %v2472
      %v2474 = vsel %vm2457, %v1262, %v2473
      %v2475 = vsel %vm2459, %v1271, %v2474
      %v2476 = vsel %vm2461, %v1280, %v2475
      %v2477 = vsel %vm2449, %v1298, %v1289
      %v2478 = vsel %vm2451, %v1307, %v2477
      %v2479 = vsel %vm2453, %v1316, %v2478
      %v2480 = vsel %vm2455, %v1325, %v2479
      %v2481 = vsel %vm2457, %v1334, %v2480
      %v2482 = vsel %vm2459, %v1343, %v2481
      %v2483 = vsel %vm2461, %v1352, %v2482
      %v2520 = vsel %vm2449, %v2146, %v2137
      %v2521 = vsel %vm2451, %v2155, %v2520
      %v2522 = vsel %vm2453, %v2164, %v2521
      %v2523 = vsel %vm2455, %v2173, %v2522
      %v2524 = vsel %vm2457, %v2182, %v2523
      %v2525 = vsel %vm2459, %v2191, %v2524
      %v2526 = vsel %vm2461, %v2200, %v2525
      %v2527 = vsel %vm2449, %v2218, %v2209
      %v2528 = vsel %vm2451, %v2227, %v2527
      %v2529 = vsel %vm2453, %v2236, %v2528
      %v2530 = vsel %vm2455, %v2245, %v2529
      %v2531 = vsel %vm2457, %v2254, %v2530
      %v2532 = vsel %vm2459, %v2263, %v2531
      %v2533 = vsel %vm2461, %v2272, %v2532
      %v2534 = vsel %vm2449, %v2290, %v2281
      %v2535 = vsel %vm2451, %v2299, %v2534
      %v2536 = vsel %vm2453, %v2308, %v2535
      %v2537 = vsel %vm2455, %v2317, %v2536
      %v2538 = vsel %vm2457, %v2326, %v2537
      %v2539 = vsel %vm2459, %v2335, %v2538
      %v2540 = vsel %vm2461, %v2344, %v2539
      %v2541 = vsel %vm2449, %v2362, %v2353
      %v2542 = vsel %vm2451, %v2371, %v2541
      %v2543 = vsel %vm2453, %v2380, %v2542
      %v2544 = vsel %vm2455, %v2389, %v2543
      %v2545 = vsel %vm2457, %v2398, %v2544
      %v2546 = vsel %vm2459, %v2407, %v2545
      %v2547 = vsel %vm2461, %v2416, %v2546
      %v2552 = vld [vmem:[%s3] sm:$0xff]
      %v2553 = vld [vmem:[%s3 + $0x8] sm:$0xff]
      %v2554 = vld [vmem:[%s3 + $0x10] sm:$0xff]
      %v2555 = vld [vmem:[%s3 + $0x18] sm:$0xff]
      %v2556 = vld [vmem:[%s3 + $0x20] sm:$0xff]
      %v2557 = vld [vmem:[%s3 + $0x28] sm:$0xff]
      %v2558 = vld [vmem:[%s3 + $0x30] sm:$0xff]
      %v2559 = vld [vmem:[%s3 + $0x38] sm:$0xff]
      %v2560 = vld [vmem:[%s3 + $0x40] sm:$0xff]
      %v2561 = vld [vmem:[%s3 + $0x48] sm:$0xff]
      %v2562 = vld [vmem:[%s3 + $0x50] sm:$0xff]
      %v2563 = vld [vmem:[%s3 + $0x58] sm:$0xff]
      %v2564 = vld [vmem:[%s3 + $0x60] sm:$0xff]
      %v2565 = vld [vmem:[%s3 + $0x68] sm:$0xff]
      %v2566 = vld [vmem:[%s3 + $0x70] sm:$0xff]
      %v2567 = vld [vmem:[%s3 + $0x78] sm:$0xff]
      %v2568 = vld [vmem:[%s4] sm:$0xff]
      %v2569 = vld [vmem:[%s4 + $0x8] sm:$0xff]
      %v2570 = vld [vmem:[%s4 + $0x10] sm:$0xff]
      %v2571 = vld [vmem:[%s4 + $0x18] sm:$0xff]
      %v2572 = vld [vmem:[%s4 + $0x20] sm:$0xff]
      %v2573 = vld [vmem:[%s4 + $0x28] sm:$0xff]
      %v2574 = vld [vmem:[%s4 + $0x30] sm:$0xff]
      %v2575 = vld [vmem:[%s4 + $0x38] sm:$0xff]
      %v2576 = vld [vmem:[%s4 + $0x40] sm:$0xff]
      %v2577 = vld [vmem:[%s4 + $0x48] sm:$0xff]
      %v2578 = vld [vmem:[%s4 + $0x50] sm:$0xff]
      %v2579 = vld [vmem:[%s4 + $0x58] sm:$0xff]
      %v2580 = vld [vmem:[%s4 + $0x60] sm:$0xff]
      %v2581 = vld [vmem:[%s4 + $0x68] sm:$0xff]
      %v2582 = vld [vmem:[%s4 + $0x70] sm:$0xff]
      %v2583 = vld [vmem:[%s4 + $0x78] sm:$0xff]
      %2585 = vset.pattern.permute.xlu0 0
      %2586 = vperm.xlu0 %2585, %v2568
      %v2587 = vpop.permute.xlu0 %2586
      %2590 = vset.pattern.permute.xlu0 0
      %2591 = vperm.xlu0 %2590, %v2569
      %v2592 = vpop.permute.xlu0 %2591
      %2595 = vset.pattern.permute.xlu0 0
      %2596 = vperm.xlu0 %2595, %v2570
      %v2597 = vpop.permute.xlu0 %2596
      %2600 = vset.pattern.permute.xlu0 0
      %2601 = vperm.xlu0 %2600, %v2571
      %v2602 = vpop.permute.xlu0 %2601
      %2605 = vset.pattern.permute.xlu0 0
      %2606 = vperm.xlu0 %2605, %v2572
      %v2607 = vpop.permute.xlu0 %2606
      %2610 = vset.pattern.permute.xlu0 0
      %2611 = vperm.xlu0 %2610, %v2573
      %v2612 = vpop.permute.xlu0 %2611
      %2615 = vset.pattern.permute.xlu0 0
      %2616 = vperm.xlu0 %2615, %v2574
      %v2617 = vpop.permute.xlu0 %2616
      %2620 = vset.pattern.permute.xlu0 0
      %2621 = vperm.xlu0 %2620, %v2575
      %v2622 = vpop.permute.xlu0 %2621
      %2625 = vset.pattern.permute.xlu0 0
      %2626 = vperm.xlu0 %2625, %v2576
      %v2627 = vpop.permute.xlu0 %2626
      %2630 = vset.pattern.permute.xlu0 0
      %2631 = vperm.xlu0 %2630, %v2577
      %v2632 = vpop.permute.xlu0 %2631
      %2635 = vset.pattern.permute.xlu0 0
      %2636 = vperm.xlu0 %2635, %v2578
      %v2637 = vpop.permute.xlu0 %2636
      %2640 = vset.pattern.permute.xlu0 0
      %2641 = vperm.xlu0 %2640, %v2579
      %v2642 = vpop.permute.xlu0 %2641
      %2645 = vset.pattern.permute.xlu0 0
      %2646 = vperm.xlu0 %2645, %v2580
      %v2647 = vpop.permute.xlu0 %2646
      %2650 = vset.pattern.permute.xlu0 0
      %2651 = vperm.xlu0 %2650, %v2581
      %v2652 = vpop.permute.xlu0 %2651
      %2655 = vset.pattern.permute.xlu0 0
      %2656 = vperm.xlu0 %2655, %v2582
      %v2657 = vpop.permute.xlu0 %2656
      %2660 = vset.pattern.permute.xlu0 0
      %2661 = vperm.xlu0 %2660, %v2583
      %v2662 = vpop.permute.xlu0 %2661
      %v2665 = vsel %vm1064, %v2552, 0
      %v2668 = vsel %vm1064, %v2553, 0
      %v2671 = vsel %vm1064, %v2554, 0
      %v2674 = vsel %vm1064, %v2555, 0
      %v2677 = vsel %vm1064, %v2556, 0
      %v2680 = vsel %vm1064, %v2557, 0
      %v2683 = vsel %vm1064, %v2558, 0
      %v2686 = vsel %vm1064, %v2559, 0
      %v2689 = vsel %vm1064, %v2560, 0
      %v2692 = vsel %vm1064, %v2561, 0
      %v2695 = vsel %vm1064, %v2562, 0
      %v2698 = vsel %vm1064, %v2563, 0
      %v2701 = vsel %vm1064, %v2564, 0
      %v2704 = vsel %vm1064, %v2565, 0
      %v2707 = vsel %vm1064, %v2566, 0
      %v2710 = vsel %vm1064, %v2567, 0
      %2712 = vmatprep.subr.mxu0 0.0
      %2713 = vmatpush1.msra.mxu0 %v2462
      %2714 = vmatprep.subr.mxu0 0.0
      %2715 = vmatpush1.msra.mxu0 %v2469
      %2716 = vmatprep.subr.mxu0 0.0
      %2717 = vmatpush1.msra.mxu0 %v2476
      %2718 = vmatprep.subr.mxu0 0.0
      %2719 = vmatpush1.msra.mxu0 %v2483
      %2720 = vmatprep.subr.mxu0 0.0
      %2721 = vmatpush1.msra.mxu0 %v2526
      %2722 = vmatprep.subr.mxu0 0.0
      %2723 = vmatpush1.msra.mxu0 %v2533
      %2724 = vmatprep.subr.mxu0 0.0
      %2725 = vmatpush1.msra.mxu0 %v2540
      %2726 = vmatprep.subr.mxu0 0.0
      %2727 = vmatpush1.msra.mxu0 %v2547
      %2728 = vmatprep.subr.mxu0 0.0
      %2729 = vmatpush1.msra.mxu0 0.0
      %2730 = vmatprep.subr.mxu0 0.0
      %2731 = vmatpush1.msra.mxu0 0.0
      %2732 = vmatprep.subr.mxu0 0.0
      %2733 = vmatpush1.msra.mxu0 0.0
      %2734 = vmatprep.subr.mxu0 0.0
      %2735 = vmatpush1.msra.mxu0 0.0
      %2736 = vmatprep.subr.mxu0 0.0
      %2737 = vmatpush1.msra.mxu0 0.0
      %2738 = vmatprep.subr.mxu0 0.0
      %2739 = vmatpush1.msra.mxu0 0.0
      %2740 = vmatprep.subr.mxu0 0.0
      %2741 = vmatpush1.msra.mxu0 0.0
      %2742 = vmatprep.subr.mxu0 0.0
      %2743 = vmatpush1.msra.mxu0 0.0
      %2744 = vmatprep.subr.mxu0 0.0
      %2745 = vmatpush1.msra.mxu0 0.0
      %2746 = vmatprep.subr.mxu0 0.0
      %2747 = vmatpush1.msra.mxu0 0.0
      %2748 = vmatprep.subr.mxu0 0.0
      %2749 = vmatpush1.msra.mxu0 0.0
      %2750 = vmatprep.subr.mxu0 0.0
      %2751 = vmatpush1.msra.mxu0 0.0
      %2752 = vmatprep.subr.mxu0 0.0
      %2753 = vmatpush1.msra.mxu0 0.0
      %2754 = vmatprep.subr.mxu0 0.0
      %2755 = vmatpush1.msra.mxu0 0.0
      %2756 = vmatprep.subr.mxu0 0.0
      %2757 = vmatpush1.msra.mxu0 0.0
      %2758 = vmatprep.subr.mxu0 0.0
      %2759 = vmatpush1.msra.mxu0 0.0
      %2760 = vmatprep.subr.mxu0 0.0
      %2761 = vmatpush1.msra.mxu0 0.0
      %2762 = vmatprep.subr.mxu0 0.0
      %2763 = vmatpush1.msra.mxu0 0.0
      %2764 = vmatprep.subr.mxu0 0.0
      %2765 = vmatpush1.msra.mxu0 0.0
      %2766 = vmatprep.subr.mxu0 0.0
      %2767 = vmatpush1.msra.mxu0 0.0
      %2768 = vmatprep.subr.mxu0 0.0
      %2769 = vmatpush1.msra.mxu0 0.0
      %2770 = vmatprep.subr.mxu0 0.0
      %2771 = vmatpush1.msra.mxu0 0.0
      %2772 = vmatprep.subr.mxu0 0.0
      %2773 = vmatpush1.msra.mxu0 0.0
      %2774 = vmatprep.subr.mxu0 0.0
      %2775 = vmatpush1.msra.mxu0 0.0
      %2776 = vmatprep.mubr.f32.mxu0 0.0
      %2777 = vmatmul.mubr.f32.gmra.mrb[0].mxu0 %v2665
      %v2778 = vpop.f32.mrb[0].mxu0
      %v2779 = vadd.f32 %v2587, %v2778
      %v2780 = vpop.f32.mrb[0].mxu0
      %2781 = vmatprep.mubr.f32.mxu0 0.0
      %2782 = vmatmul.mubr.f32.gmra.mrb[0].mxu0 %v2668
      %v2783 = vpop.f32.mrb[0].mxu0
      %v2784 = vadd.f32 %v2592, %v2783
      %v2785 = vpop.f32.mrb[0].mxu0
      %2786 = vmatprep.mubr.f32.mxu0 0.0
      %2787 = vmatmul.mubr.f32.gmra.mrb[0].mxu0 %v2671
      %v2788 = vpop.f32.mrb[0].mxu0
      %v2789 = vadd.f32 %v2597, %v2788
      %v2790 = vpop.f32.mrb[0].mxu0
      %2791 = vmatprep.mubr.f32.mxu0 0.0
      %2792 = vmatmul.mubr.f32.gmra.mrb[0].mxu0 %v2674
      %v2793 = vpop.f32.mrb[0].mxu0
      %v2794 = vadd.f32 %v2602, %v2793
      %v2795 = vpop.f32.mrb[0].mxu0
      %2796 = vmatprep.mubr.f32.mxu0 0.0
      %2797 = vmatmul.mubr.f32.gmra.mrb[0].mxu0 %v2677
      %v2798 = vpop.f32.mrb[0].mxu0
      %v2799 = vadd.f32 %v2607, %v2798
      %v2800 = vpop.f32.mrb[0].mxu0
      %2801 = vmatprep.mubr.f32.mxu0 0.0
      %2802 = vmatmul.mubr.f32.gmra.mrb[0].mxu0 %v2680
      %v2803 = vpop.f32.mrb[0].mxu0
      %v2804 = vadd.f32 %v2612, %v2803
      %v2805 = vpop.f32.mrb[0].mxu0
      %2806 = vmatprep.mubr.f32.mxu0 0.0
      %2807 = vmatmul.mubr.f32.gmra.mrb[0].mxu0 %v2683
      %v2808 = vpop.f32.mrb[0].mxu0
      %v2809 = vadd.f32 %v2617, %v2808
      %v2810 = vpop.f32.mrb[0].mxu0
      %2811 = vmatprep.mubr.f32.mxu0 0.0
      %2812 = vmatmul.mubr.f32.gmra.mrb[0].mxu0 %v2686
      %v2813 = vpop.f32.mrb[0].mxu0
      %v2814 = vadd.f32 %v2622, %v2813
      %v2815 = vpop.f32.mrb[0].mxu0
      %2816 = vmatprep.mubr.f32.mxu0 0.0
      %2817 = vmatmul.mubr.f32.gmra.mrb[0].mxu0 %v2689
      %v2818 = vpop.f32.mrb[0].mxu0
      %v2819 = vadd.f32 %v2627, %v2818
      %v2820 = vpop.f32.mrb[0].mxu0
      %2821 = vmatprep.mubr.f32.mxu0 0.0
      %2822 = vmatmul.mubr.f32.gmra.mrb[0].mxu0 %v2692
      %v2823 = vpop.f32.mrb[0].mxu0
      %v2824 = vadd.f32 %v2632, %v2823
      %v2825 = vpop.f32.mrb[0].mxu0
      %2826 = vmatprep.mubr.f32.mxu0 0.0
      %2827 = vmatmul.mubr.f32.gmra.mrb[0].mxu0 %v2695
      %v2828 = vpop.f32.mrb[0].mxu0
      %v2829 = vadd.f32 %v2637, %v2828
      %v2830 = vpop.f32.mrb[0].mxu0
      %2831 = vmatprep.mubr.f32.mxu0 0.0
      %2832 = vmatmul.mubr.f32.gmra.mrb[0].mxu0 %v2698
      %v2833 = vpop.f32.mrb[0].mxu0
      %v2834 = vadd.f32 %v2642, %v2833
      %v2835 = vpop.f32.mrb[0].mxu0
      %2836 = vmatprep.mubr.f32.mxu0 0.0
      %2837 = vmatmul.mubr.f32.gmra.mrb[0].mxu0 %v2701
      %v2838 = vpop.f32.mrb[0].mxu0
      %v2839 = vadd.f32 %v2647, %v2838
      %v2840 = vpop.f32.mrb[0].mxu0
      %2841 = vmatprep.mubr.f32.mxu0 0.0
      %2842 = vmatmul.mubr.f32.gmra.mrb[0].mxu0 %v2704
      %v2843 = vpop.f32.mrb[0].mxu0
      %v2844 = vadd.f32 %v2652, %v2843
      %v2845 = vpop.f32.mrb[0].mxu0
      %2846 = vmatprep.mubr.f32.mxu0 0.0
      %2847 = vmatmul.mubr.f32.gmra.mrb[0].mxu0 %v2707
      %v2848 = vpop.f32.mrb[0].mxu0
      %v2849 = vadd.f32 %v2657, %v2848
      %v2850 = vpop.f32.mrb[0].mxu0
      %2851 = vmatprep.mubr.f32.mxu0 0.0
      %2852 = vmatmul.mubr.f32.gmra.mrb[0].mxu0 %v2710
      %v2853 = vpop.f32.mrb[0].mxu0
      %v2854 = vadd.f32 %v2662, %v2853
      %v2855 = vpop.f32.mrb[0].mxu0
      %2856 = vdwg.mxu0
      %2857 = vst.msk [vmem:[%s279] sm:$0xff] %vm1064, %v2779
      %2858 = vst.msk [vmem:[%s279 + $0x8] sm:$0xff] %vm1064, %v2784
      %2859 = vst.msk [vmem:[%s279 + $0x10] sm:$0xff] %vm1064, %v2789
      %2860 = vst.msk [vmem:[%s279 + $0x18] sm:$0xff] %vm1064, %v2794
      %2861 = vst.msk [vmem:[%s279 + $0x20] sm:$0xff] %vm1064, %v2799
      %2862 = vst.msk [vmem:[%s279 + $0x28] sm:$0xff] %vm1064, %v2804
      %2863 = vst.msk [vmem:[%s279 + $0x30] sm:$0xff] %vm1064, %v2809
      %2864 = vst.msk [vmem:[%s279 + $0x38] sm:$0xff] %vm1064, %v2814
      %2865 = vst.msk [vmem:[%s284] sm:$0xff] %vm1064, %v2819
      %2866 = vst.msk [vmem:[%s284 + $0x8] sm:$0xff] %vm1064, %v2824
      %2867 = vst.msk [vmem:[%s284 + $0x10] sm:$0xff] %vm1064, %v2829
      %2868 = vst.msk [vmem:[%s284 + $0x18] sm:$0xff] %vm1064, %v2834
      %2869 = vst.msk [vmem:[%s284 + $0x20] sm:$0xff] %vm1064, %v2839
      %2870 = vst.msk [vmem:[%s284 + $0x28] sm:$0xff] %vm1064, %v2844
      %2871 = vst.msk [vmem:[%s284 + $0x30] sm:$0xff] %vm1064, %v2849
      %2872 = vst.msk [vmem:[%s284 + $0x38] sm:$0xff] %vm1064, %v2854
      %p2873 = scmp.lt.s32.totalorder %s18, 1
      %s2874 = scalar_select %p2873, %s18, 1
      %s2875 = smul.addr %s2874, 8
      %s2876 = smul.addr %s2875, 8
      %s2877 = scalar_lea.vmem %s5, %s2876
      %p2878 = scmp.lt.s32.totalorder %s18, 1
      %s2879 = scalar_select %p2878, %s18, 1
      %s2880 = smul.addr %s2879, 8
      %s2881 = smul.addr %s2880, 8
      %s2882 = scalar_lea.vmem %s6, %s2881
      // Predicated region
      $region41: #{dca_forward.7} parent=39 // pred_check
        %p2883 = pneg %p151
      $region42: #{dca_forward.7} parent=39 // pred_check_branch
        %2885 = sbr.rel (%p2883) target = $region44
      $region43: #{dca_forward.7} parent=39 // pred_region
        _
      $region44: #{dca_forward.7} parent=39 // pred_fallthru
        _
      // Predicated region
      $region45: #{dca_forward.7} parent=39 // pred_check
        %p2886 = pneg %p177
      $region46: #{dca_forward.7} parent=39 // pred_check_branch
        %2888 = sbr.rel (%p2886) target = $region48
      $region47: #{dca_forward.7} parent=39 // pred_region
        _
      $region48: #{dca_forward.7} parent=39 // pred_fallthru
        _
    $region40: #{dca_forward.7} parent=5 // pred_fallthru
      _
    %p2889 = scmp.le.s32.totalorder 2, %s13
    // Predicated region
    $region49: #{dca_forward.7} parent=5 // pred_check
      %p2890 = pneg %p2889
    $region50: #{dca_forward.7} parent=5 // pred_check_branch
      %2892 = sbr.rel (%p2890) target = $region52
    $region51: #{dca_forward.7} parent=5 // pred_region
      %s2893 = ssub.s32 %s13, 2
      // Predicated region
      $region53: #{dca_forward.7} parent=51 // pred_check
        %p2894 = pneg %p157
      $region54: #{dca_forward.7} parent=51 // pred_check_branch
        %2896 = sbr.rel (%p2894) target = $region56
      $region55: #{dca_forward.7} parent=51 // pred_region
        %p2897 = scmp.lt.s32.totalorder %s19, 1
        %s2898 = scalar_select %p2897, %s19, 1
        %s2899 = smul.addr %s2898, 8
        %s2900 = smul.addr %s2899, 8
        %s2901 = scalar_lea.vmem %s5, %s2900
      $region56: #{dca_forward.7} parent=51 // pred_fallthru
        _
      // Predicated region
      $region57: #{dca_forward.7} parent=51 // pred_check
        %p2902 = pneg %p183
      $region58: #{dca_forward.7} parent=51 // pred_check_branch
        %2904 = sbr.rel (%p2902) target = $region60
      $region59: #{dca_forward.7} parent=51 // pred_region
        %p2905 = scmp.lt.s32.totalorder %s19, 1
        %s2906 = scalar_select %p2905, %s19, 1
        %s2907 = smul.addr %s2906, 8
        %s2908 = smul.addr %s2907, 8
        %s2909 = scalar_lea.vmem %s6, %s2908
      $region60: #{dca_forward.7} parent=51 // pred_fallthru
        _
    $region52: #{dca_forward.7} parent=5 // pred_fallthru
      _
  $region6: #{dca_forward.7} parent=0 // loop_footer
    %s17 = sadd.s32 1, %s13
  $region7: #{dca_forward.7} parent=0 // loop_footer_branch
    %12 = sbr.rel target = $region3
  $region8: #{dca_forward.7} parent=0 // loop_exit
    _

</llo_original>
